<compile_context>
chip_gen: v5e
topology: v5e:2x2
jax: 0.10.0
libtpu: 0.0.40
codegen_flags: <defaults>
</compile_context>

<pallas_src>
import math

import jax
import jax.numpy as jnp
from jax.experimental import pallas as pl
from jax.experimental.pallas import tpu as pltpu

IN_FEATURES = 3 * 64 * 64  # 12288
H1 = 192
H2 = 24
OUT = 6

# lane-width padding for the tiny layers (zero columns/rows -> exact same logits)
H2_PAD = 128
OUT_PAD = 128


def _round_up(n: int, m: int) -> int:
    return ((n + m - 1) // m) * m


def _chip_budget():
    """One-time (import-time) choice of max batch tile and scoped-VMEM cap.

    TB=256 with an f32 x tile (12 MiB, double-buffered 24 MiB) + bf16 W1 (~9 MiB
    double-buffered) fits under a 48 MiB cap on v7x's 64 MiB physical VMEM.
    Chips with 128 MiB VMEM (v5e/v6e) get TB=512 and a 96 MiB cap for longer DMA bursts.
    """
    max_tb, vmem_limit = 256, 48 << 20
    try:
        vmem_bytes = getattr(pltpu.get_tpu_info(), "vmem_capacity_bytes", None)
        if vmem_bytes is not None and vmem_bytes >= (100 << 20):
            max_tb, vmem_limit = 512, 96 << 20
    except Exception:
        pass  # unknown chip -> keep the conservative plan (legal everywhere)
    return max_tb, vmem_limit


_MAX_TB, _VMEM_LIMIT = _chip_budget()


def _pick_batch_tile(batch: int, max_tb: int) -> int:
    """Rows per grid step: biggest tile that fits, rounded to a sublane multiple.

    Medium batches are split into >=2 tiles so a 2-TensorCore chip (v7x) can shard
    the 'parallel' batch axis; the extra ~0.35 us grid step is negligible elsewhere.
    """
    if batch > max_tb:
        return max_tb
    if batch >= 128:
        return max(8, _round_up((batch + 1) // 2, 8))
    return max(8, _round_up(batch, 8))


def mlp_kernel(x_ref, w1_ref, b1_ref, w2_ref, b2_ref, w3_ref, b3_ref, o_ref):
    # Layer 1: cast the f32 x tile to bf16 in VMEM (VPU work, hides under the x DMA),
    # then (TB,12288)bf16 @ (12288,192)bf16 -> f32 accumulate on the MXU.
    x = x_ref[...].astype(jnp.bfloat16)
    h1 = jnp.dot(x, w1_ref[...], preferred_element_type=jnp.float32)
    h1 = jnp.maximum(h1 + b1_ref[...], 0.0)  # f32 bias + ReLU on the VPU
    # Layer 2: (TB,192) @ (192,128) (cols 24..127 are zero), ReLU.
    h2 = jnp.dot(h1, w2_ref[...], preferred_element_type=jnp.float32)
    h2 = jnp.maximum(h2 + b2_ref[...], 0.0)
    # Layer 3: (TB,128) @ (128,128) (only the top-left 24x6 block is nonzero).
    o = jnp.dot(h2, w3_ref[...], preferred_element_type=jnp.float32)
    o_ref[...] = (o + b3_ref[...]).astype(o_ref.dtype)


def _pallas_forward(x, w1, b1, w2, b2, w3, b3, *, tb: int, n_tiles: int):
    b_pad = x.shape[0]

    def resident(shape):
        # Constant block index -> stays in VMEM across the whole grid.
        return pl.BlockSpec(shape, lambda i: (0, 0))

    return pl.pallas_call(
        mlp_kernel,
        out_shape=jax.ShapeDtypeStruct((b_pad, OUT_PAD), jnp.float32),
        grid=(n_tiles,),
        in_specs=[
            pl.BlockSpec((tb, IN_FEATURES), lambda i: (i, 0)),  # x: batch-tiled, f32
            resident((IN_FEATURES, H1)),
            resident((1, H1)),
            resident((H1, H2_PAD)),
            resident((1, H2_PAD)),
            resident((H2_PAD, OUT_PAD)),
            resident((1, OUT_PAD)),
        ],
        out_specs=pl.BlockSpec((tb, OUT_PAD), lambda i: (i, 0)),
        compiler_params=pltpu.CompilerParams(
            dimension_semantics=("parallel",),
            vmem_limit_bytes=_VMEM_LIMIT,
        ),
    )(x, w1, b1, w2, b2, w3, b3)


def pack_params(params):
    """One-time offline weight packing: bf16 W1, lane-pad the tiny layers.

    Do this ONCE per set of weights, not per forward call.
    """
    w1, b1, w2, b2, w3, b3 = params
    w1 = w1.astype(jnp.bfloat16)
    w2 = jnp.pad(w2, ((0, 0), (0, H2_PAD - H2)))
    b2 = jnp.pad(b2, ((0, 0), (0, H2_PAD - H2)))
    w3 = jnp.pad(w3, ((0, H2_PAD - H2), (0, OUT_PAD - OUT)))
    b3 = jnp.pad(b3, ((0, 0), (0, OUT_PAD - OUT)))
    return (w1, b1, w2, b2, w3, b3)


@jax.jit
def mlp_classifier_forward(x_nchw, packed_params):
    """x_nchw: (B, 3, 64, 64) float32, packed_params from pack_params() -> logits (B, 6) f32."""
    batch = x_nchw.shape[0]
    # torch.nn.Flatten semantics (row-major over C,H,W); stays f32 -> bf16 cast happens in-kernel.
    x = x_nchw.reshape(batch, -1)

    tb = _pick_batch_tile(batch, _MAX_TB)
    n_tiles = pl.cdiv(batch, tb)
    b_pad = n_tiles * tb
    if b_pad != batch:
        x = jnp.pad(x, ((0, b_pad - batch), (0, 0)))  # tail tile padded with zero rows

    w1, b1, w2, b2, w3, b3 = packed_params
    out = _pallas_forward(x, w1, b1, w2, b2, w3, b3, tb=tb, n_tiles=n_tiles)
    return out[:batch, :OUT]


def init_params(key):
    """Deterministic init mirroring nn.Linear's U(-1/sqrt(fan_in), 1/sqrt(fan_in)).

    Weights stored as (in_features, out_features) (transpose of PyTorch layout),
    biases as (1, out_features), all float32.
    """
    def linear(k, fan_in, fan_out):
        kw, kb = jax.random.split(k)
        bound = 1.0 / math.sqrt(fan_in)
        w = jax.random.uniform(kw, (fan_in, fan_out), jnp.float32, -bound, bound)
        b = jax.random.uniform(kb, (1, fan_out), jnp.float32, -bound, bound)
        return w, b

    k1, k2, k3 = jax.random.split(key, 3)
    w1, b1 = linear(k1, IN_FEATURES, H1)
    w2, b2 = linear(k2, H1, H2)
    w3, b3 = linear(k3, H2, OUT)
    return (w1, b1, w2, b2, w3, b3)


def reference_forward(x_nchw, params):
    """Pure-JAX reference mirroring the kernel's bf16 layer-1 quantization."""
    w1, b1, w2, b2, w3, b3 = params
    x = x_nchw.reshape(x_nchw.shape[0], -1).astype(jnp.bfloat16)
    h1 = jnp.dot(x, w1.astype(jnp.bfloat16), preferred_element_type=jnp.float32)
    h1 = jnp.maximum(h1 + b1, 0.0)
    h2 = jnp.maximum(jnp.dot(h1, w2, precision="highest") + b2, 0.0)
    return jnp.dot(h2, w3, precision="highest") + b3


if __name__ == "__main__":
    key = jax.random.PRNGKey(0)
    kx, kp = jax.random.split(key)

    B = 2
    x = jax.random.normal(kx, (B, 3, 64, 64), jnp.float32)
    params = init_params(kp)
    packed = pack_params(params)  # one-time weight packing

    out = jax.block_until_ready(mlp_classifier_forward(x, packed))
    ref = reference_forward(x, params)

    assert out.shape == (B, OUT), out.shape
    assert bool(jnp.all(jnp.isfinite(out))), out
    assert jnp.allclose(out, ref, atol=2e-2, rtol=2e-2), (out, ref)

    print("KERNEL_OK")
</pallas_src>

<mosaic_0001>
module attributes {stable_mosaic.version = 11 : i64} {
  func.func @mlp_kernel(%arg0: i32, %arg1: memref<8x12288xf32, #tpu.memory_space<vmem>>, %arg2: memref<12288x192xbf16, #tpu.memory_space<vmem>>, %arg3: memref<1x192xf32, #tpu.memory_space<vmem>>, %arg4: memref<192x128xf32, #tpu.memory_space<vmem>>, %arg5: memref<1x128xf32, #tpu.memory_space<vmem>>, %arg6: memref<128x128xf32, #tpu.memory_space<vmem>>, %arg7: memref<1x128xf32, #tpu.memory_space<vmem>>, %arg8: memref<8x128xf32, #tpu.memory_space<vmem>>) attributes {dimension_semantics = [#tpu.dimension_semantics<parallel>], iteration_bounds = array<i64: 1>, scalar_prefetch = 0 : i64, scratch_operands = 0 : i64, tpu.core_type = #tpu.core_type<tc>, window_params = [{transform_indices = @transform_0, window_bounds = array<i64: 8, 12288>}, {pipeline_mode = #tpu.pipeline_mode<synchronous>, transform_indices = @transform_1, window_bounds = array<i64: 12288, 192>}, {pipeline_mode = #tpu.pipeline_mode<synchronous>, transform_indices = @transform_2, window_bounds = array<i64: 1, 192>}, {pipeline_mode = #tpu.pipeline_mode<synchronous>, transform_indices = @transform_3, window_bounds = array<i64: 192, 128>}, {pipeline_mode = #tpu.pipeline_mode<synchronous>, transform_indices = @transform_4, window_bounds = array<i64: 1, 128>}, {pipeline_mode = #tpu.pipeline_mode<synchronous>, transform_indices = @transform_5, window_bounds = array<i64: 128, 128>}, {pipeline_mode = #tpu.pipeline_mode<synchronous>, transform_indices = @transform_6, window_bounds = array<i64: 1, 128>}, {transform_indices = @transform_7, window_bounds = array<i64: 8, 128>}]} {
    %c0 = arith.constant 0 : index
    %c0_0 = arith.constant 0 : index
    %0 = vector.load %arg1[%c0, %c0_0] : memref<8x12288xf32, #tpu.memory_space<vmem>>, vector<8x12288xf32>
    %1 = arith.truncf %0 : vector<8x12288xf32> to vector<8x12288xbf16>
    %c0_1 = arith.constant 0 : index
    %c0_2 = arith.constant 0 : index
    %2 = vector.load %arg2[%c0_1, %c0_2] : memref<12288x192xbf16, #tpu.memory_space<vmem>>, vector<12288x192xbf16>
    %cst = arith.constant dense<0.000000e+00> : vector<8x192xf32>
    %3 = tpu.matmul %1, %2, %cst {dimension_numbers = #tpu.dot_dimension_numbers<[1], [0], [0], [1], [0, 0, 1, 1], [], []>} : vector<8x12288xbf16>, vector<12288x192xbf16>, vector<8x192xf32> -> vector<8x192xf32>
    %c0_3 = arith.constant 0 : index
    %c0_4 = arith.constant 0 : index
    %4 = vector.load %arg3[%c0_3, %c0_4] : memref<1x192xf32, #tpu.memory_space<vmem>>, vector<1x192xf32>
    %5 = vector.broadcast %4 : vector<1x192xf32> to vector<8x192xf32>
    %6 = arith.addf %3, %5 : vector<8x192xf32>
    %cst_5 = arith.constant 0.000000e+00 : f32
    %7 = vector.broadcast %cst_5 : f32 to vector<8x192xf32>
    %8 = arith.maximumf %6, %7 : vector<8x192xf32>
    %c0_6 = arith.constant 0 : index
    %c0_7 = arith.constant 0 : index
    %9 = vector.load %arg4[%c0_6, %c0_7] : memref<192x128xf32, #tpu.memory_space<vmem>>, vector<192x128xf32>
    %cst_8 = arith.constant dense<0.000000e+00> : vector<8x128xf32>
    %10 = tpu.matmul %8, %9, %cst_8 {dimension_numbers = #tpu.dot_dimension_numbers<[1], [0], [0], [1], [0, 0, 1, 1], [], []>} : vector<8x192xf32>, vector<192x128xf32>, vector<8x128xf32> -> vector<8x128xf32>
    %c0_9 = arith.constant 0 : index
    %c0_10 = arith.constant 0 : index
    %11 = vector.load %arg5[%c0_9, %c0_10] : memref<1x128xf32, #tpu.memory_space<vmem>>, vector<1x128xf32>
    %12 = vector.broadcast %11 : vector<1x128xf32> to vector<8x128xf32>
    %13 = arith.addf %10, %12 : vector<8x128xf32>
    %cst_11 = arith.constant 0.000000e+00 : f32
    %14 = vector.broadcast %cst_11 : f32 to vector<8x128xf32>
    %15 = arith.maximumf %13, %14 : vector<8x128xf32>
    %c0_12 = arith.constant 0 : index
    %c0_13 = arith.constant 0 : index
    %16 = vector.load %arg6[%c0_12, %c0_13] : memref<128x128xf32, #tpu.memory_space<vmem>>, vector<128x128xf32>
    %cst_14 = arith.constant dense<0.000000e+00> : vector<8x128xf32>
    %17 = tpu.matmul %15, %16, %cst_14 {dimension_numbers = #tpu.dot_dimension_numbers<[1], [0], [0], [1], [0, 0, 1, 1], [], []>} : vector<8x128xf32>, vector<128x128xf32>, vector<8x128xf32> -> vector<8x128xf32>
    %c0_15 = arith.constant 0 : index
    %c0_16 = arith.constant 0 : index
    %18 = vector.load %arg7[%c0_15, %c0_16] : memref<1x128xf32, #tpu.memory_space<vmem>>, vector<1x128xf32>
    %19 = vector.broadcast %18 : vector<1x128xf32> to vector<8x128xf32>
    %20 = arith.addf %17, %19 : vector<8x128xf32>
    %c0_17 = arith.constant 0 : index
    %c0_18 = arith.constant 0 : index
    %21 = vector.load %arg8[%c0_17, %c0_18] : memref<8x128xf32, #tpu.memory_space<vmem>>, vector<8x128xf32>
    tpu.vector_store %arg8[%c0_17, %c0_18], %20 {strides = array<i32>} : memref<8x128xf32, #tpu.memory_space<vmem>>, vector<8x128xf32>,
    return
  }
  func.func @transform_0(%arg0: i32) -> (i32, i32) {
    %c0_i32 = arith.constant 0 : i32
    %c0_i32_0 = arith.constant 0 : i32
    return %arg0, %c0_i32 : i32, i32
  }
  func.func @transform_1(%arg0: i32) -> (i32, i32) {
    %c0_i32 = arith.constant 0 : i32
    %c0_i32_0 = arith.constant 0 : i32
    %c0_i32_1 = arith.constant 0 : i32
    return %c0_i32, %c0_i32_0 : i32, i32
  }
  func.func @transform_2(%arg0: i32) -> (i32, i32) {
    %c0_i32 = arith.constant 0 : i32
    %c0_i32_0 = arith.constant 0 : i32
    %c0_i32_1 = arith.constant 0 : i32
    return %c0_i32, %c0_i32_0 : i32, i32
  }
  func.func @transform_3(%arg0: i32) -> (i32, i32) {
    %c0_i32 = arith.constant 0 : i32
    %c0_i32_0 = arith.constant 0 : i32
    %c0_i32_1 = arith.constant 0 : i32
    return %c0_i32, %c0_i32_0 : i32, i32
  }
  func.func @transform_4(%arg0: i32) -> (i32, i32) {
    %c0_i32 = arith.constant 0 : i32
    %c0_i32_0 = arith.constant 0 : i32
    %c0_i32_1 = arith.constant 0 : i32
    return %c0_i32, %c0_i32_0 : i32, i32
  }
  func.func @transform_5(%arg0: i32) -> (i32, i32) {
    %c0_i32 = arith.constant 0 : i32
    %c0_i32_0 = arith.constant 0 : i32
    %c0_i32_1 = arith.constant 0 : i32
    return %c0_i32, %c0_i32_0 : i32, i32
  }
  func.func @transform_6(%arg0: i32) -> (i32, i32) {
    %c0_i32 = arith.constant 0 : i32
    %c0_i32_0 = arith.constant 0 : i32
    %c0_i32_1 = arith.constant 0 : i32
    return %c0_i32, %c0_i32_0 : i32, i32
  }
  func.func @transform_7(%arg0: i32) -> (i32, i32) {
    %c0_i32 = arith.constant 0 : i32
    %c0_i32_0 = arith.constant 0 : i32
    return %arg0, %c0_i32 : i32, i32
  }
}

</mosaic_0001>

<llo_original>
// kernel: mlp_classifier_forward.1
$region0: #{mlp_classifier_forward.1}
  #allocation0 [shape = 'u32[]', space=smem, size = 0x4, offset = 0x4, fixed_abs, tag = 'smem constant byte address 0x4 - core index']
  #allocation1 [shape = 'u32[72,128]{1,0:T(1,128)}', space=vmem, size = 0x9000, scoped, tag = 'internal scratch']
  %s0 = inlined_call_operand.vmem [shape: f32[8,12288], index: 0, kind: input, shape index: {}]
  %s1 = inlined_call_operand.vmem [shape: bf16[12288,192], index: 1, kind: input, shape index: {}]
  %s2 = inlined_call_operand.vmem [shape: f32[1,192], index: 2, kind: input, shape index: {}]
  %s3 = inlined_call_operand.vmem [shape: f32[192,128], index: 3, kind: input, shape index: {}]
  %s4 = inlined_call_operand.vmem [shape: f32[1,128], index: 4, kind: input, shape index: {}]
  %s5 = inlined_call_operand.vmem [shape: f32[128,128], index: 5, kind: input, shape index: {}]
  %s6 = inlined_call_operand.vmem [shape: f32[1,128], index: 6, kind: input, shape index: {}]
  %s7 = inlined_call_operand.vmem [shape: f32[8,128], index: 7, kind: output, shape index: {}]
  %s8 = sld [smem:[#allocation0]]
  $region38: #{mlp_classifier_forward.1} parent=0
    _
  %s10 = ssub.s32 1, %s8
  %s11 = scalar_select 0, %s10, %s8
  // Predicated region
  $region2: #{mlp_classifier_forward.1} parent=0 // pred_check
    _
  $region3: #{mlp_classifier_forward.1} parent=0 // pred_check_branch
    %13 = sbr.rel (0) target = $region5
  $region4: #{mlp_classifier_forward.1} parent=0 // pred_region
    _
  $region5: #{mlp_classifier_forward.1} parent=0 // pred_fallthru
    _
  // Predicated region
  $region6: #{mlp_classifier_forward.1} parent=0 // pred_check
    _
  $region7: #{mlp_classifier_forward.1} parent=0 // pred_check_branch
    %15 = sbr.rel (0) target = $region9
  $region8: #{mlp_classifier_forward.1} parent=0 // pred_region
    _
  $region9: #{mlp_classifier_forward.1} parent=0 // pred_fallthru
    _
  // Predicated region
  $region10: #{mlp_classifier_forward.1} parent=0 // pred_check
    _
  $region11: #{mlp_classifier_forward.1} parent=0 // pred_check_branch
    %17 = sbr.rel (0) target = $region13
  $region12: #{mlp_classifier_forward.1} parent=0 // pred_region
    _
  $region13: #{mlp_classifier_forward.1} parent=0 // pred_fallthru
    _
  // Predicated region
  $region14: #{mlp_classifier_forward.1} parent=0 // pred_check
    _
  $region15: #{mlp_classifier_forward.1} parent=0 // pred_check_branch
    %19 = sbr.rel (0) target = $region17
  $region16: #{mlp_classifier_forward.1} parent=0 // pred_region
    _
  $region17: #{mlp_classifier_forward.1} parent=0 // pred_fallthru
    _
  // Predicated region
  $region18: #{mlp_classifier_forward.1} parent=0 // pred_check
    _
  $region19: #{mlp_classifier_forward.1} parent=0 // pred_check_branch
    %21 = sbr.rel (0) target = $region21
  $region20: #{mlp_classifier_forward.1} parent=0 // pred_region
    _
  $region21: #{mlp_classifier_forward.1} parent=0 // pred_fallthru
    _
  // Predicated region
  $region22: #{mlp_classifier_forward.1} parent=0 // pred_check
    _
  $region23: #{mlp_classifier_forward.1} parent=0 // pred_check_branch
    %23 = sbr.rel (0) target = $region25
  $region24: #{mlp_classifier_forward.1} parent=0 // pred_region
    _
  $region25: #{mlp_classifier_forward.1} parent=0 // pred_fallthru
    _
  // Predicated region
  $region26: #{mlp_classifier_forward.1} parent=0 // pred_check
    _
  $region27: #{mlp_classifier_forward.1} parent=0 // pred_check_branch
    %25 = sbr.rel (0) target = $region29
  $region28: #{mlp_classifier_forward.1} parent=0 // pred_region
    _
  $region29: #{mlp_classifier_forward.1} parent=0 // pred_fallthru
    _
  %v26 = vld [vmem:[%s0] sm:$0xff]
  %v27 = vld [vmem:[%s0 + $0x8] sm:$0xff]
  %v28 = vld [vmem:[%s0 + $0x10] sm:$0xff]
  %v29 = vld [vmem:[%s0 + $0x18] sm:$0xff]
  %v30 = vld [vmem:[%s0 + $0x20] sm:$0xff]
  %v31 = vld [vmem:[%s0 + $0x28] sm:$0xff]
  %v32 = vld [vmem:[%s0 + $0x30] sm:$0xff]
  %v33 = vld [vmem:[%s0 + $0x38] sm:$0xff]
  %v34 = vld [vmem:[%s0 + $0x40] sm:$0xff]
  %v35 = vld [vmem:[%s0 + $0x48] sm:$0xff]
  %v36 = vld [vmem:[%s0 + $0x50] sm:$0xff]
  %v37 = vld [vmem:[%s0 + $0x58] sm:$0xff]
  %v38 = vld [vmem:[%s0 + $0x60] sm:$0xff]
  %v39 = vld [vmem:[%s0 + $0x68] sm:$0xff]
  %v40 = vld [vmem:[%s0 + $0x70] sm:$0xff]
  %v41 = vld [vmem:[%s0 + $0x78] sm:$0xff]
  %v42 = vld [vmem:[%s0 + $0x80] sm:$0xff]
  %v43 = vld [vmem:[%s0 + $0x88] sm:$0xff]
  %v44 = vld [vmem:[%s0 + $0x90] sm:$0xff]
  %v45 = vld [vmem:[%s0 + $0x98] sm:$0xff]
  %v46 = vld [vmem:[%s0 + $0xa0] sm:$0xff]
  %v47 = vld [vmem:[%s0 + $0xa8] sm:$0xff]
  %v48 = vld [vmem:[%s0 + $0xb0] sm:$0xff]
  %v49 = vld [vmem:[%s0 + $0xb8] sm:$0xff]
  %v50 = vld [vmem:[%s0 + $0xc0] sm:$0xff]
  %v51 = vld [vmem:[%s0 + $0xc8] sm:$0xff]
  %v52 = vld [vmem:[%s0 + $0xd0] sm:$0xff]
  %v53 = vld [vmem:[%s0 + $0xd8] sm:$0xff]
  %v54 = vld [vmem:[%s0 + $0xe0] sm:$0xff]
  %v55 = vld [vmem:[%s0 + $0xe8] sm:$0xff]
  %v56 = vld [vmem:[%s0 + $0xf0] sm:$0xff]
  %v57 = vld [vmem:[%s0 + $0xf8] sm:$0xff]
  %v58 = vld [vmem:[%s0 + $0x100] sm:$0xff]
  %v59 = vld [vmem:[%s0 + $0x108] sm:$0xff]
  %v60 = vld [vmem:[%s0 + $0x110] sm:$0xff]
  %v61 = vld [vmem:[%s0 + $0x118] sm:$0xff]
  %v62 = vld [vmem:[%s0 + $0x120] sm:$0xff]
  %v63 = vld [vmem:[%s0 + $0x128] sm:$0xff]
  %v64 = vld [vmem:[%s0 + $0x130] sm:$0xff]
  %v65 = vld [vmem:[%s0 + $0x138] sm:$0xff]
  %v66 = vld [vmem:[%s0 + $0x140] sm:$0xff]
  %v67 = vld [vmem:[%s0 + $0x148] sm:$0xff]
  %v68 = vld [vmem:[%s0 + $0x150] sm:$0xff]
  %v69 = vld [vmem:[%s0 + $0x158] sm:$0xff]
  %v70 = vld [vmem:[%s0 + $0x160] sm:$0xff]
  %v71 = vld [vmem:[%s0 + $0x168] sm:$0xff]
  %v72 = vld [vmem:[%s0 + $0x170] sm:$0xff]
  %v73 = vld [vmem:[%s0 + $0x178] sm:$0xff]
  %v74 = vld [vmem:[%s0 + $0x180] sm:$0xff]
  %v75 = vld [vmem:[%s0 + $0x188] sm:$0xff]
  %v76 = vld [vmem:[%s0 + $0x190] sm:$0xff]
  %v77 = vld [vmem:[%s0 + $0x198] sm:$0xff]
  %v78 = vld [vmem:[%s0 + $0x1a0] sm:$0xff]
  %v79 = vld [vmem:[%s0 + $0x1a8] sm:$0xff]
  %v80 = vld [vmem:[%s0 + $0x1b0] sm:$0xff]
  %v81 = vld [vmem:[%s0 + $0x1b8] sm:$0xff]
  %v82 = vld [vmem:[%s0 + $0x1c0] sm:$0xff]
  %v83 = vld [vmem:[%s0 + $0x1c8] sm:$0xff]
  %v84 = vld [vmem:[%s0 + $0x1d0] sm:$0xff]
  %v85 = vld [vmem:[%s0 + $0x1d8] sm:$0xff]
  %v86 = vld [vmem:[%s0 + $0x1e0] sm:$0xff]
  %v87 = vld [vmem:[%s0 + $0x1e8] sm:$0xff]
  %v88 = vld [vmem:[%s0 + $0x1f0] sm:$0xff]
  %v89 = vld [vmem:[%s0 + $0x1f8] sm:$0xff]
  %v90 = vld [vmem:[%s0 + $0x200] sm:$0xff]
  %v91 = vld [vmem:[%s0 + $0x208] sm:$0xff]
  %v92 = vld [vmem:[%s0 + $0x210] sm:$0xff]
  %v93 = vld [vmem:[%s0 + $0x218] sm:$0xff]
  %v94 = vld [vmem:[%s0 + $0x220] sm:$0xff]
  %v95 = vld [vmem:[%s0 + $0x228] sm:$0xff]
  %v96 = vld [vmem:[%s0 + $0x230] sm:$0xff]
  %v97 = vld [vmem:[%s0 + $0x238] sm:$0xff]
  %v98 = vld [vmem:[%s0 + $0x240] sm:$0xff]
  %v99 = vld [vmem:[%s0 + $0x248] sm:$0xff]
  %v100 = vld [vmem:[%s0 + $0x250] sm:$0xff]
  %v101 = vld [vmem:[%s0 + $0x258] sm:$0xff]
  %v102 = vld [vmem:[%s0 + $0x260] sm:$0xff]
  %v103 = vld [vmem:[%s0 + $0x268] sm:$0xff]
  %v104 = vld [vmem:[%s0 + $0x270] sm:$0xff]
  %v105 = vld [vmem:[%s0 + $0x278] sm:$0xff]
  %v106 = vld [vmem:[%s0 + $0x280] sm:$0xff]
  %v107 = vld [vmem:[%s0 + $0x288] sm:$0xff]
  %v108 = vld [vmem:[%s0 + $0x290] sm:$0xff]
  %v109 = vld [vmem:[%s0 + $0x298] sm:$0xff]
  %v110 = vld [vmem:[%s0 + $0x2a0] sm:$0xff]
  %v111 = vld [vmem:[%s0 + $0x2a8] sm:$0xff]
  %v112 = vld [vmem:[%s0 + $0x2b0] sm:$0xff]
  %v113 = vld [vmem:[%s0 + $0x2b8] sm:$0xff]
  %v114 = vld [vmem:[%s0 + $0x2c0] sm:$0xff]
  %v115 = vld [vmem:[%s0 + $0x2c8] sm:$0xff]
  %v116 = vld [vmem:[%s0 + $0x2d0] sm:$0xff]
  %v117 = vld [vmem:[%s0 + $0x2d8] sm:$0xff]
  %v118 = vld [vmem:[%s0 + $0x2e0] sm:$0xff]
  %v119 = vld [vmem:[%s0 + $0x2e8] sm:$0xff]
  %v120 = vld [vmem:[%s0 + $0x2f0] sm:$0xff]
  %v121 = vld [vmem:[%s0 + $0x2f8] sm:$0xff]
  %v122 = vpack.c.bf16 %v26, %v26
  %v123 = vpack.c.bf16 %v27, %v27
  %v124 = vpack.c.bf16 %v28, %v28
  %v125 = vpack.c.bf16 %v29, %v29
  %v126 = vpack.c.bf16 %v30, %v30
  %v127 = vpack.c.bf16 %v31, %v31
  %v128 = vpack.c.bf16 %v32, %v32
  %v129 = vpack.c.bf16 %v33, %v33
  %v130 = vpack.c.bf16 %v34, %v34
  %v131 = vpack.c.bf16 %v35, %v35
  %v132 = vpack.c.bf16 %v36, %v36
  %v133 = vpack.c.bf16 %v37, %v37
  %v134 = vpack.c.bf16 %v38, %v38
  %v135 = vpack.c.bf16 %v39, %v39
  %v136 = vpack.c.bf16 %v40, %v40
  %v137 = vpack.c.bf16 %v41, %v41
  %v138 = vpack.c.bf16 %v42, %v42
  %v139 = vpack.c.bf16 %v43, %v43
  %v140 = vpack.c.bf16 %v44, %v44
  %v141 = vpack.c.bf16 %v45, %v45
  %v142 = vpack.c.bf16 %v46, %v46
  %v143 = vpack.c.bf16 %v47, %v47
  %v144 = vpack.c.bf16 %v48, %v48
  %v145 = vpack.c.bf16 %v49, %v49
  %v146 = vpack.c.bf16 %v50, %v50
  %v147 = vpack.c.bf16 %v51, %v51
  %v148 = vpack.c.bf16 %v52, %v52
  %v149 = vpack.c.bf16 %v53, %v53
  %v150 = vpack.c.bf16 %v54, %v54
  %v151 = vpack.c.bf16 %v55, %v55
  %v152 = vpack.c.bf16 %v56, %v56
  %v153 = vpack.c.bf16 %v57, %v57
  %v154 = vpack.c.bf16 %v58, %v58
  %v155 = vpack.c.bf16 %v59, %v59
  %v156 = vpack.c.bf16 %v60, %v60
  %v157 = vpack.c.bf16 %v61, %v61
  %v158 = vpack.c.bf16 %v62, %v62
  %v159 = vpack.c.bf16 %v63, %v63
  %v160 = vpack.c.bf16 %v64, %v64
  %v161 = vpack.c.bf16 %v65, %v65
  %v162 = vpack.c.bf16 %v66, %v66
  %v163 = vpack.c.bf16 %v67, %v67
  %v164 = vpack.c.bf16 %v68, %v68
  %v165 = vpack.c.bf16 %v69, %v69
  %v166 = vpack.c.bf16 %v70, %v70
  %v167 = vpack.c.bf16 %v71, %v71
  %v168 = vpack.c.bf16 %v72, %v72
  %v169 = vpack.c.bf16 %v73, %v73
  %v170 = vpack.c.bf16 %v74, %v74
  %v171 = vpack.c.bf16 %v75, %v75
  %v172 = vpack.c.bf16 %v76, %v76
  %v173 = vpack.c.bf16 %v77, %v77
  %v174 = vpack.c.bf16 %v78, %v78
  %v175 = vpack.c.bf16 %v79, %v79
  %v176 = vpack.c.bf16 %v80, %v80
  %v177 = vpack.c.bf16 %v81, %v81
  %v178 = vpack.c.bf16 %v82, %v82
  %v179 = vpack.c.bf16 %v83, %v83
  %v180 = vpack.c.bf16 %v84, %v84
  %v181 = vpack.c.bf16 %v85, %v85
  %v182 = vpack.c.bf16 %v86, %v86
  %v183 = vpack.c.bf16 %v87, %v87
  %v184 = vpack.c.bf16 %v88, %v88
  %v185 = vpack.c.bf16 %v89, %v89
  %v186 = vpack.c.bf16 %v90, %v90
  %v187 = vpack.c.bf16 %v91, %v91
  %v188 = vpack.c.bf16 %v92, %v92
  %v189 = vpack.c.bf16 %v93, %v93
  %v190 = vpack.c.bf16 %v94, %v94
  %v191 = vpack.c.bf16 %v95, %v95
  %v192 = vpack.c.bf16 %v96, %v96
  %v193 = vpack.c.bf16 %v97, %v97
  %v194 = vpack.c.bf16 %v98, %v98
  %v195 = vpack.c.bf16 %v99, %v99
  %v196 = vpack.c.bf16 %v100, %v100
  %v197 = vpack.c.bf16 %v101, %v101
  %v198 = vpack.c.bf16 %v102, %v102
  %v199 = vpack.c.bf16 %v103, %v103
  %v200 = vpack.c.bf16 %v104, %v104
  %v201 = vpack.c.bf16 %v105, %v105
  %v202 = vpack.c.bf16 %v106, %v106
  %v203 = vpack.c.bf16 %v107, %v107
  %v204 = vpack.c.bf16 %v108, %v108
  %v205 = vpack.c.bf16 %v109, %v109
  %v206 = vpack.c.bf16 %v110, %v110
  %v207 = vpack.c.bf16 %v111, %v111
  %v208 = vpack.c.bf16 %v112, %v112
  %v209 = vpack.c.bf16 %v113, %v113
  %v210 = vpack.c.bf16 %v114, %v114
  %v211 = vpack.c.bf16 %v115, %v115
  %v212 = vpack.c.bf16 %v116, %v116
  %v213 = vpack.c.bf16 %v117, %v117
  %v214 = vpack.c.bf16 %v118, %v118
  %v215 = vpack.c.bf16 %v119, %v119
  %v216 = vpack.c.bf16 %v120, %v120
  %v217 = vpack.c.bf16 %v121, %v121
  %v218 = vld [vmem:[%s1] sm:$0xff]
  %v219 = vld [vmem:[%s1 + $0x8] sm:$0xff]
  %v220 = vld [vmem:[%s1 + $0x10] sm:$0xff]
  %v221 = vld [vmem:[%s1 + $0x18] sm:$0xff]
  %v222 = vld [vmem:[%s1 + $0x20] sm:$0xff]
  %v223 = vld [vmem:[%s1 + $0x28] sm:$0xff]
  %v224 = vld [vmem:[%s1 + $0x30] sm:$0xff]
  %v225 = vld [vmem:[%s1 + $0x38] sm:$0xff]
  %v226 = vld [vmem:[%s1 + $0x40] sm:$0xff]
  %v227 = vld [vmem:[%s1 + $0x48] sm:$0xff]
  %v228 = vld [vmem:[%s1 + $0x50] sm:$0xff]
  %v229 = vld [vmem:[%s1 + $0x58] sm:$0xff]
  %v230 = vld [vmem:[%s1 + $0x60] sm:$0xff]
  %v231 = vld [vmem:[%s1 + $0x68] sm:$0xff]
  %v232 = vld [vmem:[%s1 + $0x70] sm:$0xff]
  %v233 = vld [vmem:[%s1 + $0x78] sm:$0xff]
  %v234 = vld [vmem:[%s1 + $0x80] sm:$0xff]
  %v235 = vld [vmem:[%s1 + $0x88] sm:$0xff]
  %v236 = vld [vmem:[%s1 + $0x90] sm:$0xff]
  %v237 = vld [vmem:[%s1 + $0x98] sm:$0xff]
  %v238 = vld [vmem:[%s1 + $0xa0] sm:$0xff]
  %v239 = vld [vmem:[%s1 + $0xa8] sm:$0xff]
  %v240 = vld [vmem:[%s1 + $0xb0] sm:$0xff]
  %v241 = vld [vmem:[%s1 + $0xb8] sm:$0xff]
  %v242 = vld [vmem:[%s1 + $0xc0] sm:$0xff]
  %v243 = vld [vmem:[%s1 + $0xc8] sm:$0xff]
  %v244 = vld [vmem:[%s1 + $0xd0] sm:$0xff]
  %v245 = vld [vmem:[%s1 + $0xd8] sm:$0xff]
  %v246 = vld [vmem:[%s1 + $0xe0] sm:$0xff]
  %v247 = vld [vmem:[%s1 + $0xe8] sm:$0xff]
  %v248 = vld [vmem:[%s1 + $0xf0] sm:$0xff]
  %v249 = vld [vmem:[%s1 + $0xf8] sm:$0xff]
  %v250 = vld [vmem:[%s1 + $0x100] sm:$0xff]
  %v251 = vld [vmem:[%s1 + $0x108] sm:$0xff]
  %v252 = vld [vmem:[%s1 + $0x110] sm:$0xff]
  %v253 = vld [vmem:[%s1 + $0x118] sm:$0xff]
  %v254 = vld [vmem:[%s1 + $0x120] sm:$0xff]
  %v255 = vld [vmem:[%s1 + $0x128] sm:$0xff]
  %v256 = vld [vmem:[%s1 + $0x130] sm:$0xff]
  %v257 = vld [vmem:[%s1 + $0x138] sm:$0xff]
  %v258 = vld [vmem:[%s1 + $0x140] sm:$0xff]
  %v259 = vld [vmem:[%s1 + $0x148] sm:$0xff]
  %v260 = vld [vmem:[%s1 + $0x150] sm:$0xff]
  %v261 = vld [vmem:[%s1 + $0x158] sm:$0xff]
  %v262 = vld [vmem:[%s1 + $0x160] sm:$0xff]
  %v263 = vld [vmem:[%s1 + $0x168] sm:$0xff]
  %v264 = vld [vmem:[%s1 + $0x170] sm:$0xff]
  %v265 = vld [vmem:[%s1 + $0x178] sm:$0xff]
  %v266 = vld [vmem:[%s1 + $0x180] sm:$0xff]
  %v267 = vld [vmem:[%s1 + $0x188] sm:$0xff]
  %v268 = vld [vmem:[%s1 + $0x190] sm:$0xff]
  %v269 = vld [vmem:[%s1 + $0x198] sm:$0xff]
  %v270 = vld [vmem:[%s1 + $0x1a0] sm:$0xff]
  %v271 = vld [vmem:[%s1 + $0x1a8] sm:$0xff]
  %v272 = vld [vmem:[%s1 + $0x1b0] sm:$0xff]
  %v273 = vld [vmem:[%s1 + $0x1b8] sm:$0xff]
  %v274 = vld [vmem:[%s1 + $0x1c0] sm:$0xff]
  %v275 = vld [vmem:[%s1 + $0x1c8] sm:$0xff]
  %v276 = vld [vmem:[%s1 + $0x1d0] sm:$0xff]
  %v277 = vld [vmem:[%s1 + $0x1d8] sm:$0xff]
  %v278 = vld [vmem:[%s1 + $0x1e0] sm:$0xff]
  %v279 = vld [vmem:[%s1 + $0x1e8] sm:$0xff]
  %v280 = vld [vmem:[%s1 + $0x1f0] sm:$0xff]
  %v281 = vld [vmem:[%s1 + $0x1f8] sm:$0xff]
  %v282 = vld [vmem:[%s1 + $0x200] sm:$0xff]
  %v283 = vld [vmem:[%s1 + $0x208] sm:$0xff]
  %v284 = vld [vmem:[%s1 + $0x210] sm:$0xff]
  %v285 = vld [vmem:[%s1 + $0x218] sm:$0xff]
  %v286 = vld [vmem:[%s1 + $0x220] sm:$0xff]
  %v287 = vld [vmem:[%s1 + $0x228] sm:$0xff]
  %v288 = vld [vmem:[%s1 + $0x230] sm:$0xff]
  %v289 = vld [vmem:[%s1 + $0x238] sm:$0xff]
  %v290 = vld [vmem:[%s1 + $0x240] sm:$0xff]
  %v291 = vld [vmem:[%s1 + $0x248] sm:$0xff]
  %v292 = vld [vmem:[%s1 + $0x250] sm:$0xff]
  %v293 = vld [vmem:[%s1 + $0x258] sm:$0xff]
  %v294 = vld [vmem:[%s1 + $0x260] sm:$0xff]
  %v295 = vld [vmem:[%s1 + $0x268] sm:$0xff]
  %v296 = vld [vmem:[%s1 + $0x270] sm:$0xff]
  %v297 = vld [vmem:[%s1 + $0x278] sm:$0xff]
  %v298 = vld [vmem:[%s1 + $0x280] sm:$0xff]
  %v299 = vld [vmem:[%s1 + $0x288] sm:$0xff]
  %v300 = vld [vmem:[%s1 + $0x290] sm:$0xff]
  %v301 = vld [vmem:[%s1 + $0x298] sm:$0xff]
  %v302 = vld [vmem:[%s1 + $0x2a0] sm:$0xff]
  %v303 = vld [vmem:[%s1 + $0x2a8] sm:$0xff]
  %v304 = vld [vmem:[%s1 + $0x2b0] sm:$0xff]
  %v305 = vld [vmem:[%s1 + $0x2b8] sm:$0xff]
  %v306 = vld [vmem:[%s1 + $0x2c0] sm:$0xff]
  %v307 = vld [vmem:[%s1 + $0x2c8] sm:$0xff]
  %v308 = vld [vmem:[%s1 + $0x2d0] sm:$0xff]
  %v309 = vld [vmem:[%s1 + $0x2d8] sm:$0xff]
  %v310 = vld [vmem:[%s1 + $0x2e0] sm:$0xff]
  %v311 = vld [vmem:[%s1 + $0x2e8] sm:$0xff]
  %v312 = vld [vmem:[%s1 + $0x2f0] sm:$0xff]
  %v313 = vld [vmem:[%s1 + $0x2f8] sm:$0xff]
  %v314 = vld [vmem:[%s1 + $0x300] sm:$0xff]
  %v315 = vld [vmem:[%s1 + $0x308] sm:$0xff]
  %v316 = vld [vmem:[%s1 + $0x310] sm:$0xff]
  %v317 = vld [vmem:[%s1 + $0x318] sm:$0xff]
  %v318 = vld [vmem:[%s1 + $0x320] sm:$0xff]
  %v319 = vld [vmem:[%s1 + $0x328] sm:$0xff]
  %v320 = vld [vmem:[%s1 + $0x330] sm:$0xff]
  %v321 = vld [vmem:[%s1 + $0x338] sm:$0xff]
  %v322 = vld [vmem:[%s1 + $0x340] sm:$0xff]
  %v323 = vld [vmem:[%s1 + $0x348] sm:$0xff]
  %v324 = vld [vmem:[%s1 + $0x350] sm:$0xff]
  %v325 = vld [vmem:[%s1 + $0x358] sm:$0xff]
  %v326 = vld [vmem:[%s1 + $0x360] sm:$0xff]
  %v327 = vld [vmem:[%s1 + $0x368] sm:$0xff]
  %v328 = vld [vmem:[%s1 + $0x370] sm:$0xff]
  %v329 = vld [vmem:[%s1 + $0x378] sm:$0xff]
  %v330 = vld [vmem:[%s1 + $0x380] sm:$0xff]
  %v331 = vld [vmem:[%s1 + $0x388] sm:$0xff]
  %v332 = vld [vmem:[%s1 + $0x390] sm:$0xff]
  %v333 = vld [vmem:[%s1 + $0x398] sm:$0xff]
  %v334 = vld [vmem:[%s1 + $0x3a0] sm:$0xff]
  %v335 = vld [vmem:[%s1 + $0x3a8] sm:$0xff]
  %v336 = vld [vmem:[%s1 + $0x3b0] sm:$0xff]
  %v337 = vld [vmem:[%s1 + $0x3b8] sm:$0xff]
  %v338 = vld [vmem:[%s1 + $0x3c0] sm:$0xff]
  %v339 = vld [vmem:[%s1 + $0x3c8] sm:$0xff]
  %v340 = vld [vmem:[%s1 + $0x3d0] sm:$0xff]
  %v341 = vld [vmem:[%s1 + $0x3d8] sm:$0xff]
  %v342 = vld [vmem:[%s1 + $0x3e0] sm:$0xff]
  %v343 = vld [vmem:[%s1 + $0x3e8] sm:$0xff]
  %v344 = vld [vmem:[%s1 + $0x3f0] sm:$0xff]
  %v345 = vld [vmem:[%s1 + $0x3f8] sm:$0xff]
  %v346 = vld [vmem:[%s1 + $0x400] sm:$0xff]
  %v347 = vld [vmem:[%s1 + $0x408] sm:$0xff]
  %v348 = vld [vmem:[%s1 + $0x410] sm:$0xff]
  %v349 = vld [vmem:[%s1 + $0x418] sm:$0xff]
  %v350 = vld [vmem:[%s1 + $0x420] sm:$0xff]
  %v351 = vld [vmem:[%s1 + $0x428] sm:$0xff]
  %v352 = vld [vmem:[%s1 + $0x430] sm:$0xff]
  %v353 = vld [vmem:[%s1 + $0x438] sm:$0xff]
  %v354 = vld [vmem:[%s1 + $0x440] sm:$0xff]
  %v355 = vld [vmem:[%s1 + $0x448] sm:$0xff]
  %v356 = vld [vmem:[%s1 + $0x450] sm:$0xff]
  %v357 = vld [vmem:[%s1 + $0x458] sm:$0xff]
  %v358 = vld [vmem:[%s1 + $0x460] sm:$0xff]
  %v359 = vld [vmem:[%s1 + $0x468] sm:$0xff]
  %v360 = vld [vmem:[%s1 + $0x470] sm:$0xff]
  %v361 = vld [vmem:[%s1 + $0x478] sm:$0xff]
  %v362 = vld [vmem:[%s1 + $0x480] sm:$0xff]
  %v363 = vld [vmem:[%s1 + $0x488] sm:$0xff]
  %v364 = vld [vmem:[%s1 + $0x490] sm:$0xff]
  %v365 = vld [vmem:[%s1 + $0x498] sm:$0xff]
  %v366 = vld [vmem:[%s1 + $0x4a0] sm:$0xff]
  %v367 = vld [vmem:[%s1 + $0x4a8] sm:$0xff]
  %v368 = vld [vmem:[%s1 + $0x4b0] sm:$0xff]
  %v369 = vld [vmem:[%s1 + $0x4b8] sm:$0xff]
  %v370 = vld [vmem:[%s1 + $0x4c0] sm:$0xff]
  %v371 = vld [vmem:[%s1 + $0x4c8] sm:$0xff]
  %v372 = vld [vmem:[%s1 + $0x4d0] sm:$0xff]
  %v373 = vld [vmem:[%s1 + $0x4d8] sm:$0xff]
  %v374 = vld [vmem:[%s1 + $0x4e0] sm:$0xff]
  %v375 = vld [vmem:[%s1 + $0x4e8] sm:$0xff]
  %v376 = vld [vmem:[%s1 + $0x4f0] sm:$0xff]
  %v377 = vld [vmem:[%s1 + $0x4f8] sm:$0xff]
  %v378 = vld [vmem:[%s1 + $0x500] sm:$0xff]
  %v379 = vld [vmem:[%s1 + $0x508] sm:$0xff]
  %v380 = vld [vmem:[%s1 + $0x510] sm:$0xff]
  %v381 = vld [vmem:[%s1 + $0x518] sm:$0xff]
  %v382 = vld [vmem:[%s1 + $0x520] sm:$0xff]
  %v383 = vld [vmem:[%s1 + $0x528] sm:$0xff]
  %v384 = vld [vmem:[%s1 + $0x530] sm:$0xff]
  %v385 = vld [vmem:[%s1 + $0x538] sm:$0xff]
  %v386 = vld [vmem:[%s1 + $0x540] sm:$0xff]
  %v387 = vld [vmem:[%s1 + $0x548] sm:$0xff]
  %v388 = vld [vmem:[%s1 + $0x550] sm:$0xff]
  %v389 = vld [vmem:[%s1 + $0x558] sm:$0xff]
  %v390 = vld [vmem:[%s1 + $0x560] sm:$0xff]
  %v391 = vld [vmem:[%s1 + $0x568] sm:$0xff]
  %v392 = vld [vmem:[%s1 + $0x570] sm:$0xff]
  %v393 = vld [vmem:[%s1 + $0x578] sm:$0xff]
  %v394 = vld [vmem:[%s1 + $0x580] sm:$0xff]
  %v395 = vld [vmem:[%s1 + $0x588] sm:$0xff]
  %v396 = vld [vmem:[%s1 + $0x590] sm:$0xff]
  %v397 = vld [vmem:[%s1 + $0x598] sm:$0xff]
  %v398 = vld [vmem:[%s1 + $0x5a0] sm:$0xff]
  %v399 = vld [vmem:[%s1 + $0x5a8] sm:$0xff]
  %v400 = vld [vmem:[%s1 + $0x5b0] sm:$0xff]
  %v401 = vld [vmem:[%s1 + $0x5b8] sm:$0xff]
  %v402 = vld [vmem:[%s1 + $0x5c0] sm:$0xff]
  %v403 = vld [vmem:[%s1 + $0x5c8] sm:$0xff]
  %v404 = vld [vmem:[%s1 + $0x5d0] sm:$0xff]
  %v405 = vld [vmem:[%s1 + $0x5d8] sm:$0xff]
  %v406 = vld [vmem:[%s1 + $0x5e0] sm:$0xff]
  %v407 = vld [vmem:[%s1 + $0x5e8] sm:$0xff]
  %v408 = vld [vmem:[%s1 + $0x5f0] sm:$0xff]
  %v409 = vld [vmem:[%s1 + $0x5f8] sm:$0xff]
  %v410 = vld [vmem:[%s1 + $0x600] sm:$0xff]
  %v411 = vld [vmem:[%s1 + $0x608] sm:$0xff]
  %v412 = vld [vmem:[%s1 + $0x610] sm:$0xff]
  %v413 = vld [vmem:[%s1 + $0x618] sm:$0xff]
  %v414 = vld [vmem:[%s1 + $0x620] sm:$0xff]
  %v415 = vld [vmem:[%s1 + $0x628] sm:$0xff]
  %v416 = vld [vmem:[%s1 + $0x630] sm:$0xff]
  %v417 = vld [vmem:[%s1 + $0x638] sm:$0xff]
  %v418 = vld [vmem:[%s1 + $0x640] sm:$0xff]
  %v419 = vld [vmem:[%s1 + $0x648] sm:$0xff]
  %v420 = vld [vmem:[%s1 + $0x650] sm:$0xff]
  %v421 = vld [vmem:[%s1 + $0x658] sm:$0xff]
  %v422 = vld [vmem:[%s1 + $0x660] sm:$0xff]
  %v423 = vld [vmem:[%s1 + $0x668] sm:$0xff]
  %v424 = vld [vmem:[%s1 + $0x670] sm:$0xff]
  %v425 = vld [vmem:[%s1 + $0x678] sm:$0xff]
  %v426 = vld [vmem:[%s1 + $0x680] sm:$0xff]
  %v427 = vld [vmem:[%s1 + $0x688] sm:$0xff]
  %v428 = vld [vmem:[%s1 + $0x690] sm:$0xff]
  %v429 = vld [vmem:[%s1 + $0x698] sm:$0xff]
  %v430 = vld [vmem:[%s1 + $0x6a0] sm:$0xff]
  %v431 = vld [vmem:[%s1 + $0x6a8] sm:$0xff]
  %v432 = vld [vmem:[%s1 + $0x6b0] sm:$0xff]
  %v433 = vld [vmem:[%s1 + $0x6b8] sm:$0xff]
  %v434 = vld [vmem:[%s1 + $0x6c0] sm:$0xff]
  %v435 = vld [vmem:[%s1 + $0x6c8] sm:$0xff]
  %v436 = vld [vmem:[%s1 + $0x6d0] sm:$0xff]
  %v437 = vld [vmem:[%s1 + $0x6d8] sm:$0xff]
  %v438 = vld [vmem:[%s1 + $0x6e0] sm:$0xff]
  %v439 = vld [vmem:[%s1 + $0x6e8] sm:$0xff]
  %v440 = vld [vmem:[%s1 + $0x6f0] sm:$0xff]
  %v441 = vld [vmem:[%s1 + $0x6f8] sm:$0xff]
  %v442 = vld [vmem:[%s1 + $0x700] sm:$0xff]
  %v443 = vld [vmem:[%s1 + $0x708] sm:$0xff]
  %v444 = vld [vmem:[%s1 + $0x710] sm:$0xff]
  %v445 = vld [vmem:[%s1 + $0x718] sm:$0xff]
  %v446 = vld [vmem:[%s1 + $0x720] sm:$0xff]
  %v447 = vld [vmem:[%s1 + $0x728] sm:$0xff]
  %v448 = vld [vmem:[%s1 + $0x730] sm:$0xff]
  %v449 = vld [vmem:[%s1 + $0x738] sm:$0xff]
  %v450 = vld [vmem:[%s1 + $0x740] sm:$0xff]
  %v451 = vld [vmem:[%s1 + $0x748] sm:$0xff]
  %v452 = vld [vmem:[%s1 + $0x750] sm:$0xff]
  %v453 = vld [vmem:[%s1 + $0x758] sm:$0xff]
  %v454 = vld [vmem:[%s1 + $0x760] sm:$0xff]
  %v455 = vld [vmem:[%s1 + $0x768] sm:$0xff]
  %v456 = vld [vmem:[%s1 + $0x770] sm:$0xff]
  %v457 = vld [vmem:[%s1 + $0x778] sm:$0xff]
  %v458 = vld [vmem:[%s1 + $0x780] sm:$0xff]
  %v459 = vld [vmem:[%s1 + $0x788] sm:$0xff]
  %v460 = vld [vmem:[%s1 + $0x790] sm:$0xff]
  %v461 = vld [vmem:[%s1 + $0x798] sm:$0xff]
  %v462 = vld [vmem:[%s1 + $0x7a0] sm:$0xff]
  %v463 = vld [vmem:[%s1 + $0x7a8] sm:$0xff]
  %v464 = vld [vmem:[%s1 + $0x7b0] sm:$0xff]
  %v465 = vld [vmem:[%s1 + $0x7b8] sm:$0xff]
  %v466 = vld [vmem:[%s1 + $0x7c0] sm:$0xff]
  %v467 = vld [vmem:[%s1 + $0x7c8] sm:$0xff]
  %v468 = vld [vmem:[%s1 + $0x7d0] sm:$0xff]
  %v469 = vld [vmem:[%s1 + $0x7d8] sm:$0xff]
  %v470 = vld [vmem:[%s1 + $0x7e0] sm:$0xff]
  %v471 = vld [vmem:[%s1 + $0x7e8] sm:$0xff]
  %v472 = vld [vmem:[%s1 + $0x7f0] sm:$0xff]
  %v473 = vld [vmem:[%s1 + $0x7f8] sm:$0xff]
  %v474 = vld [vmem:[%s1 + $0x800] sm:$0xff]
  %v475 = vld [vmem:[%s1 + $0x808] sm:$0xff]
  %v476 = vld [vmem:[%s1 + $0x810] sm:$0xff]
  %v477 = vld [vmem:[%s1 + $0x818] sm:$0xff]
  %v478 = vld [vmem:[%s1 + $0x820] sm:$0xff]
  %v479 = vld [vmem:[%s1 + $0x828] sm:$0xff]
  %v480 = vld [vmem:[%s1 + $0x830] sm:$0xff]
  %v481 = vld [vmem:[%s1 + $0x838] sm:$0xff]
  %v482 = vld [vmem:[%s1 + $0x840] sm:$0xff]
  %v483 = vld [vmem:[%s1 + $0x848] sm:$0xff]
  %v484 = vld [vmem:[%s1 + $0x850] sm:$0xff]
  %v485 = vld [vmem:[%s1 + $0x858] sm:$0xff]
  %v486 = vld [vmem:[%s1 + $0x860] sm:$0xff]
  %v487 = vld [vmem:[%s1 + $0x868] sm:$0xff]
  %v488 = vld [vmem:[%s1 + $0x870] sm:$0xff]
  %v489 = vld [vmem:[%s1 + $0x878] sm:$0xff]
  %v490 = vld [vmem:[%s1 + $0x880] sm:$0xff]
  %v491 = vld [vmem:[%s1 + $0x888] sm:$0xff]
  %v492 = vld [vmem:[%s1 + $0x890] sm:$0xff]
  %v493 = vld [vmem:[%s1 + $0x898] sm:$0xff]
  %v494 = vld [vmem:[%s1 + $0x8a0] sm:$0xff]
  %v495 = vld [vmem:[%s1 + $0x8a8] sm:$0xff]
  %v496 = vld [vmem:[%s1 + $0x8b0] sm:$0xff]
  %v497 = vld [vmem:[%s1 + $0x8b8] sm:$0xff]
  %v498 = vld [vmem:[%s1 + $0x8c0] sm:$0xff]
  %v499 = vld [vmem:[%s1 + $0x8c8] sm:$0xff]
  %v500 = vld [vmem:[%s1 + $0x8d0] sm:$0xff]
  %v501 = vld [vmem:[%s1 + $0x8d8] sm:$0xff]
  %v502 = vld [vmem:[%s1 + $0x8e0] sm:$0xff]
  %v503 = vld [vmem:[%s1 + $0x8e8] sm:$0xff]
  %v504 = vld [vmem:[%s1 + $0x8f0] sm:$0xff]
  %v505 = vld [vmem:[%s1 + $0x8f8] sm:$0xff]
  %v506 = vld [vmem:[%s1 + $0x900] sm:$0xff]
  %v507 = vld [vmem:[%s1 + $0x908] sm:$0xff]
  %v508 = vld [vmem:[%s1 + $0x910] sm:$0xff]
  %v509 = vld [vmem:[%s1 + $0x918] sm:$0xff]
  %v510 = vld [vmem:[%s1 + $0x920] sm:$0xff]
  %v511 = vld [vmem:[%s1 + $0x928] sm:$0xff]
  %v512 = vld [vmem:[%s1 + $0x930] sm:$0xff]
  %v513 = vld [vmem:[%s1 + $0x938] sm:$0xff]
  %v514 = vld [vmem:[%s1 + $0x940] sm:$0xff]
  %v515 = vld [vmem:[%s1 + $0x948] sm:$0xff]
  %v516 = vld [vmem:[%s1 + $0x950] sm:$0xff]
  %v517 = vld [vmem:[%s1 + $0x958] sm:$0xff]
  %v518 = vld [vmem:[%s1 + $0x960] sm:$0xff]
  %v519 = vld [vmem:[%s1 + $0x968] sm:$0xff]
  %v520 = vld [vmem:[%s1 + $0x970] sm:$0xff]
  %v521 = vld [vmem:[%s1 + $0x978] sm:$0xff]
  %v522 = vld [vmem:[%s1 + $0x980] sm:$0xff]
  %v523 = vld [vmem:[%s1 + $0x988] sm:$0xff]
  %v524 = vld [vmem:[%s1 + $0x990] sm:$0xff]
  %v525 = vld [vmem:[%s1 + $0x998] sm:$0xff]
  %v526 = vld [vmem:[%s1 + $0x9a0] sm:$0xff]
  %v527 = vld [vmem:[%s1 + $0x9a8] sm:$0xff]
  %v528 = vld [vmem:[%s1 + $0x9b0] sm:$0xff]
  %v529 = vld [vmem:[%s1 + $0x9b8] sm:$0xff]
  %v530 = vld [vmem:[%s1 + $0x9c0] sm:$0xff]
  %v531 = vld [vmem:[%s1 + $0x9c8] sm:$0xff]
  %v532 = vld [vmem:[%s1 + $0x9d0] sm:$0xff]
  %v533 = vld [vmem:[%s1 + $0x9d8] sm:$0xff]
  %v534 = vld [vmem:[%s1 + $0x9e0] sm:$0xff]
  %v535 = vld [vmem:[%s1 + $0x9e8] sm:$0xff]
  %v536 = vld [vmem:[%s1 + $0x9f0] sm:$0xff]
  %v537 = vld [vmem:[%s1 + $0x9f8] sm:$0xff]
  %v538 = vld [vmem:[%s1 + $0xa00] sm:$0xff]
  %v539 = vld [vmem:[%s1 + $0xa08] sm:$0xff]
  %v540 = vld [vmem:[%s1 + $0xa10] sm:$0xff]
  %v541 = vld [vmem:[%s1 + $0xa18] sm:$0xff]
  %v542 = vld [vmem:[%s1 + $0xa20] sm:$0xff]
  %v543 = vld [vmem:[%s1 + $0xa28] sm:$0xff]
  %v544 = vld [vmem:[%s1 + $0xa30] sm:$0xff]
  %v545 = vld [vmem:[%s1 + $0xa38] sm:$0xff]
  %v546 = vld [vmem:[%s1 + $0xa40] sm:$0xff]
  %v547 = vld [vmem:[%s1 + $0xa48] sm:$0xff]
  %v548 = vld [vmem:[%s1 + $0xa50] sm:$0xff]
  %v549 = vld [vmem:[%s1 + $0xa58] sm:$0xff]
  %v550 = vld [vmem:[%s1 + $0xa60] sm:$0xff]
  %v551 = vld [vmem:[%s1 + $0xa68] sm:$0xff]
  %v552 = vld [vmem:[%s1 + $0xa70] sm:$0xff]
  %v553 = vld [vmem:[%s1 + $0xa78] sm:$0xff]
  %v554 = vld [vmem:[%s1 + $0xa80] sm:$0xff]
  %v555 = vld [vmem:[%s1 + $0xa88] sm:$0xff]
  %v556 = vld [vmem:[%s1 + $0xa90] sm:$0xff]
  %v557 = vld [vmem:[%s1 + $0xa98] sm:$0xff]
  %v558 = vld [vmem:[%s1 + $0xaa0] sm:$0xff]
  %v559 = vld [vmem:[%s1 + $0xaa8] sm:$0xff]
  %v560 = vld [vmem:[%s1 + $0xab0] sm:$0xff]
  %v561 = vld [vmem:[%s1 + $0xab8] sm:$0xff]
  %v562 = vld [vmem:[%s1 + $0xac0] sm:$0xff]
  %v563 = vld [vmem:[%s1 + $0xac8] sm:$0xff]
  %v564 = vld [vmem:[%s1 + $0xad0] sm:$0xff]
  %v565 = vld [vmem:[%s1 + $0xad8] sm:$0xff]
  %v566 = vld [vmem:[%s1 + $0xae0] sm:$0xff]
  %v567 = vld [vmem:[%s1 + $0xae8] sm:$0xff]
  %v568 = vld [vmem:[%s1 + $0xaf0] sm:$0xff]
  %v569 = vld [vmem:[%s1 + $0xaf8] sm:$0xff]
  %v570 = vld [vmem:[%s1 + $0xb00] sm:$0xff]
  %v571 = vld [vmem:[%s1 + $0xb08] sm:$0xff]
  %v572 = vld [vmem:[%s1 + $0xb10] sm:$0xff]
  %v573 = vld [vmem:[%s1 + $0xb18] sm:$0xff]
  %v574 = vld [vmem:[%s1 + $0xb20] sm:$0xff]
  %v575 = vld [vmem:[%s1 + $0xb28] sm:$0xff]
  %v576 = vld [vmem:[%s1 + $0xb30] sm:$0xff]
  %v577 = vld [vmem:[%s1 + $0xb38] sm:$0xff]
  %v578 = vld [vmem:[%s1 + $0xb40] sm:$0xff]
  %v579 = vld [vmem:[%s1 + $0xb48] sm:$0xff]
  %v580 = vld [vmem:[%s1 + $0xb50] sm:$0xff]
  %v581 = vld [vmem:[%s1 + $0xb58] sm:$0xff]
  %v582 = vld [vmem:[%s1 + $0xb60] sm:$0xff]
  %v583 = vld [vmem:[%s1 + $0xb68] sm:$0xff]
  %v584 = vld [vmem:[%s1 + $0xb70] sm:$0xff]
  %v585 = vld [vmem:[%s1 + $0xb78] sm:$0xff]
  %v586 = vld [vmem:[%s1 + $0xb80] sm:$0xff]
  %v587 = vld [vmem:[%s1 + $0xb88] sm:$0xff]
  %v588 = vld [vmem:[%s1 + $0xb90] sm:$0xff]
  %v589 = vld [vmem:[%s1 + $0xb98] sm:$0xff]
  %v590 = vld [vmem:[%s1 + $0xba0] sm:$0xff]
  %v591 = vld [vmem:[%s1 + $0xba8] sm:$0xff]
  %v592 = vld [vmem:[%s1 + $0xbb0] sm:$0xff]
  %v593 = vld [vmem:[%s1 + $0xbb8] sm:$0xff]
  %v594 = vld [vmem:[%s1 + $0xbc0] sm:$0xff]
  %v595 = vld [vmem:[%s1 + $0xbc8] sm:$0xff]
  %v596 = vld [vmem:[%s1 + $0xbd0] sm:$0xff]
  %v597 = vld [vmem:[%s1 + $0xbd8] sm:$0xff]
  %v598 = vld [vmem:[%s1 + $0xbe0] sm:$0xff]
  %v599 = vld [vmem:[%s1 + $0xbe8] sm:$0xff]
  %v600 = vld [vmem:[%s1 + $0xbf0] sm:$0xff]
  %v601 = vld [vmem:[%s1 + $0xbf8] sm:$0xff]
  %v602 = vld [vmem:[%s1 + $0xc00] sm:$0xff]
  %v603 = vld [vmem:[%s1 + $0xc08] sm:$0xff]
  %v604 = vld [vmem:[%s1 + $0xc10] sm:$0xff]
  %v605 = vld [vmem:[%s1 + $0xc18] sm:$0xff]
  %v606 = vld [vmem:[%s1 + $0xc20] sm:$0xff]
  %v607 = vld [vmem:[%s1 + $0xc28] sm:$0xff]
  %v608 = vld [vmem:[%s1 + $0xc30] sm:$0xff]
  %v609 = vld [vmem:[%s1 + $0xc38] sm:$0xff]
  %v610 = vld [vmem:[%s1 + $0xc40] sm:$0xff]
  %v611 = vld [vmem:[%s1 + $0xc48] sm:$0xff]
  %v612 = vld [vmem:[%s1 + $0xc50] sm:$0xff]
  %v613 = vld [vmem:[%s1 + $0xc58] sm:$0xff]
  %v614 = vld [vmem:[%s1 + $0xc60] sm:$0xff]
  %v615 = vld [vmem:[%s1 + $0xc68] sm:$0xff]
  %v616 = vld [vmem:[%s1 + $0xc70] sm:$0xff]
  %v617 = vld [vmem:[%s1 + $0xc78] sm:$0xff]
  %v618 = vld [vmem:[%s1 + $0xc80] sm:$0xff]
  %v619 = vld [vmem:[%s1 + $0xc88] sm:$0xff]
  %v620 = vld [vmem:[%s1 + $0xc90] sm:$0xff]
  %v621 = vld [vmem:[%s1 + $0xc98] sm:$0xff]
  %v622 = vld [vmem:[%s1 + $0xca0] sm:$0xff]
  %v623 = vld [vmem:[%s1 + $0xca8] sm:$0xff]
  %v624 = vld [vmem:[%s1 + $0xcb0] sm:$0xff]
  %v625 = vld [vmem:[%s1 + $0xcb8] sm:$0xff]
  %v626 = vld [vmem:[%s1 + $0xcc0] sm:$0xff]
  %v627 = vld [vmem:[%s1 + $0xcc8] sm:$0xff]
  %v628 = vld [vmem:[%s1 + $0xcd0] sm:$0xff]
  %v629 = vld [vmem:[%s1 + $0xcd8] sm:$0xff]
  %v630 = vld [vmem:[%s1 + $0xce0] sm:$0xff]
  %v631 = vld [vmem:[%s1 + $0xce8] sm:$0xff]
  %v632 = vld [vmem:[%s1 + $0xcf0] sm:$0xff]
  %v633 = vld [vmem:[%s1 + $0xcf8] sm:$0xff]
  %v634 = vld [vmem:[%s1 + $0xd00] sm:$0xff]
  %v635 = vld [vmem:[%s1 + $0xd08] sm:$0xff]
  %v636 = vld [vmem:[%s1 + $0xd10] sm:$0xff]
  %v637 = vld [vmem:[%s1 + $0xd18] sm:$0xff]
  %v638 = vld [vmem:[%s1 + $0xd20] sm:$0xff]
  %v639 = vld [vmem:[%s1 + $0xd28] sm:$0xff]
  %v640 = vld [vmem:[%s1 + $0xd30] sm:$0xff]
  %v641 = vld [vmem:[%s1 + $0xd38] sm:$0xff]
  %v642 = vld [vmem:[%s1 + $0xd40] sm:$0xff]
  %v643 = vld [vmem:[%s1 + $0xd48] sm:$0xff]
  %v644 = vld [vmem:[%s1 + $0xd50] sm:$0xff]
  %v645 = vld [vmem:[%s1 + $0xd58] sm:$0xff]
  %v646 = vld [vmem:[%s1 + $0xd60] sm:$0xff]
  %v647 = vld [vmem:[%s1 + $0xd68] sm:$0xff]
  %v648 = vld [vmem:[%s1 + $0xd70] sm:$0xff]
  %v649 = vld [vmem:[%s1 + $0xd78] sm:$0xff]
  %v650 = vld [vmem:[%s1 + $0xd80] sm:$0xff]
  %v651 = vld [vmem:[%s1 + $0xd88] sm:$0xff]
  %v652 = vld [vmem:[%s1 + $0xd90] sm:$0xff]
  %v653 = vld [vmem:[%s1 + $0xd98] sm:$0xff]
  %v654 = vld [vmem:[%s1 + $0xda0] sm:$0xff]
  %v655 = vld [vmem:[%s1 + $0xda8] sm:$0xff]
  %v656 = vld [vmem:[%s1 + $0xdb0] sm:$0xff]
  %v657 = vld [vmem:[%s1 + $0xdb8] sm:$0xff]
  %v658 = vld [vmem:[%s1 + $0xdc0] sm:$0xff]
  %v659 = vld [vmem:[%s1 + $0xdc8] sm:$0xff]
  %v660 = vld [vmem:[%s1 + $0xdd0] sm:$0xff]
  %v661 = vld [vmem:[%s1 + $0xdd8] sm:$0xff]
  %v662 = vld [vmem:[%s1 + $0xde0] sm:$0xff]
  %v663 = vld [vmem:[%s1 + $0xde8] sm:$0xff]
  %v664 = vld [vmem:[%s1 + $0xdf0] sm:$0xff]
  %v665 = vld [vmem:[%s1 + $0xdf8] sm:$0xff]
  %v666 = vld [vmem:[%s1 + $0xe00] sm:$0xff]
  %v667 = vld [vmem:[%s1 + $0xe08] sm:$0xff]
  %v668 = vld [vmem:[%s1 + $0xe10] sm:$0xff]
  %v669 = vld [vmem:[%s1 + $0xe18] sm:$0xff]
  %v670 = vld [vmem:[%s1 + $0xe20] sm:$0xff]
  %v671 = vld [vmem:[%s1 + $0xe28] sm:$0xff]
  %v672 = vld [vmem:[%s1 + $0xe30] sm:$0xff]
  %v673 = vld [vmem:[%s1 + $0xe38] sm:$0xff]
  %v674 = vld [vmem:[%s1 + $0xe40] sm:$0xff]
  %v675 = vld [vmem:[%s1 + $0xe48] sm:$0xff]
  %v676 = vld [vmem:[%s1 + $0xe50] sm:$0xff]
  %v677 = vld [vmem:[%s1 + $0xe58] sm:$0xff]
  %v678 = vld [vmem:[%s1 + $0xe60] sm:$0xff]
  %v679 = vld [vmem:[%s1 + $0xe68] sm:$0xff]
  %v680 = vld [vmem:[%s1 + $0xe70] sm:$0xff]
  %v681 = vld [vmem:[%s1 + $0xe78] sm:$0xff]
  %v682 = vld [vmem:[%s1 + $0xe80] sm:$0xff]
  %v683 = vld [vmem:[%s1 + $0xe88] sm:$0xff]
  %v684 = vld [vmem:[%s1 + $0xe90] sm:$0xff]
  %v685 = vld [vmem:[%s1 + $0xe98] sm:$0xff]
  %v686 = vld [vmem:[%s1 + $0xea0] sm:$0xff]
  %v687 = vld [vmem:[%s1 + $0xea8] sm:$0xff]
  %v688 = vld [vmem:[%s1 + $0xeb0] sm:$0xff]
  %v689 = vld [vmem:[%s1 + $0xeb8] sm:$0xff]
  %v690 = vld [vmem:[%s1 + $0xec0] sm:$0xff]
  %v691 = vld [vmem:[%s1 + $0xec8] sm:$0xff]
  %v692 = vld [vmem:[%s1 + $0xed0] sm:$0xff]
  %v693 = vld [vmem:[%s1 + $0xed8] sm:$0xff]
  %v694 = vld [vmem:[%s1 + $0xee0] sm:$0xff]
  %v695 = vld [vmem:[%s1 + $0xee8] sm:$0xff]
  %v696 = vld [vmem:[%s1 + $0xef0] sm:$0xff]
  %v697 = vld [vmem:[%s1 + $0xef8] sm:$0xff]
  %v698 = vld [vmem:[%s1 + $0xf00] sm:$0xff]
  %v699 = vld [vmem:[%s1 + $0xf08] sm:$0xff]
  %v700 = vld [vmem:[%s1 + $0xf10] sm:$0xff]
  %v701 = vld [vmem:[%s1 + $0xf18] sm:$0xff]
  %v702 = vld [vmem:[%s1 + $0xf20] sm:$0xff]
  %v703 = vld [vmem:[%s1 + $0xf28] sm:$0xff]
  %v704 = vld [vmem:[%s1 + $0xf30] sm:$0xff]
  %v705 = vld [vmem:[%s1 + $0xf38] sm:$0xff]
  %v706 = vld [vmem:[%s1 + $0xf40] sm:$0xff]
  %v707 = vld [vmem:[%s1 + $0xf48] sm:$0xff]
  %v708 = vld [vmem:[%s1 + $0xf50] sm:$0xff]
  %v709 = vld [vmem:[%s1 + $0xf58] sm:$0xff]
  %v710 = vld [vmem:[%s1 + $0xf60] sm:$0xff]
  %v711 = vld [vmem:[%s1 + $0xf68] sm:$0xff]
  %v712 = vld [vmem:[%s1 + $0xf70] sm:$0xff]
  %v713 = vld [vmem:[%s1 + $0xf78] sm:$0xff]
  %v714 = vld [vmem:[%s1 + $0xf80] sm:$0xff]
  %v715 = vld [vmem:[%s1 + $0xf88] sm:$0xff]
  %v716 = vld [vmem:[%s1 + $0xf90] sm:$0xff]
  %v717 = vld [vmem:[%s1 + $0xf98] sm:$0xff]
  %v718 = vld [vmem:[%s1 + $0xfa0] sm:$0xff]
  %v719 = vld [vmem:[%s1 + $0xfa8] sm:$0xff]
  %v720 = vld [vmem:[%s1 + $0xfb0] sm:$0xff]
  %v721 = vld [vmem:[%s1 + $0xfb8] sm:$0xff]
  %v722 = vld [vmem:[%s1 + $0xfc0] sm:$0xff]
  %v723 = vld [vmem:[%s1 + $0xfc8] sm:$0xff]
  %v724 = vld [vmem:[%s1 + $0xfd0] sm:$0xff]
  %v725 = vld [vmem:[%s1 + $0xfd8] sm:$0xff]
  %v726 = vld [vmem:[%s1 + $0xfe0] sm:$0xff]
  %v727 = vld [vmem:[%s1 + $0xfe8] sm:$0xff]
  %v728 = vld [vmem:[%s1 + $0xff0] sm:$0xff]
  %v729 = vld [vmem:[%s1 + $0xff8] sm:$0xff]
  %v730 = vld [vmem:[%s1 + $0x1000] sm:$0xff]
  %v731 = vld [vmem:[%s1 + $0x1008] sm:$0xff]
  %v732 = vld [vmem:[%s1 + $0x1010] sm:$0xff]
  %v733 = vld [vmem:[%s1 + $0x1018] sm:$0xff]
  %v734 = vld [vmem:[%s1 + $0x1020] sm:$0xff]
  %v735 = vld [vmem:[%s1 + $0x1028] sm:$0xff]
  %v736 = vld [vmem:[%s1 + $0x1030] sm:$0xff]
  %v737 = vld [vmem:[%s1 + $0x1038] sm:$0xff]
  %v738 = vld [vmem:[%s1 + $0x1040] sm:$0xff]
  %v739 = vld [vmem:[%s1 + $0x1048] sm:$0xff]
  %v740 = vld [vmem:[%s1 + $0x1050] sm:$0xff]
  %v741 = vld [vmem:[%s1 + $0x1058] sm:$0xff]
  %v742 = vld [vmem:[%s1 + $0x1060] sm:$0xff]
  %v743 = vld [vmem:[%s1 + $0x1068] sm:$0xff]
  %v744 = vld [vmem:[%s1 + $0x1070] sm:$0xff]
  %v745 = vld [vmem:[%s1 + $0x1078] sm:$0xff]
  %v746 = vld [vmem:[%s1 + $0x1080] sm:$0xff]
  %v747 = vld [vmem:[%s1 + $0x1088] sm:$0xff]
  %v748 = vld [vmem:[%s1 + $0x1090] sm:$0xff]
  %v749 = vld [vmem:[%s1 + $0x1098] sm:$0xff]
  %v750 = vld [vmem:[%s1 + $0x10a0] sm:$0xff]
  %v751 = vld [vmem:[%s1 + $0x10a8] sm:$0xff]
  %v752 = vld [vmem:[%s1 + $0x10b0] sm:$0xff]
  %v753 = vld [vmem:[%s1 + $0x10b8] sm:$0xff]
  %v754 = vld [vmem:[%s1 + $0x10c0] sm:$0xff]
  %v755 = vld [vmem:[%s1 + $0x10c8] sm:$0xff]
  %v756 = vld [vmem:[%s1 + $0x10d0] sm:$0xff]
  %v757 = vld [vmem:[%s1 + $0x10d8] sm:$0xff]
  %v758 = vld [vmem:[%s1 + $0x10e0] sm:$0xff]
  %v759 = vld [vmem:[%s1 + $0x10e8] sm:$0xff]
  %v760 = vld [vmem:[%s1 + $0x10f0] sm:$0xff]
  %v761 = vld [vmem:[%s1 + $0x10f8] sm:$0xff]
  %v762 = vld [vmem:[%s1 + $0x1100] sm:$0xff]
  %v763 = vld [vmem:[%s1 + $0x1108] sm:$0xff]
  %v764 = vld [vmem:[%s1 + $0x1110] sm:$0xff]
  %v765 = vld [vmem:[%s1 + $0x1118] sm:$0xff]
  %v766 = vld [vmem:[%s1 + $0x1120] sm:$0xff]
  %v767 = vld [vmem:[%s1 + $0x1128] sm:$0xff]
  %v768 = vld [vmem:[%s1 + $0x1130] sm:$0xff]
  %v769 = vld [vmem:[%s1 + $0x1138] sm:$0xff]
  %v770 = vld [vmem:[%s1 + $0x1140] sm:$0xff]
  %v771 = vld [vmem:[%s1 + $0x1148] sm:$0xff]
  %v772 = vld [vmem:[%s1 + $0x1150] sm:$0xff]
  %v773 = vld [vmem:[%s1 + $0x1158] sm:$0xff]
  %v774 = vld [vmem:[%s1 + $0x1160] sm:$0xff]
  %v775 = vld [vmem:[%s1 + $0x1168] sm:$0xff]
  %v776 = vld [vmem:[%s1 + $0x1170] sm:$0xff]
  %v777 = vld [vmem:[%s1 + $0x1178] sm:$0xff]
  %v778 = vld [vmem:[%s1 + $0x1180] sm:$0xff]
  %v779 = vld [vmem:[%s1 + $0x1188] sm:$0xff]
  %v780 = vld [vmem:[%s1 + $0x1190] sm:$0xff]
  %v781 = vld [vmem:[%s1 + $0x1198] sm:$0xff]
  %v782 = vld [vmem:[%s1 + $0x11a0] sm:$0xff]
  %v783 = vld [vmem:[%s1 + $0x11a8] sm:$0xff]
  %v784 = vld [vmem:[%s1 + $0x11b0] sm:$0xff]
  %v785 = vld [vmem:[%s1 + $0x11b8] sm:$0xff]
  %v786 = vld [vmem:[%s1 + $0x11c0] sm:$0xff]
  %v787 = vld [vmem:[%s1 + $0x11c8] sm:$0xff]
  %v788 = vld [vmem:[%s1 + $0x11d0] sm:$0xff]
  %v789 = vld [vmem:[%s1 + $0x11d8] sm:$0xff]
  %v790 = vld [vmem:[%s1 + $0x11e0] sm:$0xff]
  %v791 = vld [vmem:[%s1 + $0x11e8] sm:$0xff]
  %v792 = vld [vmem:[%s1 + $0x11f0] sm:$0xff]
  %v793 = vld [vmem:[%s1 + $0x11f8] sm:$0xff]
  %v794 = vld [vmem:[%s1 + $0x1200] sm:$0xff]
  %v795 = vld [vmem:[%s1 + $0x1208] sm:$0xff]
  %v796 = vld [vmem:[%s1 + $0x1210] sm:$0xff]
  %v797 = vld [vmem:[%s1 + $0x1218] sm:$0xff]
  %v798 = vld [vmem:[%s1 + $0x1220] sm:$0xff]
  %v799 = vld [vmem:[%s1 + $0x1228] sm:$0xff]
  %v800 = vld [vmem:[%s1 + $0x1230] sm:$0xff]
  %v801 = vld [vmem:[%s1 + $0x1238] sm:$0xff]
  %v802 = vld [vmem:[%s1 + $0x1240] sm:$0xff]
  %v803 = vld [vmem:[%s1 + $0x1248] sm:$0xff]
  %v804 = vld [vmem:[%s1 + $0x1250] sm:$0xff]
  %v805 = vld [vmem:[%s1 + $0x1258] sm:$0xff]
  %v806 = vld [vmem:[%s1 + $0x1260] sm:$0xff]
  %v807 = vld [vmem:[%s1 + $0x1268] sm:$0xff]
  %v808 = vld [vmem:[%s1 + $0x1270] sm:$0xff]
  %v809 = vld [vmem:[%s1 + $0x1278] sm:$0xff]
  %v810 = vld [vmem:[%s1 + $0x1280] sm:$0xff]
  %v811 = vld [vmem:[%s1 + $0x1288] sm:$0xff]
  %v812 = vld [vmem:[%s1 + $0x1290] sm:$0xff]
  %v813 = vld [vmem:[%s1 + $0x1298] sm:$0xff]
  %v814 = vld [vmem:[%s1 + $0x12a0] sm:$0xff]
  %v815 = vld [vmem:[%s1 + $0x12a8] sm:$0xff]
  %v816 = vld [vmem:[%s1 + $0x12b0] sm:$0xff]
  %v817 = vld [vmem:[%s1 + $0x12b8] sm:$0xff]
  %v818 = vld [vmem:[%s1 + $0x12c0] sm:$0xff]
  %v819 = vld [vmem:[%s1 + $0x12c8] sm:$0xff]
  %v820 = vld [vmem:[%s1 + $0x12d0] sm:$0xff]
  %v821 = vld [vmem:[%s1 + $0x12d8] sm:$0xff]
  %v822 = vld [vmem:[%s1 + $0x12e0] sm:$0xff]
  %v823 = vld [vmem:[%s1 + $0x12e8] sm:$0xff]
  %v824 = vld [vmem:[%s1 + $0x12f0] sm:$0xff]
  %v825 = vld [vmem:[%s1 + $0x12f8] sm:$0xff]
  %v826 = vld [vmem:[%s1 + $0x1300] sm:$0xff]
  %v827 = vld [vmem:[%s1 + $0x1308] sm:$0xff]
  %v828 = vld [vmem:[%s1 + $0x1310] sm:$0xff]
  %v829 = vld [vmem:[%s1 + $0x1318] sm:$0xff]
  %v830 = vld [vmem:[%s1 + $0x1320] sm:$0xff]
  %v831 = vld [vmem:[%s1 + $0x1328] sm:$0xff]
  %v832 = vld [vmem:[%s1 + $0x1330] sm:$0xff]
  %v833 = vld [vmem:[%s1 + $0x1338] sm:$0xff]
  %v834 = vld [vmem:[%s1 + $0x1340] sm:$0xff]
  %v835 = vld [vmem:[%s1 + $0x1348] sm:$0xff]
  %v836 = vld [vmem:[%s1 + $0x1350] sm:$0xff]
  %v837 = vld [vmem:[%s1 + $0x1358] sm:$0xff]
  %v838 = vld [vmem:[%s1 + $0x1360] sm:$0xff]
  %v839 = vld [vmem:[%s1 + $0x1368] sm:$0xff]
  %v840 = vld [vmem:[%s1 + $0x1370] sm:$0xff]
  %v841 = vld [vmem:[%s1 + $0x1378] sm:$0xff]
  %v842 = vld [vmem:[%s1 + $0x1380] sm:$0xff]
  %v843 = vld [vmem:[%s1 + $0x1388] sm:$0xff]
  %v844 = vld [vmem:[%s1 + $0x1390] sm:$0xff]
  %v845 = vld [vmem:[%s1 + $0x1398] sm:$0xff]
  %v846 = vld [vmem:[%s1 + $0x13a0] sm:$0xff]
  %v847 = vld [vmem:[%s1 + $0x13a8] sm:$0xff]
  %v848 = vld [vmem:[%s1 + $0x13b0] sm:$0xff]
  %v849 = vld [vmem:[%s1 + $0x13b8] sm:$0xff]
  %v850 = vld [vmem:[%s1 + $0x13c0] sm:$0xff]
  %v851 = vld [vmem:[%s1 + $0x13c8] sm:$0xff]
  %v852 = vld [vmem:[%s1 + $0x13d0] sm:$0xff]
  %v853 = vld [vmem:[%s1 + $0x13d8] sm:$0xff]
  %v854 = vld [vmem:[%s1 + $0x13e0] sm:$0xff]
  %v855 = vld [vmem:[%s1 + $0x13e8] sm:$0xff]
  %v856 = vld [vmem:[%s1 + $0x13f0] sm:$0xff]
  %v857 = vld [vmem:[%s1 + $0x13f8] sm:$0xff]
  %v858 = vld [vmem:[%s1 + $0x1400] sm:$0xff]
  %v859 = vld [vmem:[%s1 + $0x1408] sm:$0xff]
  %v860 = vld [vmem:[%s1 + $0x1410] sm:$0xff]
  %v861 = vld [vmem:[%s1 + $0x1418] sm:$0xff]
  %v862 = vld [vmem:[%s1 + $0x1420] sm:$0xff]
  %v863 = vld [vmem:[%s1 + $0x1428] sm:$0xff]
  %v864 = vld [vmem:[%s1 + $0x1430] sm:$0xff]
  %v865 = vld [vmem:[%s1 + $0x1438] sm:$0xff]
  %v866 = vld [vmem:[%s1 + $0x1440] sm:$0xff]
  %v867 = vld [vmem:[%s1 + $0x1448] sm:$0xff]
  %v868 = vld [vmem:[%s1 + $0x1450] sm:$0xff]
  %v869 = vld [vmem:[%s1 + $0x1458] sm:$0xff]
  %v870 = vld [vmem:[%s1 + $0x1460] sm:$0xff]
  %v871 = vld [vmem:[%s1 + $0x1468] sm:$0xff]
  %v872 = vld [vmem:[%s1 + $0x1470] sm:$0xff]
  %v873 = vld [vmem:[%s1 + $0x1478] sm:$0xff]
  %v874 = vld [vmem:[%s1 + $0x1480] sm:$0xff]
  %v875 = vld [vmem:[%s1 + $0x1488] sm:$0xff]
  %v876 = vld [vmem:[%s1 + $0x1490] sm:$0xff]
  %v877 = vld [vmem:[%s1 + $0x1498] sm:$0xff]
  %v878 = vld [vmem:[%s1 + $0x14a0] sm:$0xff]
  %v879 = vld [vmem:[%s1 + $0x14a8] sm:$0xff]
  %v880 = vld [vmem:[%s1 + $0x14b0] sm:$0xff]
  %v881 = vld [vmem:[%s1 + $0x14b8] sm:$0xff]
  %v882 = vld [vmem:[%s1 + $0x14c0] sm:$0xff]
  %v883 = vld [vmem:[%s1 + $0x14c8] sm:$0xff]
  %v884 = vld [vmem:[%s1 + $0x14d0] sm:$0xff]
  %v885 = vld [vmem:[%s1 + $0x14d8] sm:$0xff]
  %v886 = vld [vmem:[%s1 + $0x14e0] sm:$0xff]
  %v887 = vld [vmem:[%s1 + $0x14e8] sm:$0xff]
  %v888 = vld [vmem:[%s1 + $0x14f0] sm:$0xff]
  %v889 = vld [vmem:[%s1 + $0x14f8] sm:$0xff]
  %v890 = vld [vmem:[%s1 + $0x1500] sm:$0xff]
  %v891 = vld [vmem:[%s1 + $0x1508] sm:$0xff]
  %v892 = vld [vmem:[%s1 + $0x1510] sm:$0xff]
  %v893 = vld [vmem:[%s1 + $0x1518] sm:$0xff]
  %v894 = vld [vmem:[%s1 + $0x1520] sm:$0xff]
  %v895 = vld [vmem:[%s1 + $0x1528] sm:$0xff]
  %v896 = vld [vmem:[%s1 + $0x1530] sm:$0xff]
  %v897 = vld [vmem:[%s1 + $0x1538] sm:$0xff]
  %v898 = vld [vmem:[%s1 + $0x1540] sm:$0xff]
  %v899 = vld [vmem:[%s1 + $0x1548] sm:$0xff]
  %v900 = vld [vmem:[%s1 + $0x1550] sm:$0xff]
  %v901 = vld [vmem:[%s1 + $0x1558] sm:$0xff]
  %v902 = vld [vmem:[%s1 + $0x1560] sm:$0xff]
  %v903 = vld [vmem:[%s1 + $0x1568] sm:$0xff]
  %v904 = vld [vmem:[%s1 + $0x1570] sm:$0xff]
  %v905 = vld [vmem:[%s1 + $0x1578] sm:$0xff]
  %v906 = vld [vmem:[%s1 + $0x1580] sm:$0xff]
  %v907 = vld [vmem:[%s1 + $0x1588] sm:$0xff]
  %v908 = vld [vmem:[%s1 + $0x1590] sm:$0xff]
  %v909 = vld [vmem:[%s1 + $0x1598] sm:$0xff]
  %v910 = vld [vmem:[%s1 + $0x15a0] sm:$0xff]
  %v911 = vld [vmem:[%s1 + $0x15a8] sm:$0xff]
  %v912 = vld [vmem:[%s1 + $0x15b0] sm:$0xff]
  %v913 = vld [vmem:[%s1 + $0x15b8] sm:$0xff]
  %v914 = vld [vmem:[%s1 + $0x15c0] sm:$0xff]
  %v915 = vld [vmem:[%s1 + $0x15c8] sm:$0xff]
  %v916 = vld [vmem:[%s1 + $0x15d0] sm:$0xff]
  %v917 = vld [vmem:[%s1 + $0x15d8] sm:$0xff]
  %v918 = vld [vmem:[%s1 + $0x15e0] sm:$0xff]
  %v919 = vld [vmem:[%s1 + $0x15e8] sm:$0xff]
  %v920 = vld [vmem:[%s1 + $0x15f0] sm:$0xff]
  %v921 = vld [vmem:[%s1 + $0x15f8] sm:$0xff]
  %v922 = vld [vmem:[%s1 + $0x1600] sm:$0xff]
  %v923 = vld [vmem:[%s1 + $0x1608] sm:$0xff]
  %v924 = vld [vmem:[%s1 + $0x1610] sm:$0xff]
  %v925 = vld [vmem:[%s1 + $0x1618] sm:$0xff]
  %v926 = vld [vmem:[%s1 + $0x1620] sm:$0xff]
  %v927 = vld [vmem:[%s1 + $0x1628] sm:$0xff]
  %v928 = vld [vmem:[%s1 + $0x1630] sm:$0xff]
  %v929 = vld [vmem:[%s1 + $0x1638] sm:$0xff]
  %v930 = vld [vmem:[%s1 + $0x1640] sm:$0xff]
  %v931 = vld [vmem:[%s1 + $0x1648] sm:$0xff]
  %v932 = vld [vmem:[%s1 + $0x1650] sm:$0xff]
  %v933 = vld [vmem:[%s1 + $0x1658] sm:$0xff]
  %v934 = vld [vmem:[%s1 + $0x1660] sm:$0xff]
  %v935 = vld [vmem:[%s1 + $0x1668] sm:$0xff]
  %v936 = vld [vmem:[%s1 + $0x1670] sm:$0xff]
  %v937 = vld [vmem:[%s1 + $0x1678] sm:$0xff]
  %v938 = vld [vmem:[%s1 + $0x1680] sm:$0xff]
  %v939 = vld [vmem:[%s1 + $0x1688] sm:$0xff]
  %v940 = vld [vmem:[%s1 + $0x1690] sm:$0xff]
  %v941 = vld [vmem:[%s1 + $0x1698] sm:$0xff]
  %v942 = vld [vmem:[%s1 + $0x16a0] sm:$0xff]
  %v943 = vld [vmem:[%s1 + $0x16a8] sm:$0xff]
  %v944 = vld [vmem:[%s1 + $0x16b0] sm:$0xff]
  %v945 = vld [vmem:[%s1 + $0x16b8] sm:$0xff]
  %v946 = vld [vmem:[%s1 + $0x16c0] sm:$0xff]
  %v947 = vld [vmem:[%s1 + $0x16c8] sm:$0xff]
  %v948 = vld [vmem:[%s1 + $0x16d0] sm:$0xff]
  %v949 = vld [vmem:[%s1 + $0x16d8] sm:$0xff]
  %v950 = vld [vmem:[%s1 + $0x16e0] sm:$0xff]
  %v951 = vld [vmem:[%s1 + $0x16e8] sm:$0xff]
  %v952 = vld [vmem:[%s1 + $0x16f0] sm:$0xff]
  %v953 = vld [vmem:[%s1 + $0x16f8] sm:$0xff]
  %v954 = vld [vmem:[%s1 + $0x1700] sm:$0xff]
  %v955 = vld [vmem:[%s1 + $0x1708] sm:$0xff]
  %v956 = vld [vmem:[%s1 + $0x1710] sm:$0xff]
  %v957 = vld [vmem:[%s1 + $0x1718] sm:$0xff]
  %v958 = vld [vmem:[%s1 + $0x1720] sm:$0xff]
  %v959 = vld [vmem:[%s1 + $0x1728] sm:$0xff]
  %v960 = vld [vmem:[%s1 + $0x1730] sm:$0xff]
  %v961 = vld [vmem:[%s1 + $0x1738] sm:$0xff]
  %v962 = vld [vmem:[%s1 + $0x1740] sm:$0xff]
  %v963 = vld [vmem:[%s1 + $0x1748] sm:$0xff]
  %v964 = vld [vmem:[%s1 + $0x1750] sm:$0xff]
  %v965 = vld [vmem:[%s1 + $0x1758] sm:$0xff]
  %v966 = vld [vmem:[%s1 + $0x1760] sm:$0xff]
  %v967 = vld [vmem:[%s1 + $0x1768] sm:$0xff]
  %v968 = vld [vmem:[%s1 + $0x1770] sm:$0xff]
  %v969 = vld [vmem:[%s1 + $0x1778] sm:$0xff]
  %v970 = vld [vmem:[%s1 + $0x1780] sm:$0xff]
  %v971 = vld [vmem:[%s1 + $0x1788] sm:$0xff]
  %v972 = vld [vmem:[%s1 + $0x1790] sm:$0xff]
  %v973 = vld [vmem:[%s1 + $0x1798] sm:$0xff]
  %v974 = vld [vmem:[%s1 + $0x17a0] sm:$0xff]
  %v975 = vld [vmem:[%s1 + $0x17a8] sm:$0xff]
  %v976 = vld [vmem:[%s1 + $0x17b0] sm:$0xff]
  %v977 = vld [vmem:[%s1 + $0x17b8] sm:$0xff]
  %v978 = vld [vmem:[%s1 + $0x17c0] sm:$0xff]
  %v979 = vld [vmem:[%s1 + $0x17c8] sm:$0xff]
  %v980 = vld [vmem:[%s1 + $0x17d0] sm:$0xff]
  %v981 = vld [vmem:[%s1 + $0x17d8] sm:$0xff]
  %v982 = vld [vmem:[%s1 + $0x17e0] sm:$0xff]
  %v983 = vld [vmem:[%s1 + $0x17e8] sm:$0xff]
  %v984 = vld [vmem:[%s1 + $0x17f0] sm:$0xff]
  %v985 = vld [vmem:[%s1 + $0x17f8] sm:$0xff]
  %v986 = vld [vmem:[%s1 + $0x1800] sm:$0xff]
  %v987 = vld [vmem:[%s1 + $0x1808] sm:$0xff]
  %v988 = vld [vmem:[%s1 + $0x1810] sm:$0xff]
  %v989 = vld [vmem:[%s1 + $0x1818] sm:$0xff]
  %v990 = vld [vmem:[%s1 + $0x1820] sm:$0xff]
  %v991 = vld [vmem:[%s1 + $0x1828] sm:$0xff]
  %v992 = vld [vmem:[%s1 + $0x1830] sm:$0xff]
  %v993 = vld [vmem:[%s1 + $0x1838] sm:$0xff]
  %v994 = vld [vmem:[%s1 + $0x1840] sm:$0xff]
  %v995 = vld [vmem:[%s1 + $0x1848] sm:$0xff]
  %v996 = vld [vmem:[%s1 + $0x1850] sm:$0xff]
  %v997 = vld [vmem:[%s1 + $0x1858] sm:$0xff]
  %v998 = vld [vmem:[%s1 + $0x1860] sm:$0xff]
  %v999 = vld [vmem:[%s1 + $0x1868] sm:$0xff]
  %v1000 = vld [vmem:[%s1 + $0x1870] sm:$0xff]
  %v1001 = vld [vmem:[%s1 + $0x1878] sm:$0xff]
  %v1002 = vld [vmem:[%s1 + $0x1880] sm:$0xff]
  %v1003 = vld [vmem:[%s1 + $0x1888] sm:$0xff]
  %v1004 = vld [vmem:[%s1 + $0x1890] sm:$0xff]
  %v1005 = vld [vmem:[%s1 + $0x1898] sm:$0xff]
  %v1006 = vld [vmem:[%s1 + $0x18a0] sm:$0xff]
  %v1007 = vld [vmem:[%s1 + $0x18a8] sm:$0xff]
  %v1008 = vld [vmem:[%s1 + $0x18b0] sm:$0xff]
  %v1009 = vld [vmem:[%s1 + $0x18b8] sm:$0xff]
  %v1010 = vld [vmem:[%s1 + $0x18c0] sm:$0xff]
  %v1011 = vld [vmem:[%s1 + $0x18c8] sm:$0xff]
  %v1012 = vld [vmem:[%s1 + $0x18d0] sm:$0xff]
  %v1013 = vld [vmem:[%s1 + $0x18d8] sm:$0xff]
  %v1014 = vld [vmem:[%s1 + $0x18e0] sm:$0xff]
  %v1015 = vld [vmem:[%s1 + $0x18e8] sm:$0xff]
  %v1016 = vld [vmem:[%s1 + $0x18f0] sm:$0xff]
  %v1017 = vld [vmem:[%s1 + $0x18f8] sm:$0xff]
  %v1018 = vld [vmem:[%s1 + $0x1900] sm:$0xff]
  %v1019 = vld [vmem:[%s1 + $0x1908] sm:$0xff]
  %v1020 = vld [vmem:[%s1 + $0x1910] sm:$0xff]
  %v1021 = vld [vmem:[%s1 + $0x1918] sm:$0xff]
  %v1022 = vld [vmem:[%s1 + $0x1920] sm:$0xff]
  %v1023 = vld [vmem:[%s1 + $0x1928] sm:$0xff]
  %v1024 = vld [vmem:[%s1 + $0x1930] sm:$0xff]
  %v1025 = vld [vmem:[%s1 + $0x1938] sm:$0xff]
  %v1026 = vld [vmem:[%s1 + $0x1940] sm:$0xff]
  %v1027 = vld [vmem:[%s1 + $0x1948] sm:$0xff]
  %v1028 = vld [vmem:[%s1 + $0x1950] sm:$0xff]
  %v1029 = vld [vmem:[%s1 + $0x1958] sm:$0xff]
  %v1030 = vld [vmem:[%s1 + $0x1960] sm:$0xff]
  %v1031 = vld [vmem:[%s1 + $0x1968] sm:$0xff]
  %v1032 = vld [vmem:[%s1 + $0x1970] sm:$0xff]
  %v1033 = vld [vmem:[%s1 + $0x1978] sm:$0xff]
  %v1034 = vld [vmem:[%s1 + $0x1980] sm:$0xff]
  %v1035 = vld [vmem:[%s1 + $0x1988] sm:$0xff]
  %v1036 = vld [vmem:[%s1 + $0x1990] sm:$0xff]
  %v1037 = vld [vmem:[%s1 + $0x1998] sm:$0xff]
  %v1038 = vld [vmem:[%s1 + $0x19a0] sm:$0xff]
  %v1039 = vld [vmem:[%s1 + $0x19a8] sm:$0xff]
  %v1040 = vld [vmem:[%s1 + $0x19b0] sm:$0xff]
  %v1041 = vld [vmem:[%s1 + $0x19b8] sm:$0xff]
  %v1042 = vld [vmem:[%s1 + $0x19c0] sm:$0xff]
  %v1043 = vld [vmem:[%s1 + $0x19c8] sm:$0xff]
  %v1044 = vld [vmem:[%s1 + $0x19d0] sm:$0xff]
  %v1045 = vld [vmem:[%s1 + $0x19d8] sm:$0xff]
  %v1046 = vld [vmem:[%s1 + $0x19e0] sm:$0xff]
  %v1047 = vld [vmem:[%s1 + $0x19e8] sm:$0xff]
  %v1048 = vld [vmem:[%s1 + $0x19f0] sm:$0xff]
  %v1049 = vld [vmem:[%s1 + $0x19f8] sm:$0xff]
  %v1050 = vld [vmem:[%s1 + $0x1a00] sm:$0xff]
  %v1051 = vld [vmem:[%s1 + $0x1a08] sm:$0xff]
  %v1052 = vld [vmem:[%s1 + $0x1a10] sm:$0xff]
  %v1053 = vld [vmem:[%s1 + $0x1a18] sm:$0xff]
  %v1054 = vld [vmem:[%s1 + $0x1a20] sm:$0xff]
  %v1055 = vld [vmem:[%s1 + $0x1a28] sm:$0xff]
  %v1056 = vld [vmem:[%s1 + $0x1a30] sm:$0xff]
  %v1057 = vld [vmem:[%s1 + $0x1a38] sm:$0xff]
  %v1058 = vld [vmem:[%s1 + $0x1a40] sm:$0xff]
  %v1059 = vld [vmem:[%s1 + $0x1a48] sm:$0xff]
  %v1060 = vld [vmem:[%s1 + $0x1a50] sm:$0xff]
  %v1061 = vld [vmem:[%s1 + $0x1a58] sm:$0xff]
  %v1062 = vld [vmem:[%s1 + $0x1a60] sm:$0xff]
  %v1063 = vld [vmem:[%s1 + $0x1a68] sm:$0xff]
  %v1064 = vld [vmem:[%s1 + $0x1a70] sm:$0xff]
  %v1065 = vld [vmem:[%s1 + $0x1a78] sm:$0xff]
  %v1066 = vld [vmem:[%s1 + $0x1a80] sm:$0xff]
  %v1067 = vld [vmem:[%s1 + $0x1a88] sm:$0xff]
  %v1068 = vld [vmem:[%s1 + $0x1a90] sm:$0xff]
  %v1069 = vld [vmem:[%s1 + $0x1a98] sm:$0xff]
  %v1070 = vld [vmem:[%s1 + $0x1aa0] sm:$0xff]
  %v1071 = vld [vmem:[%s1 + $0x1aa8] sm:$0xff]
  %v1072 = vld [vmem:[%s1 + $0x1ab0] sm:$0xff]
  %v1073 = vld [vmem:[%s1 + $0x1ab8] sm:$0xff]
  %v1074 = vld [vmem:[%s1 + $0x1ac0] sm:$0xff]
  %v1075 = vld [vmem:[%s1 + $0x1ac8] sm:$0xff]
  %v1076 = vld [vmem:[%s1 + $0x1ad0] sm:$0xff]
  %v1077 = vld [vmem:[%s1 + $0x1ad8] sm:$0xff]
  %v1078 = vld [vmem:[%s1 + $0x1ae0] sm:$0xff]
  %v1079 = vld [vmem:[%s1 + $0x1ae8] sm:$0xff]
  %v1080 = vld [vmem:[%s1 + $0x1af0] sm:$0xff]
  %v1081 = vld [vmem:[%s1 + $0x1af8] sm:$0xff]
  %v1082 = vld [vmem:[%s1 + $0x1b00] sm:$0xff]
  %v1083 = vld [vmem:[%s1 + $0x1b08] sm:$0xff]
  %v1084 = vld [vmem:[%s1 + $0x1b10] sm:$0xff]
  %v1085 = vld [vmem:[%s1 + $0x1b18] sm:$0xff]
  %v1086 = vld [vmem:[%s1 + $0x1b20] sm:$0xff]
  %v1087 = vld [vmem:[%s1 + $0x1b28] sm:$0xff]
  %v1088 = vld [vmem:[%s1 + $0x1b30] sm:$0xff]
  %v1089 = vld [vmem:[%s1 + $0x1b38] sm:$0xff]
  %v1090 = vld [vmem:[%s1 + $0x1b40] sm:$0xff]
  %v1091 = vld [vmem:[%s1 + $0x1b48] sm:$0xff]
  %v1092 = vld [vmem:[%s1 + $0x1b50] sm:$0xff]
  %v1093 = vld [vmem:[%s1 + $0x1b58] sm:$0xff]
  %v1094 = vld [vmem:[%s1 + $0x1b60] sm:$0xff]
  %v1095 = vld [vmem:[%s1 + $0x1b68] sm:$0xff]
  %v1096 = vld [vmem:[%s1 + $0x1b70] sm:$0xff]
  %v1097 = vld [vmem:[%s1 + $0x1b78] sm:$0xff]
  %v1098 = vld [vmem:[%s1 + $0x1b80] sm:$0xff]
  %v1099 = vld [vmem:[%s1 + $0x1b88] sm:$0xff]
  %v1100 = vld [vmem:[%s1 + $0x1b90] sm:$0xff]
  %v1101 = vld [vmem:[%s1 + $0x1b98] sm:$0xff]
  %v1102 = vld [vmem:[%s1 + $0x1ba0] sm:$0xff]
  %v1103 = vld [vmem:[%s1 + $0x1ba8] sm:$0xff]
  %v1104 = vld [vmem:[%s1 + $0x1bb0] sm:$0xff]
  %v1105 = vld [vmem:[%s1 + $0x1bb8] sm:$0xff]
  %v1106 = vld [vmem:[%s1 + $0x1bc0] sm:$0xff]
  %v1107 = vld [vmem:[%s1 + $0x1bc8] sm:$0xff]
  %v1108 = vld [vmem:[%s1 + $0x1bd0] sm:$0xff]
  %v1109 = vld [vmem:[%s1 + $0x1bd8] sm:$0xff]
  %v1110 = vld [vmem:[%s1 + $0x1be0] sm:$0xff]
  %v1111 = vld [vmem:[%s1 + $0x1be8] sm:$0xff]
  %v1112 = vld [vmem:[%s1 + $0x1bf0] sm:$0xff]
  %v1113 = vld [vmem:[%s1 + $0x1bf8] sm:$0xff]
  %v1114 = vld [vmem:[%s1 + $0x1c00] sm:$0xff]
  %v1115 = vld [vmem:[%s1 + $0x1c08] sm:$0xff]
  %v1116 = vld [vmem:[%s1 + $0x1c10] sm:$0xff]
  %v1117 = vld [vmem:[%s1 + $0x1c18] sm:$0xff]
  %v1118 = vld [vmem:[%s1 + $0x1c20] sm:$0xff]
  %v1119 = vld [vmem:[%s1 + $0x1c28] sm:$0xff]
  %v1120 = vld [vmem:[%s1 + $0x1c30] sm:$0xff]
  %v1121 = vld [vmem:[%s1 + $0x1c38] sm:$0xff]
  %v1122 = vld [vmem:[%s1 + $0x1c40] sm:$0xff]
  %v1123 = vld [vmem:[%s1 + $0x1c48] sm:$0xff]
  %v1124 = vld [vmem:[%s1 + $0x1c50] sm:$0xff]
  %v1125 = vld [vmem:[%s1 + $0x1c58] sm:$0xff]
  %v1126 = vld [vmem:[%s1 + $0x1c60] sm:$0xff]
  %v1127 = vld [vmem:[%s1 + $0x1c68] sm:$0xff]
  %v1128 = vld [vmem:[%s1 + $0x1c70] sm:$0xff]
  %v1129 = vld [vmem:[%s1 + $0x1c78] sm:$0xff]
  %v1130 = vld [vmem:[%s1 + $0x1c80] sm:$0xff]
  %v1131 = vld [vmem:[%s1 + $0x1c88] sm:$0xff]
  %v1132 = vld [vmem:[%s1 + $0x1c90] sm:$0xff]
  %v1133 = vld [vmem:[%s1 + $0x1c98] sm:$0xff]
  %v1134 = vld [vmem:[%s1 + $0x1ca0] sm:$0xff]
  %v1135 = vld [vmem:[%s1 + $0x1ca8] sm:$0xff]
  %v1136 = vld [vmem:[%s1 + $0x1cb0] sm:$0xff]
  %v1137 = vld [vmem:[%s1 + $0x1cb8] sm:$0xff]
  %v1138 = vld [vmem:[%s1 + $0x1cc0] sm:$0xff]
  %v1139 = vld [vmem:[%s1 + $0x1cc8] sm:$0xff]
  %v1140 = vld [vmem:[%s1 + $0x1cd0] sm:$0xff]
  %v1141 = vld [vmem:[%s1 + $0x1cd8] sm:$0xff]
  %v1142 = vld [vmem:[%s1 + $0x1ce0] sm:$0xff]
  %v1143 = vld [vmem:[%s1 + $0x1ce8] sm:$0xff]
  %v1144 = vld [vmem:[%s1 + $0x1cf0] sm:$0xff]
  %v1145 = vld [vmem:[%s1 + $0x1cf8] sm:$0xff]
  %v1146 = vld [vmem:[%s1 + $0x1d00] sm:$0xff]
  %v1147 = vld [vmem:[%s1 + $0x1d08] sm:$0xff]
  %v1148 = vld [vmem:[%s1 + $0x1d10] sm:$0xff]
  %v1149 = vld [vmem:[%s1 + $0x1d18] sm:$0xff]
  %v1150 = vld [vmem:[%s1 + $0x1d20] sm:$0xff]
  %v1151 = vld [vmem:[%s1 + $0x1d28] sm:$0xff]
  %v1152 = vld [vmem:[%s1 + $0x1d30] sm:$0xff]
  %v1153 = vld [vmem:[%s1 + $0x1d38] sm:$0xff]
  %v1154 = vld [vmem:[%s1 + $0x1d40] sm:$0xff]
  %v1155 = vld [vmem:[%s1 + $0x1d48] sm:$0xff]
  %v1156 = vld [vmem:[%s1 + $0x1d50] sm:$0xff]
  %v1157 = vld [vmem:[%s1 + $0x1d58] sm:$0xff]
  %v1158 = vld [vmem:[%s1 + $0x1d60] sm:$0xff]
  %v1159 = vld [vmem:[%s1 + $0x1d68] sm:$0xff]
  %v1160 = vld [vmem:[%s1 + $0x1d70] sm:$0xff]
  %v1161 = vld [vmem:[%s1 + $0x1d78] sm:$0xff]
  %v1162 = vld [vmem:[%s1 + $0x1d80] sm:$0xff]
  %v1163 = vld [vmem:[%s1 + $0x1d88] sm:$0xff]
  %v1164 = vld [vmem:[%s1 + $0x1d90] sm:$0xff]
  %v1165 = vld [vmem:[%s1 + $0x1d98] sm:$0xff]
  %v1166 = vld [vmem:[%s1 + $0x1da0] sm:$0xff]
  %v1167 = vld [vmem:[%s1 + $0x1da8] sm:$0xff]
  %v1168 = vld [vmem:[%s1 + $0x1db0] sm:$0xff]
  %v1169 = vld [vmem:[%s1 + $0x1db8] sm:$0xff]
  %v1170 = vld [vmem:[%s1 + $0x1dc0] sm:$0xff]
  %v1171 = vld [vmem:[%s1 + $0x1dc8] sm:$0xff]
  %v1172 = vld [vmem:[%s1 + $0x1dd0] sm:$0xff]
  %v1173 = vld [vmem:[%s1 + $0x1dd8] sm:$0xff]
  %v1174 = vld [vmem:[%s1 + $0x1de0] sm:$0xff]
  %v1175 = vld [vmem:[%s1 + $0x1de8] sm:$0xff]
  %v1176 = vld [vmem:[%s1 + $0x1df0] sm:$0xff]
  %v1177 = vld [vmem:[%s1 + $0x1df8] sm:$0xff]
  %v1178 = vld [vmem:[%s1 + $0x1e00] sm:$0xff]
  %v1179 = vld [vmem:[%s1 + $0x1e08] sm:$0xff]
  %v1180 = vld [vmem:[%s1 + $0x1e10] sm:$0xff]
  %v1181 = vld [vmem:[%s1 + $0x1e18] sm:$0xff]
  %v1182 = vld [vmem:[%s1 + $0x1e20] sm:$0xff]
  %v1183 = vld [vmem:[%s1 + $0x1e28] sm:$0xff]
  %v1184 = vld [vmem:[%s1 + $0x1e30] sm:$0xff]
  %v1185 = vld [vmem:[%s1 + $0x1e38] sm:$0xff]
  %v1186 = vld [vmem:[%s1 + $0x1e40] sm:$0xff]
  %v1187 = vld [vmem:[%s1 + $0x1e48] sm:$0xff]
  %v1188 = vld [vmem:[%s1 + $0x1e50] sm:$0xff]
  %v1189 = vld [vmem:[%s1 + $0x1e58] sm:$0xff]
  %v1190 = vld [vmem:[%s1 + $0x1e60] sm:$0xff]
  %v1191 = vld [vmem:[%s1 + $0x1e68] sm:$0xff]
  %v1192 = vld [vmem:[%s1 + $0x1e70] sm:$0xff]
  %v1193 = vld [vmem:[%s1 + $0x1e78] sm:$0xff]
  %v1194 = vld [vmem:[%s1 + $0x1e80] sm:$0xff]
  %v1195 = vld [vmem:[%s1 + $0x1e88] sm:$0xff]
  %v1196 = vld [vmem:[%s1 + $0x1e90] sm:$0xff]
  %v1197 = vld [vmem:[%s1 + $0x1e98] sm:$0xff]
  %v1198 = vld [vmem:[%s1 + $0x1ea0] sm:$0xff]
  %v1199 = vld [vmem:[%s1 + $0x1ea8] sm:$0xff]
  %v1200 = vld [vmem:[%s1 + $0x1eb0] sm:$0xff]
  %v1201 = vld [vmem:[%s1 + $0x1eb8] sm:$0xff]
  %v1202 = vld [vmem:[%s1 + $0x1ec0] sm:$0xff]
  %v1203 = vld [vmem:[%s1 + $0x1ec8] sm:$0xff]
  %v1204 = vld [vmem:[%s1 + $0x1ed0] sm:$0xff]
  %v1205 = vld [vmem:[%s1 + $0x1ed8] sm:$0xff]
  %v1206 = vld [vmem:[%s1 + $0x1ee0] sm:$0xff]
  %v1207 = vld [vmem:[%s1 + $0x1ee8] sm:$0xff]
  %v1208 = vld [vmem:[%s1 + $0x1ef0] sm:$0xff]
  %v1209 = vld [vmem:[%s1 + $0x1ef8] sm:$0xff]
  %v1210 = vld [vmem:[%s1 + $0x1f00] sm:$0xff]
  %v1211 = vld [vmem:[%s1 + $0x1f08] sm:$0xff]
  %v1212 = vld [vmem:[%s1 + $0x1f10] sm:$0xff]
  %v1213 = vld [vmem:[%s1 + $0x1f18] sm:$0xff]
  %v1214 = vld [vmem:[%s1 + $0x1f20] sm:$0xff]
  %v1215 = vld [vmem:[%s1 + $0x1f28] sm:$0xff]
  %v1216 = vld [vmem:[%s1 + $0x1f30] sm:$0xff]
  %v1217 = vld [vmem:[%s1 + $0x1f38] sm:$0xff]
  %v1218 = vld [vmem:[%s1 + $0x1f40] sm:$0xff]
  %v1219 = vld [vmem:[%s1 + $0x1f48] sm:$0xff]
  %v1220 = vld [vmem:[%s1 + $0x1f50] sm:$0xff]
  %v1221 = vld [vmem:[%s1 + $0x1f58] sm:$0xff]
  %v1222 = vld [vmem:[%s1 + $0x1f60] sm:$0xff]
  %v1223 = vld [vmem:[%s1 + $0x1f68] sm:$0xff]
  %v1224 = vld [vmem:[%s1 + $0x1f70] sm:$0xff]
  %v1225 = vld [vmem:[%s1 + $0x1f78] sm:$0xff]
  %v1226 = vld [vmem:[%s1 + $0x1f80] sm:$0xff]
  %v1227 = vld [vmem:[%s1 + $0x1f88] sm:$0xff]
  %v1228 = vld [vmem:[%s1 + $0x1f90] sm:$0xff]
  %v1229 = vld [vmem:[%s1 + $0x1f98] sm:$0xff]
  %v1230 = vld [vmem:[%s1 + $0x1fa0] sm:$0xff]
  %v1231 = vld [vmem:[%s1 + $0x1fa8] sm:$0xff]
  %v1232 = vld [vmem:[%s1 + $0x1fb0] sm:$0xff]
  %v1233 = vld [vmem:[%s1 + $0x1fb8] sm:$0xff]
  %v1234 = vld [vmem:[%s1 + $0x1fc0] sm:$0xff]
  %v1235 = vld [vmem:[%s1 + $0x1fc8] sm:$0xff]
  %v1236 = vld [vmem:[%s1 + $0x1fd0] sm:$0xff]
  %v1237 = vld [vmem:[%s1 + $0x1fd8] sm:$0xff]
  %v1238 = vld [vmem:[%s1 + $0x1fe0] sm:$0xff]
  %v1239 = vld [vmem:[%s1 + $0x1fe8] sm:$0xff]
  %v1240 = vld [vmem:[%s1 + $0x1ff0] sm:$0xff]
  %v1241 = vld [vmem:[%s1 + $0x1ff8] sm:$0xff]
  %v1242 = vld [vmem:[%s1 + $0x2000] sm:$0xff]
  %v1243 = vld [vmem:[%s1 + $0x2008] sm:$0xff]
  %v1244 = vld [vmem:[%s1 + $0x2010] sm:$0xff]
  %v1245 = vld [vmem:[%s1 + $0x2018] sm:$0xff]
  %v1246 = vld [vmem:[%s1 + $0x2020] sm:$0xff]
  %v1247 = vld [vmem:[%s1 + $0x2028] sm:$0xff]
  %v1248 = vld [vmem:[%s1 + $0x2030] sm:$0xff]
  %v1249 = vld [vmem:[%s1 + $0x2038] sm:$0xff]
  %v1250 = vld [vmem:[%s1 + $0x2040] sm:$0xff]
  %v1251 = vld [vmem:[%s1 + $0x2048] sm:$0xff]
  %v1252 = vld [vmem:[%s1 + $0x2050] sm:$0xff]
  %v1253 = vld [vmem:[%s1 + $0x2058] sm:$0xff]
  %v1254 = vld [vmem:[%s1 + $0x2060] sm:$0xff]
  %v1255 = vld [vmem:[%s1 + $0x2068] sm:$0xff]
  %v1256 = vld [vmem:[%s1 + $0x2070] sm:$0xff]
  %v1257 = vld [vmem:[%s1 + $0x2078] sm:$0xff]
  %v1258 = vld [vmem:[%s1 + $0x2080] sm:$0xff]
  %v1259 = vld [vmem:[%s1 + $0x2088] sm:$0xff]
  %v1260 = vld [vmem:[%s1 + $0x2090] sm:$0xff]
  %v1261 = vld [vmem:[%s1 + $0x2098] sm:$0xff]
  %v1262 = vld [vmem:[%s1 + $0x20a0] sm:$0xff]
  %v1263 = vld [vmem:[%s1 + $0x20a8] sm:$0xff]
  %v1264 = vld [vmem:[%s1 + $0x20b0] sm:$0xff]
  %v1265 = vld [vmem:[%s1 + $0x20b8] sm:$0xff]
  %v1266 = vld [vmem:[%s1 + $0x20c0] sm:$0xff]
  %v1267 = vld [vmem:[%s1 + $0x20c8] sm:$0xff]
  %v1268 = vld [vmem:[%s1 + $0x20d0] sm:$0xff]
  %v1269 = vld [vmem:[%s1 + $0x20d8] sm:$0xff]
  %v1270 = vld [vmem:[%s1 + $0x20e0] sm:$0xff]
  %v1271 = vld [vmem:[%s1 + $0x20e8] sm:$0xff]
  %v1272 = vld [vmem:[%s1 + $0x20f0] sm:$0xff]
  %v1273 = vld [vmem:[%s1 + $0x20f8] sm:$0xff]
  %v1274 = vld [vmem:[%s1 + $0x2100] sm:$0xff]
  %v1275 = vld [vmem:[%s1 + $0x2108] sm:$0xff]
  %v1276 = vld [vmem:[%s1 + $0x2110] sm:$0xff]
  %v1277 = vld [vmem:[%s1 + $0x2118] sm:$0xff]
  %v1278 = vld [vmem:[%s1 + $0x2120] sm:$0xff]
  %v1279 = vld [vmem:[%s1 + $0x2128] sm:$0xff]
  %v1280 = vld [vmem:[%s1 + $0x2130] sm:$0xff]
  %v1281 = vld [vmem:[%s1 + $0x2138] sm:$0xff]
  %v1282 = vld [vmem:[%s1 + $0x2140] sm:$0xff]
  %v1283 = vld [vmem:[%s1 + $0x2148] sm:$0xff]
  %v1284 = vld [vmem:[%s1 + $0x2150] sm:$0xff]
  %v1285 = vld [vmem:[%s1 + $0x2158] sm:$0xff]
  %v1286 = vld [vmem:[%s1 + $0x2160] sm:$0xff]
  %v1287 = vld [vmem:[%s1 + $0x2168] sm:$0xff]
  %v1288 = vld [vmem:[%s1 + $0x2170] sm:$0xff]
  %v1289 = vld [vmem:[%s1 + $0x2178] sm:$0xff]
  %v1290 = vld [vmem:[%s1 + $0x2180] sm:$0xff]
  %v1291 = vld [vmem:[%s1 + $0x2188] sm:$0xff]
  %v1292 = vld [vmem:[%s1 + $0x2190] sm:$0xff]
  %v1293 = vld [vmem:[%s1 + $0x2198] sm:$0xff]
  %v1294 = vld [vmem:[%s1 + $0x21a0] sm:$0xff]
  %v1295 = vld [vmem:[%s1 + $0x21a8] sm:$0xff]
  %v1296 = vld [vmem:[%s1 + $0x21b0] sm:$0xff]
  %v1297 = vld [vmem:[%s1 + $0x21b8] sm:$0xff]
  %v1298 = vld [vmem:[%s1 + $0x21c0] sm:$0xff]
  %v1299 = vld [vmem:[%s1 + $0x21c8] sm:$0xff]
  %v1300 = vld [vmem:[%s1 + $0x21d0] sm:$0xff]
  %v1301 = vld [vmem:[%s1 + $0x21d8] sm:$0xff]
  %v1302 = vld [vmem:[%s1 + $0x21e0] sm:$0xff]
  %v1303 = vld [vmem:[%s1 + $0x21e8] sm:$0xff]
  %v1304 = vld [vmem:[%s1 + $0x21f0] sm:$0xff]
  %v1305 = vld [vmem:[%s1 + $0x21f8] sm:$0xff]
  %v1306 = vld [vmem:[%s1 + $0x2200] sm:$0xff]
  %v1307 = vld [vmem:[%s1 + $0x2208] sm:$0xff]
  %v1308 = vld [vmem:[%s1 + $0x2210] sm:$0xff]
  %v1309 = vld [vmem:[%s1 + $0x2218] sm:$0xff]
  %v1310 = vld [vmem:[%s1 + $0x2220] sm:$0xff]
  %v1311 = vld [vmem:[%s1 + $0x2228] sm:$0xff]
  %v1312 = vld [vmem:[%s1 + $0x2230] sm:$0xff]
  %v1313 = vld [vmem:[%s1 + $0x2238] sm:$0xff]
  %v1314 = vld [vmem:[%s1 + $0x2240] sm:$0xff]
  %v1315 = vld [vmem:[%s1 + $0x2248] sm:$0xff]
  %v1316 = vld [vmem:[%s1 + $0x2250] sm:$0xff]
  %v1317 = vld [vmem:[%s1 + $0x2258] sm:$0xff]
  %v1318 = vld [vmem:[%s1 + $0x2260] sm:$0xff]
  %v1319 = vld [vmem:[%s1 + $0x2268] sm:$0xff]
  %v1320 = vld [vmem:[%s1 + $0x2270] sm:$0xff]
  %v1321 = vld [vmem:[%s1 + $0x2278] sm:$0xff]
  %v1322 = vld [vmem:[%s1 + $0x2280] sm:$0xff]
  %v1323 = vld [vmem:[%s1 + $0x2288] sm:$0xff]
  %v1324 = vld [vmem:[%s1 + $0x2290] sm:$0xff]
  %v1325 = vld [vmem:[%s1 + $0x2298] sm:$0xff]
  %v1326 = vld [vmem:[%s1 + $0x22a0] sm:$0xff]
  %v1327 = vld [vmem:[%s1 + $0x22a8] sm:$0xff]
  %v1328 = vld [vmem:[%s1 + $0x22b0] sm:$0xff]
  %v1329 = vld [vmem:[%s1 + $0x22b8] sm:$0xff]
  %v1330 = vld [vmem:[%s1 + $0x22c0] sm:$0xff]
  %v1331 = vld [vmem:[%s1 + $0x22c8] sm:$0xff]
  %v1332 = vld [vmem:[%s1 + $0x22d0] sm:$0xff]
  %v1333 = vld [vmem:[%s1 + $0x22d8] sm:$0xff]
  %v1334 = vld [vmem:[%s1 + $0x22e0] sm:$0xff]
  %v1335 = vld [vmem:[%s1 + $0x22e8] sm:$0xff]
  %v1336 = vld [vmem:[%s1 + $0x22f0] sm:$0xff]
  %v1337 = vld [vmem:[%s1 + $0x22f8] sm:$0xff]
  %v1338 = vld [vmem:[%s1 + $0x2300] sm:$0xff]
  %v1339 = vld [vmem:[%s1 + $0x2308] sm:$0xff]
  %v1340 = vld [vmem:[%s1 + $0x2310] sm:$0xff]
  %v1341 = vld [vmem:[%s1 + $0x2318] sm:$0xff]
  %v1342 = vld [vmem:[%s1 + $0x2320] sm:$0xff]
  %v1343 = vld [vmem:[%s1 + $0x2328] sm:$0xff]
  %v1344 = vld [vmem:[%s1 + $0x2330] sm:$0xff]
  %v1345 = vld [vmem:[%s1 + $0x2338] sm:$0xff]
  %v1346 = vld [vmem:[%s1 + $0x2340] sm:$0xff]
  %v1347 = vld [vmem:[%s1 + $0x2348] sm:$0xff]
  %v1348 = vld [vmem:[%s1 + $0x2350] sm:$0xff]
  %v1349 = vld [vmem:[%s1 + $0x2358] sm:$0xff]
  %v1350 = vld [vmem:[%s1 + $0x2360] sm:$0xff]
  %v1351 = vld [vmem:[%s1 + $0x2368] sm:$0xff]
  %v1352 = vld [vmem:[%s1 + $0x2370] sm:$0xff]
  %v1353 = vld [vmem:[%s1 + $0x2378] sm:$0xff]
  %v1354 = vld [vmem:[%s1 + $0x2380] sm:$0xff]
  %v1355 = vld [vmem:[%s1 + $0x2388] sm:$0xff]
  %v1356 = vld [vmem:[%s1 + $0x2390] sm:$0xff]
  %v1357 = vld [vmem:[%s1 + $0x2398] sm:$0xff]
  %v1358 = vld [vmem:[%s1 + $0x23a0] sm:$0xff]
  %v1359 = vld [vmem:[%s1 + $0x23a8] sm:$0xff]
  %v1360 = vld [vmem:[%s1 + $0x23b0] sm:$0xff]
  %v1361 = vld [vmem:[%s1 + $0x23b8] sm:$0xff]
  %v1362 = vld [vmem:[%s1 + $0x23c0] sm:$0xff]
  %v1363 = vld [vmem:[%s1 + $0x23c8] sm:$0xff]
  %v1364 = vld [vmem:[%s1 + $0x23d0] sm:$0xff]
  %v1365 = vld [vmem:[%s1 + $0x23d8] sm:$0xff]
  %v1366 = vld [vmem:[%s1 + $0x23e0] sm:$0xff]
  %v1367 = vld [vmem:[%s1 + $0x23e8] sm:$0xff]
  %v1368 = vld [vmem:[%s1 + $0x23f0] sm:$0xff]
  %v1369 = vld [vmem:[%s1 + $0x23f8] sm:$0xff]
  %v1370 = vld [vmem:[%s1 + $0x2400] sm:$0xff]
  %v1371 = vld [vmem:[%s1 + $0x2408] sm:$0xff]
  %v1372 = vld [vmem:[%s1 + $0x2410] sm:$0xff]
  %v1373 = vld [vmem:[%s1 + $0x2418] sm:$0xff]
  %v1374 = vld [vmem:[%s1 + $0x2420] sm:$0xff]
  %v1375 = vld [vmem:[%s1 + $0x2428] sm:$0xff]
  %v1376 = vld [vmem:[%s1 + $0x2430] sm:$0xff]
  %v1377 = vld [vmem:[%s1 + $0x2438] sm:$0xff]
  %v1378 = vld [vmem:[%s1 + $0x2440] sm:$0xff]
  %v1379 = vld [vmem:[%s1 + $0x2448] sm:$0xff]
  %v1380 = vld [vmem:[%s1 + $0x2450] sm:$0xff]
  %v1381 = vld [vmem:[%s1 + $0x2458] sm:$0xff]
  %v1382 = vld [vmem:[%s1 + $0x2460] sm:$0xff]
  %v1383 = vld [vmem:[%s1 + $0x2468] sm:$0xff]
  %v1384 = vld [vmem:[%s1 + $0x2470] sm:$0xff]
  %v1385 = vld [vmem:[%s1 + $0x2478] sm:$0xff]
  %v1386 = vld [vmem:[%s1 + $0x2480] sm:$0xff]
  %v1387 = vld [vmem:[%s1 + $0x2488] sm:$0xff]
  %v1388 = vld [vmem:[%s1 + $0x2490] sm:$0xff]
  %v1389 = vld [vmem:[%s1 + $0x2498] sm:$0xff]
  %v1390 = vld [vmem:[%s1 + $0x24a0] sm:$0xff]
  %v1391 = vld [vmem:[%s1 + $0x24a8] sm:$0xff]
  %v1392 = vld [vmem:[%s1 + $0x24b0] sm:$0xff]
  %v1393 = vld [vmem:[%s1 + $0x24b8] sm:$0xff]
  %v1394 = vld [vmem:[%s1 + $0x24c0] sm:$0xff]
  %v1395 = vld [vmem:[%s1 + $0x24c8] sm:$0xff]
  %v1396 = vld [vmem:[%s1 + $0x24d0] sm:$0xff]
  %v1397 = vld [vmem:[%s1 + $0x24d8] sm:$0xff]
  %v1398 = vld [vmem:[%s1 + $0x24e0] sm:$0xff]
  %v1399 = vld [vmem:[%s1 + $0x24e8] sm:$0xff]
  %v1400 = vld [vmem:[%s1 + $0x24f0] sm:$0xff]
  %v1401 = vld [vmem:[%s1 + $0x24f8] sm:$0xff]
  %v1402 = vld [vmem:[%s1 + $0x2500] sm:$0xff]
  %v1403 = vld [vmem:[%s1 + $0x2508] sm:$0xff]
  %v1404 = vld [vmem:[%s1 + $0x2510] sm:$0xff]
  %v1405 = vld [vmem:[%s1 + $0x2518] sm:$0xff]
  %v1406 = vld [vmem:[%s1 + $0x2520] sm:$0xff]
  %v1407 = vld [vmem:[%s1 + $0x2528] sm:$0xff]
  %v1408 = vld [vmem:[%s1 + $0x2530] sm:$0xff]
  %v1409 = vld [vmem:[%s1 + $0x2538] sm:$0xff]
  %v1410 = vld [vmem:[%s1 + $0x2540] sm:$0xff]
  %v1411 = vld [vmem:[%s1 + $0x2548] sm:$0xff]
  %v1412 = vld [vmem:[%s1 + $0x2550] sm:$0xff]
  %v1413 = vld [vmem:[%s1 + $0x2558] sm:$0xff]
  %v1414 = vld [vmem:[%s1 + $0x2560] sm:$0xff]
  %v1415 = vld [vmem:[%s1 + $0x2568] sm:$0xff]
  %v1416 = vld [vmem:[%s1 + $0x2570] sm:$0xff]
  %v1417 = vld [vmem:[%s1 + $0x2578] sm:$0xff]
  %v1418 = vld [vmem:[%s1 + $0x2580] sm:$0xff]
  %v1419 = vld [vmem:[%s1 + $0x2588] sm:$0xff]
  %v1420 = vld [vmem:[%s1 + $0x2590] sm:$0xff]
  %v1421 = vld [vmem:[%s1 + $0x2598] sm:$0xff]
  %v1422 = vld [vmem:[%s1 + $0x25a0] sm:$0xff]
  %v1423 = vld [vmem:[%s1 + $0x25a8] sm:$0xff]
  %v1424 = vld [vmem:[%s1 + $0x25b0] sm:$0xff]
  %v1425 = vld [vmem:[%s1 + $0x25b8] sm:$0xff]
  %v1426 = vld [vmem:[%s1 + $0x25c0] sm:$0xff]
  %v1427 = vld [vmem:[%s1 + $0x25c8] sm:$0xff]
  %v1428 = vld [vmem:[%s1 + $0x25d0] sm:$0xff]
  %v1429 = vld [vmem:[%s1 + $0x25d8] sm:$0xff]
  %v1430 = vld [vmem:[%s1 + $0x25e0] sm:$0xff]
  %v1431 = vld [vmem:[%s1 + $0x25e8] sm:$0xff]
  %v1432 = vld [vmem:[%s1 + $0x25f0] sm:$0xff]
  %v1433 = vld [vmem:[%s1 + $0x25f8] sm:$0xff]
  %v1434 = vld [vmem:[%s1 + $0x2600] sm:$0xff]
  %v1435 = vld [vmem:[%s1 + $0x2608] sm:$0xff]
  %v1436 = vld [vmem:[%s1 + $0x2610] sm:$0xff]
  %v1437 = vld [vmem:[%s1 + $0x2618] sm:$0xff]
  %v1438 = vld [vmem:[%s1 + $0x2620] sm:$0xff]
  %v1439 = vld [vmem:[%s1 + $0x2628] sm:$0xff]
  %v1440 = vld [vmem:[%s1 + $0x2630] sm:$0xff]
  %v1441 = vld [vmem:[%s1 + $0x2638] sm:$0xff]
  %v1442 = vld [vmem:[%s1 + $0x2640] sm:$0xff]
  %v1443 = vld [vmem:[%s1 + $0x2648] sm:$0xff]
  %v1444 = vld [vmem:[%s1 + $0x2650] sm:$0xff]
  %v1445 = vld [vmem:[%s1 + $0x2658] sm:$0xff]
  %v1446 = vld [vmem:[%s1 + $0x2660] sm:$0xff]
  %v1447 = vld [vmem:[%s1 + $0x2668] sm:$0xff]
  %v1448 = vld [vmem:[%s1 + $0x2670] sm:$0xff]
  %v1449 = vld [vmem:[%s1 + $0x2678] sm:$0xff]
  %v1450 = vld [vmem:[%s1 + $0x2680] sm:$0xff]
  %v1451 = vld [vmem:[%s1 + $0x2688] sm:$0xff]
  %v1452 = vld [vmem:[%s1 + $0x2690] sm:$0xff]
  %v1453 = vld [vmem:[%s1 + $0x2698] sm:$0xff]
  %v1454 = vld [vmem:[%s1 + $0x26a0] sm:$0xff]
  %v1455 = vld [vmem:[%s1 + $0x26a8] sm:$0xff]
  %v1456 = vld [vmem:[%s1 + $0x26b0] sm:$0xff]
  %v1457 = vld [vmem:[%s1 + $0x26b8] sm:$0xff]
  %v1458 = vld [vmem:[%s1 + $0x26c0] sm:$0xff]
  %v1459 = vld [vmem:[%s1 + $0x26c8] sm:$0xff]
  %v1460 = vld [vmem:[%s1 + $0x26d0] sm:$0xff]
  %v1461 = vld [vmem:[%s1 + $0x26d8] sm:$0xff]
  %v1462 = vld [vmem:[%s1 + $0x26e0] sm:$0xff]
  %v1463 = vld [vmem:[%s1 + $0x26e8] sm:$0xff]
  %v1464 = vld [vmem:[%s1 + $0x26f0] sm:$0xff]
  %v1465 = vld [vmem:[%s1 + $0x26f8] sm:$0xff]
  %v1466 = vld [vmem:[%s1 + $0x2700] sm:$0xff]
  %v1467 = vld [vmem:[%s1 + $0x2708] sm:$0xff]
  %v1468 = vld [vmem:[%s1 + $0x2710] sm:$0xff]
  %v1469 = vld [vmem:[%s1 + $0x2718] sm:$0xff]
  %v1470 = vld [vmem:[%s1 + $0x2720] sm:$0xff]
  %v1471 = vld [vmem:[%s1 + $0x2728] sm:$0xff]
  %v1472 = vld [vmem:[%s1 + $0x2730] sm:$0xff]
  %v1473 = vld [vmem:[%s1 + $0x2738] sm:$0xff]
  %v1474 = vld [vmem:[%s1 + $0x2740] sm:$0xff]
  %v1475 = vld [vmem:[%s1 + $0x2748] sm:$0xff]
  %v1476 = vld [vmem:[%s1 + $0x2750] sm:$0xff]
  %v1477 = vld [vmem:[%s1 + $0x2758] sm:$0xff]
  %v1478 = vld [vmem:[%s1 + $0x2760] sm:$0xff]
  %v1479 = vld [vmem:[%s1 + $0x2768] sm:$0xff]
  %v1480 = vld [vmem:[%s1 + $0x2770] sm:$0xff]
  %v1481 = vld [vmem:[%s1 + $0x2778] sm:$0xff]
  %v1482 = vld [vmem:[%s1 + $0x2780] sm:$0xff]
  %v1483 = vld [vmem:[%s1 + $0x2788] sm:$0xff]
  %v1484 = vld [vmem:[%s1 + $0x2790] sm:$0xff]
  %v1485 = vld [vmem:[%s1 + $0x2798] sm:$0xff]
  %v1486 = vld [vmem:[%s1 + $0x27a0] sm:$0xff]
  %v1487 = vld [vmem:[%s1 + $0x27a8] sm:$0xff]
  %v1488 = vld [vmem:[%s1 + $0x27b0] sm:$0xff]
  %v1489 = vld [vmem:[%s1 + $0x27b8] sm:$0xff]
  %v1490 = vld [vmem:[%s1 + $0x27c0] sm:$0xff]
  %v1491 = vld [vmem:[%s1 + $0x27c8] sm:$0xff]
  %v1492 = vld [vmem:[%s1 + $0x27d0] sm:$0xff]
  %v1493 = vld [vmem:[%s1 + $0x27d8] sm:$0xff]
  %v1494 = vld [vmem:[%s1 + $0x27e0] sm:$0xff]
  %v1495 = vld [vmem:[%s1 + $0x27e8] sm:$0xff]
  %v1496 = vld [vmem:[%s1 + $0x27f0] sm:$0xff]
  %v1497 = vld [vmem:[%s1 + $0x27f8] sm:$0xff]
  %v1498 = vld [vmem:[%s1 + $0x2800] sm:$0xff]
  %v1499 = vld [vmem:[%s1 + $0x2808] sm:$0xff]
  %v1500 = vld [vmem:[%s1 + $0x2810] sm:$0xff]
  %v1501 = vld [vmem:[%s1 + $0x2818] sm:$0xff]
  %v1502 = vld [vmem:[%s1 + $0x2820] sm:$0xff]
  %v1503 = vld [vmem:[%s1 + $0x2828] sm:$0xff]
  %v1504 = vld [vmem:[%s1 + $0x2830] sm:$0xff]
  %v1505 = vld [vmem:[%s1 + $0x2838] sm:$0xff]
  %v1506 = vld [vmem:[%s1 + $0x2840] sm:$0xff]
  %v1507 = vld [vmem:[%s1 + $0x2848] sm:$0xff]
  %v1508 = vld [vmem:[%s1 + $0x2850] sm:$0xff]
  %v1509 = vld [vmem:[%s1 + $0x2858] sm:$0xff]
  %v1510 = vld [vmem:[%s1 + $0x2860] sm:$0xff]
  %v1511 = vld [vmem:[%s1 + $0x2868] sm:$0xff]
  %v1512 = vld [vmem:[%s1 + $0x2870] sm:$0xff]
  %v1513 = vld [vmem:[%s1 + $0x2878] sm:$0xff]
  %v1514 = vld [vmem:[%s1 + $0x2880] sm:$0xff]
  %v1515 = vld [vmem:[%s1 + $0x2888] sm:$0xff]
  %v1516 = vld [vmem:[%s1 + $0x2890] sm:$0xff]
  %v1517 = vld [vmem:[%s1 + $0x2898] sm:$0xff]
  %v1518 = vld [vmem:[%s1 + $0x28a0] sm:$0xff]
  %v1519 = vld [vmem:[%s1 + $0x28a8] sm:$0xff]
  %v1520 = vld [vmem:[%s1 + $0x28b0] sm:$0xff]
  %v1521 = vld [vmem:[%s1 + $0x28b8] sm:$0xff]
  %v1522 = vld [vmem:[%s1 + $0x28c0] sm:$0xff]
  %v1523 = vld [vmem:[%s1 + $0x28c8] sm:$0xff]
  %v1524 = vld [vmem:[%s1 + $0x28d0] sm:$0xff]
  %v1525 = vld [vmem:[%s1 + $0x28d8] sm:$0xff]
  %v1526 = vld [vmem:[%s1 + $0x28e0] sm:$0xff]
  %v1527 = vld [vmem:[%s1 + $0x28e8] sm:$0xff]
  %v1528 = vld [vmem:[%s1 + $0x28f0] sm:$0xff]
  %v1529 = vld [vmem:[%s1 + $0x28f8] sm:$0xff]
  %v1530 = vld [vmem:[%s1 + $0x2900] sm:$0xff]
  %v1531 = vld [vmem:[%s1 + $0x2908] sm:$0xff]
  %v1532 = vld [vmem:[%s1 + $0x2910] sm:$0xff]
  %v1533 = vld [vmem:[%s1 + $0x2918] sm:$0xff]
  %v1534 = vld [vmem:[%s1 + $0x2920] sm:$0xff]
  %v1535 = vld [vmem:[%s1 + $0x2928] sm:$0xff]
  %v1536 = vld [vmem:[%s1 + $0x2930] sm:$0xff]
  %v1537 = vld [vmem:[%s1 + $0x2938] sm:$0xff]
  %v1538 = vld [vmem:[%s1 + $0x2940] sm:$0xff]
  %v1539 = vld [vmem:[%s1 + $0x2948] sm:$0xff]
  %v1540 = vld [vmem:[%s1 + $0x2950] sm:$0xff]
  %v1541 = vld [vmem:[%s1 + $0x2958] sm:$0xff]
  %v1542 = vld [vmem:[%s1 + $0x2960] sm:$0xff]
  %v1543 = vld [vmem:[%s1 + $0x2968] sm:$0xff]
  %v1544 = vld [vmem:[%s1 + $0x2970] sm:$0xff]
  %v1545 = vld [vmem:[%s1 + $0x2978] sm:$0xff]
  %v1546 = vld [vmem:[%s1 + $0x2980] sm:$0xff]
  %v1547 = vld [vmem:[%s1 + $0x2988] sm:$0xff]
  %v1548 = vld [vmem:[%s1 + $0x2990] sm:$0xff]
  %v1549 = vld [vmem:[%s1 + $0x2998] sm:$0xff]
  %v1550 = vld [vmem:[%s1 + $0x29a0] sm:$0xff]
  %v1551 = vld [vmem:[%s1 + $0x29a8] sm:$0xff]
  %v1552 = vld [vmem:[%s1 + $0x29b0] sm:$0xff]
  %v1553 = vld [vmem:[%s1 + $0x29b8] sm:$0xff]
  %v1554 = vld [vmem:[%s1 + $0x29c0] sm:$0xff]
  %v1555 = vld [vmem:[%s1 + $0x29c8] sm:$0xff]
  %v1556 = vld [vmem:[%s1 + $0x29d0] sm:$0xff]
  %v1557 = vld [vmem:[%s1 + $0x29d8] sm:$0xff]
  %v1558 = vld [vmem:[%s1 + $0x29e0] sm:$0xff]
  %v1559 = vld [vmem:[%s1 + $0x29e8] sm:$0xff]
  %v1560 = vld [vmem:[%s1 + $0x29f0] sm:$0xff]
  %v1561 = vld [vmem:[%s1 + $0x29f8] sm:$0xff]
  %v1562 = vld [vmem:[%s1 + $0x2a00] sm:$0xff]
  %v1563 = vld [vmem:[%s1 + $0x2a08] sm:$0xff]
  %v1564 = vld [vmem:[%s1 + $0x2a10] sm:$0xff]
  %v1565 = vld [vmem:[%s1 + $0x2a18] sm:$0xff]
  %v1566 = vld [vmem:[%s1 + $0x2a20] sm:$0xff]
  %v1567 = vld [vmem:[%s1 + $0x2a28] sm:$0xff]
  %v1568 = vld [vmem:[%s1 + $0x2a30] sm:$0xff]
  %v1569 = vld [vmem:[%s1 + $0x2a38] sm:$0xff]
  %v1570 = vld [vmem:[%s1 + $0x2a40] sm:$0xff]
  %v1571 = vld [vmem:[%s1 + $0x2a48] sm:$0xff]
  %v1572 = vld [vmem:[%s1 + $0x2a50] sm:$0xff]
  %v1573 = vld [vmem:[%s1 + $0x2a58] sm:$0xff]
  %v1574 = vld [vmem:[%s1 + $0x2a60] sm:$0xff]
  %v1575 = vld [vmem:[%s1 + $0x2a68] sm:$0xff]
  %v1576 = vld [vmem:[%s1 + $0x2a70] sm:$0xff]
  %v1577 = vld [vmem:[%s1 + $0x2a78] sm:$0xff]
  %v1578 = vld [vmem:[%s1 + $0x2a80] sm:$0xff]
  %v1579 = vld [vmem:[%s1 + $0x2a88] sm:$0xff]
  %v1580 = vld [vmem:[%s1 + $0x2a90] sm:$0xff]
  %v1581 = vld [vmem:[%s1 + $0x2a98] sm:$0xff]
  %v1582 = vld [vmem:[%s1 + $0x2aa0] sm:$0xff]
  %v1583 = vld [vmem:[%s1 + $0x2aa8] sm:$0xff]
  %v1584 = vld [vmem:[%s1 + $0x2ab0] sm:$0xff]
  %v1585 = vld [vmem:[%s1 + $0x2ab8] sm:$0xff]
  %v1586 = vld [vmem:[%s1 + $0x2ac0] sm:$0xff]
  %v1587 = vld [vmem:[%s1 + $0x2ac8] sm:$0xff]
  %v1588 = vld [vmem:[%s1 + $0x2ad0] sm:$0xff]
  %v1589 = vld [vmem:[%s1 + $0x2ad8] sm:$0xff]
  %v1590 = vld [vmem:[%s1 + $0x2ae0] sm:$0xff]
  %v1591 = vld [vmem:[%s1 + $0x2ae8] sm:$0xff]
  %v1592 = vld [vmem:[%s1 + $0x2af0] sm:$0xff]
  %v1593 = vld [vmem:[%s1 + $0x2af8] sm:$0xff]
  %v1594 = vld [vmem:[%s1 + $0x2b00] sm:$0xff]
  %v1595 = vld [vmem:[%s1 + $0x2b08] sm:$0xff]
  %v1596 = vld [vmem:[%s1 + $0x2b10] sm:$0xff]
  %v1597 = vld [vmem:[%s1 + $0x2b18] sm:$0xff]
  %v1598 = vld [vmem:[%s1 + $0x2b20] sm:$0xff]
  %v1599 = vld [vmem:[%s1 + $0x2b28] sm:$0xff]
  %v1600 = vld [vmem:[%s1 + $0x2b30] sm:$0xff]
  %v1601 = vld [vmem:[%s1 + $0x2b38] sm:$0xff]
  %v1602 = vld [vmem:[%s1 + $0x2b40] sm:$0xff]
  %v1603 = vld [vmem:[%s1 + $0x2b48] sm:$0xff]
  %v1604 = vld [vmem:[%s1 + $0x2b50] sm:$0xff]
  %v1605 = vld [vmem:[%s1 + $0x2b58] sm:$0xff]
  %v1606 = vld [vmem:[%s1 + $0x2b60] sm:$0xff]
  %v1607 = vld [vmem:[%s1 + $0x2b68] sm:$0xff]
  %v1608 = vld [vmem:[%s1 + $0x2b70] sm:$0xff]
  %v1609 = vld [vmem:[%s1 + $0x2b78] sm:$0xff]
  %v1610 = vld [vmem:[%s1 + $0x2b80] sm:$0xff]
  %v1611 = vld [vmem:[%s1 + $0x2b88] sm:$0xff]
  %v1612 = vld [vmem:[%s1 + $0x2b90] sm:$0xff]
  %v1613 = vld [vmem:[%s1 + $0x2b98] sm:$0xff]
  %v1614 = vld [vmem:[%s1 + $0x2ba0] sm:$0xff]
  %v1615 = vld [vmem:[%s1 + $0x2ba8] sm:$0xff]
  %v1616 = vld [vmem:[%s1 + $0x2bb0] sm:$0xff]
  %v1617 = vld [vmem:[%s1 + $0x2bb8] sm:$0xff]
  %v1618 = vld [vmem:[%s1 + $0x2bc0] sm:$0xff]
  %v1619 = vld [vmem:[%s1 + $0x2bc8] sm:$0xff]
  %v1620 = vld [vmem:[%s1 + $0x2bd0] sm:$0xff]
  %v1621 = vld [vmem:[%s1 + $0x2bd8] sm:$0xff]
  %v1622 = vld [vmem:[%s1 + $0x2be0] sm:$0xff]
  %v1623 = vld [vmem:[%s1 + $0x2be8] sm:$0xff]
  %v1624 = vld [vmem:[%s1 + $0x2bf0] sm:$0xff]
  %v1625 = vld [vmem:[%s1 + $0x2bf8] sm:$0xff]
  %v1626 = vld [vmem:[%s1 + $0x2c00] sm:$0xff]
  %v1627 = vld [vmem:[%s1 + $0x2c08] sm:$0xff]
  %v1628 = vld [vmem:[%s1 + $0x2c10] sm:$0xff]
  %v1629 = vld [vmem:[%s1 + $0x2c18] sm:$0xff]
  %v1630 = vld [vmem:[%s1 + $0x2c20] sm:$0xff]
  %v1631 = vld [vmem:[%s1 + $0x2c28] sm:$0xff]
  %v1632 = vld [vmem:[%s1 + $0x2c30] sm:$0xff]
  %v1633 = vld [vmem:[%s1 + $0x2c38] sm:$0xff]
  %v1634 = vld [vmem:[%s1 + $0x2c40] sm:$0xff]
  %v1635 = vld [vmem:[%s1 + $0x2c48] sm:$0xff]
  %v1636 = vld [vmem:[%s1 + $0x2c50] sm:$0xff]
  %v1637 = vld [vmem:[%s1 + $0x2c58] sm:$0xff]
  %v1638 = vld [vmem:[%s1 + $0x2c60] sm:$0xff]
  %v1639 = vld [vmem:[%s1 + $0x2c68] sm:$0xff]
  %v1640 = vld [vmem:[%s1 + $0x2c70] sm:$0xff]
  %v1641 = vld [vmem:[%s1 + $0x2c78] sm:$0xff]
  %v1642 = vld [vmem:[%s1 + $0x2c80] sm:$0xff]
  %v1643 = vld [vmem:[%s1 + $0x2c88] sm:$0xff]
  %v1644 = vld [vmem:[%s1 + $0x2c90] sm:$0xff]
  %v1645 = vld [vmem:[%s1 + $0x2c98] sm:$0xff]
  %v1646 = vld [vmem:[%s1 + $0x2ca0] sm:$0xff]
  %v1647 = vld [vmem:[%s1 + $0x2ca8] sm:$0xff]
  %v1648 = vld [vmem:[%s1 + $0x2cb0] sm:$0xff]
  %v1649 = vld [vmem:[%s1 + $0x2cb8] sm:$0xff]
  %v1650 = vld [vmem:[%s1 + $0x2cc0] sm:$0xff]
  %v1651 = vld [vmem:[%s1 + $0x2cc8] sm:$0xff]
  %v1652 = vld [vmem:[%s1 + $0x2cd0] sm:$0xff]
  %v1653 = vld [vmem:[%s1 + $0x2cd8] sm:$0xff]
  %v1654 = vld [vmem:[%s1 + $0x2ce0] sm:$0xff]
  %v1655 = vld [vmem:[%s1 + $0x2ce8] sm:$0xff]
  %v1656 = vld [vmem:[%s1 + $0x2cf0] sm:$0xff]
  %v1657 = vld [vmem:[%s1 + $0x2cf8] sm:$0xff]
  %v1658 = vld [vmem:[%s1 + $0x2d00] sm:$0xff]
  %v1659 = vld [vmem:[%s1 + $0x2d08] sm:$0xff]
  %v1660 = vld [vmem:[%s1 + $0x2d10] sm:$0xff]
  %v1661 = vld [vmem:[%s1 + $0x2d18] sm:$0xff]
  %v1662 = vld [vmem:[%s1 + $0x2d20] sm:$0xff]
  %v1663 = vld [vmem:[%s1 + $0x2d28] sm:$0xff]
  %v1664 = vld [vmem:[%s1 + $0x2d30] sm:$0xff]
  %v1665 = vld [vmem:[%s1 + $0x2d38] sm:$0xff]
  %v1666 = vld [vmem:[%s1 + $0x2d40] sm:$0xff]
  %v1667 = vld [vmem:[%s1 + $0x2d48] sm:$0xff]
  %v1668 = vld [vmem:[%s1 + $0x2d50] sm:$0xff]
  %v1669 = vld [vmem:[%s1 + $0x2d58] sm:$0xff]
  %v1670 = vld [vmem:[%s1 + $0x2d60] sm:$0xff]
  %v1671 = vld [vmem:[%s1 + $0x2d68] sm:$0xff]
  %v1672 = vld [vmem:[%s1 + $0x2d70] sm:$0xff]
  %v1673 = vld [vmem:[%s1 + $0x2d78] sm:$0xff]
  %v1674 = vld [vmem:[%s1 + $0x2d80] sm:$0xff]
  %v1675 = vld [vmem:[%s1 + $0x2d88] sm:$0xff]
  %v1676 = vld [vmem:[%s1 + $0x2d90] sm:$0xff]
  %v1677 = vld [vmem:[%s1 + $0x2d98] sm:$0xff]
  %v1678 = vld [vmem:[%s1 + $0x2da0] sm:$0xff]
  %v1679 = vld [vmem:[%s1 + $0x2da8] sm:$0xff]
  %v1680 = vld [vmem:[%s1 + $0x2db0] sm:$0xff]
  %v1681 = vld [vmem:[%s1 + $0x2db8] sm:$0xff]
  %v1682 = vld [vmem:[%s1 + $0x2dc0] sm:$0xff]
  %v1683 = vld [vmem:[%s1 + $0x2dc8] sm:$0xff]
  %v1684 = vld [vmem:[%s1 + $0x2dd0] sm:$0xff]
  %v1685 = vld [vmem:[%s1 + $0x2dd8] sm:$0xff]
  %v1686 = vld [vmem:[%s1 + $0x2de0] sm:$0xff]
  %v1687 = vld [vmem:[%s1 + $0x2de8] sm:$0xff]
  %v1688 = vld [vmem:[%s1 + $0x2df0] sm:$0xff]
  %v1689 = vld [vmem:[%s1 + $0x2df8] sm:$0xff]
  %v1690 = vld [vmem:[%s1 + $0x2e00] sm:$0xff]
  %v1691 = vld [vmem:[%s1 + $0x2e08] sm:$0xff]
  %v1692 = vld [vmem:[%s1 + $0x2e10] sm:$0xff]
  %v1693 = vld [vmem:[%s1 + $0x2e18] sm:$0xff]
  %v1694 = vld [vmem:[%s1 + $0x2e20] sm:$0xff]
  %v1695 = vld [vmem:[%s1 + $0x2e28] sm:$0xff]
  %v1696 = vld [vmem:[%s1 + $0x2e30] sm:$0xff]
  %v1697 = vld [vmem:[%s1 + $0x2e38] sm:$0xff]
  %v1698 = vld [vmem:[%s1 + $0x2e40] sm:$0xff]
  %v1699 = vld [vmem:[%s1 + $0x2e48] sm:$0xff]
  %v1700 = vld [vmem:[%s1 + $0x2e50] sm:$0xff]
  %v1701 = vld [vmem:[%s1 + $0x2e58] sm:$0xff]
  %v1702 = vld [vmem:[%s1 + $0x2e60] sm:$0xff]
  %v1703 = vld [vmem:[%s1 + $0x2e68] sm:$0xff]
  %v1704 = vld [vmem:[%s1 + $0x2e70] sm:$0xff]
  %v1705 = vld [vmem:[%s1 + $0x2e78] sm:$0xff]
  %v1706 = vld [vmem:[%s1 + $0x2e80] sm:$0xff]
  %v1707 = vld [vmem:[%s1 + $0x2e88] sm:$0xff]
  %v1708 = vld [vmem:[%s1 + $0x2e90] sm:$0xff]
  %v1709 = vld [vmem:[%s1 + $0x2e98] sm:$0xff]
  %v1710 = vld [vmem:[%s1 + $0x2ea0] sm:$0xff]
  %v1711 = vld [vmem:[%s1 + $0x2ea8] sm:$0xff]
  %v1712 = vld [vmem:[%s1 + $0x2eb0] sm:$0xff]
  %v1713 = vld [vmem:[%s1 + $0x2eb8] sm:$0xff]
  %v1714 = vld [vmem:[%s1 + $0x2ec0] sm:$0xff]
  %v1715 = vld [vmem:[%s1 + $0x2ec8] sm:$0xff]
  %v1716 = vld [vmem:[%s1 + $0x2ed0] sm:$0xff]
  %v1717 = vld [vmem:[%s1 + $0x2ed8] sm:$0xff]
  %v1718 = vld [vmem:[%s1 + $0x2ee0] sm:$0xff]
  %v1719 = vld [vmem:[%s1 + $0x2ee8] sm:$0xff]
  %v1720 = vld [vmem:[%s1 + $0x2ef0] sm:$0xff]
  %v1721 = vld [vmem:[%s1 + $0x2ef8] sm:$0xff]
  %v1722 = vld [vmem:[%s1 + $0x2f00] sm:$0xff]
  %v1723 = vld [vmem:[%s1 + $0x2f08] sm:$0xff]
  %v1724 = vld [vmem:[%s1 + $0x2f10] sm:$0xff]
  %v1725 = vld [vmem:[%s1 + $0x2f18] sm:$0xff]
  %v1726 = vld [vmem:[%s1 + $0x2f20] sm:$0xff]
  %v1727 = vld [vmem:[%s1 + $0x2f28] sm:$0xff]
  %v1728 = vld [vmem:[%s1 + $0x2f30] sm:$0xff]
  %v1729 = vld [vmem:[%s1 + $0x2f38] sm:$0xff]
  %v1730 = vld [vmem:[%s1 + $0x2f40] sm:$0xff]
  %v1731 = vld [vmem:[%s1 + $0x2f48] sm:$0xff]
  %v1732 = vld [vmem:[%s1 + $0x2f50] sm:$0xff]
  %v1733 = vld [vmem:[%s1 + $0x2f58] sm:$0xff]
  %v1734 = vld [vmem:[%s1 + $0x2f60] sm:$0xff]
  %v1735 = vld [vmem:[%s1 + $0x2f68] sm:$0xff]
  %v1736 = vld [vmem:[%s1 + $0x2f70] sm:$0xff]
  %v1737 = vld [vmem:[%s1 + $0x2f78] sm:$0xff]
  %v1738 = vld [vmem:[%s1 + $0x2f80] sm:$0xff]
  %v1739 = vld [vmem:[%s1 + $0x2f88] sm:$0xff]
  %v1740 = vld [vmem:[%s1 + $0x2f90] sm:$0xff]
  %v1741 = vld [vmem:[%s1 + $0x2f98] sm:$0xff]
  %v1742 = vld [vmem:[%s1 + $0x2fa0] sm:$0xff]
  %v1743 = vld [vmem:[%s1 + $0x2fa8] sm:$0xff]
  %v1744 = vld [vmem:[%s1 + $0x2fb0] sm:$0xff]
  %v1745 = vld [vmem:[%s1 + $0x2fb8] sm:$0xff]
  %v1746 = vld [vmem:[%s1 + $0x2fc0] sm:$0xff]
  %v1747 = vld [vmem:[%s1 + $0x2fc8] sm:$0xff]
  %v1748 = vld [vmem:[%s1 + $0x2fd0] sm:$0xff]
  %v1749 = vld [vmem:[%s1 + $0x2fd8] sm:$0xff]
  %v1750 = vld [vmem:[%s1 + $0x2fe0] sm:$0xff]
  %v1751 = vld [vmem:[%s1 + $0x2fe8] sm:$0xff]
  %v1752 = vld [vmem:[%s1 + $0x2ff0] sm:$0xff]
  %v1753 = vld [vmem:[%s1 + $0x2ff8] sm:$0xff]
  %v1754 = vld [vmem:[%s2] sm:$0x3]
  %v1756 = vperm.slane %v1754, 0
  %v1757 = vperm.slane %v1754, 1
  %v3296 = vunpack.c.l.b16 %v218
  %v3297 = vunpack.c.h.b16 %v218
  %v3298 = vunpack.c.l.b16 %v219
  %v3299 = vunpack.c.h.b16 %v219
  %v3300 = vunpack.c.l.b16 %v220
  %v3301 = vunpack.c.h.b16 %v220
  %v3302 = vunpack.c.l.b16 %v221
  %v3303 = vunpack.c.h.b16 %v221
  %v3304 = vunpack.c.l.b16 %v222
  %v3305 = vunpack.c.h.b16 %v222
  %v3306 = vunpack.c.l.b16 %v223
  %v3307 = vunpack.c.h.b16 %v223
  %v3308 = vunpack.c.l.b16 %v224
  %v3309 = vunpack.c.h.b16 %v224
  %v3310 = vunpack.c.l.b16 %v225
  %v3311 = vunpack.c.h.b16 %v225
  %v3312 = vunpack.c.l.b16 %v226
  %v3313 = vunpack.c.h.b16 %v226
  %v3314 = vunpack.c.l.b16 %v227
  %v3315 = vunpack.c.h.b16 %v227
  %v3316 = vunpack.c.l.b16 %v228
  %v3317 = vunpack.c.h.b16 %v228
  %v3318 = vunpack.c.l.b16 %v229
  %v3319 = vunpack.c.h.b16 %v229
  %v3320 = vunpack.c.l.b16 %v230
  %v3321 = vunpack.c.h.b16 %v230
  %v3322 = vunpack.c.l.b16 %v231
  %v3323 = vunpack.c.h.b16 %v231
  %v3324 = vunpack.c.l.b16 %v232
  %v3325 = vunpack.c.h.b16 %v232
  %v3326 = vunpack.c.l.b16 %v233
  %v3327 = vunpack.c.h.b16 %v233
  %v3328 = vunpack.c.l.b16 %v234
  %v3329 = vunpack.c.h.b16 %v234
  %v3330 = vunpack.c.l.b16 %v235
  %v3331 = vunpack.c.h.b16 %v235
  %v3332 = vunpack.c.l.b16 %v236
  %v3333 = vunpack.c.h.b16 %v236
  %v3334 = vunpack.c.l.b16 %v237
  %v3335 = vunpack.c.h.b16 %v237
  %v3336 = vunpack.c.l.b16 %v238
  %v3337 = vunpack.c.h.b16 %v238
  %v3338 = vunpack.c.l.b16 %v239
  %v3339 = vunpack.c.h.b16 %v239
  %v3340 = vunpack.c.l.b16 %v240
  %v3341 = vunpack.c.h.b16 %v240
  %v3342 = vunpack.c.l.b16 %v241
  %v3343 = vunpack.c.h.b16 %v241
  %v3344 = vunpack.c.l.b16 %v242
  %v3345 = vunpack.c.h.b16 %v242
  %v3346 = vunpack.c.l.b16 %v243
  %v3347 = vunpack.c.h.b16 %v243
  %v3348 = vunpack.c.l.b16 %v244
  %v3349 = vunpack.c.h.b16 %v244
  %v3350 = vunpack.c.l.b16 %v245
  %v3351 = vunpack.c.h.b16 %v245
  %v3352 = vunpack.c.l.b16 %v246
  %v3353 = vunpack.c.h.b16 %v246
  %v3354 = vunpack.c.l.b16 %v247
  %v3355 = vunpack.c.h.b16 %v247
  %v3356 = vunpack.c.l.b16 %v248
  %v3357 = vunpack.c.h.b16 %v248
  %v3358 = vunpack.c.l.b16 %v249
  %v3359 = vunpack.c.h.b16 %v249
  %v3360 = vunpack.c.l.b16 %v250
  %v3361 = vunpack.c.h.b16 %v250
  %v3362 = vunpack.c.l.b16 %v251
  %v3363 = vunpack.c.h.b16 %v251
  %v3364 = vunpack.c.l.b16 %v252
  %v3365 = vunpack.c.h.b16 %v252
  %v3366 = vunpack.c.l.b16 %v253
  %v3367 = vunpack.c.h.b16 %v253
  %v3368 = vunpack.c.l.b16 %v254
  %v3369 = vunpack.c.h.b16 %v254
  %v3370 = vunpack.c.l.b16 %v255
  %v3371 = vunpack.c.h.b16 %v255
  %v3372 = vunpack.c.l.b16 %v256
  %v3373 = vunpack.c.h.b16 %v256
  %v3374 = vunpack.c.l.b16 %v257
  %v3375 = vunpack.c.h.b16 %v257
  %v3376 = vunpack.c.l.b16 %v258
  %v3377 = vunpack.c.h.b16 %v258
  %v3378 = vunpack.c.l.b16 %v259
  %v3379 = vunpack.c.h.b16 %v259
  %v3380 = vunpack.c.l.b16 %v260
  %v3381 = vunpack.c.h.b16 %v260
  %v3382 = vunpack.c.l.b16 %v261
  %v3383 = vunpack.c.h.b16 %v261
  %v3384 = vunpack.c.l.b16 %v262
  %v3385 = vunpack.c.h.b16 %v262
  %v3386 = vunpack.c.l.b16 %v263
  %v3387 = vunpack.c.h.b16 %v263
  %v3388 = vunpack.c.l.b16 %v264
  %v3389 = vunpack.c.h.b16 %v264
  %v3390 = vunpack.c.l.b16 %v265
  %v3391 = vunpack.c.h.b16 %v265
  %v3392 = vunpack.c.l.b16 %v266
  %v3393 = vunpack.c.h.b16 %v266
  %v3394 = vunpack.c.l.b16 %v267
  %v3395 = vunpack.c.h.b16 %v267
  %v3396 = vunpack.c.l.b16 %v268
  %v3397 = vunpack.c.h.b16 %v268
  %v3398 = vunpack.c.l.b16 %v269
  %v3399 = vunpack.c.h.b16 %v269
  %v3400 = vunpack.c.l.b16 %v270
  %v3401 = vunpack.c.h.b16 %v270
  %v3402 = vunpack.c.l.b16 %v271
  %v3403 = vunpack.c.h.b16 %v271
  %v3404 = vunpack.c.l.b16 %v272
  %v3405 = vunpack.c.h.b16 %v272
  %v3406 = vunpack.c.l.b16 %v273
  %v3407 = vunpack.c.h.b16 %v273
  %v3408 = vunpack.c.l.b16 %v274
  %v3409 = vunpack.c.h.b16 %v274
  %v3410 = vunpack.c.l.b16 %v275
  %v3411 = vunpack.c.h.b16 %v275
  %v3412 = vunpack.c.l.b16 %v276
  %v3413 = vunpack.c.h.b16 %v276
  %v3414 = vunpack.c.l.b16 %v277
  %v3415 = vunpack.c.h.b16 %v277
  %v3416 = vunpack.c.l.b16 %v278
  %v3417 = vunpack.c.h.b16 %v278
  %v3418 = vunpack.c.l.b16 %v279
  %v3419 = vunpack.c.h.b16 %v279
  %v3420 = vunpack.c.l.b16 %v280
  %v3421 = vunpack.c.h.b16 %v280
  %v3422 = vunpack.c.l.b16 %v281
  %v3423 = vunpack.c.h.b16 %v281
  %v3424 = vunpack.c.l.b16 %v282
  %v3425 = vunpack.c.h.b16 %v282
  %v3426 = vunpack.c.l.b16 %v283
  %v3427 = vunpack.c.h.b16 %v283
  %v3428 = vunpack.c.l.b16 %v284
  %v3429 = vunpack.c.h.b16 %v284
  %v3430 = vunpack.c.l.b16 %v285
  %v3431 = vunpack.c.h.b16 %v285
  %v3432 = vunpack.c.l.b16 %v286
  %v3433 = vunpack.c.h.b16 %v286
  %v3434 = vunpack.c.l.b16 %v287
  %v3435 = vunpack.c.h.b16 %v287
  %v3436 = vunpack.c.l.b16 %v288
  %v3437 = vunpack.c.h.b16 %v288
  %v3438 = vunpack.c.l.b16 %v289
  %v3439 = vunpack.c.h.b16 %v289
  %v3440 = vunpack.c.l.b16 %v290
  %v3441 = vunpack.c.h.b16 %v290
  %v3442 = vunpack.c.l.b16 %v291
  %v3443 = vunpack.c.h.b16 %v291
  %v3444 = vunpack.c.l.b16 %v292
  %v3445 = vunpack.c.h.b16 %v292
  %v3446 = vunpack.c.l.b16 %v293
  %v3447 = vunpack.c.h.b16 %v293
  %v3448 = vunpack.c.l.b16 %v294
  %v3449 = vunpack.c.h.b16 %v294
  %v3450 = vunpack.c.l.b16 %v295
  %v3451 = vunpack.c.h.b16 %v295
  %v3452 = vunpack.c.l.b16 %v296
  %v3453 = vunpack.c.h.b16 %v296
  %v3454 = vunpack.c.l.b16 %v297
  %v3455 = vunpack.c.h.b16 %v297
  %v3456 = vunpack.c.l.b16 %v298
  %v3457 = vunpack.c.h.b16 %v298
  %v3458 = vunpack.c.l.b16 %v299
  %v3459 = vunpack.c.h.b16 %v299
  %v3460 = vunpack.c.l.b16 %v300
  %v3461 = vunpack.c.h.b16 %v300
  %v3462 = vunpack.c.l.b16 %v301
  %v3463 = vunpack.c.h.b16 %v301
  %v3464 = vunpack.c.l.b16 %v302
  %v3465 = vunpack.c.h.b16 %v302
  %v3466 = vunpack.c.l.b16 %v303
  %v3467 = vunpack.c.h.b16 %v303
  %v3468 = vunpack.c.l.b16 %v304
  %v3469 = vunpack.c.h.b16 %v304
  %v3470 = vunpack.c.l.b16 %v305
  %v3471 = vunpack.c.h.b16 %v305
  %v3472 = vunpack.c.l.b16 %v306
  %v3473 = vunpack.c.h.b16 %v306
  %v3474 = vunpack.c.l.b16 %v307
  %v3475 = vunpack.c.h.b16 %v307
  %v3476 = vunpack.c.l.b16 %v308
  %v3477 = vunpack.c.h.b16 %v308
  %v3478 = vunpack.c.l.b16 %v309
  %v3479 = vunpack.c.h.b16 %v309
  %v3480 = vunpack.c.l.b16 %v310
  %v3481 = vunpack.c.h.b16 %v310
  %v3482 = vunpack.c.l.b16 %v311
  %v3483 = vunpack.c.h.b16 %v311
  %v3484 = vunpack.c.l.b16 %v312
  %v3485 = vunpack.c.h.b16 %v312
  %v3486 = vunpack.c.l.b16 %v313
  %v3487 = vunpack.c.h.b16 %v313
  %v3488 = vunpack.c.l.b16 %v314
  %v3489 = vunpack.c.h.b16 %v314
  %v3490 = vunpack.c.l.b16 %v315
  %v3491 = vunpack.c.h.b16 %v315
  %v3492 = vunpack.c.l.b16 %v316
  %v3493 = vunpack.c.h.b16 %v316
  %v3494 = vunpack.c.l.b16 %v317
  %v3495 = vunpack.c.h.b16 %v317
  %v3496 = vunpack.c.l.b16 %v318
  %v3497 = vunpack.c.h.b16 %v318
  %v3498 = vunpack.c.l.b16 %v319
  %v3499 = vunpack.c.h.b16 %v319
  %v3500 = vunpack.c.l.b16 %v320
  %v3501 = vunpack.c.h.b16 %v320
  %v3502 = vunpack.c.l.b16 %v321
  %v3503 = vunpack.c.h.b16 %v321
  %v3504 = vunpack.c.l.b16 %v322
  %v3505 = vunpack.c.h.b16 %v322
  %v3506 = vunpack.c.l.b16 %v323
  %v3507 = vunpack.c.h.b16 %v323
  %v3508 = vunpack.c.l.b16 %v324
  %v3509 = vunpack.c.h.b16 %v324
  %v3510 = vunpack.c.l.b16 %v325
  %v3511 = vunpack.c.h.b16 %v325
  %v3512 = vunpack.c.l.b16 %v326
  %v3513 = vunpack.c.h.b16 %v326
  %v3514 = vunpack.c.l.b16 %v327
  %v3515 = vunpack.c.h.b16 %v327
  %v3516 = vunpack.c.l.b16 %v328
  %v3517 = vunpack.c.h.b16 %v328
  %v3518 = vunpack.c.l.b16 %v329
  %v3519 = vunpack.c.h.b16 %v329
  %v3520 = vunpack.c.l.b16 %v330
  %v3521 = vunpack.c.h.b16 %v330
  %v3522 = vunpack.c.l.b16 %v331
  %v3523 = vunpack.c.h.b16 %v331
  %v3524 = vunpack.c.l.b16 %v332
  %v3525 = vunpack.c.h.b16 %v332
  %v3526 = vunpack.c.l.b16 %v333
  %v3527 = vunpack.c.h.b16 %v333
  %v3528 = vunpack.c.l.b16 %v334
  %v3529 = vunpack.c.h.b16 %v334
  %v3530 = vunpack.c.l.b16 %v335
  %v3531 = vunpack.c.h.b16 %v335
  %v3532 = vunpack.c.l.b16 %v336
  %v3533 = vunpack.c.h.b16 %v336
  %v3534 = vunpack.c.l.b16 %v337
  %v3535 = vunpack.c.h.b16 %v337
  %v3536 = vunpack.c.l.b16 %v338
  %v3537 = vunpack.c.h.b16 %v338
  %v3538 = vunpack.c.l.b16 %v339
  %v3539 = vunpack.c.h.b16 %v339
  %v3540 = vunpack.c.l.b16 %v340
  %v3541 = vunpack.c.h.b16 %v340
  %v3542 = vunpack.c.l.b16 %v341
  %v3543 = vunpack.c.h.b16 %v341
  %v3544 = vunpack.c.l.b16 %v342
  %v3545 = vunpack.c.h.b16 %v342
  %v3546 = vunpack.c.l.b16 %v343
  %v3547 = vunpack.c.h.b16 %v343
  %v3548 = vunpack.c.l.b16 %v344
  %v3549 = vunpack.c.h.b16 %v344
  %v3550 = vunpack.c.l.b16 %v345
  %v3551 = vunpack.c.h.b16 %v345
  %v3552 = vunpack.c.l.b16 %v346
  %v3553 = vunpack.c.h.b16 %v346
  %v3554 = vunpack.c.l.b16 %v347
  %v3555 = vunpack.c.h.b16 %v347
  %v3556 = vunpack.c.l.b16 %v348
  %v3557 = vunpack.c.h.b16 %v348
  %v3558 = vunpack.c.l.b16 %v349
  %v3559 = vunpack.c.h.b16 %v349
  %v3560 = vunpack.c.l.b16 %v350
  %v3561 = vunpack.c.h.b16 %v350
  %v3562 = vunpack.c.l.b16 %v351
  %v3563 = vunpack.c.h.b16 %v351
  %v3564 = vunpack.c.l.b16 %v352
  %v3565 = vunpack.c.h.b16 %v352
  %v3566 = vunpack.c.l.b16 %v353
  %v3567 = vunpack.c.h.b16 %v353
  %v3568 = vunpack.c.l.b16 %v354
  %v3569 = vunpack.c.h.b16 %v354
  %v3570 = vunpack.c.l.b16 %v355
  %v3571 = vunpack.c.h.b16 %v355
  %v3572 = vunpack.c.l.b16 %v356
  %v3573 = vunpack.c.h.b16 %v356
  %v3574 = vunpack.c.l.b16 %v357
  %v3575 = vunpack.c.h.b16 %v357
  %v3576 = vunpack.c.l.b16 %v358
  %v3577 = vunpack.c.h.b16 %v358
  %v3578 = vunpack.c.l.b16 %v359
  %v3579 = vunpack.c.h.b16 %v359
  %v3580 = vunpack.c.l.b16 %v360
  %v3581 = vunpack.c.h.b16 %v360
  %v3582 = vunpack.c.l.b16 %v361
  %v3583 = vunpack.c.h.b16 %v361
  %v3584 = vunpack.c.l.b16 %v362
  %v3585 = vunpack.c.h.b16 %v362
  %v3586 = vunpack.c.l.b16 %v363
  %v3587 = vunpack.c.h.b16 %v363
  %v3588 = vunpack.c.l.b16 %v364
  %v3589 = vunpack.c.h.b16 %v364
  %v3590 = vunpack.c.l.b16 %v365
  %v3591 = vunpack.c.h.b16 %v365
  %v3592 = vunpack.c.l.b16 %v366
  %v3593 = vunpack.c.h.b16 %v366
  %v3594 = vunpack.c.l.b16 %v367
  %v3595 = vunpack.c.h.b16 %v367
  %v3596 = vunpack.c.l.b16 %v368
  %v3597 = vunpack.c.h.b16 %v368
  %v3598 = vunpack.c.l.b16 %v369
  %v3599 = vunpack.c.h.b16 %v369
  %v3600 = vunpack.c.l.b16 %v370
  %v3601 = vunpack.c.h.b16 %v370
  %v3602 = vunpack.c.l.b16 %v371
  %v3603 = vunpack.c.h.b16 %v371
  %v3604 = vunpack.c.l.b16 %v372
  %v3605 = vunpack.c.h.b16 %v372
  %v3606 = vunpack.c.l.b16 %v373
  %v3607 = vunpack.c.h.b16 %v373
  %v3608 = vunpack.c.l.b16 %v374
  %v3609 = vunpack.c.h.b16 %v374
  %v3610 = vunpack.c.l.b16 %v375
  %v3611 = vunpack.c.h.b16 %v375
  %v3612 = vunpack.c.l.b16 %v376
  %v3613 = vunpack.c.h.b16 %v376
  %v3614 = vunpack.c.l.b16 %v377
  %v3615 = vunpack.c.h.b16 %v377
  %v3616 = vunpack.c.l.b16 %v378
  %v3617 = vunpack.c.h.b16 %v378
  %v3618 = vunpack.c.l.b16 %v379
  %v3619 = vunpack.c.h.b16 %v379
  %v3620 = vunpack.c.l.b16 %v380
  %v3621 = vunpack.c.h.b16 %v380
  %v3622 = vunpack.c.l.b16 %v381
  %v3623 = vunpack.c.h.b16 %v381
  %v3624 = vunpack.c.l.b16 %v382
  %v3625 = vunpack.c.h.b16 %v382
  %v3626 = vunpack.c.l.b16 %v383
  %v3627 = vunpack.c.h.b16 %v383
  %v3628 = vunpack.c.l.b16 %v384
  %v3629 = vunpack.c.h.b16 %v384
  %v3630 = vunpack.c.l.b16 %v385
  %v3631 = vunpack.c.h.b16 %v385
  %v3632 = vunpack.c.l.b16 %v386
  %v3633 = vunpack.c.h.b16 %v386
  %v3634 = vunpack.c.l.b16 %v387
  %v3635 = vunpack.c.h.b16 %v387
  %v3636 = vunpack.c.l.b16 %v388
  %v3637 = vunpack.c.h.b16 %v388
  %v3638 = vunpack.c.l.b16 %v389
  %v3639 = vunpack.c.h.b16 %v389
  %v3640 = vunpack.c.l.b16 %v390
  %v3641 = vunpack.c.h.b16 %v390
  %v3642 = vunpack.c.l.b16 %v391
  %v3643 = vunpack.c.h.b16 %v391
  %v3644 = vunpack.c.l.b16 %v392
  %v3645 = vunpack.c.h.b16 %v392
  %v3646 = vunpack.c.l.b16 %v393
  %v3647 = vunpack.c.h.b16 %v393
  %v3648 = vunpack.c.l.b16 %v394
  %v3649 = vunpack.c.h.b16 %v394
  %v3650 = vunpack.c.l.b16 %v395
  %v3651 = vunpack.c.h.b16 %v395
  %v3652 = vunpack.c.l.b16 %v396
  %v3653 = vunpack.c.h.b16 %v396
  %v3654 = vunpack.c.l.b16 %v397
  %v3655 = vunpack.c.h.b16 %v397
  %v3656 = vunpack.c.l.b16 %v398
  %v3657 = vunpack.c.h.b16 %v398
  %v3658 = vunpack.c.l.b16 %v399
  %v3659 = vunpack.c.h.b16 %v399
  %v3660 = vunpack.c.l.b16 %v400
  %v3661 = vunpack.c.h.b16 %v400
  %v3662 = vunpack.c.l.b16 %v401
  %v3663 = vunpack.c.h.b16 %v401
  %v3664 = vunpack.c.l.b16 %v402
  %v3665 = vunpack.c.h.b16 %v402
  %v3666 = vunpack.c.l.b16 %v403
  %v3667 = vunpack.c.h.b16 %v403
  %v3668 = vunpack.c.l.b16 %v404
  %v3669 = vunpack.c.h.b16 %v404
  %v3670 = vunpack.c.l.b16 %v405
  %v3671 = vunpack.c.h.b16 %v405
  %v3672 = vunpack.c.l.b16 %v406
  %v3673 = vunpack.c.h.b16 %v406
  %v3674 = vunpack.c.l.b16 %v407
  %v3675 = vunpack.c.h.b16 %v407
  %v3676 = vunpack.c.l.b16 %v408
  %v3677 = vunpack.c.h.b16 %v408
  %v3678 = vunpack.c.l.b16 %v409
  %v3679 = vunpack.c.h.b16 %v409
  %v3680 = vunpack.c.l.b16 %v410
  %v3681 = vunpack.c.h.b16 %v410
  %v3682 = vunpack.c.l.b16 %v411
  %v3683 = vunpack.c.h.b16 %v411
  %v3684 = vunpack.c.l.b16 %v412
  %v3685 = vunpack.c.h.b16 %v412
  %v3686 = vunpack.c.l.b16 %v413
  %v3687 = vunpack.c.h.b16 %v413
  %v3688 = vunpack.c.l.b16 %v414
  %v3689 = vunpack.c.h.b16 %v414
  %v3690 = vunpack.c.l.b16 %v415
  %v3691 = vunpack.c.h.b16 %v415
  %v3692 = vunpack.c.l.b16 %v416
  %v3693 = vunpack.c.h.b16 %v416
  %v3694 = vunpack.c.l.b16 %v417
  %v3695 = vunpack.c.h.b16 %v417
  %v3696 = vunpack.c.l.b16 %v418
  %v3697 = vunpack.c.h.b16 %v418
  %v3698 = vunpack.c.l.b16 %v419
  %v3699 = vunpack.c.h.b16 %v419
  %v3700 = vunpack.c.l.b16 %v420
  %v3701 = vunpack.c.h.b16 %v420
  %v3702 = vunpack.c.l.b16 %v421
  %v3703 = vunpack.c.h.b16 %v421
  %v3704 = vunpack.c.l.b16 %v422
  %v3705 = vunpack.c.h.b16 %v422
  %v3706 = vunpack.c.l.b16 %v423
  %v3707 = vunpack.c.h.b16 %v423
  %v3708 = vunpack.c.l.b16 %v424
  %v3709 = vunpack.c.h.b16 %v424
  %v3710 = vunpack.c.l.b16 %v425
  %v3711 = vunpack.c.h.b16 %v425
  %v3712 = vunpack.c.l.b16 %v426
  %v3713 = vunpack.c.h.b16 %v426
  %v3714 = vunpack.c.l.b16 %v427
  %v3715 = vunpack.c.h.b16 %v427
  %v3716 = vunpack.c.l.b16 %v428
  %v3717 = vunpack.c.h.b16 %v428
  %v3718 = vunpack.c.l.b16 %v429
  %v3719 = vunpack.c.h.b16 %v429
  %v3720 = vunpack.c.l.b16 %v430
  %v3721 = vunpack.c.h.b16 %v430
  %v3722 = vunpack.c.l.b16 %v431
  %v3723 = vunpack.c.h.b16 %v431
  %v3724 = vunpack.c.l.b16 %v432
  %v3725 = vunpack.c.h.b16 %v432
  %v3726 = vunpack.c.l.b16 %v433
  %v3727 = vunpack.c.h.b16 %v433
  %v3728 = vunpack.c.l.b16 %v434
  %v3729 = vunpack.c.h.b16 %v434
  %v3730 = vunpack.c.l.b16 %v435
  %v3731 = vunpack.c.h.b16 %v435
  %v3732 = vunpack.c.l.b16 %v436
  %v3733 = vunpack.c.h.b16 %v436
  %v3734 = vunpack.c.l.b16 %v437
  %v3735 = vunpack.c.h.b16 %v437
  %v3736 = vunpack.c.l.b16 %v438
  %v3737 = vunpack.c.h.b16 %v438
  %v3738 = vunpack.c.l.b16 %v439
  %v3739 = vunpack.c.h.b16 %v439
  %v3740 = vunpack.c.l.b16 %v440
  %v3741 = vunpack.c.h.b16 %v440
  %v3742 = vunpack.c.l.b16 %v441
  %v3743 = vunpack.c.h.b16 %v441
  %v3744 = vunpack.c.l.b16 %v442
  %v3745 = vunpack.c.h.b16 %v442
  %v3746 = vunpack.c.l.b16 %v443
  %v3747 = vunpack.c.h.b16 %v443
  %v3748 = vunpack.c.l.b16 %v444
  %v3749 = vunpack.c.h.b16 %v444
  %v3750 = vunpack.c.l.b16 %v445
  %v3751 = vunpack.c.h.b16 %v445
  %v3752 = vunpack.c.l.b16 %v446
  %v3753 = vunpack.c.h.b16 %v446
  %v3754 = vunpack.c.l.b16 %v447
  %v3755 = vunpack.c.h.b16 %v447
  %v3756 = vunpack.c.l.b16 %v448
  %v3757 = vunpack.c.h.b16 %v448
  %v3758 = vunpack.c.l.b16 %v449
  %v3759 = vunpack.c.h.b16 %v449
  %v3760 = vunpack.c.l.b16 %v450
  %v3761 = vunpack.c.h.b16 %v450
  %v3762 = vunpack.c.l.b16 %v451
  %v3763 = vunpack.c.h.b16 %v451
  %v3764 = vunpack.c.l.b16 %v452
  %v3765 = vunpack.c.h.b16 %v452
  %v3766 = vunpack.c.l.b16 %v453
  %v3767 = vunpack.c.h.b16 %v453
  %v3768 = vunpack.c.l.b16 %v454
  %v3769 = vunpack.c.h.b16 %v454
  %v3770 = vunpack.c.l.b16 %v455
  %v3771 = vunpack.c.h.b16 %v455
  %v3772 = vunpack.c.l.b16 %v456
  %v3773 = vunpack.c.h.b16 %v456
  %v3774 = vunpack.c.l.b16 %v457
  %v3775 = vunpack.c.h.b16 %v457
  %v3776 = vunpack.c.l.b16 %v458
  %v3777 = vunpack.c.h.b16 %v458
  %v3778 = vunpack.c.l.b16 %v459
  %v3779 = vunpack.c.h.b16 %v459
  %v3780 = vunpack.c.l.b16 %v460
  %v3781 = vunpack.c.h.b16 %v460
  %v3782 = vunpack.c.l.b16 %v461
  %v3783 = vunpack.c.h.b16 %v461
  %v3784 = vunpack.c.l.b16 %v462
  %v3785 = vunpack.c.h.b16 %v462
  %v3786 = vunpack.c.l.b16 %v463
  %v3787 = vunpack.c.h.b16 %v463
  %v3788 = vunpack.c.l.b16 %v464
  %v3789 = vunpack.c.h.b16 %v464
  %v3790 = vunpack.c.l.b16 %v465
  %v3791 = vunpack.c.h.b16 %v465
  %v3792 = vunpack.c.l.b16 %v466
  %v3793 = vunpack.c.h.b16 %v466
  %v3794 = vunpack.c.l.b16 %v467
  %v3795 = vunpack.c.h.b16 %v467
  %v3796 = vunpack.c.l.b16 %v468
  %v3797 = vunpack.c.h.b16 %v468
  %v3798 = vunpack.c.l.b16 %v469
  %v3799 = vunpack.c.h.b16 %v469
  %v3800 = vunpack.c.l.b16 %v470
  %v3801 = vunpack.c.h.b16 %v470
  %v3802 = vunpack.c.l.b16 %v471
  %v3803 = vunpack.c.h.b16 %v471
  %v3804 = vunpack.c.l.b16 %v472
  %v3805 = vunpack.c.h.b16 %v472
  %v3806 = vunpack.c.l.b16 %v473
  %v3807 = vunpack.c.h.b16 %v473
  %v3808 = vunpack.c.l.b16 %v474
  %v3809 = vunpack.c.h.b16 %v474
  %v3810 = vunpack.c.l.b16 %v475
  %v3811 = vunpack.c.h.b16 %v475
  %v3812 = vunpack.c.l.b16 %v476
  %v3813 = vunpack.c.h.b16 %v476
  %v3814 = vunpack.c.l.b16 %v477
  %v3815 = vunpack.c.h.b16 %v477
  %v3816 = vunpack.c.l.b16 %v478
  %v3817 = vunpack.c.h.b16 %v478
  %v3818 = vunpack.c.l.b16 %v479
  %v3819 = vunpack.c.h.b16 %v479
  %v3820 = vunpack.c.l.b16 %v480
  %v3821 = vunpack.c.h.b16 %v480
  %v3822 = vunpack.c.l.b16 %v481
  %v3823 = vunpack.c.h.b16 %v481
  %v3824 = vunpack.c.l.b16 %v482
  %v3825 = vunpack.c.h.b16 %v482
  %v3826 = vunpack.c.l.b16 %v483
  %v3827 = vunpack.c.h.b16 %v483
  %v3828 = vunpack.c.l.b16 %v484
  %v3829 = vunpack.c.h.b16 %v484
  %v3830 = vunpack.c.l.b16 %v485
  %v3831 = vunpack.c.h.b16 %v485
  %v3832 = vunpack.c.l.b16 %v486
  %v3833 = vunpack.c.h.b16 %v486
  %v3834 = vunpack.c.l.b16 %v487
  %v3835 = vunpack.c.h.b16 %v487
  %v3836 = vunpack.c.l.b16 %v488
  %v3837 = vunpack.c.h.b16 %v488
  %v3838 = vunpack.c.l.b16 %v489
  %v3839 = vunpack.c.h.b16 %v489
  %v3840 = vunpack.c.l.b16 %v490
  %v3841 = vunpack.c.h.b16 %v490
  %v3842 = vunpack.c.l.b16 %v491
  %v3843 = vunpack.c.h.b16 %v491
  %v3844 = vunpack.c.l.b16 %v492
  %v3845 = vunpack.c.h.b16 %v492
  %v3846 = vunpack.c.l.b16 %v493
  %v3847 = vunpack.c.h.b16 %v493
  %v3848 = vunpack.c.l.b16 %v494
  %v3849 = vunpack.c.h.b16 %v494
  %v3850 = vunpack.c.l.b16 %v495
  %v3851 = vunpack.c.h.b16 %v495
  %v3852 = vunpack.c.l.b16 %v496
  %v3853 = vunpack.c.h.b16 %v496
  %v3854 = vunpack.c.l.b16 %v497
  %v3855 = vunpack.c.h.b16 %v497
  %v3856 = vunpack.c.l.b16 %v498
  %v3857 = vunpack.c.h.b16 %v498
  %v3858 = vunpack.c.l.b16 %v499
  %v3859 = vunpack.c.h.b16 %v499
  %v3860 = vunpack.c.l.b16 %v500
  %v3861 = vunpack.c.h.b16 %v500
  %v3862 = vunpack.c.l.b16 %v501
  %v3863 = vunpack.c.h.b16 %v501
  %v3864 = vunpack.c.l.b16 %v502
  %v3865 = vunpack.c.h.b16 %v502
  %v3866 = vunpack.c.l.b16 %v503
  %v3867 = vunpack.c.h.b16 %v503
  %v3868 = vunpack.c.l.b16 %v504
  %v3869 = vunpack.c.h.b16 %v504
  %v3870 = vunpack.c.l.b16 %v505
  %v3871 = vunpack.c.h.b16 %v505
  %v3872 = vunpack.c.l.b16 %v506
  %v3873 = vunpack.c.h.b16 %v506
  %v3874 = vunpack.c.l.b16 %v507
  %v3875 = vunpack.c.h.b16 %v507
  %v3876 = vunpack.c.l.b16 %v508
  %v3877 = vunpack.c.h.b16 %v508
  %v3878 = vunpack.c.l.b16 %v509
  %v3879 = vunpack.c.h.b16 %v509
  %v3880 = vunpack.c.l.b16 %v510
  %v3881 = vunpack.c.h.b16 %v510
  %v3882 = vunpack.c.l.b16 %v511
  %v3883 = vunpack.c.h.b16 %v511
  %v3884 = vunpack.c.l.b16 %v512
  %v3885 = vunpack.c.h.b16 %v512
  %v3886 = vunpack.c.l.b16 %v513
  %v3887 = vunpack.c.h.b16 %v513
  %v3888 = vunpack.c.l.b16 %v514
  %v3889 = vunpack.c.h.b16 %v514
  %v3890 = vunpack.c.l.b16 %v515
  %v3891 = vunpack.c.h.b16 %v515
  %v3892 = vunpack.c.l.b16 %v516
  %v3893 = vunpack.c.h.b16 %v516
  %v3894 = vunpack.c.l.b16 %v517
  %v3895 = vunpack.c.h.b16 %v517
  %v3896 = vunpack.c.l.b16 %v518
  %v3897 = vunpack.c.h.b16 %v518
  %v3898 = vunpack.c.l.b16 %v519
  %v3899 = vunpack.c.h.b16 %v519
  %v3900 = vunpack.c.l.b16 %v520
  %v3901 = vunpack.c.h.b16 %v520
  %v3902 = vunpack.c.l.b16 %v521
  %v3903 = vunpack.c.h.b16 %v521
  %v3904 = vunpack.c.l.b16 %v522
  %v3905 = vunpack.c.h.b16 %v522
  %v3906 = vunpack.c.l.b16 %v523
  %v3907 = vunpack.c.h.b16 %v523
  %v3908 = vunpack.c.l.b16 %v524
  %v3909 = vunpack.c.h.b16 %v524
  %v3910 = vunpack.c.l.b16 %v525
  %v3911 = vunpack.c.h.b16 %v525
  %v3912 = vunpack.c.l.b16 %v526
  %v3913 = vunpack.c.h.b16 %v526
  %v3914 = vunpack.c.l.b16 %v527
  %v3915 = vunpack.c.h.b16 %v527
  %v3916 = vunpack.c.l.b16 %v528
  %v3917 = vunpack.c.h.b16 %v528
  %v3918 = vunpack.c.l.b16 %v529
  %v3919 = vunpack.c.h.b16 %v529
  %v3920 = vunpack.c.l.b16 %v530
  %v3921 = vunpack.c.h.b16 %v530
  %v3922 = vunpack.c.l.b16 %v531
  %v3923 = vunpack.c.h.b16 %v531
  %v3924 = vunpack.c.l.b16 %v532
  %v3925 = vunpack.c.h.b16 %v532
  %v3926 = vunpack.c.l.b16 %v533
  %v3927 = vunpack.c.h.b16 %v533
  %v3928 = vunpack.c.l.b16 %v534
  %v3929 = vunpack.c.h.b16 %v534
  %v3930 = vunpack.c.l.b16 %v535
  %v3931 = vunpack.c.h.b16 %v535
  %v3932 = vunpack.c.l.b16 %v536
  %v3933 = vunpack.c.h.b16 %v536
  %v3934 = vunpack.c.l.b16 %v537
  %v3935 = vunpack.c.h.b16 %v537
  %v3936 = vunpack.c.l.b16 %v538
  %v3937 = vunpack.c.h.b16 %v538
  %v3938 = vunpack.c.l.b16 %v539
  %v3939 = vunpack.c.h.b16 %v539
  %v3940 = vunpack.c.l.b16 %v540
  %v3941 = vunpack.c.h.b16 %v540
  %v3942 = vunpack.c.l.b16 %v541
  %v3943 = vunpack.c.h.b16 %v541
  %v3944 = vunpack.c.l.b16 %v542
  %v3945 = vunpack.c.h.b16 %v542
  %v3946 = vunpack.c.l.b16 %v543
  %v3947 = vunpack.c.h.b16 %v543
  %v3948 = vunpack.c.l.b16 %v544
  %v3949 = vunpack.c.h.b16 %v544
  %v3950 = vunpack.c.l.b16 %v545
  %v3951 = vunpack.c.h.b16 %v545
  %v3952 = vunpack.c.l.b16 %v546
  %v3953 = vunpack.c.h.b16 %v546
  %v3954 = vunpack.c.l.b16 %v547
  %v3955 = vunpack.c.h.b16 %v547
  %v3956 = vunpack.c.l.b16 %v548
  %v3957 = vunpack.c.h.b16 %v548
  %v3958 = vunpack.c.l.b16 %v549
  %v3959 = vunpack.c.h.b16 %v549
  %v3960 = vunpack.c.l.b16 %v550
  %v3961 = vunpack.c.h.b16 %v550
  %v3962 = vunpack.c.l.b16 %v551
  %v3963 = vunpack.c.h.b16 %v551
  %v3964 = vunpack.c.l.b16 %v552
  %v3965 = vunpack.c.h.b16 %v552
  %v3966 = vunpack.c.l.b16 %v553
  %v3967 = vunpack.c.h.b16 %v553
  %v3968 = vunpack.c.l.b16 %v554
  %v3969 = vunpack.c.h.b16 %v554
  %v3970 = vunpack.c.l.b16 %v555
  %v3971 = vunpack.c.h.b16 %v555
  %v3972 = vunpack.c.l.b16 %v556
  %v3973 = vunpack.c.h.b16 %v556
  %v3974 = vunpack.c.l.b16 %v557
  %v3975 = vunpack.c.h.b16 %v557
  %v3976 = vunpack.c.l.b16 %v558
  %v3977 = vunpack.c.h.b16 %v558
  %v3978 = vunpack.c.l.b16 %v559
  %v3979 = vunpack.c.h.b16 %v559
  %v3980 = vunpack.c.l.b16 %v560
  %v3981 = vunpack.c.h.b16 %v560
  %v3982 = vunpack.c.l.b16 %v561
  %v3983 = vunpack.c.h.b16 %v561
  %v3984 = vunpack.c.l.b16 %v562
  %v3985 = vunpack.c.h.b16 %v562
  %v3986 = vunpack.c.l.b16 %v563
  %v3987 = vunpack.c.h.b16 %v563
  %v3988 = vunpack.c.l.b16 %v564
  %v3989 = vunpack.c.h.b16 %v564
  %v3990 = vunpack.c.l.b16 %v565
  %v3991 = vunpack.c.h.b16 %v565
  %v3992 = vunpack.c.l.b16 %v566
  %v3993 = vunpack.c.h.b16 %v566
  %v3994 = vunpack.c.l.b16 %v567
  %v3995 = vunpack.c.h.b16 %v567
  %v3996 = vunpack.c.l.b16 %v568
  %v3997 = vunpack.c.h.b16 %v568
  %v3998 = vunpack.c.l.b16 %v569
  %v3999 = vunpack.c.h.b16 %v569
  %v4000 = vunpack.c.l.b16 %v570
  %v4001 = vunpack.c.h.b16 %v570
  %v4002 = vunpack.c.l.b16 %v571
  %v4003 = vunpack.c.h.b16 %v571
  %v4004 = vunpack.c.l.b16 %v572
  %v4005 = vunpack.c.h.b16 %v572
  %v4006 = vunpack.c.l.b16 %v573
  %v4007 = vunpack.c.h.b16 %v573
  %v4008 = vunpack.c.l.b16 %v574
  %v4009 = vunpack.c.h.b16 %v574
  %v4010 = vunpack.c.l.b16 %v575
  %v4011 = vunpack.c.h.b16 %v575
  %v4012 = vunpack.c.l.b16 %v576
  %v4013 = vunpack.c.h.b16 %v576
  %v4014 = vunpack.c.l.b16 %v577
  %v4015 = vunpack.c.h.b16 %v577
  %v4016 = vunpack.c.l.b16 %v578
  %v4017 = vunpack.c.h.b16 %v578
  %v4018 = vunpack.c.l.b16 %v579
  %v4019 = vunpack.c.h.b16 %v579
  %v4020 = vunpack.c.l.b16 %v580
  %v4021 = vunpack.c.h.b16 %v580
  %v4022 = vunpack.c.l.b16 %v581
  %v4023 = vunpack.c.h.b16 %v581
  %v4024 = vunpack.c.l.b16 %v582
  %v4025 = vunpack.c.h.b16 %v582
  %v4026 = vunpack.c.l.b16 %v583
  %v4027 = vunpack.c.h.b16 %v583
  %v4028 = vunpack.c.l.b16 %v584
  %v4029 = vunpack.c.h.b16 %v584
  %v4030 = vunpack.c.l.b16 %v585
  %v4031 = vunpack.c.h.b16 %v585
  %v4032 = vunpack.c.l.b16 %v586
  %v4033 = vunpack.c.h.b16 %v586
  %v4034 = vunpack.c.l.b16 %v587
  %v4035 = vunpack.c.h.b16 %v587
  %v4036 = vunpack.c.l.b16 %v588
  %v4037 = vunpack.c.h.b16 %v588
  %v4038 = vunpack.c.l.b16 %v589
  %v4039 = vunpack.c.h.b16 %v589
  %v4040 = vunpack.c.l.b16 %v590
  %v4041 = vunpack.c.h.b16 %v590
  %v4042 = vunpack.c.l.b16 %v591
  %v4043 = vunpack.c.h.b16 %v591
  %v4044 = vunpack.c.l.b16 %v592
  %v4045 = vunpack.c.h.b16 %v592
  %v4046 = vunpack.c.l.b16 %v593
  %v4047 = vunpack.c.h.b16 %v593
  %v4048 = vunpack.c.l.b16 %v594
  %v4049 = vunpack.c.h.b16 %v594
  %v4050 = vunpack.c.l.b16 %v595
  %v4051 = vunpack.c.h.b16 %v595
  %v4052 = vunpack.c.l.b16 %v596
  %v4053 = vunpack.c.h.b16 %v596
  %v4054 = vunpack.c.l.b16 %v597
  %v4055 = vunpack.c.h.b16 %v597
  %v4056 = vunpack.c.l.b16 %v598
  %v4057 = vunpack.c.h.b16 %v598
  %v4058 = vunpack.c.l.b16 %v599
  %v4059 = vunpack.c.h.b16 %v599
  %v4060 = vunpack.c.l.b16 %v600
  %v4061 = vunpack.c.h.b16 %v600
  %v4062 = vunpack.c.l.b16 %v601
  %v4063 = vunpack.c.h.b16 %v601
  %v4064 = vunpack.c.l.b16 %v602
  %v4065 = vunpack.c.h.b16 %v602
  %v4066 = vunpack.c.l.b16 %v603
  %v4067 = vunpack.c.h.b16 %v603
  %v4068 = vunpack.c.l.b16 %v604
  %v4069 = vunpack.c.h.b16 %v604
  %v4070 = vunpack.c.l.b16 %v605
  %v4071 = vunpack.c.h.b16 %v605
  %v4072 = vunpack.c.l.b16 %v606
  %v4073 = vunpack.c.h.b16 %v606
  %v4074 = vunpack.c.l.b16 %v607
  %v4075 = vunpack.c.h.b16 %v607
  %v4076 = vunpack.c.l.b16 %v608
  %v4077 = vunpack.c.h.b16 %v608
  %v4078 = vunpack.c.l.b16 %v609
  %v4079 = vunpack.c.h.b16 %v609
  %v4080 = vunpack.c.l.b16 %v610
  %v4081 = vunpack.c.h.b16 %v610
  %v4082 = vunpack.c.l.b16 %v611
  %v4083 = vunpack.c.h.b16 %v611
  %v4084 = vunpack.c.l.b16 %v612
  %v4085 = vunpack.c.h.b16 %v612
  %v4086 = vunpack.c.l.b16 %v613
  %v4087 = vunpack.c.h.b16 %v613
  %v4088 = vunpack.c.l.b16 %v614
  %v4089 = vunpack.c.h.b16 %v614
  %v4090 = vunpack.c.l.b16 %v615
  %v4091 = vunpack.c.h.b16 %v615
  %v4092 = vunpack.c.l.b16 %v616
  %v4093 = vunpack.c.h.b16 %v616
  %v4094 = vunpack.c.l.b16 %v617
  %v4095 = vunpack.c.h.b16 %v617
  %v4096 = vunpack.c.l.b16 %v618
  %v4097 = vunpack.c.h.b16 %v618
  %v4098 = vunpack.c.l.b16 %v619
  %v4099 = vunpack.c.h.b16 %v619
  %v4100 = vunpack.c.l.b16 %v620
  %v4101 = vunpack.c.h.b16 %v620
  %v4102 = vunpack.c.l.b16 %v621
  %v4103 = vunpack.c.h.b16 %v621
  %v4104 = vunpack.c.l.b16 %v622
  %v4105 = vunpack.c.h.b16 %v622
  %v4106 = vunpack.c.l.b16 %v623
  %v4107 = vunpack.c.h.b16 %v623
  %v4108 = vunpack.c.l.b16 %v624
  %v4109 = vunpack.c.h.b16 %v624
  %v4110 = vunpack.c.l.b16 %v625
  %v4111 = vunpack.c.h.b16 %v625
  %v4112 = vunpack.c.l.b16 %v626
  %v4113 = vunpack.c.h.b16 %v626
  %v4114 = vunpack.c.l.b16 %v627
  %v4115 = vunpack.c.h.b16 %v627
  %v4116 = vunpack.c.l.b16 %v628
  %v4117 = vunpack.c.h.b16 %v628
  %v4118 = vunpack.c.l.b16 %v629
  %v4119 = vunpack.c.h.b16 %v629
  %v4120 = vunpack.c.l.b16 %v630
  %v4121 = vunpack.c.h.b16 %v630
  %v4122 = vunpack.c.l.b16 %v631
  %v4123 = vunpack.c.h.b16 %v631
  %v4124 = vunpack.c.l.b16 %v632
  %v4125 = vunpack.c.h.b16 %v632
  %v4126 = vunpack.c.l.b16 %v633
  %v4127 = vunpack.c.h.b16 %v633
  %v4128 = vunpack.c.l.b16 %v634
  %v4129 = vunpack.c.h.b16 %v634
  %v4130 = vunpack.c.l.b16 %v635
  %v4131 = vunpack.c.h.b16 %v635
  %v4132 = vunpack.c.l.b16 %v636
  %v4133 = vunpack.c.h.b16 %v636
  %v4134 = vunpack.c.l.b16 %v637
  %v4135 = vunpack.c.h.b16 %v637
  %v4136 = vunpack.c.l.b16 %v638
  %v4137 = vunpack.c.h.b16 %v638
  %v4138 = vunpack.c.l.b16 %v639
  %v4139 = vunpack.c.h.b16 %v639
  %v4140 = vunpack.c.l.b16 %v640
  %v4141 = vunpack.c.h.b16 %v640
  %v4142 = vunpack.c.l.b16 %v641
  %v4143 = vunpack.c.h.b16 %v641
  %v4144 = vunpack.c.l.b16 %v642
  %v4145 = vunpack.c.h.b16 %v642
  %v4146 = vunpack.c.l.b16 %v643
  %v4147 = vunpack.c.h.b16 %v643
  %v4148 = vunpack.c.l.b16 %v644
  %v4149 = vunpack.c.h.b16 %v644
  %v4150 = vunpack.c.l.b16 %v645
  %v4151 = vunpack.c.h.b16 %v645
  %v4152 = vunpack.c.l.b16 %v646
  %v4153 = vunpack.c.h.b16 %v646
  %v4154 = vunpack.c.l.b16 %v647
  %v4155 = vunpack.c.h.b16 %v647
  %v4156 = vunpack.c.l.b16 %v648
  %v4157 = vunpack.c.h.b16 %v648
  %v4158 = vunpack.c.l.b16 %v649
  %v4159 = vunpack.c.h.b16 %v649
  %v4160 = vunpack.c.l.b16 %v650
  %v4161 = vunpack.c.h.b16 %v650
  %v4162 = vunpack.c.l.b16 %v651
  %v4163 = vunpack.c.h.b16 %v651
  %v4164 = vunpack.c.l.b16 %v652
  %v4165 = vunpack.c.h.b16 %v652
  %v4166 = vunpack.c.l.b16 %v653
  %v4167 = vunpack.c.h.b16 %v653
  %v4168 = vunpack.c.l.b16 %v654
  %v4169 = vunpack.c.h.b16 %v654
  %v4170 = vunpack.c.l.b16 %v655
  %v4171 = vunpack.c.h.b16 %v655
  %v4172 = vunpack.c.l.b16 %v656
  %v4173 = vunpack.c.h.b16 %v656
  %v4174 = vunpack.c.l.b16 %v657
  %v4175 = vunpack.c.h.b16 %v657
  %v4176 = vunpack.c.l.b16 %v658
  %v4177 = vunpack.c.h.b16 %v658
  %v4178 = vunpack.c.l.b16 %v659
  %v4179 = vunpack.c.h.b16 %v659
  %v4180 = vunpack.c.l.b16 %v660
  %v4181 = vunpack.c.h.b16 %v660
  %v4182 = vunpack.c.l.b16 %v661
  %v4183 = vunpack.c.h.b16 %v661
  %v4184 = vunpack.c.l.b16 %v662
  %v4185 = vunpack.c.h.b16 %v662
  %v4186 = vunpack.c.l.b16 %v663
  %v4187 = vunpack.c.h.b16 %v663
  %v4188 = vunpack.c.l.b16 %v664
  %v4189 = vunpack.c.h.b16 %v664
  %v4190 = vunpack.c.l.b16 %v665
  %v4191 = vunpack.c.h.b16 %v665
  %v4192 = vunpack.c.l.b16 %v666
  %v4193 = vunpack.c.h.b16 %v666
  %v4194 = vunpack.c.l.b16 %v667
  %v4195 = vunpack.c.h.b16 %v667
  %v4196 = vunpack.c.l.b16 %v668
  %v4197 = vunpack.c.h.b16 %v668
  %v4198 = vunpack.c.l.b16 %v669
  %v4199 = vunpack.c.h.b16 %v669
  %v4200 = vunpack.c.l.b16 %v670
  %v4201 = vunpack.c.h.b16 %v670
  %v4202 = vunpack.c.l.b16 %v671
  %v4203 = vunpack.c.h.b16 %v671
  %v4204 = vunpack.c.l.b16 %v672
  %v4205 = vunpack.c.h.b16 %v672
  %v4206 = vunpack.c.l.b16 %v673
  %v4207 = vunpack.c.h.b16 %v673
  %v4208 = vunpack.c.l.b16 %v674
  %v4209 = vunpack.c.h.b16 %v674
  %v4210 = vunpack.c.l.b16 %v675
  %v4211 = vunpack.c.h.b16 %v675
  %v4212 = vunpack.c.l.b16 %v676
  %v4213 = vunpack.c.h.b16 %v676
  %v4214 = vunpack.c.l.b16 %v677
  %v4215 = vunpack.c.h.b16 %v677
  %v4216 = vunpack.c.l.b16 %v678
  %v4217 = vunpack.c.h.b16 %v678
  %v4218 = vunpack.c.l.b16 %v679
  %v4219 = vunpack.c.h.b16 %v679
  %v4220 = vunpack.c.l.b16 %v680
  %v4221 = vunpack.c.h.b16 %v680
  %v4222 = vunpack.c.l.b16 %v681
  %v4223 = vunpack.c.h.b16 %v681
  %v4224 = vunpack.c.l.b16 %v682
  %v4225 = vunpack.c.h.b16 %v682
  %v4226 = vunpack.c.l.b16 %v683
  %v4227 = vunpack.c.h.b16 %v683
  %v4228 = vunpack.c.l.b16 %v684
  %v4229 = vunpack.c.h.b16 %v684
  %v4230 = vunpack.c.l.b16 %v685
  %v4231 = vunpack.c.h.b16 %v685
  %v4232 = vunpack.c.l.b16 %v686
  %v4233 = vunpack.c.h.b16 %v686
  %v4234 = vunpack.c.l.b16 %v687
  %v4235 = vunpack.c.h.b16 %v687
  %v4236 = vunpack.c.l.b16 %v688
  %v4237 = vunpack.c.h.b16 %v688
  %v4238 = vunpack.c.l.b16 %v689
  %v4239 = vunpack.c.h.b16 %v689
  %v4240 = vunpack.c.l.b16 %v690
  %v4241 = vunpack.c.h.b16 %v690
  %v4242 = vunpack.c.l.b16 %v691
  %v4243 = vunpack.c.h.b16 %v691
  %v4244 = vunpack.c.l.b16 %v692
  %v4245 = vunpack.c.h.b16 %v692
  %v4246 = vunpack.c.l.b16 %v693
  %v4247 = vunpack.c.h.b16 %v693
  %v4248 = vunpack.c.l.b16 %v694
  %v4249 = vunpack.c.h.b16 %v694
  %v4250 = vunpack.c.l.b16 %v695
  %v4251 = vunpack.c.h.b16 %v695
  %v4252 = vunpack.c.l.b16 %v696
  %v4253 = vunpack.c.h.b16 %v696
  %v4254 = vunpack.c.l.b16 %v697
  %v4255 = vunpack.c.h.b16 %v697
  %v4256 = vunpack.c.l.b16 %v698
  %v4257 = vunpack.c.h.b16 %v698
  %v4258 = vunpack.c.l.b16 %v699
  %v4259 = vunpack.c.h.b16 %v699
  %v4260 = vunpack.c.l.b16 %v700
  %v4261 = vunpack.c.h.b16 %v700
  %v4262 = vunpack.c.l.b16 %v701
  %v4263 = vunpack.c.h.b16 %v701
  %v4264 = vunpack.c.l.b16 %v702
  %v4265 = vunpack.c.h.b16 %v702
  %v4266 = vunpack.c.l.b16 %v703
  %v4267 = vunpack.c.h.b16 %v703
  %v4268 = vunpack.c.l.b16 %v704
  %v4269 = vunpack.c.h.b16 %v704
  %v4270 = vunpack.c.l.b16 %v705
  %v4271 = vunpack.c.h.b16 %v705
  %v4272 = vunpack.c.l.b16 %v706
  %v4273 = vunpack.c.h.b16 %v706
  %v4274 = vunpack.c.l.b16 %v707
  %v4275 = vunpack.c.h.b16 %v707
  %v4276 = vunpack.c.l.b16 %v708
  %v4277 = vunpack.c.h.b16 %v708
  %v4278 = vunpack.c.l.b16 %v709
  %v4279 = vunpack.c.h.b16 %v709
  %v4280 = vunpack.c.l.b16 %v710
  %v4281 = vunpack.c.h.b16 %v710
  %v4282 = vunpack.c.l.b16 %v711
  %v4283 = vunpack.c.h.b16 %v711
  %v4284 = vunpack.c.l.b16 %v712
  %v4285 = vunpack.c.h.b16 %v712
  %v4286 = vunpack.c.l.b16 %v713
  %v4287 = vunpack.c.h.b16 %v713
  %v4288 = vunpack.c.l.b16 %v714
  %v4289 = vunpack.c.h.b16 %v714
  %v4290 = vunpack.c.l.b16 %v715
  %v4291 = vunpack.c.h.b16 %v715
  %v4292 = vunpack.c.l.b16 %v716
  %v4293 = vunpack.c.h.b16 %v716
  %v4294 = vunpack.c.l.b16 %v717
  %v4295 = vunpack.c.h.b16 %v717
  %v4296 = vunpack.c.l.b16 %v718
  %v4297 = vunpack.c.h.b16 %v718
  %v4298 = vunpack.c.l.b16 %v719
  %v4299 = vunpack.c.h.b16 %v719
  %v4300 = vunpack.c.l.b16 %v720
  %v4301 = vunpack.c.h.b16 %v720
  %v4302 = vunpack.c.l.b16 %v721
  %v4303 = vunpack.c.h.b16 %v721
  %v4304 = vunpack.c.l.b16 %v722
  %v4305 = vunpack.c.h.b16 %v722
  %v4306 = vunpack.c.l.b16 %v723
  %v4307 = vunpack.c.h.b16 %v723
  %v4308 = vunpack.c.l.b16 %v724
  %v4309 = vunpack.c.h.b16 %v724
  %v4310 = vunpack.c.l.b16 %v725
  %v4311 = vunpack.c.h.b16 %v725
  %v4312 = vunpack.c.l.b16 %v726
  %v4313 = vunpack.c.h.b16 %v726
  %v4314 = vunpack.c.l.b16 %v727
  %v4315 = vunpack.c.h.b16 %v727
  %v4316 = vunpack.c.l.b16 %v728
  %v4317 = vunpack.c.h.b16 %v728
  %v4318 = vunpack.c.l.b16 %v729
  %v4319 = vunpack.c.h.b16 %v729
  %v4320 = vunpack.c.l.b16 %v730
  %v4321 = vunpack.c.h.b16 %v730
  %v4322 = vunpack.c.l.b16 %v731
  %v4323 = vunpack.c.h.b16 %v731
  %v4324 = vunpack.c.l.b16 %v732
  %v4325 = vunpack.c.h.b16 %v732
  %v4326 = vunpack.c.l.b16 %v733
  %v4327 = vunpack.c.h.b16 %v733
  %v4328 = vunpack.c.l.b16 %v734
  %v4329 = vunpack.c.h.b16 %v734
  %v4330 = vunpack.c.l.b16 %v735
  %v4331 = vunpack.c.h.b16 %v735
  %v4332 = vunpack.c.l.b16 %v736
  %v4333 = vunpack.c.h.b16 %v736
  %v4334 = vunpack.c.l.b16 %v737
  %v4335 = vunpack.c.h.b16 %v737
  %v4336 = vunpack.c.l.b16 %v738
  %v4337 = vunpack.c.h.b16 %v738
  %v4338 = vunpack.c.l.b16 %v739
  %v4339 = vunpack.c.h.b16 %v739
  %v4340 = vunpack.c.l.b16 %v740
  %v4341 = vunpack.c.h.b16 %v740
  %v4342 = vunpack.c.l.b16 %v741
  %v4343 = vunpack.c.h.b16 %v741
  %v4344 = vunpack.c.l.b16 %v742
  %v4345 = vunpack.c.h.b16 %v742
  %v4346 = vunpack.c.l.b16 %v743
  %v4347 = vunpack.c.h.b16 %v743
  %v4348 = vunpack.c.l.b16 %v744
  %v4349 = vunpack.c.h.b16 %v744
  %v4350 = vunpack.c.l.b16 %v745
  %v4351 = vunpack.c.h.b16 %v745
  %v4352 = vunpack.c.l.b16 %v746
  %v4353 = vunpack.c.h.b16 %v746
  %v4354 = vunpack.c.l.b16 %v747
  %v4355 = vunpack.c.h.b16 %v747
  %v4356 = vunpack.c.l.b16 %v748
  %v4357 = vunpack.c.h.b16 %v748
  %v4358 = vunpack.c.l.b16 %v749
  %v4359 = vunpack.c.h.b16 %v749
  %v4360 = vunpack.c.l.b16 %v750
  %v4361 = vunpack.c.h.b16 %v750
  %v4362 = vunpack.c.l.b16 %v751
  %v4363 = vunpack.c.h.b16 %v751
  %v4364 = vunpack.c.l.b16 %v752
  %v4365 = vunpack.c.h.b16 %v752
  %v4366 = vunpack.c.l.b16 %v753
  %v4367 = vunpack.c.h.b16 %v753
  %v4368 = vunpack.c.l.b16 %v754
  %v4369 = vunpack.c.h.b16 %v754
  %v4370 = vunpack.c.l.b16 %v755
  %v4371 = vunpack.c.h.b16 %v755
  %v4372 = vunpack.c.l.b16 %v756
  %v4373 = vunpack.c.h.b16 %v756
  %v4374 = vunpack.c.l.b16 %v757
  %v4375 = vunpack.c.h.b16 %v757
  %v4376 = vunpack.c.l.b16 %v758
  %v4377 = vunpack.c.h.b16 %v758
  %v4378 = vunpack.c.l.b16 %v759
  %v4379 = vunpack.c.h.b16 %v759
  %v4380 = vunpack.c.l.b16 %v760
  %v4381 = vunpack.c.h.b16 %v760
  %v4382 = vunpack.c.l.b16 %v761
  %v4383 = vunpack.c.h.b16 %v761
  %v4384 = vunpack.c.l.b16 %v762
  %v4385 = vunpack.c.h.b16 %v762
  %v4386 = vunpack.c.l.b16 %v763
  %v4387 = vunpack.c.h.b16 %v763
  %v4388 = vunpack.c.l.b16 %v764
  %v4389 = vunpack.c.h.b16 %v764
  %v4390 = vunpack.c.l.b16 %v765
  %v4391 = vunpack.c.h.b16 %v765
  %v4392 = vunpack.c.l.b16 %v766
  %v4393 = vunpack.c.h.b16 %v766
  %v4394 = vunpack.c.l.b16 %v767
  %v4395 = vunpack.c.h.b16 %v767
  %v4396 = vunpack.c.l.b16 %v768
  %v4397 = vunpack.c.h.b16 %v768
  %v4398 = vunpack.c.l.b16 %v769
  %v4399 = vunpack.c.h.b16 %v769
  %v4400 = vunpack.c.l.b16 %v770
  %v4401 = vunpack.c.h.b16 %v770
  %v4402 = vunpack.c.l.b16 %v771
  %v4403 = vunpack.c.h.b16 %v771
  %v4404 = vunpack.c.l.b16 %v772
  %v4405 = vunpack.c.h.b16 %v772
  %v4406 = vunpack.c.l.b16 %v773
  %v4407 = vunpack.c.h.b16 %v773
  %v4408 = vunpack.c.l.b16 %v774
  %v4409 = vunpack.c.h.b16 %v774
  %v4410 = vunpack.c.l.b16 %v775
  %v4411 = vunpack.c.h.b16 %v775
  %v4412 = vunpack.c.l.b16 %v776
  %v4413 = vunpack.c.h.b16 %v776
  %v4414 = vunpack.c.l.b16 %v777
  %v4415 = vunpack.c.h.b16 %v777
  %v4416 = vunpack.c.l.b16 %v778
  %v4417 = vunpack.c.h.b16 %v778
  %v4418 = vunpack.c.l.b16 %v779
  %v4419 = vunpack.c.h.b16 %v779
  %v4420 = vunpack.c.l.b16 %v780
  %v4421 = vunpack.c.h.b16 %v780
  %v4422 = vunpack.c.l.b16 %v781
  %v4423 = vunpack.c.h.b16 %v781
  %v4424 = vunpack.c.l.b16 %v782
  %v4425 = vunpack.c.h.b16 %v782
  %v4426 = vunpack.c.l.b16 %v783
  %v4427 = vunpack.c.h.b16 %v783
  %v4428 = vunpack.c.l.b16 %v784
  %v4429 = vunpack.c.h.b16 %v784
  %v4430 = vunpack.c.l.b16 %v785
  %v4431 = vunpack.c.h.b16 %v785
  %v4432 = vunpack.c.l.b16 %v786
  %v4433 = vunpack.c.h.b16 %v786
  %v4434 = vunpack.c.l.b16 %v787
  %v4435 = vunpack.c.h.b16 %v787
  %v4436 = vunpack.c.l.b16 %v788
  %v4437 = vunpack.c.h.b16 %v788
  %v4438 = vunpack.c.l.b16 %v789
  %v4439 = vunpack.c.h.b16 %v789
  %v4440 = vunpack.c.l.b16 %v790
  %v4441 = vunpack.c.h.b16 %v790
  %v4442 = vunpack.c.l.b16 %v791
  %v4443 = vunpack.c.h.b16 %v791
  %v4444 = vunpack.c.l.b16 %v792
  %v4445 = vunpack.c.h.b16 %v792
  %v4446 = vunpack.c.l.b16 %v793
  %v4447 = vunpack.c.h.b16 %v793
  %v4448 = vunpack.c.l.b16 %v794
  %v4449 = vunpack.c.h.b16 %v794
  %v4450 = vunpack.c.l.b16 %v795
  %v4451 = vunpack.c.h.b16 %v795
  %v4452 = vunpack.c.l.b16 %v796
  %v4453 = vunpack.c.h.b16 %v796
  %v4454 = vunpack.c.l.b16 %v797
  %v4455 = vunpack.c.h.b16 %v797
  %v4456 = vunpack.c.l.b16 %v798
  %v4457 = vunpack.c.h.b16 %v798
  %v4458 = vunpack.c.l.b16 %v799
  %v4459 = vunpack.c.h.b16 %v799
  %v4460 = vunpack.c.l.b16 %v800
  %v4461 = vunpack.c.h.b16 %v800
  %v4462 = vunpack.c.l.b16 %v801
  %v4463 = vunpack.c.h.b16 %v801
  %v4464 = vunpack.c.l.b16 %v802
  %v4465 = vunpack.c.h.b16 %v802
  %v4466 = vunpack.c.l.b16 %v803
  %v4467 = vunpack.c.h.b16 %v803
  %v4468 = vunpack.c.l.b16 %v804
  %v4469 = vunpack.c.h.b16 %v804
  %v4470 = vunpack.c.l.b16 %v805
  %v4471 = vunpack.c.h.b16 %v805
  %v4472 = vunpack.c.l.b16 %v806
  %v4473 = vunpack.c.h.b16 %v806
  %v4474 = vunpack.c.l.b16 %v807
  %v4475 = vunpack.c.h.b16 %v807
  %v4476 = vunpack.c.l.b16 %v808
  %v4477 = vunpack.c.h.b16 %v808
  %v4478 = vunpack.c.l.b16 %v809
  %v4479 = vunpack.c.h.b16 %v809
  %v4480 = vunpack.c.l.b16 %v810
  %v4481 = vunpack.c.h.b16 %v810
  %v4482 = vunpack.c.l.b16 %v811
  %v4483 = vunpack.c.h.b16 %v811
  %v4484 = vunpack.c.l.b16 %v812
  %v4485 = vunpack.c.h.b16 %v812
  %v4486 = vunpack.c.l.b16 %v813
  %v4487 = vunpack.c.h.b16 %v813
  %v4488 = vunpack.c.l.b16 %v814
  %v4489 = vunpack.c.h.b16 %v814
  %v4490 = vunpack.c.l.b16 %v815
  %v4491 = vunpack.c.h.b16 %v815
  %v4492 = vunpack.c.l.b16 %v816
  %v4493 = vunpack.c.h.b16 %v816
  %v4494 = vunpack.c.l.b16 %v817
  %v4495 = vunpack.c.h.b16 %v817
  %v4496 = vunpack.c.l.b16 %v818
  %v4497 = vunpack.c.h.b16 %v818
  %v4498 = vunpack.c.l.b16 %v819
  %v4499 = vunpack.c.h.b16 %v819
  %v4500 = vunpack.c.l.b16 %v820
  %v4501 = vunpack.c.h.b16 %v820
  %v4502 = vunpack.c.l.b16 %v821
  %v4503 = vunpack.c.h.b16 %v821
  %v4504 = vunpack.c.l.b16 %v822
  %v4505 = vunpack.c.h.b16 %v822
  %v4506 = vunpack.c.l.b16 %v823
  %v4507 = vunpack.c.h.b16 %v823
  %v4508 = vunpack.c.l.b16 %v824
  %v4509 = vunpack.c.h.b16 %v824
  %v4510 = vunpack.c.l.b16 %v825
  %v4511 = vunpack.c.h.b16 %v825
  %v4512 = vunpack.c.l.b16 %v826
  %v4513 = vunpack.c.h.b16 %v826
  %v4514 = vunpack.c.l.b16 %v827
  %v4515 = vunpack.c.h.b16 %v827
  %v4516 = vunpack.c.l.b16 %v828
  %v4517 = vunpack.c.h.b16 %v828
  %v4518 = vunpack.c.l.b16 %v829
  %v4519 = vunpack.c.h.b16 %v829
  %v4520 = vunpack.c.l.b16 %v830
  %v4521 = vunpack.c.h.b16 %v830
  %v4522 = vunpack.c.l.b16 %v831
  %v4523 = vunpack.c.h.b16 %v831
  %v4524 = vunpack.c.l.b16 %v832
  %v4525 = vunpack.c.h.b16 %v832
  %v4526 = vunpack.c.l.b16 %v833
  %v4527 = vunpack.c.h.b16 %v833
  %v4528 = vunpack.c.l.b16 %v834
  %v4529 = vunpack.c.h.b16 %v834
  %v4530 = vunpack.c.l.b16 %v835
  %v4531 = vunpack.c.h.b16 %v835
  %v4532 = vunpack.c.l.b16 %v836
  %v4533 = vunpack.c.h.b16 %v836
  %v4534 = vunpack.c.l.b16 %v837
  %v4535 = vunpack.c.h.b16 %v837
  %v4536 = vunpack.c.l.b16 %v838
  %v4537 = vunpack.c.h.b16 %v838
  %v4538 = vunpack.c.l.b16 %v839
  %v4539 = vunpack.c.h.b16 %v839
  %v4540 = vunpack.c.l.b16 %v840
  %v4541 = vunpack.c.h.b16 %v840
  %v4542 = vunpack.c.l.b16 %v841
  %v4543 = vunpack.c.h.b16 %v841
  %v4544 = vunpack.c.l.b16 %v842
  %v4545 = vunpack.c.h.b16 %v842
  %v4546 = vunpack.c.l.b16 %v843
  %v4547 = vunpack.c.h.b16 %v843
  %v4548 = vunpack.c.l.b16 %v844
  %v4549 = vunpack.c.h.b16 %v844
  %v4550 = vunpack.c.l.b16 %v845
  %v4551 = vunpack.c.h.b16 %v845
  %v4552 = vunpack.c.l.b16 %v846
  %v4553 = vunpack.c.h.b16 %v846
  %v4554 = vunpack.c.l.b16 %v847
  %v4555 = vunpack.c.h.b16 %v847
  %v4556 = vunpack.c.l.b16 %v848
  %v4557 = vunpack.c.h.b16 %v848
  %v4558 = vunpack.c.l.b16 %v849
  %v4559 = vunpack.c.h.b16 %v849
  %v4560 = vunpack.c.l.b16 %v850
  %v4561 = vunpack.c.h.b16 %v850
  %v4562 = vunpack.c.l.b16 %v851
  %v4563 = vunpack.c.h.b16 %v851
  %v4564 = vunpack.c.l.b16 %v852
  %v4565 = vunpack.c.h.b16 %v852
  %v4566 = vunpack.c.l.b16 %v853
  %v4567 = vunpack.c.h.b16 %v853
  %v4568 = vunpack.c.l.b16 %v854
  %v4569 = vunpack.c.h.b16 %v854
  %v4570 = vunpack.c.l.b16 %v855
  %v4571 = vunpack.c.h.b16 %v855
  %v4572 = vunpack.c.l.b16 %v856
  %v4573 = vunpack.c.h.b16 %v856
  %v4574 = vunpack.c.l.b16 %v857
  %v4575 = vunpack.c.h.b16 %v857
  %v4576 = vunpack.c.l.b16 %v858
  %v4577 = vunpack.c.h.b16 %v858
  %v4578 = vunpack.c.l.b16 %v859
  %v4579 = vunpack.c.h.b16 %v859
  %v4580 = vunpack.c.l.b16 %v860
  %v4581 = vunpack.c.h.b16 %v860
  %v4582 = vunpack.c.l.b16 %v861
  %v4583 = vunpack.c.h.b16 %v861
  %v4584 = vunpack.c.l.b16 %v862
  %v4585 = vunpack.c.h.b16 %v862
  %v4586 = vunpack.c.l.b16 %v863
  %v4587 = vunpack.c.h.b16 %v863
  %v4588 = vunpack.c.l.b16 %v864
  %v4589 = vunpack.c.h.b16 %v864
  %v4590 = vunpack.c.l.b16 %v865
  %v4591 = vunpack.c.h.b16 %v865
  %v4592 = vunpack.c.l.b16 %v866
  %v4593 = vunpack.c.h.b16 %v866
  %v4594 = vunpack.c.l.b16 %v867
  %v4595 = vunpack.c.h.b16 %v867
  %v4596 = vunpack.c.l.b16 %v868
  %v4597 = vunpack.c.h.b16 %v868
  %v4598 = vunpack.c.l.b16 %v869
  %v4599 = vunpack.c.h.b16 %v869
  %v4600 = vunpack.c.l.b16 %v870
  %v4601 = vunpack.c.h.b16 %v870
  %v4602 = vunpack.c.l.b16 %v871
  %v4603 = vunpack.c.h.b16 %v871
  %v4604 = vunpack.c.l.b16 %v872
  %v4605 = vunpack.c.h.b16 %v872
  %v4606 = vunpack.c.l.b16 %v873
  %v4607 = vunpack.c.h.b16 %v873
  %v4608 = vunpack.c.l.b16 %v874
  %v4609 = vunpack.c.h.b16 %v874
  %v4610 = vunpack.c.l.b16 %v875
  %v4611 = vunpack.c.h.b16 %v875
  %v4612 = vunpack.c.l.b16 %v876
  %v4613 = vunpack.c.h.b16 %v876
  %v4614 = vunpack.c.l.b16 %v877
  %v4615 = vunpack.c.h.b16 %v877
  %v4616 = vunpack.c.l.b16 %v878
  %v4617 = vunpack.c.h.b16 %v878
  %v4618 = vunpack.c.l.b16 %v879
  %v4619 = vunpack.c.h.b16 %v879
  %v4620 = vunpack.c.l.b16 %v880
  %v4621 = vunpack.c.h.b16 %v880
  %v4622 = vunpack.c.l.b16 %v881
  %v4623 = vunpack.c.h.b16 %v881
  %v4624 = vunpack.c.l.b16 %v882
  %v4625 = vunpack.c.h.b16 %v882
  %v4626 = vunpack.c.l.b16 %v883
  %v4627 = vunpack.c.h.b16 %v883
  %v4628 = vunpack.c.l.b16 %v884
  %v4629 = vunpack.c.h.b16 %v884
  %v4630 = vunpack.c.l.b16 %v885
  %v4631 = vunpack.c.h.b16 %v885
  %v4632 = vunpack.c.l.b16 %v886
  %v4633 = vunpack.c.h.b16 %v886
  %v4634 = vunpack.c.l.b16 %v887
  %v4635 = vunpack.c.h.b16 %v887
  %v4636 = vunpack.c.l.b16 %v888
  %v4637 = vunpack.c.h.b16 %v888
  %v4638 = vunpack.c.l.b16 %v889
  %v4639 = vunpack.c.h.b16 %v889
  %v4640 = vunpack.c.l.b16 %v890
  %v4641 = vunpack.c.h.b16 %v890
  %v4642 = vunpack.c.l.b16 %v891
  %v4643 = vunpack.c.h.b16 %v891
  %v4644 = vunpack.c.l.b16 %v892
  %v4645 = vunpack.c.h.b16 %v892
  %v4646 = vunpack.c.l.b16 %v893
  %v4647 = vunpack.c.h.b16 %v893
  %v4648 = vunpack.c.l.b16 %v894
  %v4649 = vunpack.c.h.b16 %v894
  %v4650 = vunpack.c.l.b16 %v895
  %v4651 = vunpack.c.h.b16 %v895
  %v4652 = vunpack.c.l.b16 %v896
  %v4653 = vunpack.c.h.b16 %v896
  %v4654 = vunpack.c.l.b16 %v897
  %v4655 = vunpack.c.h.b16 %v897
  %v4656 = vunpack.c.l.b16 %v898
  %v4657 = vunpack.c.h.b16 %v898
  %v4658 = vunpack.c.l.b16 %v899
  %v4659 = vunpack.c.h.b16 %v899
  %v4660 = vunpack.c.l.b16 %v900
  %v4661 = vunpack.c.h.b16 %v900
  %v4662 = vunpack.c.l.b16 %v901
  %v4663 = vunpack.c.h.b16 %v901
  %v4664 = vunpack.c.l.b16 %v902
  %v4665 = vunpack.c.h.b16 %v902
  %v4666 = vunpack.c.l.b16 %v903
  %v4667 = vunpack.c.h.b16 %v903
  %v4668 = vunpack.c.l.b16 %v904
  %v4669 = vunpack.c.h.b16 %v904
  %v4670 = vunpack.c.l.b16 %v905
  %v4671 = vunpack.c.h.b16 %v905
  %v4672 = vunpack.c.l.b16 %v906
  %v4673 = vunpack.c.h.b16 %v906
  %v4674 = vunpack.c.l.b16 %v907
  %v4675 = vunpack.c.h.b16 %v907
  %v4676 = vunpack.c.l.b16 %v908
  %v4677 = vunpack.c.h.b16 %v908
  %v4678 = vunpack.c.l.b16 %v909
  %v4679 = vunpack.c.h.b16 %v909
  %v4680 = vunpack.c.l.b16 %v910
  %v4681 = vunpack.c.h.b16 %v910
  %v4682 = vunpack.c.l.b16 %v911
  %v4683 = vunpack.c.h.b16 %v911
  %v4684 = vunpack.c.l.b16 %v912
  %v4685 = vunpack.c.h.b16 %v912
  %v4686 = vunpack.c.l.b16 %v913
  %v4687 = vunpack.c.h.b16 %v913
  %v4688 = vunpack.c.l.b16 %v914
  %v4689 = vunpack.c.h.b16 %v914
  %v4690 = vunpack.c.l.b16 %v915
  %v4691 = vunpack.c.h.b16 %v915
  %v4692 = vunpack.c.l.b16 %v916
  %v4693 = vunpack.c.h.b16 %v916
  %v4694 = vunpack.c.l.b16 %v917
  %v4695 = vunpack.c.h.b16 %v917
  %v4696 = vunpack.c.l.b16 %v918
  %v4697 = vunpack.c.h.b16 %v918
  %v4698 = vunpack.c.l.b16 %v919
  %v4699 = vunpack.c.h.b16 %v919
  %v4700 = vunpack.c.l.b16 %v920
  %v4701 = vunpack.c.h.b16 %v920
  %v4702 = vunpack.c.l.b16 %v921
  %v4703 = vunpack.c.h.b16 %v921
  %v4704 = vunpack.c.l.b16 %v922
  %v4705 = vunpack.c.h.b16 %v922
  %v4706 = vunpack.c.l.b16 %v923
  %v4707 = vunpack.c.h.b16 %v923
  %v4708 = vunpack.c.l.b16 %v924
  %v4709 = vunpack.c.h.b16 %v924
  %v4710 = vunpack.c.l.b16 %v925
  %v4711 = vunpack.c.h.b16 %v925
  %v4712 = vunpack.c.l.b16 %v926
  %v4713 = vunpack.c.h.b16 %v926
  %v4714 = vunpack.c.l.b16 %v927
  %v4715 = vunpack.c.h.b16 %v927
  %v4716 = vunpack.c.l.b16 %v928
  %v4717 = vunpack.c.h.b16 %v928
  %v4718 = vunpack.c.l.b16 %v929
  %v4719 = vunpack.c.h.b16 %v929
  %v4720 = vunpack.c.l.b16 %v930
  %v4721 = vunpack.c.h.b16 %v930
  %v4722 = vunpack.c.l.b16 %v931
  %v4723 = vunpack.c.h.b16 %v931
  %v4724 = vunpack.c.l.b16 %v932
  %v4725 = vunpack.c.h.b16 %v932
  %v4726 = vunpack.c.l.b16 %v933
  %v4727 = vunpack.c.h.b16 %v933
  %v4728 = vunpack.c.l.b16 %v934
  %v4729 = vunpack.c.h.b16 %v934
  %v4730 = vunpack.c.l.b16 %v935
  %v4731 = vunpack.c.h.b16 %v935
  %v4732 = vunpack.c.l.b16 %v936
  %v4733 = vunpack.c.h.b16 %v936
  %v4734 = vunpack.c.l.b16 %v937
  %v4735 = vunpack.c.h.b16 %v937
  %v4736 = vunpack.c.l.b16 %v938
  %v4737 = vunpack.c.h.b16 %v938
  %v4738 = vunpack.c.l.b16 %v939
  %v4739 = vunpack.c.h.b16 %v939
  %v4740 = vunpack.c.l.b16 %v940
  %v4741 = vunpack.c.h.b16 %v940
  %v4742 = vunpack.c.l.b16 %v941
  %v4743 = vunpack.c.h.b16 %v941
  %v4744 = vunpack.c.l.b16 %v942
  %v4745 = vunpack.c.h.b16 %v942
  %v4746 = vunpack.c.l.b16 %v943
  %v4747 = vunpack.c.h.b16 %v943
  %v4748 = vunpack.c.l.b16 %v944
  %v4749 = vunpack.c.h.b16 %v944
  %v4750 = vunpack.c.l.b16 %v945
  %v4751 = vunpack.c.h.b16 %v945
  %v4752 = vunpack.c.l.b16 %v946
  %v4753 = vunpack.c.h.b16 %v946
  %v4754 = vunpack.c.l.b16 %v947
  %v4755 = vunpack.c.h.b16 %v947
  %v4756 = vunpack.c.l.b16 %v948
  %v4757 = vunpack.c.h.b16 %v948
  %v4758 = vunpack.c.l.b16 %v949
  %v4759 = vunpack.c.h.b16 %v949
  %v4760 = vunpack.c.l.b16 %v950
  %v4761 = vunpack.c.h.b16 %v950
  %v4762 = vunpack.c.l.b16 %v951
  %v4763 = vunpack.c.h.b16 %v951
  %v4764 = vunpack.c.l.b16 %v952
  %v4765 = vunpack.c.h.b16 %v952
  %v4766 = vunpack.c.l.b16 %v953
  %v4767 = vunpack.c.h.b16 %v953
  %v4768 = vunpack.c.l.b16 %v954
  %v4769 = vunpack.c.h.b16 %v954
  %v4770 = vunpack.c.l.b16 %v955
  %v4771 = vunpack.c.h.b16 %v955
  %v4772 = vunpack.c.l.b16 %v956
  %v4773 = vunpack.c.h.b16 %v956
  %v4774 = vunpack.c.l.b16 %v957
  %v4775 = vunpack.c.h.b16 %v957
  %v4776 = vunpack.c.l.b16 %v958
  %v4777 = vunpack.c.h.b16 %v958
  %v4778 = vunpack.c.l.b16 %v959
  %v4779 = vunpack.c.h.b16 %v959
  %v4780 = vunpack.c.l.b16 %v960
  %v4781 = vunpack.c.h.b16 %v960
  %v4782 = vunpack.c.l.b16 %v961
  %v4783 = vunpack.c.h.b16 %v961
  %v4784 = vunpack.c.l.b16 %v962
  %v4785 = vunpack.c.h.b16 %v962
  %v4786 = vunpack.c.l.b16 %v963
  %v4787 = vunpack.c.h.b16 %v963
  %v4788 = vunpack.c.l.b16 %v964
  %v4789 = vunpack.c.h.b16 %v964
  %v4790 = vunpack.c.l.b16 %v965
  %v4791 = vunpack.c.h.b16 %v965
  %v4792 = vunpack.c.l.b16 %v966
  %v4793 = vunpack.c.h.b16 %v966
  %v4794 = vunpack.c.l.b16 %v967
  %v4795 = vunpack.c.h.b16 %v967
  %v4796 = vunpack.c.l.b16 %v968
  %v4797 = vunpack.c.h.b16 %v968
  %v4798 = vunpack.c.l.b16 %v969
  %v4799 = vunpack.c.h.b16 %v969
  %v4800 = vunpack.c.l.b16 %v970
  %v4801 = vunpack.c.h.b16 %v970
  %v4802 = vunpack.c.l.b16 %v971
  %v4803 = vunpack.c.h.b16 %v971
  %v4804 = vunpack.c.l.b16 %v972
  %v4805 = vunpack.c.h.b16 %v972
  %v4806 = vunpack.c.l.b16 %v973
  %v4807 = vunpack.c.h.b16 %v973
  %v4808 = vunpack.c.l.b16 %v974
  %v4809 = vunpack.c.h.b16 %v974
  %v4810 = vunpack.c.l.b16 %v975
  %v4811 = vunpack.c.h.b16 %v975
  %v4812 = vunpack.c.l.b16 %v976
  %v4813 = vunpack.c.h.b16 %v976
  %v4814 = vunpack.c.l.b16 %v977
  %v4815 = vunpack.c.h.b16 %v977
  %v4816 = vunpack.c.l.b16 %v978
  %v4817 = vunpack.c.h.b16 %v978
  %v4818 = vunpack.c.l.b16 %v979
  %v4819 = vunpack.c.h.b16 %v979
  %v4820 = vunpack.c.l.b16 %v980
  %v4821 = vunpack.c.h.b16 %v980
  %v4822 = vunpack.c.l.b16 %v981
  %v4823 = vunpack.c.h.b16 %v981
  %v4824 = vunpack.c.l.b16 %v982
  %v4825 = vunpack.c.h.b16 %v982
  %v4826 = vunpack.c.l.b16 %v983
  %v4827 = vunpack.c.h.b16 %v983
  %v4828 = vunpack.c.l.b16 %v984
  %v4829 = vunpack.c.h.b16 %v984
  %v4830 = vunpack.c.l.b16 %v985
  %v4831 = vunpack.c.h.b16 %v985
  %v4832 = vunpack.c.l.b16 %v986
  %v4833 = vunpack.c.h.b16 %v986
  %v4834 = vunpack.c.l.b16 %v987
  %v4835 = vunpack.c.h.b16 %v987
  %v4836 = vunpack.c.l.b16 %v988
  %v4837 = vunpack.c.h.b16 %v988
  %v4838 = vunpack.c.l.b16 %v989
  %v4839 = vunpack.c.h.b16 %v989
  %v4840 = vunpack.c.l.b16 %v990
  %v4841 = vunpack.c.h.b16 %v990
  %v4842 = vunpack.c.l.b16 %v991
  %v4843 = vunpack.c.h.b16 %v991
  %v4844 = vunpack.c.l.b16 %v992
  %v4845 = vunpack.c.h.b16 %v992
  %v4846 = vunpack.c.l.b16 %v993
  %v4847 = vunpack.c.h.b16 %v993
  %v4848 = vunpack.c.l.b16 %v994
  %v4849 = vunpack.c.h.b16 %v994
  %v4850 = vunpack.c.l.b16 %v995
  %v4851 = vunpack.c.h.b16 %v995
  %v4852 = vunpack.c.l.b16 %v996
  %v4853 = vunpack.c.h.b16 %v996
  %v4854 = vunpack.c.l.b16 %v997
  %v4855 = vunpack.c.h.b16 %v997
  %v4856 = vunpack.c.l.b16 %v998
  %v4857 = vunpack.c.h.b16 %v998
  %v4858 = vunpack.c.l.b16 %v999
  %v4859 = vunpack.c.h.b16 %v999
  %v4860 = vunpack.c.l.b16 %v1000
  %v4861 = vunpack.c.h.b16 %v1000
  %v4862 = vunpack.c.l.b16 %v1001
  %v4863 = vunpack.c.h.b16 %v1001
  %v4864 = vunpack.c.l.b16 %v1002
  %v4865 = vunpack.c.h.b16 %v1002
  %v4866 = vunpack.c.l.b16 %v1003
  %v4867 = vunpack.c.h.b16 %v1003
  %v4868 = vunpack.c.l.b16 %v1004
  %v4869 = vunpack.c.h.b16 %v1004
  %v4870 = vunpack.c.l.b16 %v1005
  %v4871 = vunpack.c.h.b16 %v1005
  %v4872 = vunpack.c.l.b16 %v1006
  %v4873 = vunpack.c.h.b16 %v1006
  %v4874 = vunpack.c.l.b16 %v1007
  %v4875 = vunpack.c.h.b16 %v1007
  %v4876 = vunpack.c.l.b16 %v1008
  %v4877 = vunpack.c.h.b16 %v1008
  %v4878 = vunpack.c.l.b16 %v1009
  %v4879 = vunpack.c.h.b16 %v1009
  %v4880 = vunpack.c.l.b16 %v1010
  %v4881 = vunpack.c.h.b16 %v1010
  %v4882 = vunpack.c.l.b16 %v1011
  %v4883 = vunpack.c.h.b16 %v1011
  %v4884 = vunpack.c.l.b16 %v1012
  %v4885 = vunpack.c.h.b16 %v1012
  %v4886 = vunpack.c.l.b16 %v1013
  %v4887 = vunpack.c.h.b16 %v1013
  %v4888 = vunpack.c.l.b16 %v1014
  %v4889 = vunpack.c.h.b16 %v1014
  %v4890 = vunpack.c.l.b16 %v1015
  %v4891 = vunpack.c.h.b16 %v1015
  %v4892 = vunpack.c.l.b16 %v1016
  %v4893 = vunpack.c.h.b16 %v1016
  %v4894 = vunpack.c.l.b16 %v1017
  %v4895 = vunpack.c.h.b16 %v1017
  %v4896 = vunpack.c.l.b16 %v1018
  %v4897 = vunpack.c.h.b16 %v1018
  %v4898 = vunpack.c.l.b16 %v1019
  %v4899 = vunpack.c.h.b16 %v1019
  %v4900 = vunpack.c.l.b16 %v1020
  %v4901 = vunpack.c.h.b16 %v1020
  %v4902 = vunpack.c.l.b16 %v1021
  %v4903 = vunpack.c.h.b16 %v1021
  %v4904 = vunpack.c.l.b16 %v1022
  %v4905 = vunpack.c.h.b16 %v1022
  %v4906 = vunpack.c.l.b16 %v1023
  %v4907 = vunpack.c.h.b16 %v1023
  %v4908 = vunpack.c.l.b16 %v1024
  %v4909 = vunpack.c.h.b16 %v1024
  %v4910 = vunpack.c.l.b16 %v1025
  %v4911 = vunpack.c.h.b16 %v1025
  %v4912 = vunpack.c.l.b16 %v1026
  %v4913 = vunpack.c.h.b16 %v1026
  %v4914 = vunpack.c.l.b16 %v1027
  %v4915 = vunpack.c.h.b16 %v1027
  %v4916 = vunpack.c.l.b16 %v1028
  %v4917 = vunpack.c.h.b16 %v1028
  %v4918 = vunpack.c.l.b16 %v1029
  %v4919 = vunpack.c.h.b16 %v1029
  %v4920 = vunpack.c.l.b16 %v1030
  %v4921 = vunpack.c.h.b16 %v1030
  %v4922 = vunpack.c.l.b16 %v1031
  %v4923 = vunpack.c.h.b16 %v1031
  %v4924 = vunpack.c.l.b16 %v1032
  %v4925 = vunpack.c.h.b16 %v1032
  %v4926 = vunpack.c.l.b16 %v1033
  %v4927 = vunpack.c.h.b16 %v1033
  %v4928 = vunpack.c.l.b16 %v1034
  %v4929 = vunpack.c.h.b16 %v1034
  %v4930 = vunpack.c.l.b16 %v1035
  %v4931 = vunpack.c.h.b16 %v1035
  %v4932 = vunpack.c.l.b16 %v1036
  %v4933 = vunpack.c.h.b16 %v1036
  %v4934 = vunpack.c.l.b16 %v1037
  %v4935 = vunpack.c.h.b16 %v1037
  %v4936 = vunpack.c.l.b16 %v1038
  %v4937 = vunpack.c.h.b16 %v1038
  %v4938 = vunpack.c.l.b16 %v1039
  %v4939 = vunpack.c.h.b16 %v1039
  %v4940 = vunpack.c.l.b16 %v1040
  %v4941 = vunpack.c.h.b16 %v1040
  %v4942 = vunpack.c.l.b16 %v1041
  %v4943 = vunpack.c.h.b16 %v1041
  %v4944 = vunpack.c.l.b16 %v1042
  %v4945 = vunpack.c.h.b16 %v1042
  %v4946 = vunpack.c.l.b16 %v1043
  %v4947 = vunpack.c.h.b16 %v1043
  %v4948 = vunpack.c.l.b16 %v1044
  %v4949 = vunpack.c.h.b16 %v1044
  %v4950 = vunpack.c.l.b16 %v1045
  %v4951 = vunpack.c.h.b16 %v1045
  %v4952 = vunpack.c.l.b16 %v1046
  %v4953 = vunpack.c.h.b16 %v1046
  %v4954 = vunpack.c.l.b16 %v1047
  %v4955 = vunpack.c.h.b16 %v1047
  %v4956 = vunpack.c.l.b16 %v1048
  %v4957 = vunpack.c.h.b16 %v1048
  %v4958 = vunpack.c.l.b16 %v1049
  %v4959 = vunpack.c.h.b16 %v1049
  %v4960 = vunpack.c.l.b16 %v1050
  %v4961 = vunpack.c.h.b16 %v1050
  %v4962 = vunpack.c.l.b16 %v1051
  %v4963 = vunpack.c.h.b16 %v1051
  %v4964 = vunpack.c.l.b16 %v1052
  %v4965 = vunpack.c.h.b16 %v1052
  %v4966 = vunpack.c.l.b16 %v1053
  %v4967 = vunpack.c.h.b16 %v1053
  %v4968 = vunpack.c.l.b16 %v1054
  %v4969 = vunpack.c.h.b16 %v1054
  %v4970 = vunpack.c.l.b16 %v1055
  %v4971 = vunpack.c.h.b16 %v1055
  %v4972 = vunpack.c.l.b16 %v1056
  %v4973 = vunpack.c.h.b16 %v1056
  %v4974 = vunpack.c.l.b16 %v1057
  %v4975 = vunpack.c.h.b16 %v1057
  %v4976 = vunpack.c.l.b16 %v1058
  %v4977 = vunpack.c.h.b16 %v1058
  %v4978 = vunpack.c.l.b16 %v1059
  %v4979 = vunpack.c.h.b16 %v1059
  %v4980 = vunpack.c.l.b16 %v1060
  %v4981 = vunpack.c.h.b16 %v1060
  %v4982 = vunpack.c.l.b16 %v1061
  %v4983 = vunpack.c.h.b16 %v1061
  %v4984 = vunpack.c.l.b16 %v1062
  %v4985 = vunpack.c.h.b16 %v1062
  %v4986 = vunpack.c.l.b16 %v1063
  %v4987 = vunpack.c.h.b16 %v1063
  %v4988 = vunpack.c.l.b16 %v1064
  %v4989 = vunpack.c.h.b16 %v1064
  %v4990 = vunpack.c.l.b16 %v1065
  %v4991 = vunpack.c.h.b16 %v1065
  %v4992 = vunpack.c.l.b16 %v1066
  %v4993 = vunpack.c.h.b16 %v1066
  %v4994 = vunpack.c.l.b16 %v1067
  %v4995 = vunpack.c.h.b16 %v1067
  %v4996 = vunpack.c.l.b16 %v1068
  %v4997 = vunpack.c.h.b16 %v1068
  %v4998 = vunpack.c.l.b16 %v1069
  %v4999 = vunpack.c.h.b16 %v1069
  %v5000 = vunpack.c.l.b16 %v1070
  %v5001 = vunpack.c.h.b16 %v1070
  %v5002 = vunpack.c.l.b16 %v1071
  %v5003 = vunpack.c.h.b16 %v1071
  %v5004 = vunpack.c.l.b16 %v1072
  %v5005 = vunpack.c.h.b16 %v1072
  %v5006 = vunpack.c.l.b16 %v1073
  %v5007 = vunpack.c.h.b16 %v1073
  %v5008 = vunpack.c.l.b16 %v1074
  %v5009 = vunpack.c.h.b16 %v1074
  %v5010 = vunpack.c.l.b16 %v1075
  %v5011 = vunpack.c.h.b16 %v1075
  %v5012 = vunpack.c.l.b16 %v1076
  %v5013 = vunpack.c.h.b16 %v1076
  %v5014 = vunpack.c.l.b16 %v1077
  %v5015 = vunpack.c.h.b16 %v1077
  %v5016 = vunpack.c.l.b16 %v1078
  %v5017 = vunpack.c.h.b16 %v1078
  %v5018 = vunpack.c.l.b16 %v1079
  %v5019 = vunpack.c.h.b16 %v1079
  %v5020 = vunpack.c.l.b16 %v1080
  %v5021 = vunpack.c.h.b16 %v1080
  %v5022 = vunpack.c.l.b16 %v1081
  %v5023 = vunpack.c.h.b16 %v1081
  %v5024 = vunpack.c.l.b16 %v1082
  %v5025 = vunpack.c.h.b16 %v1082
  %v5026 = vunpack.c.l.b16 %v1083
  %v5027 = vunpack.c.h.b16 %v1083
  %v5028 = vunpack.c.l.b16 %v1084
  %v5029 = vunpack.c.h.b16 %v1084
  %v5030 = vunpack.c.l.b16 %v1085
  %v5031 = vunpack.c.h.b16 %v1085
  %v5032 = vunpack.c.l.b16 %v1086
  %v5033 = vunpack.c.h.b16 %v1086
  %v5034 = vunpack.c.l.b16 %v1087
  %v5035 = vunpack.c.h.b16 %v1087
  %v5036 = vunpack.c.l.b16 %v1088
  %v5037 = vunpack.c.h.b16 %v1088
  %v5038 = vunpack.c.l.b16 %v1089
  %v5039 = vunpack.c.h.b16 %v1089
  %v5040 = vunpack.c.l.b16 %v1090
  %v5041 = vunpack.c.h.b16 %v1090
  %v5042 = vunpack.c.l.b16 %v1091
  %v5043 = vunpack.c.h.b16 %v1091
  %v5044 = vunpack.c.l.b16 %v1092
  %v5045 = vunpack.c.h.b16 %v1092
  %v5046 = vunpack.c.l.b16 %v1093
  %v5047 = vunpack.c.h.b16 %v1093
  %v5048 = vunpack.c.l.b16 %v1094
  %v5049 = vunpack.c.h.b16 %v1094
  %v5050 = vunpack.c.l.b16 %v1095
  %v5051 = vunpack.c.h.b16 %v1095
  %v5052 = vunpack.c.l.b16 %v1096
  %v5053 = vunpack.c.h.b16 %v1096
  %v5054 = vunpack.c.l.b16 %v1097
  %v5055 = vunpack.c.h.b16 %v1097
  %v5056 = vunpack.c.l.b16 %v1098
  %v5057 = vunpack.c.h.b16 %v1098
  %v5058 = vunpack.c.l.b16 %v1099
  %v5059 = vunpack.c.h.b16 %v1099
  %v5060 = vunpack.c.l.b16 %v1100
  %v5061 = vunpack.c.h.b16 %v1100
  %v5062 = vunpack.c.l.b16 %v1101
  %v5063 = vunpack.c.h.b16 %v1101
  %v5064 = vunpack.c.l.b16 %v1102
  %v5065 = vunpack.c.h.b16 %v1102
  %v5066 = vunpack.c.l.b16 %v1103
  %v5067 = vunpack.c.h.b16 %v1103
  %v5068 = vunpack.c.l.b16 %v1104
  %v5069 = vunpack.c.h.b16 %v1104
  %v5070 = vunpack.c.l.b16 %v1105
  %v5071 = vunpack.c.h.b16 %v1105
  %v5072 = vunpack.c.l.b16 %v1106
  %v5073 = vunpack.c.h.b16 %v1106
  %v5074 = vunpack.c.l.b16 %v1107
  %v5075 = vunpack.c.h.b16 %v1107
  %v5076 = vunpack.c.l.b16 %v1108
  %v5077 = vunpack.c.h.b16 %v1108
  %v5078 = vunpack.c.l.b16 %v1109
  %v5079 = vunpack.c.h.b16 %v1109
  %v5080 = vunpack.c.l.b16 %v1110
  %v5081 = vunpack.c.h.b16 %v1110
  %v5082 = vunpack.c.l.b16 %v1111
  %v5083 = vunpack.c.h.b16 %v1111
  %v5084 = vunpack.c.l.b16 %v1112
  %v5085 = vunpack.c.h.b16 %v1112
  %v5086 = vunpack.c.l.b16 %v1113
  %v5087 = vunpack.c.h.b16 %v1113
  %v5088 = vunpack.c.l.b16 %v1114
  %v5089 = vunpack.c.h.b16 %v1114
  %v5090 = vunpack.c.l.b16 %v1115
  %v5091 = vunpack.c.h.b16 %v1115
  %v5092 = vunpack.c.l.b16 %v1116
  %v5093 = vunpack.c.h.b16 %v1116
  %v5094 = vunpack.c.l.b16 %v1117
  %v5095 = vunpack.c.h.b16 %v1117
  %v5096 = vunpack.c.l.b16 %v1118
  %v5097 = vunpack.c.h.b16 %v1118
  %v5098 = vunpack.c.l.b16 %v1119
  %v5099 = vunpack.c.h.b16 %v1119
  %v5100 = vunpack.c.l.b16 %v1120
  %v5101 = vunpack.c.h.b16 %v1120
  %v5102 = vunpack.c.l.b16 %v1121
  %v5103 = vunpack.c.h.b16 %v1121
  %v5104 = vunpack.c.l.b16 %v1122
  %v5105 = vunpack.c.h.b16 %v1122
  %v5106 = vunpack.c.l.b16 %v1123
  %v5107 = vunpack.c.h.b16 %v1123
  %v5108 = vunpack.c.l.b16 %v1124
  %v5109 = vunpack.c.h.b16 %v1124
  %v5110 = vunpack.c.l.b16 %v1125
  %v5111 = vunpack.c.h.b16 %v1125
  %v5112 = vunpack.c.l.b16 %v1126
  %v5113 = vunpack.c.h.b16 %v1126
  %v5114 = vunpack.c.l.b16 %v1127
  %v5115 = vunpack.c.h.b16 %v1127
  %v5116 = vunpack.c.l.b16 %v1128
  %v5117 = vunpack.c.h.b16 %v1128
  %v5118 = vunpack.c.l.b16 %v1129
  %v5119 = vunpack.c.h.b16 %v1129
  %v5120 = vunpack.c.l.b16 %v1130
  %v5121 = vunpack.c.h.b16 %v1130
  %v5122 = vunpack.c.l.b16 %v1131
  %v5123 = vunpack.c.h.b16 %v1131
  %v5124 = vunpack.c.l.b16 %v1132
  %v5125 = vunpack.c.h.b16 %v1132
  %v5126 = vunpack.c.l.b16 %v1133
  %v5127 = vunpack.c.h.b16 %v1133
  %v5128 = vunpack.c.l.b16 %v1134
  %v5129 = vunpack.c.h.b16 %v1134
  %v5130 = vunpack.c.l.b16 %v1135
  %v5131 = vunpack.c.h.b16 %v1135
  %v5132 = vunpack.c.l.b16 %v1136
  %v5133 = vunpack.c.h.b16 %v1136
  %v5134 = vunpack.c.l.b16 %v1137
  %v5135 = vunpack.c.h.b16 %v1137
  %v5136 = vunpack.c.l.b16 %v1138
  %v5137 = vunpack.c.h.b16 %v1138
  %v5138 = vunpack.c.l.b16 %v1139
  %v5139 = vunpack.c.h.b16 %v1139
  %v5140 = vunpack.c.l.b16 %v1140
  %v5141 = vunpack.c.h.b16 %v1140
  %v5142 = vunpack.c.l.b16 %v1141
  %v5143 = vunpack.c.h.b16 %v1141
  %v5144 = vunpack.c.l.b16 %v1142
  %v5145 = vunpack.c.h.b16 %v1142
  %v5146 = vunpack.c.l.b16 %v1143
  %v5147 = vunpack.c.h.b16 %v1143
  %v5148 = vunpack.c.l.b16 %v1144
  %v5149 = vunpack.c.h.b16 %v1144
  %v5150 = vunpack.c.l.b16 %v1145
  %v5151 = vunpack.c.h.b16 %v1145
  %v5152 = vunpack.c.l.b16 %v1146
  %v5153 = vunpack.c.h.b16 %v1146
  %v5154 = vunpack.c.l.b16 %v1147
  %v5155 = vunpack.c.h.b16 %v1147
  %v5156 = vunpack.c.l.b16 %v1148
  %v5157 = vunpack.c.h.b16 %v1148
  %v5158 = vunpack.c.l.b16 %v1149
  %v5159 = vunpack.c.h.b16 %v1149
  %v5160 = vunpack.c.l.b16 %v1150
  %v5161 = vunpack.c.h.b16 %v1150
  %v5162 = vunpack.c.l.b16 %v1151
  %v5163 = vunpack.c.h.b16 %v1151
  %v5164 = vunpack.c.l.b16 %v1152
  %v5165 = vunpack.c.h.b16 %v1152
  %v5166 = vunpack.c.l.b16 %v1153
  %v5167 = vunpack.c.h.b16 %v1153
  %v5168 = vunpack.c.l.b16 %v1154
  %v5169 = vunpack.c.h.b16 %v1154
  %v5170 = vunpack.c.l.b16 %v1155
  %v5171 = vunpack.c.h.b16 %v1155
  %v5172 = vunpack.c.l.b16 %v1156
  %v5173 = vunpack.c.h.b16 %v1156
  %v5174 = vunpack.c.l.b16 %v1157
  %v5175 = vunpack.c.h.b16 %v1157
  %v5176 = vunpack.c.l.b16 %v1158
  %v5177 = vunpack.c.h.b16 %v1158
  %v5178 = vunpack.c.l.b16 %v1159
  %v5179 = vunpack.c.h.b16 %v1159
  %v5180 = vunpack.c.l.b16 %v1160
  %v5181 = vunpack.c.h.b16 %v1160
  %v5182 = vunpack.c.l.b16 %v1161
  %v5183 = vunpack.c.h.b16 %v1161
  %v5184 = vunpack.c.l.b16 %v1162
  %v5185 = vunpack.c.h.b16 %v1162
  %v5186 = vunpack.c.l.b16 %v1163
  %v5187 = vunpack.c.h.b16 %v1163
  %v5188 = vunpack.c.l.b16 %v1164
  %v5189 = vunpack.c.h.b16 %v1164
  %v5190 = vunpack.c.l.b16 %v1165
  %v5191 = vunpack.c.h.b16 %v1165
  %v5192 = vunpack.c.l.b16 %v1166
  %v5193 = vunpack.c.h.b16 %v1166
  %v5194 = vunpack.c.l.b16 %v1167
  %v5195 = vunpack.c.h.b16 %v1167
  %v5196 = vunpack.c.l.b16 %v1168
  %v5197 = vunpack.c.h.b16 %v1168
  %v5198 = vunpack.c.l.b16 %v1169
  %v5199 = vunpack.c.h.b16 %v1169
  %v5200 = vunpack.c.l.b16 %v1170
  %v5201 = vunpack.c.h.b16 %v1170
  %v5202 = vunpack.c.l.b16 %v1171
  %v5203 = vunpack.c.h.b16 %v1171
  %v5204 = vunpack.c.l.b16 %v1172
  %v5205 = vunpack.c.h.b16 %v1172
  %v5206 = vunpack.c.l.b16 %v1173
  %v5207 = vunpack.c.h.b16 %v1173
  %v5208 = vunpack.c.l.b16 %v1174
  %v5209 = vunpack.c.h.b16 %v1174
  %v5210 = vunpack.c.l.b16 %v1175
  %v5211 = vunpack.c.h.b16 %v1175
  %v5212 = vunpack.c.l.b16 %v1176
  %v5213 = vunpack.c.h.b16 %v1176
  %v5214 = vunpack.c.l.b16 %v1177
  %v5215 = vunpack.c.h.b16 %v1177
  %v5216 = vunpack.c.l.b16 %v1178
  %v5217 = vunpack.c.h.b16 %v1178
  %v5218 = vunpack.c.l.b16 %v1179
  %v5219 = vunpack.c.h.b16 %v1179
  %v5220 = vunpack.c.l.b16 %v1180
  %v5221 = vunpack.c.h.b16 %v1180
  %v5222 = vunpack.c.l.b16 %v1181
  %v5223 = vunpack.c.h.b16 %v1181
  %v5224 = vunpack.c.l.b16 %v1182
  %v5225 = vunpack.c.h.b16 %v1182
  %v5226 = vunpack.c.l.b16 %v1183
  %v5227 = vunpack.c.h.b16 %v1183
  %v5228 = vunpack.c.l.b16 %v1184
  %v5229 = vunpack.c.h.b16 %v1184
  %v5230 = vunpack.c.l.b16 %v1185
  %v5231 = vunpack.c.h.b16 %v1185
  %v5232 = vunpack.c.l.b16 %v1186
  %v5233 = vunpack.c.h.b16 %v1186
  %v5234 = vunpack.c.l.b16 %v1187
  %v5235 = vunpack.c.h.b16 %v1187
  %v5236 = vunpack.c.l.b16 %v1188
  %v5237 = vunpack.c.h.b16 %v1188
  %v5238 = vunpack.c.l.b16 %v1189
  %v5239 = vunpack.c.h.b16 %v1189
  %v5240 = vunpack.c.l.b16 %v1190
  %v5241 = vunpack.c.h.b16 %v1190
  %v5242 = vunpack.c.l.b16 %v1191
  %v5243 = vunpack.c.h.b16 %v1191
  %v5244 = vunpack.c.l.b16 %v1192
  %v5245 = vunpack.c.h.b16 %v1192
  %v5246 = vunpack.c.l.b16 %v1193
  %v5247 = vunpack.c.h.b16 %v1193
  %v5248 = vunpack.c.l.b16 %v1194
  %v5249 = vunpack.c.h.b16 %v1194
  %v5250 = vunpack.c.l.b16 %v1195
  %v5251 = vunpack.c.h.b16 %v1195
  %v5252 = vunpack.c.l.b16 %v1196
  %v5253 = vunpack.c.h.b16 %v1196
  %v5254 = vunpack.c.l.b16 %v1197
  %v5255 = vunpack.c.h.b16 %v1197
  %v5256 = vunpack.c.l.b16 %v1198
  %v5257 = vunpack.c.h.b16 %v1198
  %v5258 = vunpack.c.l.b16 %v1199
  %v5259 = vunpack.c.h.b16 %v1199
  %v5260 = vunpack.c.l.b16 %v1200
  %v5261 = vunpack.c.h.b16 %v1200
  %v5262 = vunpack.c.l.b16 %v1201
  %v5263 = vunpack.c.h.b16 %v1201
  %v5264 = vunpack.c.l.b16 %v1202
  %v5265 = vunpack.c.h.b16 %v1202
  %v5266 = vunpack.c.l.b16 %v1203
  %v5267 = vunpack.c.h.b16 %v1203
  %v5268 = vunpack.c.l.b16 %v1204
  %v5269 = vunpack.c.h.b16 %v1204
  %v5270 = vunpack.c.l.b16 %v1205
  %v5271 = vunpack.c.h.b16 %v1205
  %v5272 = vunpack.c.l.b16 %v1206
  %v5273 = vunpack.c.h.b16 %v1206
  %v5274 = vunpack.c.l.b16 %v1207
  %v5275 = vunpack.c.h.b16 %v1207
  %v5276 = vunpack.c.l.b16 %v1208
  %v5277 = vunpack.c.h.b16 %v1208
  %v5278 = vunpack.c.l.b16 %v1209
  %v5279 = vunpack.c.h.b16 %v1209
  %v5280 = vunpack.c.l.b16 %v1210
  %v5281 = vunpack.c.h.b16 %v1210
  %v5282 = vunpack.c.l.b16 %v1211
  %v5283 = vunpack.c.h.b16 %v1211
  %v5284 = vunpack.c.l.b16 %v1212
  %v5285 = vunpack.c.h.b16 %v1212
  %v5286 = vunpack.c.l.b16 %v1213
  %v5287 = vunpack.c.h.b16 %v1213
  %v5288 = vunpack.c.l.b16 %v1214
  %v5289 = vunpack.c.h.b16 %v1214
  %v5290 = vunpack.c.l.b16 %v1215
  %v5291 = vunpack.c.h.b16 %v1215
  %v5292 = vunpack.c.l.b16 %v1216
  %v5293 = vunpack.c.h.b16 %v1216
  %v5294 = vunpack.c.l.b16 %v1217
  %v5295 = vunpack.c.h.b16 %v1217
  %v5296 = vunpack.c.l.b16 %v1218
  %v5297 = vunpack.c.h.b16 %v1218
  %v5298 = vunpack.c.l.b16 %v1219
  %v5299 = vunpack.c.h.b16 %v1219
  %v5300 = vunpack.c.l.b16 %v1220
  %v5301 = vunpack.c.h.b16 %v1220
  %v5302 = vunpack.c.l.b16 %v1221
  %v5303 = vunpack.c.h.b16 %v1221
  %v5304 = vunpack.c.l.b16 %v1222
  %v5305 = vunpack.c.h.b16 %v1222
  %v5306 = vunpack.c.l.b16 %v1223
  %v5307 = vunpack.c.h.b16 %v1223
  %v5308 = vunpack.c.l.b16 %v1224
  %v5309 = vunpack.c.h.b16 %v1224
  %v5310 = vunpack.c.l.b16 %v1225
  %v5311 = vunpack.c.h.b16 %v1225
  %v5312 = vunpack.c.l.b16 %v1226
  %v5313 = vunpack.c.h.b16 %v1226
  %v5314 = vunpack.c.l.b16 %v1227
  %v5315 = vunpack.c.h.b16 %v1227
  %v5316 = vunpack.c.l.b16 %v1228
  %v5317 = vunpack.c.h.b16 %v1228
  %v5318 = vunpack.c.l.b16 %v1229
  %v5319 = vunpack.c.h.b16 %v1229
  %v5320 = vunpack.c.l.b16 %v1230
  %v5321 = vunpack.c.h.b16 %v1230
  %v5322 = vunpack.c.l.b16 %v1231
  %v5323 = vunpack.c.h.b16 %v1231
  %v5324 = vunpack.c.l.b16 %v1232
  %v5325 = vunpack.c.h.b16 %v1232
  %v5326 = vunpack.c.l.b16 %v1233
  %v5327 = vunpack.c.h.b16 %v1233
  %v5328 = vunpack.c.l.b16 %v1234
  %v5329 = vunpack.c.h.b16 %v1234
  %v5330 = vunpack.c.l.b16 %v1235
  %v5331 = vunpack.c.h.b16 %v1235
  %v5332 = vunpack.c.l.b16 %v1236
  %v5333 = vunpack.c.h.b16 %v1236
  %v5334 = vunpack.c.l.b16 %v1237
  %v5335 = vunpack.c.h.b16 %v1237
  %v5336 = vunpack.c.l.b16 %v1238
  %v5337 = vunpack.c.h.b16 %v1238
  %v5338 = vunpack.c.l.b16 %v1239
  %v5339 = vunpack.c.h.b16 %v1239
  %v5340 = vunpack.c.l.b16 %v1240
  %v5341 = vunpack.c.h.b16 %v1240
  %v5342 = vunpack.c.l.b16 %v1241
  %v5343 = vunpack.c.h.b16 %v1241
  %v5344 = vunpack.c.l.b16 %v1242
  %v5345 = vunpack.c.h.b16 %v1242
  %v5346 = vunpack.c.l.b16 %v1243
  %v5347 = vunpack.c.h.b16 %v1243
  %v5348 = vunpack.c.l.b16 %v1244
  %v5349 = vunpack.c.h.b16 %v1244
  %v5350 = vunpack.c.l.b16 %v1245
  %v5351 = vunpack.c.h.b16 %v1245
  %v5352 = vunpack.c.l.b16 %v1246
  %v5353 = vunpack.c.h.b16 %v1246
  %v5354 = vunpack.c.l.b16 %v1247
  %v5355 = vunpack.c.h.b16 %v1247
  %v5356 = vunpack.c.l.b16 %v1248
  %v5357 = vunpack.c.h.b16 %v1248
  %v5358 = vunpack.c.l.b16 %v1249
  %v5359 = vunpack.c.h.b16 %v1249
  %v5360 = vunpack.c.l.b16 %v1250
  %v5361 = vunpack.c.h.b16 %v1250
  %v5362 = vunpack.c.l.b16 %v1251
  %v5363 = vunpack.c.h.b16 %v1251
  %v5364 = vunpack.c.l.b16 %v1252
  %v5365 = vunpack.c.h.b16 %v1252
  %v5366 = vunpack.c.l.b16 %v1253
  %v5367 = vunpack.c.h.b16 %v1253
  %v5368 = vunpack.c.l.b16 %v1254
  %v5369 = vunpack.c.h.b16 %v1254
  %v5370 = vunpack.c.l.b16 %v1255
  %v5371 = vunpack.c.h.b16 %v1255
  %v5372 = vunpack.c.l.b16 %v1256
  %v5373 = vunpack.c.h.b16 %v1256
  %v5374 = vunpack.c.l.b16 %v1257
  %v5375 = vunpack.c.h.b16 %v1257
  %v5376 = vunpack.c.l.b16 %v1258
  %v5377 = vunpack.c.h.b16 %v1258
  %v5378 = vunpack.c.l.b16 %v1259
  %v5379 = vunpack.c.h.b16 %v1259
  %v5380 = vunpack.c.l.b16 %v1260
  %v5381 = vunpack.c.h.b16 %v1260
  %v5382 = vunpack.c.l.b16 %v1261
  %v5383 = vunpack.c.h.b16 %v1261
  %v5384 = vunpack.c.l.b16 %v1262
  %v5385 = vunpack.c.h.b16 %v1262
  %v5386 = vunpack.c.l.b16 %v1263
  %v5387 = vunpack.c.h.b16 %v1263
  %v5388 = vunpack.c.l.b16 %v1264
  %v5389 = vunpack.c.h.b16 %v1264
  %v5390 = vunpack.c.l.b16 %v1265
  %v5391 = vunpack.c.h.b16 %v1265
  %v5392 = vunpack.c.l.b16 %v1266
  %v5393 = vunpack.c.h.b16 %v1266
  %v5394 = vunpack.c.l.b16 %v1267
  %v5395 = vunpack.c.h.b16 %v1267
  %v5396 = vunpack.c.l.b16 %v1268
  %v5397 = vunpack.c.h.b16 %v1268
  %v5398 = vunpack.c.l.b16 %v1269
  %v5399 = vunpack.c.h.b16 %v1269
  %v5400 = vunpack.c.l.b16 %v1270
  %v5401 = vunpack.c.h.b16 %v1270
  %v5402 = vunpack.c.l.b16 %v1271
  %v5403 = vunpack.c.h.b16 %v1271
  %v5404 = vunpack.c.l.b16 %v1272
  %v5405 = vunpack.c.h.b16 %v1272
  %v5406 = vunpack.c.l.b16 %v1273
  %v5407 = vunpack.c.h.b16 %v1273
  %v5408 = vunpack.c.l.b16 %v1274
  %v5409 = vunpack.c.h.b16 %v1274
  %v5410 = vunpack.c.l.b16 %v1275
  %v5411 = vunpack.c.h.b16 %v1275
  %v5412 = vunpack.c.l.b16 %v1276
  %v5413 = vunpack.c.h.b16 %v1276
  %v5414 = vunpack.c.l.b16 %v1277
  %v5415 = vunpack.c.h.b16 %v1277
  %v5416 = vunpack.c.l.b16 %v1278
  %v5417 = vunpack.c.h.b16 %v1278
  %v5418 = vunpack.c.l.b16 %v1279
  %v5419 = vunpack.c.h.b16 %v1279
  %v5420 = vunpack.c.l.b16 %v1280
  %v5421 = vunpack.c.h.b16 %v1280
  %v5422 = vunpack.c.l.b16 %v1281
  %v5423 = vunpack.c.h.b16 %v1281
  %v5424 = vunpack.c.l.b16 %v1282
  %v5425 = vunpack.c.h.b16 %v1282
  %v5426 = vunpack.c.l.b16 %v1283
  %v5427 = vunpack.c.h.b16 %v1283
  %v5428 = vunpack.c.l.b16 %v1284
  %v5429 = vunpack.c.h.b16 %v1284
  %v5430 = vunpack.c.l.b16 %v1285
  %v5431 = vunpack.c.h.b16 %v1285
  %v5432 = vunpack.c.l.b16 %v1286
  %v5433 = vunpack.c.h.b16 %v1286
  %v5434 = vunpack.c.l.b16 %v1287
  %v5435 = vunpack.c.h.b16 %v1287
  %v5436 = vunpack.c.l.b16 %v1288
  %v5437 = vunpack.c.h.b16 %v1288
  %v5438 = vunpack.c.l.b16 %v1289
  %v5439 = vunpack.c.h.b16 %v1289
  %v5440 = vunpack.c.l.b16 %v1290
  %v5441 = vunpack.c.h.b16 %v1290
  %v5442 = vunpack.c.l.b16 %v1291
  %v5443 = vunpack.c.h.b16 %v1291
  %v5444 = vunpack.c.l.b16 %v1292
  %v5445 = vunpack.c.h.b16 %v1292
  %v5446 = vunpack.c.l.b16 %v1293
  %v5447 = vunpack.c.h.b16 %v1293
  %v5448 = vunpack.c.l.b16 %v1294
  %v5449 = vunpack.c.h.b16 %v1294
  %v5450 = vunpack.c.l.b16 %v1295
  %v5451 = vunpack.c.h.b16 %v1295
  %v5452 = vunpack.c.l.b16 %v1296
  %v5453 = vunpack.c.h.b16 %v1296
  %v5454 = vunpack.c.l.b16 %v1297
  %v5455 = vunpack.c.h.b16 %v1297
  %v5456 = vunpack.c.l.b16 %v1298
  %v5457 = vunpack.c.h.b16 %v1298
  %v5458 = vunpack.c.l.b16 %v1299
  %v5459 = vunpack.c.h.b16 %v1299
  %v5460 = vunpack.c.l.b16 %v1300
  %v5461 = vunpack.c.h.b16 %v1300
  %v5462 = vunpack.c.l.b16 %v1301
  %v5463 = vunpack.c.h.b16 %v1301
  %v5464 = vunpack.c.l.b16 %v1302
  %v5465 = vunpack.c.h.b16 %v1302
  %v5466 = vunpack.c.l.b16 %v1303
  %v5467 = vunpack.c.h.b16 %v1303
  %v5468 = vunpack.c.l.b16 %v1304
  %v5469 = vunpack.c.h.b16 %v1304
  %v5470 = vunpack.c.l.b16 %v1305
  %v5471 = vunpack.c.h.b16 %v1305
  %v5472 = vunpack.c.l.b16 %v1306
  %v5473 = vunpack.c.h.b16 %v1306
  %v5474 = vunpack.c.l.b16 %v1307
  %v5475 = vunpack.c.h.b16 %v1307
  %v5476 = vunpack.c.l.b16 %v1308
  %v5477 = vunpack.c.h.b16 %v1308
  %v5478 = vunpack.c.l.b16 %v1309
  %v5479 = vunpack.c.h.b16 %v1309
  %v5480 = vunpack.c.l.b16 %v1310
  %v5481 = vunpack.c.h.b16 %v1310
  %v5482 = vunpack.c.l.b16 %v1311
  %v5483 = vunpack.c.h.b16 %v1311
  %v5484 = vunpack.c.l.b16 %v1312
  %v5485 = vunpack.c.h.b16 %v1312
  %v5486 = vunpack.c.l.b16 %v1313
  %v5487 = vunpack.c.h.b16 %v1313
  %v5488 = vunpack.c.l.b16 %v1314
  %v5489 = vunpack.c.h.b16 %v1314
  %v5490 = vunpack.c.l.b16 %v1315
  %v5491 = vunpack.c.h.b16 %v1315
  %v5492 = vunpack.c.l.b16 %v1316
  %v5493 = vunpack.c.h.b16 %v1316
  %v5494 = vunpack.c.l.b16 %v1317
  %v5495 = vunpack.c.h.b16 %v1317
  %v5496 = vunpack.c.l.b16 %v1318
  %v5497 = vunpack.c.h.b16 %v1318
  %v5498 = vunpack.c.l.b16 %v1319
  %v5499 = vunpack.c.h.b16 %v1319
  %v5500 = vunpack.c.l.b16 %v1320
  %v5501 = vunpack.c.h.b16 %v1320
  %v5502 = vunpack.c.l.b16 %v1321
  %v5503 = vunpack.c.h.b16 %v1321
  %v5504 = vunpack.c.l.b16 %v1322
  %v5505 = vunpack.c.h.b16 %v1322
  %v5506 = vunpack.c.l.b16 %v1323
  %v5507 = vunpack.c.h.b16 %v1323
  %v5508 = vunpack.c.l.b16 %v1324
  %v5509 = vunpack.c.h.b16 %v1324
  %v5510 = vunpack.c.l.b16 %v1325
  %v5511 = vunpack.c.h.b16 %v1325
  %v5512 = vunpack.c.l.b16 %v1326
  %v5513 = vunpack.c.h.b16 %v1326
  %v5514 = vunpack.c.l.b16 %v1327
  %v5515 = vunpack.c.h.b16 %v1327
  %v5516 = vunpack.c.l.b16 %v1328
  %v5517 = vunpack.c.h.b16 %v1328
  %v5518 = vunpack.c.l.b16 %v1329
  %v5519 = vunpack.c.h.b16 %v1329
  %v5520 = vunpack.c.l.b16 %v1330
  %v5521 = vunpack.c.h.b16 %v1330
  %v5522 = vunpack.c.l.b16 %v1331
  %v5523 = vunpack.c.h.b16 %v1331
  %v5524 = vunpack.c.l.b16 %v1332
  %v5525 = vunpack.c.h.b16 %v1332
  %v5526 = vunpack.c.l.b16 %v1333
  %v5527 = vunpack.c.h.b16 %v1333
  %v5528 = vunpack.c.l.b16 %v1334
  %v5529 = vunpack.c.h.b16 %v1334
  %v5530 = vunpack.c.l.b16 %v1335
  %v5531 = vunpack.c.h.b16 %v1335
  %v5532 = vunpack.c.l.b16 %v1336
  %v5533 = vunpack.c.h.b16 %v1336
  %v5534 = vunpack.c.l.b16 %v1337
  %v5535 = vunpack.c.h.b16 %v1337
  %v5536 = vunpack.c.l.b16 %v1338
  %v5537 = vunpack.c.h.b16 %v1338
  %v5538 = vunpack.c.l.b16 %v1339
  %v5539 = vunpack.c.h.b16 %v1339
  %v5540 = vunpack.c.l.b16 %v1340
  %v5541 = vunpack.c.h.b16 %v1340
  %v5542 = vunpack.c.l.b16 %v1341
  %v5543 = vunpack.c.h.b16 %v1341
  %v5544 = vunpack.c.l.b16 %v1342
  %v5545 = vunpack.c.h.b16 %v1342
  %v5546 = vunpack.c.l.b16 %v1343
  %v5547 = vunpack.c.h.b16 %v1343
  %v5548 = vunpack.c.l.b16 %v1344
  %v5549 = vunpack.c.h.b16 %v1344
  %v5550 = vunpack.c.l.b16 %v1345
  %v5551 = vunpack.c.h.b16 %v1345
  %v5552 = vunpack.c.l.b16 %v1346
  %v5553 = vunpack.c.h.b16 %v1346
  %v5554 = vunpack.c.l.b16 %v1347
  %v5555 = vunpack.c.h.b16 %v1347
  %v5556 = vunpack.c.l.b16 %v1348
  %v5557 = vunpack.c.h.b16 %v1348
  %v5558 = vunpack.c.l.b16 %v1349
  %v5559 = vunpack.c.h.b16 %v1349
  %v5560 = vunpack.c.l.b16 %v1350
  %v5561 = vunpack.c.h.b16 %v1350
  %v5562 = vunpack.c.l.b16 %v1351
  %v5563 = vunpack.c.h.b16 %v1351
  %v5564 = vunpack.c.l.b16 %v1352
  %v5565 = vunpack.c.h.b16 %v1352
  %v5566 = vunpack.c.l.b16 %v1353
  %v5567 = vunpack.c.h.b16 %v1353
  %v5568 = vunpack.c.l.b16 %v1354
  %v5569 = vunpack.c.h.b16 %v1354
  %v5570 = vunpack.c.l.b16 %v1355
  %v5571 = vunpack.c.h.b16 %v1355
  %v5572 = vunpack.c.l.b16 %v1356
  %v5573 = vunpack.c.h.b16 %v1356
  %v5574 = vunpack.c.l.b16 %v1357
  %v5575 = vunpack.c.h.b16 %v1357
  %v5576 = vunpack.c.l.b16 %v1358
  %v5577 = vunpack.c.h.b16 %v1358
  %v5578 = vunpack.c.l.b16 %v1359
  %v5579 = vunpack.c.h.b16 %v1359
  %v5580 = vunpack.c.l.b16 %v1360
  %v5581 = vunpack.c.h.b16 %v1360
  %v5582 = vunpack.c.l.b16 %v1361
  %v5583 = vunpack.c.h.b16 %v1361
  %v5584 = vunpack.c.l.b16 %v1362
  %v5585 = vunpack.c.h.b16 %v1362
  %v5586 = vunpack.c.l.b16 %v1363
  %v5587 = vunpack.c.h.b16 %v1363
  %v5588 = vunpack.c.l.b16 %v1364
  %v5589 = vunpack.c.h.b16 %v1364
  %v5590 = vunpack.c.l.b16 %v1365
  %v5591 = vunpack.c.h.b16 %v1365
  %v5592 = vunpack.c.l.b16 %v1366
  %v5593 = vunpack.c.h.b16 %v1366
  %v5594 = vunpack.c.l.b16 %v1367
  %v5595 = vunpack.c.h.b16 %v1367
  %v5596 = vunpack.c.l.b16 %v1368
  %v5597 = vunpack.c.h.b16 %v1368
  %v5598 = vunpack.c.l.b16 %v1369
  %v5599 = vunpack.c.h.b16 %v1369
  %v5600 = vunpack.c.l.b16 %v1370
  %v5601 = vunpack.c.h.b16 %v1370
  %v5602 = vunpack.c.l.b16 %v1371
  %v5603 = vunpack.c.h.b16 %v1371
  %v5604 = vunpack.c.l.b16 %v1372
  %v5605 = vunpack.c.h.b16 %v1372
  %v5606 = vunpack.c.l.b16 %v1373
  %v5607 = vunpack.c.h.b16 %v1373
  %v5608 = vunpack.c.l.b16 %v1374
  %v5609 = vunpack.c.h.b16 %v1374
  %v5610 = vunpack.c.l.b16 %v1375
  %v5611 = vunpack.c.h.b16 %v1375
  %v5612 = vunpack.c.l.b16 %v1376
  %v5613 = vunpack.c.h.b16 %v1376
  %v5614 = vunpack.c.l.b16 %v1377
  %v5615 = vunpack.c.h.b16 %v1377
  %v5616 = vunpack.c.l.b16 %v1378
  %v5617 = vunpack.c.h.b16 %v1378
  %v5618 = vunpack.c.l.b16 %v1379
  %v5619 = vunpack.c.h.b16 %v1379
  %v5620 = vunpack.c.l.b16 %v1380
  %v5621 = vunpack.c.h.b16 %v1380
  %v5622 = vunpack.c.l.b16 %v1381
  %v5623 = vunpack.c.h.b16 %v1381
  %v5624 = vunpack.c.l.b16 %v1382
  %v5625 = vunpack.c.h.b16 %v1382
  %v5626 = vunpack.c.l.b16 %v1383
  %v5627 = vunpack.c.h.b16 %v1383
  %v5628 = vunpack.c.l.b16 %v1384
  %v5629 = vunpack.c.h.b16 %v1384
  %v5630 = vunpack.c.l.b16 %v1385
  %v5631 = vunpack.c.h.b16 %v1385
  %v5632 = vunpack.c.l.b16 %v1386
  %v5633 = vunpack.c.h.b16 %v1386
  %v5634 = vunpack.c.l.b16 %v1387
  %v5635 = vunpack.c.h.b16 %v1387
  %v5636 = vunpack.c.l.b16 %v1388
  %v5637 = vunpack.c.h.b16 %v1388
  %v5638 = vunpack.c.l.b16 %v1389
  %v5639 = vunpack.c.h.b16 %v1389
  %v5640 = vunpack.c.l.b16 %v1390
  %v5641 = vunpack.c.h.b16 %v1390
  %v5642 = vunpack.c.l.b16 %v1391
  %v5643 = vunpack.c.h.b16 %v1391
  %v5644 = vunpack.c.l.b16 %v1392
  %v5645 = vunpack.c.h.b16 %v1392
  %v5646 = vunpack.c.l.b16 %v1393
  %v5647 = vunpack.c.h.b16 %v1393
  %v5648 = vunpack.c.l.b16 %v1394
  %v5649 = vunpack.c.h.b16 %v1394
  %v5650 = vunpack.c.l.b16 %v1395
  %v5651 = vunpack.c.h.b16 %v1395
  %v5652 = vunpack.c.l.b16 %v1396
  %v5653 = vunpack.c.h.b16 %v1396
  %v5654 = vunpack.c.l.b16 %v1397
  %v5655 = vunpack.c.h.b16 %v1397
  %v5656 = vunpack.c.l.b16 %v1398
  %v5657 = vunpack.c.h.b16 %v1398
  %v5658 = vunpack.c.l.b16 %v1399
  %v5659 = vunpack.c.h.b16 %v1399
  %v5660 = vunpack.c.l.b16 %v1400
  %v5661 = vunpack.c.h.b16 %v1400
  %v5662 = vunpack.c.l.b16 %v1401
  %v5663 = vunpack.c.h.b16 %v1401
  %v5664 = vunpack.c.l.b16 %v1402
  %v5665 = vunpack.c.h.b16 %v1402
  %v5666 = vunpack.c.l.b16 %v1403
  %v5667 = vunpack.c.h.b16 %v1403
  %v5668 = vunpack.c.l.b16 %v1404
  %v5669 = vunpack.c.h.b16 %v1404
  %v5670 = vunpack.c.l.b16 %v1405
  %v5671 = vunpack.c.h.b16 %v1405
  %v5672 = vunpack.c.l.b16 %v1406
  %v5673 = vunpack.c.h.b16 %v1406
  %v5674 = vunpack.c.l.b16 %v1407
  %v5675 = vunpack.c.h.b16 %v1407
  %v5676 = vunpack.c.l.b16 %v1408
  %v5677 = vunpack.c.h.b16 %v1408
  %v5678 = vunpack.c.l.b16 %v1409
  %v5679 = vunpack.c.h.b16 %v1409
  %v5680 = vunpack.c.l.b16 %v1410
  %v5681 = vunpack.c.h.b16 %v1410
  %v5682 = vunpack.c.l.b16 %v1411
  %v5683 = vunpack.c.h.b16 %v1411
  %v5684 = vunpack.c.l.b16 %v1412
  %v5685 = vunpack.c.h.b16 %v1412
  %v5686 = vunpack.c.l.b16 %v1413
  %v5687 = vunpack.c.h.b16 %v1413
  %v5688 = vunpack.c.l.b16 %v1414
  %v5689 = vunpack.c.h.b16 %v1414
  %v5690 = vunpack.c.l.b16 %v1415
  %v5691 = vunpack.c.h.b16 %v1415
  %v5692 = vunpack.c.l.b16 %v1416
  %v5693 = vunpack.c.h.b16 %v1416
  %v5694 = vunpack.c.l.b16 %v1417
  %v5695 = vunpack.c.h.b16 %v1417
  %v5696 = vunpack.c.l.b16 %v1418
  %v5697 = vunpack.c.h.b16 %v1418
  %v5698 = vunpack.c.l.b16 %v1419
  %v5699 = vunpack.c.h.b16 %v1419
  %v5700 = vunpack.c.l.b16 %v1420
  %v5701 = vunpack.c.h.b16 %v1420
  %v5702 = vunpack.c.l.b16 %v1421
  %v5703 = vunpack.c.h.b16 %v1421
  %v5704 = vunpack.c.l.b16 %v1422
  %v5705 = vunpack.c.h.b16 %v1422
  %v5706 = vunpack.c.l.b16 %v1423
  %v5707 = vunpack.c.h.b16 %v1423
  %v5708 = vunpack.c.l.b16 %v1424
  %v5709 = vunpack.c.h.b16 %v1424
  %v5710 = vunpack.c.l.b16 %v1425
  %v5711 = vunpack.c.h.b16 %v1425
  %v5712 = vunpack.c.l.b16 %v1426
  %v5713 = vunpack.c.h.b16 %v1426
  %v5714 = vunpack.c.l.b16 %v1427
  %v5715 = vunpack.c.h.b16 %v1427
  %v5716 = vunpack.c.l.b16 %v1428
  %v5717 = vunpack.c.h.b16 %v1428
  %v5718 = vunpack.c.l.b16 %v1429
  %v5719 = vunpack.c.h.b16 %v1429
  %v5720 = vunpack.c.l.b16 %v1430
  %v5721 = vunpack.c.h.b16 %v1430
  %v5722 = vunpack.c.l.b16 %v1431
  %v5723 = vunpack.c.h.b16 %v1431
  %v5724 = vunpack.c.l.b16 %v1432
  %v5725 = vunpack.c.h.b16 %v1432
  %v5726 = vunpack.c.l.b16 %v1433
  %v5727 = vunpack.c.h.b16 %v1433
  %v5728 = vunpack.c.l.b16 %v1434
  %v5729 = vunpack.c.h.b16 %v1434
  %v5730 = vunpack.c.l.b16 %v1435
  %v5731 = vunpack.c.h.b16 %v1435
  %v5732 = vunpack.c.l.b16 %v1436
  %v5733 = vunpack.c.h.b16 %v1436
  %v5734 = vunpack.c.l.b16 %v1437
  %v5735 = vunpack.c.h.b16 %v1437
  %v5736 = vunpack.c.l.b16 %v1438
  %v5737 = vunpack.c.h.b16 %v1438
  %v5738 = vunpack.c.l.b16 %v1439
  %v5739 = vunpack.c.h.b16 %v1439
  %v5740 = vunpack.c.l.b16 %v1440
  %v5741 = vunpack.c.h.b16 %v1440
  %v5742 = vunpack.c.l.b16 %v1441
  %v5743 = vunpack.c.h.b16 %v1441
  %v5744 = vunpack.c.l.b16 %v1442
  %v5745 = vunpack.c.h.b16 %v1442
  %v5746 = vunpack.c.l.b16 %v1443
  %v5747 = vunpack.c.h.b16 %v1443
  %v5748 = vunpack.c.l.b16 %v1444
  %v5749 = vunpack.c.h.b16 %v1444
  %v5750 = vunpack.c.l.b16 %v1445
  %v5751 = vunpack.c.h.b16 %v1445
  %v5752 = vunpack.c.l.b16 %v1446
  %v5753 = vunpack.c.h.b16 %v1446
  %v5754 = vunpack.c.l.b16 %v1447
  %v5755 = vunpack.c.h.b16 %v1447
  %v5756 = vunpack.c.l.b16 %v1448
  %v5757 = vunpack.c.h.b16 %v1448
  %v5758 = vunpack.c.l.b16 %v1449
  %v5759 = vunpack.c.h.b16 %v1449
  %v5760 = vunpack.c.l.b16 %v1450
  %v5761 = vunpack.c.h.b16 %v1450
  %v5762 = vunpack.c.l.b16 %v1451
  %v5763 = vunpack.c.h.b16 %v1451
  %v5764 = vunpack.c.l.b16 %v1452
  %v5765 = vunpack.c.h.b16 %v1452
  %v5766 = vunpack.c.l.b16 %v1453
  %v5767 = vunpack.c.h.b16 %v1453
  %v5768 = vunpack.c.l.b16 %v1454
  %v5769 = vunpack.c.h.b16 %v1454
  %v5770 = vunpack.c.l.b16 %v1455
  %v5771 = vunpack.c.h.b16 %v1455
  %v5772 = vunpack.c.l.b16 %v1456
  %v5773 = vunpack.c.h.b16 %v1456
  %v5774 = vunpack.c.l.b16 %v1457
  %v5775 = vunpack.c.h.b16 %v1457
  %v5776 = vunpack.c.l.b16 %v1458
  %v5777 = vunpack.c.h.b16 %v1458
  %v5778 = vunpack.c.l.b16 %v1459
  %v5779 = vunpack.c.h.b16 %v1459
  %v5780 = vunpack.c.l.b16 %v1460
  %v5781 = vunpack.c.h.b16 %v1460
  %v5782 = vunpack.c.l.b16 %v1461
  %v5783 = vunpack.c.h.b16 %v1461
  %v5784 = vunpack.c.l.b16 %v1462
  %v5785 = vunpack.c.h.b16 %v1462
  %v5786 = vunpack.c.l.b16 %v1463
  %v5787 = vunpack.c.h.b16 %v1463
  %v5788 = vunpack.c.l.b16 %v1464
  %v5789 = vunpack.c.h.b16 %v1464
  %v5790 = vunpack.c.l.b16 %v1465
  %v5791 = vunpack.c.h.b16 %v1465
  %v5792 = vunpack.c.l.b16 %v1466
  %v5793 = vunpack.c.h.b16 %v1466
  %v5794 = vunpack.c.l.b16 %v1467
  %v5795 = vunpack.c.h.b16 %v1467
  %v5796 = vunpack.c.l.b16 %v1468
  %v5797 = vunpack.c.h.b16 %v1468
  %v5798 = vunpack.c.l.b16 %v1469
  %v5799 = vunpack.c.h.b16 %v1469
  %v5800 = vunpack.c.l.b16 %v1470
  %v5801 = vunpack.c.h.b16 %v1470
  %v5802 = vunpack.c.l.b16 %v1471
  %v5803 = vunpack.c.h.b16 %v1471
  %v5804 = vunpack.c.l.b16 %v1472
  %v5805 = vunpack.c.h.b16 %v1472
  %v5806 = vunpack.c.l.b16 %v1473
  %v5807 = vunpack.c.h.b16 %v1473
  %v5808 = vunpack.c.l.b16 %v1474
  %v5809 = vunpack.c.h.b16 %v1474
  %v5810 = vunpack.c.l.b16 %v1475
  %v5811 = vunpack.c.h.b16 %v1475
  %v5812 = vunpack.c.l.b16 %v1476
  %v5813 = vunpack.c.h.b16 %v1476
  %v5814 = vunpack.c.l.b16 %v1477
  %v5815 = vunpack.c.h.b16 %v1477
  %v5816 = vunpack.c.l.b16 %v1478
  %v5817 = vunpack.c.h.b16 %v1478
  %v5818 = vunpack.c.l.b16 %v1479
  %v5819 = vunpack.c.h.b16 %v1479
  %v5820 = vunpack.c.l.b16 %v1480
  %v5821 = vunpack.c.h.b16 %v1480
  %v5822 = vunpack.c.l.b16 %v1481
  %v5823 = vunpack.c.h.b16 %v1481
  %v5824 = vunpack.c.l.b16 %v1482
  %v5825 = vunpack.c.h.b16 %v1482
  %v5826 = vunpack.c.l.b16 %v1483
  %v5827 = vunpack.c.h.b16 %v1483
  %v5828 = vunpack.c.l.b16 %v1484
  %v5829 = vunpack.c.h.b16 %v1484
  %v5830 = vunpack.c.l.b16 %v1485
  %v5831 = vunpack.c.h.b16 %v1485
  %v5832 = vunpack.c.l.b16 %v1486
  %v5833 = vunpack.c.h.b16 %v1486
  %v5834 = vunpack.c.l.b16 %v1487
  %v5835 = vunpack.c.h.b16 %v1487
  %v5836 = vunpack.c.l.b16 %v1488
  %v5837 = vunpack.c.h.b16 %v1488
  %v5838 = vunpack.c.l.b16 %v1489
  %v5839 = vunpack.c.h.b16 %v1489
  %v5840 = vunpack.c.l.b16 %v1490
  %v5841 = vunpack.c.h.b16 %v1490
  %v5842 = vunpack.c.l.b16 %v1491
  %v5843 = vunpack.c.h.b16 %v1491
  %v5844 = vunpack.c.l.b16 %v1492
  %v5845 = vunpack.c.h.b16 %v1492
  %v5846 = vunpack.c.l.b16 %v1493
  %v5847 = vunpack.c.h.b16 %v1493
  %v5848 = vunpack.c.l.b16 %v1494
  %v5849 = vunpack.c.h.b16 %v1494
  %v5850 = vunpack.c.l.b16 %v1495
  %v5851 = vunpack.c.h.b16 %v1495
  %v5852 = vunpack.c.l.b16 %v1496
  %v5853 = vunpack.c.h.b16 %v1496
  %v5854 = vunpack.c.l.b16 %v1497
  %v5855 = vunpack.c.h.b16 %v1497
  %v5856 = vunpack.c.l.b16 %v1498
  %v5857 = vunpack.c.h.b16 %v1498
  %v5858 = vunpack.c.l.b16 %v1499
  %v5859 = vunpack.c.h.b16 %v1499
  %v5860 = vunpack.c.l.b16 %v1500
  %v5861 = vunpack.c.h.b16 %v1500
  %v5862 = vunpack.c.l.b16 %v1501
  %v5863 = vunpack.c.h.b16 %v1501
  %v5864 = vunpack.c.l.b16 %v1502
  %v5865 = vunpack.c.h.b16 %v1502
  %v5866 = vunpack.c.l.b16 %v1503
  %v5867 = vunpack.c.h.b16 %v1503
  %v5868 = vunpack.c.l.b16 %v1504
  %v5869 = vunpack.c.h.b16 %v1504
  %v5870 = vunpack.c.l.b16 %v1505
  %v5871 = vunpack.c.h.b16 %v1505
  %v5872 = vunpack.c.l.b16 %v1506
  %v5873 = vunpack.c.h.b16 %v1506
  %v5874 = vunpack.c.l.b16 %v1507
  %v5875 = vunpack.c.h.b16 %v1507
  %v5876 = vunpack.c.l.b16 %v1508
  %v5877 = vunpack.c.h.b16 %v1508
  %v5878 = vunpack.c.l.b16 %v1509
  %v5879 = vunpack.c.h.b16 %v1509
  %v5880 = vunpack.c.l.b16 %v1510
  %v5881 = vunpack.c.h.b16 %v1510
  %v5882 = vunpack.c.l.b16 %v1511
  %v5883 = vunpack.c.h.b16 %v1511
  %v5884 = vunpack.c.l.b16 %v1512
  %v5885 = vunpack.c.h.b16 %v1512
  %v5886 = vunpack.c.l.b16 %v1513
  %v5887 = vunpack.c.h.b16 %v1513
  %v5888 = vunpack.c.l.b16 %v1514
  %v5889 = vunpack.c.h.b16 %v1514
  %v5890 = vunpack.c.l.b16 %v1515
  %v5891 = vunpack.c.h.b16 %v1515
  %v5892 = vunpack.c.l.b16 %v1516
  %v5893 = vunpack.c.h.b16 %v1516
  %v5894 = vunpack.c.l.b16 %v1517
  %v5895 = vunpack.c.h.b16 %v1517
  %v5896 = vunpack.c.l.b16 %v1518
  %v5897 = vunpack.c.h.b16 %v1518
  %v5898 = vunpack.c.l.b16 %v1519
  %v5899 = vunpack.c.h.b16 %v1519
  %v5900 = vunpack.c.l.b16 %v1520
  %v5901 = vunpack.c.h.b16 %v1520
  %v5902 = vunpack.c.l.b16 %v1521
  %v5903 = vunpack.c.h.b16 %v1521
  %v5904 = vunpack.c.l.b16 %v1522
  %v5905 = vunpack.c.h.b16 %v1522
  %v5906 = vunpack.c.l.b16 %v1523
  %v5907 = vunpack.c.h.b16 %v1523
  %v5908 = vunpack.c.l.b16 %v1524
  %v5909 = vunpack.c.h.b16 %v1524
  %v5910 = vunpack.c.l.b16 %v1525
  %v5911 = vunpack.c.h.b16 %v1525
  %v5912 = vunpack.c.l.b16 %v1526
  %v5913 = vunpack.c.h.b16 %v1526
  %v5914 = vunpack.c.l.b16 %v1527
  %v5915 = vunpack.c.h.b16 %v1527
  %v5916 = vunpack.c.l.b16 %v1528
  %v5917 = vunpack.c.h.b16 %v1528
  %v5918 = vunpack.c.l.b16 %v1529
  %v5919 = vunpack.c.h.b16 %v1529
  %v5920 = vunpack.c.l.b16 %v1530
  %v5921 = vunpack.c.h.b16 %v1530
  %v5922 = vunpack.c.l.b16 %v1531
  %v5923 = vunpack.c.h.b16 %v1531
  %v5924 = vunpack.c.l.b16 %v1532
  %v5925 = vunpack.c.h.b16 %v1532
  %v5926 = vunpack.c.l.b16 %v1533
  %v5927 = vunpack.c.h.b16 %v1533
  %v5928 = vunpack.c.l.b16 %v1534
  %v5929 = vunpack.c.h.b16 %v1534
  %v5930 = vunpack.c.l.b16 %v1535
  %v5931 = vunpack.c.h.b16 %v1535
  %v5932 = vunpack.c.l.b16 %v1536
  %v5933 = vunpack.c.h.b16 %v1536
  %v5934 = vunpack.c.l.b16 %v1537
  %v5935 = vunpack.c.h.b16 %v1537
  %v5936 = vunpack.c.l.b16 %v1538
  %v5937 = vunpack.c.h.b16 %v1538
  %v5938 = vunpack.c.l.b16 %v1539
  %v5939 = vunpack.c.h.b16 %v1539
  %v5940 = vunpack.c.l.b16 %v1540
  %v5941 = vunpack.c.h.b16 %v1540
  %v5942 = vunpack.c.l.b16 %v1541
  %v5943 = vunpack.c.h.b16 %v1541
  %v5944 = vunpack.c.l.b16 %v1542
  %v5945 = vunpack.c.h.b16 %v1542
  %v5946 = vunpack.c.l.b16 %v1543
  %v5947 = vunpack.c.h.b16 %v1543
  %v5948 = vunpack.c.l.b16 %v1544
  %v5949 = vunpack.c.h.b16 %v1544
  %v5950 = vunpack.c.l.b16 %v1545
  %v5951 = vunpack.c.h.b16 %v1545
  %v5952 = vunpack.c.l.b16 %v1546
  %v5953 = vunpack.c.h.b16 %v1546
  %v5954 = vunpack.c.l.b16 %v1547
  %v5955 = vunpack.c.h.b16 %v1547
  %v5956 = vunpack.c.l.b16 %v1548
  %v5957 = vunpack.c.h.b16 %v1548
  %v5958 = vunpack.c.l.b16 %v1549
  %v5959 = vunpack.c.h.b16 %v1549
  %v5960 = vunpack.c.l.b16 %v1550
  %v5961 = vunpack.c.h.b16 %v1550
  %v5962 = vunpack.c.l.b16 %v1551
  %v5963 = vunpack.c.h.b16 %v1551
  %v5964 = vunpack.c.l.b16 %v1552
  %v5965 = vunpack.c.h.b16 %v1552
  %v5966 = vunpack.c.l.b16 %v1553
  %v5967 = vunpack.c.h.b16 %v1553
  %v5968 = vunpack.c.l.b16 %v1554
  %v5969 = vunpack.c.h.b16 %v1554
  %v5970 = vunpack.c.l.b16 %v1555
  %v5971 = vunpack.c.h.b16 %v1555
  %v5972 = vunpack.c.l.b16 %v1556
  %v5973 = vunpack.c.h.b16 %v1556
  %v5974 = vunpack.c.l.b16 %v1557
  %v5975 = vunpack.c.h.b16 %v1557
  %v5976 = vunpack.c.l.b16 %v1558
  %v5977 = vunpack.c.h.b16 %v1558
  %v5978 = vunpack.c.l.b16 %v1559
  %v5979 = vunpack.c.h.b16 %v1559
  %v5980 = vunpack.c.l.b16 %v1560
  %v5981 = vunpack.c.h.b16 %v1560
  %v5982 = vunpack.c.l.b16 %v1561
  %v5983 = vunpack.c.h.b16 %v1561
  %v5984 = vunpack.c.l.b16 %v1562
  %v5985 = vunpack.c.h.b16 %v1562
  %v5986 = vunpack.c.l.b16 %v1563
  %v5987 = vunpack.c.h.b16 %v1563
  %v5988 = vunpack.c.l.b16 %v1564
  %v5989 = vunpack.c.h.b16 %v1564
  %v5990 = vunpack.c.l.b16 %v1565
  %v5991 = vunpack.c.h.b16 %v1565
  %v5992 = vunpack.c.l.b16 %v1566
  %v5993 = vunpack.c.h.b16 %v1566
  %v5994 = vunpack.c.l.b16 %v1567
  %v5995 = vunpack.c.h.b16 %v1567
  %v5996 = vunpack.c.l.b16 %v1568
  %v5997 = vunpack.c.h.b16 %v1568
  %v5998 = vunpack.c.l.b16 %v1569
  %v5999 = vunpack.c.h.b16 %v1569
  %v6000 = vunpack.c.l.b16 %v1570
  %v6001 = vunpack.c.h.b16 %v1570
  %v6002 = vunpack.c.l.b16 %v1571
  %v6003 = vunpack.c.h.b16 %v1571
  %v6004 = vunpack.c.l.b16 %v1572
  %v6005 = vunpack.c.h.b16 %v1572
  %v6006 = vunpack.c.l.b16 %v1573
  %v6007 = vunpack.c.h.b16 %v1573
  %v6008 = vunpack.c.l.b16 %v1574
  %v6009 = vunpack.c.h.b16 %v1574
  %v6010 = vunpack.c.l.b16 %v1575
  %v6011 = vunpack.c.h.b16 %v1575
  %v6012 = vunpack.c.l.b16 %v1576
  %v6013 = vunpack.c.h.b16 %v1576
  %v6014 = vunpack.c.l.b16 %v1577
  %v6015 = vunpack.c.h.b16 %v1577
  %v6016 = vunpack.c.l.b16 %v1578
  %v6017 = vunpack.c.h.b16 %v1578
  %v6018 = vunpack.c.l.b16 %v1579
  %v6019 = vunpack.c.h.b16 %v1579
  %v6020 = vunpack.c.l.b16 %v1580
  %v6021 = vunpack.c.h.b16 %v1580
  %v6022 = vunpack.c.l.b16 %v1581
  %v6023 = vunpack.c.h.b16 %v1581
  %v6024 = vunpack.c.l.b16 %v1582
  %v6025 = vunpack.c.h.b16 %v1582
  %v6026 = vunpack.c.l.b16 %v1583
  %v6027 = vunpack.c.h.b16 %v1583
  %v6028 = vunpack.c.l.b16 %v1584
  %v6029 = vunpack.c.h.b16 %v1584
  %v6030 = vunpack.c.l.b16 %v1585
  %v6031 = vunpack.c.h.b16 %v1585
  %v6032 = vunpack.c.l.b16 %v1586
  %v6033 = vunpack.c.h.b16 %v1586
  %v6034 = vunpack.c.l.b16 %v1587
  %v6035 = vunpack.c.h.b16 %v1587
  %v6036 = vunpack.c.l.b16 %v1588
  %v6037 = vunpack.c.h.b16 %v1588
  %v6038 = vunpack.c.l.b16 %v1589
  %v6039 = vunpack.c.h.b16 %v1589
  %v6040 = vunpack.c.l.b16 %v1590
  %v6041 = vunpack.c.h.b16 %v1590
  %v6042 = vunpack.c.l.b16 %v1591
  %v6043 = vunpack.c.h.b16 %v1591
  %v6044 = vunpack.c.l.b16 %v1592
  %v6045 = vunpack.c.h.b16 %v1592
  %v6046 = vunpack.c.l.b16 %v1593
  %v6047 = vunpack.c.h.b16 %v1593
  %v6048 = vunpack.c.l.b16 %v1594
  %v6049 = vunpack.c.h.b16 %v1594
  %v6050 = vunpack.c.l.b16 %v1595
  %v6051 = vunpack.c.h.b16 %v1595
  %v6052 = vunpack.c.l.b16 %v1596
  %v6053 = vunpack.c.h.b16 %v1596
  %v6054 = vunpack.c.l.b16 %v1597
  %v6055 = vunpack.c.h.b16 %v1597
  %v6056 = vunpack.c.l.b16 %v1598
  %v6057 = vunpack.c.h.b16 %v1598
  %v6058 = vunpack.c.l.b16 %v1599
  %v6059 = vunpack.c.h.b16 %v1599
  %v6060 = vunpack.c.l.b16 %v1600
  %v6061 = vunpack.c.h.b16 %v1600
  %v6062 = vunpack.c.l.b16 %v1601
  %v6063 = vunpack.c.h.b16 %v1601
  %v6064 = vunpack.c.l.b16 %v1602
  %v6065 = vunpack.c.h.b16 %v1602
  %v6066 = vunpack.c.l.b16 %v1603
  %v6067 = vunpack.c.h.b16 %v1603
  %v6068 = vunpack.c.l.b16 %v1604
  %v6069 = vunpack.c.h.b16 %v1604
  %v6070 = vunpack.c.l.b16 %v1605
  %v6071 = vunpack.c.h.b16 %v1605
  %v6072 = vunpack.c.l.b16 %v1606
  %v6073 = vunpack.c.h.b16 %v1606
  %v6074 = vunpack.c.l.b16 %v1607
  %v6075 = vunpack.c.h.b16 %v1607
  %v6076 = vunpack.c.l.b16 %v1608
  %v6077 = vunpack.c.h.b16 %v1608
  %v6078 = vunpack.c.l.b16 %v1609
  %v6079 = vunpack.c.h.b16 %v1609
  %v6080 = vunpack.c.l.b16 %v1610
  %v6081 = vunpack.c.h.b16 %v1610
  %v6082 = vunpack.c.l.b16 %v1611
  %v6083 = vunpack.c.h.b16 %v1611
  %v6084 = vunpack.c.l.b16 %v1612
  %v6085 = vunpack.c.h.b16 %v1612
  %v6086 = vunpack.c.l.b16 %v1613
  %v6087 = vunpack.c.h.b16 %v1613
  %v6088 = vunpack.c.l.b16 %v1614
  %v6089 = vunpack.c.h.b16 %v1614
  %v6090 = vunpack.c.l.b16 %v1615
  %v6091 = vunpack.c.h.b16 %v1615
  %v6092 = vunpack.c.l.b16 %v1616
  %v6093 = vunpack.c.h.b16 %v1616
  %v6094 = vunpack.c.l.b16 %v1617
  %v6095 = vunpack.c.h.b16 %v1617
  %v6096 = vunpack.c.l.b16 %v1618
  %v6097 = vunpack.c.h.b16 %v1618
  %v6098 = vunpack.c.l.b16 %v1619
  %v6099 = vunpack.c.h.b16 %v1619
  %v6100 = vunpack.c.l.b16 %v1620
  %v6101 = vunpack.c.h.b16 %v1620
  %v6102 = vunpack.c.l.b16 %v1621
  %v6103 = vunpack.c.h.b16 %v1621
  %v6104 = vunpack.c.l.b16 %v1622
  %v6105 = vunpack.c.h.b16 %v1622
  %v6106 = vunpack.c.l.b16 %v1623
  %v6107 = vunpack.c.h.b16 %v1623
  %v6108 = vunpack.c.l.b16 %v1624
  %v6109 = vunpack.c.h.b16 %v1624
  %v6110 = vunpack.c.l.b16 %v1625
  %v6111 = vunpack.c.h.b16 %v1625
  %v6112 = vunpack.c.l.b16 %v1626
  %v6113 = vunpack.c.h.b16 %v1626
  %v6114 = vunpack.c.l.b16 %v1627
  %v6115 = vunpack.c.h.b16 %v1627
  %v6116 = vunpack.c.l.b16 %v1628
  %v6117 = vunpack.c.h.b16 %v1628
  %v6118 = vunpack.c.l.b16 %v1629
  %v6119 = vunpack.c.h.b16 %v1629
  %v6120 = vunpack.c.l.b16 %v1630
  %v6121 = vunpack.c.h.b16 %v1630
  %v6122 = vunpack.c.l.b16 %v1631
  %v6123 = vunpack.c.h.b16 %v1631
  %v6124 = vunpack.c.l.b16 %v1632
  %v6125 = vunpack.c.h.b16 %v1632
  %v6126 = vunpack.c.l.b16 %v1633
  %v6127 = vunpack.c.h.b16 %v1633
  %v6128 = vunpack.c.l.b16 %v1634
  %v6129 = vunpack.c.h.b16 %v1634
  %v6130 = vunpack.c.l.b16 %v1635
  %v6131 = vunpack.c.h.b16 %v1635
  %v6132 = vunpack.c.l.b16 %v1636
  %v6133 = vunpack.c.h.b16 %v1636
  %v6134 = vunpack.c.l.b16 %v1637
  %v6135 = vunpack.c.h.b16 %v1637
  %v6136 = vunpack.c.l.b16 %v1638
  %v6137 = vunpack.c.h.b16 %v1638
  %v6138 = vunpack.c.l.b16 %v1639
  %v6139 = vunpack.c.h.b16 %v1639
  %v6140 = vunpack.c.l.b16 %v1640
  %v6141 = vunpack.c.h.b16 %v1640
  %v6142 = vunpack.c.l.b16 %v1641
  %v6143 = vunpack.c.h.b16 %v1641
  %v6144 = vunpack.c.l.b16 %v1642
  %v6145 = vunpack.c.h.b16 %v1642
  %v6146 = vunpack.c.l.b16 %v1643
  %v6147 = vunpack.c.h.b16 %v1643
  %v6148 = vunpack.c.l.b16 %v1644
  %v6149 = vunpack.c.h.b16 %v1644
  %v6150 = vunpack.c.l.b16 %v1645
  %v6151 = vunpack.c.h.b16 %v1645
  %v6152 = vunpack.c.l.b16 %v1646
  %v6153 = vunpack.c.h.b16 %v1646
  %v6154 = vunpack.c.l.b16 %v1647
  %v6155 = vunpack.c.h.b16 %v1647
  %v6156 = vunpack.c.l.b16 %v1648
  %v6157 = vunpack.c.h.b16 %v1648
  %v6158 = vunpack.c.l.b16 %v1649
  %v6159 = vunpack.c.h.b16 %v1649
  %v6160 = vunpack.c.l.b16 %v1650
  %v6161 = vunpack.c.h.b16 %v1650
  %v6162 = vunpack.c.l.b16 %v1651
  %v6163 = vunpack.c.h.b16 %v1651
  %v6164 = vunpack.c.l.b16 %v1652
  %v6165 = vunpack.c.h.b16 %v1652
  %v6166 = vunpack.c.l.b16 %v1653
  %v6167 = vunpack.c.h.b16 %v1653
  %v6168 = vunpack.c.l.b16 %v1654
  %v6169 = vunpack.c.h.b16 %v1654
  %v6170 = vunpack.c.l.b16 %v1655
  %v6171 = vunpack.c.h.b16 %v1655
  %v6172 = vunpack.c.l.b16 %v1656
  %v6173 = vunpack.c.h.b16 %v1656
  %v6174 = vunpack.c.l.b16 %v1657
  %v6175 = vunpack.c.h.b16 %v1657
  %v6176 = vunpack.c.l.b16 %v1658
  %v6177 = vunpack.c.h.b16 %v1658
  %v6178 = vunpack.c.l.b16 %v1659
  %v6179 = vunpack.c.h.b16 %v1659
  %v6180 = vunpack.c.l.b16 %v1660
  %v6181 = vunpack.c.h.b16 %v1660
  %v6182 = vunpack.c.l.b16 %v1661
  %v6183 = vunpack.c.h.b16 %v1661
  %v6184 = vunpack.c.l.b16 %v1662
  %v6185 = vunpack.c.h.b16 %v1662
  %v6186 = vunpack.c.l.b16 %v1663
  %v6187 = vunpack.c.h.b16 %v1663
  %v6188 = vunpack.c.l.b16 %v1664
  %v6189 = vunpack.c.h.b16 %v1664
  %v6190 = vunpack.c.l.b16 %v1665
  %v6191 = vunpack.c.h.b16 %v1665
  %v6192 = vunpack.c.l.b16 %v1666
  %v6193 = vunpack.c.h.b16 %v1666
  %v6194 = vunpack.c.l.b16 %v1667
  %v6195 = vunpack.c.h.b16 %v1667
  %v6196 = vunpack.c.l.b16 %v1668
  %v6197 = vunpack.c.h.b16 %v1668
  %v6198 = vunpack.c.l.b16 %v1669
  %v6199 = vunpack.c.h.b16 %v1669
  %v6200 = vunpack.c.l.b16 %v1670
  %v6201 = vunpack.c.h.b16 %v1670
  %v6202 = vunpack.c.l.b16 %v1671
  %v6203 = vunpack.c.h.b16 %v1671
  %v6204 = vunpack.c.l.b16 %v1672
  %v6205 = vunpack.c.h.b16 %v1672
  %v6206 = vunpack.c.l.b16 %v1673
  %v6207 = vunpack.c.h.b16 %v1673
  %v6208 = vunpack.c.l.b16 %v1674
  %v6209 = vunpack.c.h.b16 %v1674
  %v6210 = vunpack.c.l.b16 %v1675
  %v6211 = vunpack.c.h.b16 %v1675
  %v6212 = vunpack.c.l.b16 %v1676
  %v6213 = vunpack.c.h.b16 %v1676
  %v6214 = vunpack.c.l.b16 %v1677
  %v6215 = vunpack.c.h.b16 %v1677
  %v6216 = vunpack.c.l.b16 %v1678
  %v6217 = vunpack.c.h.b16 %v1678
  %v6218 = vunpack.c.l.b16 %v1679
  %v6219 = vunpack.c.h.b16 %v1679
  %v6220 = vunpack.c.l.b16 %v1680
  %v6221 = vunpack.c.h.b16 %v1680
  %v6222 = vunpack.c.l.b16 %v1681
  %v6223 = vunpack.c.h.b16 %v1681
  %v6224 = vunpack.c.l.b16 %v1682
  %v6225 = vunpack.c.h.b16 %v1682
  %v6226 = vunpack.c.l.b16 %v1683
  %v6227 = vunpack.c.h.b16 %v1683
  %v6228 = vunpack.c.l.b16 %v1684
  %v6229 = vunpack.c.h.b16 %v1684
  %v6230 = vunpack.c.l.b16 %v1685
  %v6231 = vunpack.c.h.b16 %v1685
  %v6232 = vunpack.c.l.b16 %v1686
  %v6233 = vunpack.c.h.b16 %v1686
  %v6234 = vunpack.c.l.b16 %v1687
  %v6235 = vunpack.c.h.b16 %v1687
  %v6236 = vunpack.c.l.b16 %v1688
  %v6237 = vunpack.c.h.b16 %v1688
  %v6238 = vunpack.c.l.b16 %v1689
  %v6239 = vunpack.c.h.b16 %v1689
  %v6240 = vunpack.c.l.b16 %v1690
  %v6241 = vunpack.c.h.b16 %v1690
  %v6242 = vunpack.c.l.b16 %v1691
  %v6243 = vunpack.c.h.b16 %v1691
  %v6244 = vunpack.c.l.b16 %v1692
  %v6245 = vunpack.c.h.b16 %v1692
  %v6246 = vunpack.c.l.b16 %v1693
  %v6247 = vunpack.c.h.b16 %v1693
  %v6248 = vunpack.c.l.b16 %v1694
  %v6249 = vunpack.c.h.b16 %v1694
  %v6250 = vunpack.c.l.b16 %v1695
  %v6251 = vunpack.c.h.b16 %v1695
  %v6252 = vunpack.c.l.b16 %v1696
  %v6253 = vunpack.c.h.b16 %v1696
  %v6254 = vunpack.c.l.b16 %v1697
  %v6255 = vunpack.c.h.b16 %v1697
  %v6256 = vunpack.c.l.b16 %v1698
  %v6257 = vunpack.c.h.b16 %v1698
  %v6258 = vunpack.c.l.b16 %v1699
  %v6259 = vunpack.c.h.b16 %v1699
  %v6260 = vunpack.c.l.b16 %v1700
  %v6261 = vunpack.c.h.b16 %v1700
  %v6262 = vunpack.c.l.b16 %v1701
  %v6263 = vunpack.c.h.b16 %v1701
  %v6264 = vunpack.c.l.b16 %v1702
  %v6265 = vunpack.c.h.b16 %v1702
  %v6266 = vunpack.c.l.b16 %v1703
  %v6267 = vunpack.c.h.b16 %v1703
  %v6268 = vunpack.c.l.b16 %v1704
  %v6269 = vunpack.c.h.b16 %v1704
  %v6270 = vunpack.c.l.b16 %v1705
  %v6271 = vunpack.c.h.b16 %v1705
  %v6272 = vunpack.c.l.b16 %v1706
  %v6273 = vunpack.c.h.b16 %v1706
  %v6274 = vunpack.c.l.b16 %v1707
  %v6275 = vunpack.c.h.b16 %v1707
  %v6276 = vunpack.c.l.b16 %v1708
  %v6277 = vunpack.c.h.b16 %v1708
  %v6278 = vunpack.c.l.b16 %v1709
  %v6279 = vunpack.c.h.b16 %v1709
  %v6280 = vunpack.c.l.b16 %v1710
  %v6281 = vunpack.c.h.b16 %v1710
  %v6282 = vunpack.c.l.b16 %v1711
  %v6283 = vunpack.c.h.b16 %v1711
  %v6284 = vunpack.c.l.b16 %v1712
  %v6285 = vunpack.c.h.b16 %v1712
  %v6286 = vunpack.c.l.b16 %v1713
  %v6287 = vunpack.c.h.b16 %v1713
  %v6288 = vunpack.c.l.b16 %v1714
  %v6289 = vunpack.c.h.b16 %v1714
  %v6290 = vunpack.c.l.b16 %v1715
  %v6291 = vunpack.c.h.b16 %v1715
  %v6292 = vunpack.c.l.b16 %v1716
  %v6293 = vunpack.c.h.b16 %v1716
  %v6294 = vunpack.c.l.b16 %v1717
  %v6295 = vunpack.c.h.b16 %v1717
  %v6296 = vunpack.c.l.b16 %v1718
  %v6297 = vunpack.c.h.b16 %v1718
  %v6298 = vunpack.c.l.b16 %v1719
  %v6299 = vunpack.c.h.b16 %v1719
  %v6300 = vunpack.c.l.b16 %v1720
  %v6301 = vunpack.c.h.b16 %v1720
  %v6302 = vunpack.c.l.b16 %v1721
  %v6303 = vunpack.c.h.b16 %v1721
  %v6304 = vunpack.c.l.b16 %v1722
  %v6305 = vunpack.c.h.b16 %v1722
  %v6306 = vunpack.c.l.b16 %v1723
  %v6307 = vunpack.c.h.b16 %v1723
  %v6308 = vunpack.c.l.b16 %v1724
  %v6309 = vunpack.c.h.b16 %v1724
  %v6310 = vunpack.c.l.b16 %v1725
  %v6311 = vunpack.c.h.b16 %v1725
  %v6312 = vunpack.c.l.b16 %v1726
  %v6313 = vunpack.c.h.b16 %v1726
  %v6314 = vunpack.c.l.b16 %v1727
  %v6315 = vunpack.c.h.b16 %v1727
  %v6316 = vunpack.c.l.b16 %v1728
  %v6317 = vunpack.c.h.b16 %v1728
  %v6318 = vunpack.c.l.b16 %v1729
  %v6319 = vunpack.c.h.b16 %v1729
  %v6320 = vunpack.c.l.b16 %v1730
  %v6321 = vunpack.c.h.b16 %v1730
  %v6322 = vunpack.c.l.b16 %v1731
  %v6323 = vunpack.c.h.b16 %v1731
  %v6324 = vunpack.c.l.b16 %v1732
  %v6325 = vunpack.c.h.b16 %v1732
  %v6326 = vunpack.c.l.b16 %v1733
  %v6327 = vunpack.c.h.b16 %v1733
  %v6328 = vunpack.c.l.b16 %v1734
  %v6329 = vunpack.c.h.b16 %v1734
  %v6330 = vunpack.c.l.b16 %v1735
  %v6331 = vunpack.c.h.b16 %v1735
  %v6332 = vunpack.c.l.b16 %v1736
  %v6333 = vunpack.c.h.b16 %v1736
  %v6334 = vunpack.c.l.b16 %v1737
  %v6335 = vunpack.c.h.b16 %v1737
  %v6336 = vunpack.c.l.b16 %v1738
  %v6337 = vunpack.c.h.b16 %v1738
  %v6338 = vunpack.c.l.b16 %v1739
  %v6339 = vunpack.c.h.b16 %v1739
  %v6340 = vunpack.c.l.b16 %v1740
  %v6341 = vunpack.c.h.b16 %v1740
  %v6342 = vunpack.c.l.b16 %v1741
  %v6343 = vunpack.c.h.b16 %v1741
  %v6344 = vunpack.c.l.b16 %v1742
  %v6345 = vunpack.c.h.b16 %v1742
  %v6346 = vunpack.c.l.b16 %v1743
  %v6347 = vunpack.c.h.b16 %v1743
  %v6348 = vunpack.c.l.b16 %v1744
  %v6349 = vunpack.c.h.b16 %v1744
  %v6350 = vunpack.c.l.b16 %v1745
  %v6351 = vunpack.c.h.b16 %v1745
  %v6352 = vunpack.c.l.b16 %v1746
  %v6353 = vunpack.c.h.b16 %v1746
  %v6354 = vunpack.c.l.b16 %v1747
  %v6355 = vunpack.c.h.b16 %v1747
  %v6356 = vunpack.c.l.b16 %v1748
  %v6357 = vunpack.c.h.b16 %v1748
  %v6358 = vunpack.c.l.b16 %v1749
  %v6359 = vunpack.c.h.b16 %v1749
  %v6360 = vunpack.c.l.b16 %v1750
  %v6361 = vunpack.c.h.b16 %v1750
  %v6362 = vunpack.c.l.b16 %v1751
  %v6363 = vunpack.c.h.b16 %v1751
  %v6364 = vunpack.c.l.b16 %v1752
  %v6365 = vunpack.c.h.b16 %v1752
  %v6366 = vunpack.c.l.b16 %v1753
  %v6367 = vunpack.c.h.b16 %v1753
  %v6368 = vpack.c.b16 %v3298, %v3296
  %v6369 = vpack.c.b16 %v3299, %v3297
  %v6370 = vpack.c.b16 %v3302, %v3300
  %v6371 = vpack.c.b16 %v3303, %v3301
  %v6372 = vpack.c.b16 %v3306, %v3304
  %v6373 = vpack.c.b16 %v3307, %v3305
  %v6374 = vpack.c.b16 %v3310, %v3308
  %v6375 = vpack.c.b16 %v3311, %v3309
  %v6376 = vpack.c.b16 %v3314, %v3312
  %v6377 = vpack.c.b16 %v3315, %v3313
  %v6378 = vpack.c.b16 %v3318, %v3316
  %v6379 = vpack.c.b16 %v3319, %v3317
  %v6380 = vpack.c.b16 %v3322, %v3320
  %v6381 = vpack.c.b16 %v3323, %v3321
  %v6382 = vpack.c.b16 %v3326, %v3324
  %v6383 = vpack.c.b16 %v3327, %v3325
  %v6384 = vpack.c.b16 %v3330, %v3328
  %v6385 = vpack.c.b16 %v3331, %v3329
  %v6386 = vpack.c.b16 %v3334, %v3332
  %v6387 = vpack.c.b16 %v3335, %v3333
  %v6388 = vpack.c.b16 %v3338, %v3336
  %v6389 = vpack.c.b16 %v3339, %v3337
  %v6390 = vpack.c.b16 %v3342, %v3340
  %v6391 = vpack.c.b16 %v3343, %v3341
  %v6392 = vpack.c.b16 %v3346, %v3344
  %v6393 = vpack.c.b16 %v3347, %v3345
  %v6394 = vpack.c.b16 %v3350, %v3348
  %v6395 = vpack.c.b16 %v3351, %v3349
  %v6396 = vpack.c.b16 %v3354, %v3352
  %v6397 = vpack.c.b16 %v3355, %v3353
  %v6398 = vpack.c.b16 %v3358, %v3356
  %v6399 = vpack.c.b16 %v3359, %v3357
  %v6400 = vpack.c.b16 %v3362, %v3360
  %v6401 = vpack.c.b16 %v3363, %v3361
  %v6402 = vpack.c.b16 %v3366, %v3364
  %v6403 = vpack.c.b16 %v3367, %v3365
  %v6404 = vpack.c.b16 %v3370, %v3368
  %v6405 = vpack.c.b16 %v3371, %v3369
  %v6406 = vpack.c.b16 %v3374, %v3372
  %v6407 = vpack.c.b16 %v3375, %v3373
  %v6408 = vpack.c.b16 %v3378, %v3376
  %v6409 = vpack.c.b16 %v3379, %v3377
  %v6410 = vpack.c.b16 %v3382, %v3380
  %v6411 = vpack.c.b16 %v3383, %v3381
  %v6412 = vpack.c.b16 %v3386, %v3384
  %v6413 = vpack.c.b16 %v3387, %v3385
  %v6414 = vpack.c.b16 %v3390, %v3388
  %v6415 = vpack.c.b16 %v3391, %v3389
  %v6416 = vpack.c.b16 %v3394, %v3392
  %v6417 = vpack.c.b16 %v3395, %v3393
  %v6418 = vpack.c.b16 %v3398, %v3396
  %v6419 = vpack.c.b16 %v3399, %v3397
  %v6420 = vpack.c.b16 %v3402, %v3400
  %v6421 = vpack.c.b16 %v3403, %v3401
  %v6422 = vpack.c.b16 %v3406, %v3404
  %v6423 = vpack.c.b16 %v3407, %v3405
  %v6424 = vpack.c.b16 %v3410, %v3408
  %v6425 = vpack.c.b16 %v3411, %v3409
  %v6426 = vpack.c.b16 %v3414, %v3412
  %v6427 = vpack.c.b16 %v3415, %v3413
  %v6428 = vpack.c.b16 %v3418, %v3416
  %v6429 = vpack.c.b16 %v3419, %v3417
  %v6430 = vpack.c.b16 %v3422, %v3420
  %v6431 = vpack.c.b16 %v3423, %v3421
  %v6432 = vpack.c.b16 %v3426, %v3424
  %v6433 = vpack.c.b16 %v3427, %v3425
  %v6434 = vpack.c.b16 %v3430, %v3428
  %v6435 = vpack.c.b16 %v3431, %v3429
  %v6436 = vpack.c.b16 %v3434, %v3432
  %v6437 = vpack.c.b16 %v3435, %v3433
  %v6438 = vpack.c.b16 %v3438, %v3436
  %v6439 = vpack.c.b16 %v3439, %v3437
  %v6440 = vpack.c.b16 %v3442, %v3440
  %v6441 = vpack.c.b16 %v3443, %v3441
  %v6442 = vpack.c.b16 %v3446, %v3444
  %v6443 = vpack.c.b16 %v3447, %v3445
  %v6444 = vpack.c.b16 %v3450, %v3448
  %v6445 = vpack.c.b16 %v3451, %v3449
  %v6446 = vpack.c.b16 %v3454, %v3452
  %v6447 = vpack.c.b16 %v3455, %v3453
  %v6448 = vpack.c.b16 %v3458, %v3456
  %v6449 = vpack.c.b16 %v3459, %v3457
  %v6450 = vpack.c.b16 %v3462, %v3460
  %v6451 = vpack.c.b16 %v3463, %v3461
  %v6452 = vpack.c.b16 %v3466, %v3464
  %v6453 = vpack.c.b16 %v3467, %v3465
  %v6454 = vpack.c.b16 %v3470, %v3468
  %v6455 = vpack.c.b16 %v3471, %v3469
  %v6456 = vpack.c.b16 %v3474, %v3472
  %v6457 = vpack.c.b16 %v3475, %v3473
  %v6458 = vpack.c.b16 %v3478, %v3476
  %v6459 = vpack.c.b16 %v3479, %v3477
  %v6460 = vpack.c.b16 %v3482, %v3480
  %v6461 = vpack.c.b16 %v3483, %v3481
  %v6462 = vpack.c.b16 %v3486, %v3484
  %v6463 = vpack.c.b16 %v3487, %v3485
  %v6464 = vpack.c.b16 %v3490, %v3488
  %v6465 = vpack.c.b16 %v3491, %v3489
  %v6466 = vpack.c.b16 %v3494, %v3492
  %v6467 = vpack.c.b16 %v3495, %v3493
  %v6468 = vpack.c.b16 %v3498, %v3496
  %v6469 = vpack.c.b16 %v3499, %v3497
  %v6470 = vpack.c.b16 %v3502, %v3500
  %v6471 = vpack.c.b16 %v3503, %v3501
  %v6472 = vpack.c.b16 %v3506, %v3504
  %v6473 = vpack.c.b16 %v3507, %v3505
  %v6474 = vpack.c.b16 %v3510, %v3508
  %v6475 = vpack.c.b16 %v3511, %v3509
  %v6476 = vpack.c.b16 %v3514, %v3512
  %v6477 = vpack.c.b16 %v3515, %v3513
  %v6478 = vpack.c.b16 %v3518, %v3516
  %v6479 = vpack.c.b16 %v3519, %v3517
  %v6480 = vpack.c.b16 %v3522, %v3520
  %v6481 = vpack.c.b16 %v3523, %v3521
  %v6482 = vpack.c.b16 %v3526, %v3524
  %v6483 = vpack.c.b16 %v3527, %v3525
  %v6484 = vpack.c.b16 %v3530, %v3528
  %v6485 = vpack.c.b16 %v3531, %v3529
  %v6486 = vpack.c.b16 %v3534, %v3532
  %v6487 = vpack.c.b16 %v3535, %v3533
  %v6488 = vpack.c.b16 %v3538, %v3536
  %v6489 = vpack.c.b16 %v3539, %v3537
  %v6490 = vpack.c.b16 %v3542, %v3540
  %v6491 = vpack.c.b16 %v3543, %v3541
  %v6492 = vpack.c.b16 %v3546, %v3544
  %v6493 = vpack.c.b16 %v3547, %v3545
  %v6494 = vpack.c.b16 %v3550, %v3548
  %v6495 = vpack.c.b16 %v3551, %v3549
  %v6496 = vpack.c.b16 %v3554, %v3552
  %v6497 = vpack.c.b16 %v3555, %v3553
  %v6498 = vpack.c.b16 %v3558, %v3556
  %v6499 = vpack.c.b16 %v3559, %v3557
  %v6500 = vpack.c.b16 %v3562, %v3560
  %v6501 = vpack.c.b16 %v3563, %v3561
  %v6502 = vpack.c.b16 %v3566, %v3564
  %v6503 = vpack.c.b16 %v3567, %v3565
  %v6504 = vpack.c.b16 %v3570, %v3568
  %v6505 = vpack.c.b16 %v3571, %v3569
  %v6506 = vpack.c.b16 %v3574, %v3572
  %v6507 = vpack.c.b16 %v3575, %v3573
  %v6508 = vpack.c.b16 %v3578, %v3576
  %v6509 = vpack.c.b16 %v3579, %v3577
  %v6510 = vpack.c.b16 %v3582, %v3580
  %v6511 = vpack.c.b16 %v3583, %v3581
  %v6512 = vpack.c.b16 %v3586, %v3584
  %v6513 = vpack.c.b16 %v3587, %v3585
  %v6514 = vpack.c.b16 %v3590, %v3588
  %v6515 = vpack.c.b16 %v3591, %v3589
  %v6516 = vpack.c.b16 %v3594, %v3592
  %v6517 = vpack.c.b16 %v3595, %v3593
  %v6518 = vpack.c.b16 %v3598, %v3596
  %v6519 = vpack.c.b16 %v3599, %v3597
  %v6520 = vpack.c.b16 %v3602, %v3600
  %v6521 = vpack.c.b16 %v3603, %v3601
  %v6522 = vpack.c.b16 %v3606, %v3604
  %v6523 = vpack.c.b16 %v3607, %v3605
  %v6524 = vpack.c.b16 %v3610, %v3608
  %v6525 = vpack.c.b16 %v3611, %v3609
  %v6526 = vpack.c.b16 %v3614, %v3612
  %v6527 = vpack.c.b16 %v3615, %v3613
  %v6528 = vpack.c.b16 %v3618, %v3616
  %v6529 = vpack.c.b16 %v3619, %v3617
  %v6530 = vpack.c.b16 %v3622, %v3620
  %v6531 = vpack.c.b16 %v3623, %v3621
  %v6532 = vpack.c.b16 %v3626, %v3624
  %v6533 = vpack.c.b16 %v3627, %v3625
  %v6534 = vpack.c.b16 %v3630, %v3628
  %v6535 = vpack.c.b16 %v3631, %v3629
  %v6536 = vpack.c.b16 %v3634, %v3632
  %v6537 = vpack.c.b16 %v3635, %v3633
  %v6538 = vpack.c.b16 %v3638, %v3636
  %v6539 = vpack.c.b16 %v3639, %v3637
  %v6540 = vpack.c.b16 %v3642, %v3640
  %v6541 = vpack.c.b16 %v3643, %v3641
  %v6542 = vpack.c.b16 %v3646, %v3644
  %v6543 = vpack.c.b16 %v3647, %v3645
  %v6544 = vpack.c.b16 %v3650, %v3648
  %v6545 = vpack.c.b16 %v3651, %v3649
  %v6546 = vpack.c.b16 %v3654, %v3652
  %v6547 = vpack.c.b16 %v3655, %v3653
  %v6548 = vpack.c.b16 %v3658, %v3656
  %v6549 = vpack.c.b16 %v3659, %v3657
  %v6550 = vpack.c.b16 %v3662, %v3660
  %v6551 = vpack.c.b16 %v3663, %v3661
  %v6552 = vpack.c.b16 %v3666, %v3664
  %v6553 = vpack.c.b16 %v3667, %v3665
  %v6554 = vpack.c.b16 %v3670, %v3668
  %v6555 = vpack.c.b16 %v3671, %v3669
  %v6556 = vpack.c.b16 %v3674, %v3672
  %v6557 = vpack.c.b16 %v3675, %v3673
  %v6558 = vpack.c.b16 %v3678, %v3676
  %v6559 = vpack.c.b16 %v3679, %v3677
  %v6560 = vpack.c.b16 %v3682, %v3680
  %v6561 = vpack.c.b16 %v3683, %v3681
  %v6562 = vpack.c.b16 %v3686, %v3684
  %v6563 = vpack.c.b16 %v3687, %v3685
  %v6564 = vpack.c.b16 %v3690, %v3688
  %v6565 = vpack.c.b16 %v3691, %v3689
  %v6566 = vpack.c.b16 %v3694, %v3692
  %v6567 = vpack.c.b16 %v3695, %v3693
  %v6568 = vpack.c.b16 %v3698, %v3696
  %v6569 = vpack.c.b16 %v3699, %v3697
  %v6570 = vpack.c.b16 %v3702, %v3700
  %v6571 = vpack.c.b16 %v3703, %v3701
  %v6572 = vpack.c.b16 %v3706, %v3704
  %v6573 = vpack.c.b16 %v3707, %v3705
  %v6574 = vpack.c.b16 %v3710, %v3708
  %v6575 = vpack.c.b16 %v3711, %v3709
  %v6576 = vpack.c.b16 %v3714, %v3712
  %v6577 = vpack.c.b16 %v3715, %v3713
  %v6578 = vpack.c.b16 %v3718, %v3716
  %v6579 = vpack.c.b16 %v3719, %v3717
  %v6580 = vpack.c.b16 %v3722, %v3720
  %v6581 = vpack.c.b16 %v3723, %v3721
  %v6582 = vpack.c.b16 %v3726, %v3724
  %v6583 = vpack.c.b16 %v3727, %v3725
  %v6584 = vpack.c.b16 %v3730, %v3728
  %v6585 = vpack.c.b16 %v3731, %v3729
  %v6586 = vpack.c.b16 %v3734, %v3732
  %v6587 = vpack.c.b16 %v3735, %v3733
  %v6588 = vpack.c.b16 %v3738, %v3736
  %v6589 = vpack.c.b16 %v3739, %v3737
  %v6590 = vpack.c.b16 %v3742, %v3740
  %v6591 = vpack.c.b16 %v3743, %v3741
  %v6592 = vpack.c.b16 %v3746, %v3744
  %v6593 = vpack.c.b16 %v3747, %v3745
  %v6594 = vpack.c.b16 %v3750, %v3748
  %v6595 = vpack.c.b16 %v3751, %v3749
  %v6596 = vpack.c.b16 %v3754, %v3752
  %v6597 = vpack.c.b16 %v3755, %v3753
  %v6598 = vpack.c.b16 %v3758, %v3756
  %v6599 = vpack.c.b16 %v3759, %v3757
  %v6600 = vpack.c.b16 %v3762, %v3760
  %v6601 = vpack.c.b16 %v3763, %v3761
  %v6602 = vpack.c.b16 %v3766, %v3764
  %v6603 = vpack.c.b16 %v3767, %v3765
  %v6604 = vpack.c.b16 %v3770, %v3768
  %v6605 = vpack.c.b16 %v3771, %v3769
  %v6606 = vpack.c.b16 %v3774, %v3772
  %v6607 = vpack.c.b16 %v3775, %v3773
  %v6608 = vpack.c.b16 %v3778, %v3776
  %v6609 = vpack.c.b16 %v3779, %v3777
  %v6610 = vpack.c.b16 %v3782, %v3780
  %v6611 = vpack.c.b16 %v3783, %v3781
  %v6612 = vpack.c.b16 %v3786, %v3784
  %v6613 = vpack.c.b16 %v3787, %v3785
  %v6614 = vpack.c.b16 %v3790, %v3788
  %v6615 = vpack.c.b16 %v3791, %v3789
  %v6616 = vpack.c.b16 %v3794, %v3792
  %v6617 = vpack.c.b16 %v3795, %v3793
  %v6618 = vpack.c.b16 %v3798, %v3796
  %v6619 = vpack.c.b16 %v3799, %v3797
  %v6620 = vpack.c.b16 %v3802, %v3800
  %v6621 = vpack.c.b16 %v3803, %v3801
  %v6622 = vpack.c.b16 %v3806, %v3804
  %v6623 = vpack.c.b16 %v3807, %v3805
  %v6624 = vpack.c.b16 %v3810, %v3808
  %v6625 = vpack.c.b16 %v3811, %v3809
  %v6626 = vpack.c.b16 %v3814, %v3812
  %v6627 = vpack.c.b16 %v3815, %v3813
  %v6628 = vpack.c.b16 %v3818, %v3816
  %v6629 = vpack.c.b16 %v3819, %v3817
  %v6630 = vpack.c.b16 %v3822, %v3820
  %v6631 = vpack.c.b16 %v3823, %v3821
  %v6632 = vpack.c.b16 %v3826, %v3824
  %v6633 = vpack.c.b16 %v3827, %v3825
  %v6634 = vpack.c.b16 %v3830, %v3828
  %v6635 = vpack.c.b16 %v3831, %v3829
  %v6636 = vpack.c.b16 %v3834, %v3832
  %v6637 = vpack.c.b16 %v3835, %v3833
  %v6638 = vpack.c.b16 %v3838, %v3836
  %v6639 = vpack.c.b16 %v3839, %v3837
  %v6640 = vpack.c.b16 %v3842, %v3840
  %v6641 = vpack.c.b16 %v3843, %v3841
  %v6642 = vpack.c.b16 %v3846, %v3844
  %v6643 = vpack.c.b16 %v3847, %v3845
  %v6644 = vpack.c.b16 %v3850, %v3848
  %v6645 = vpack.c.b16 %v3851, %v3849
  %v6646 = vpack.c.b16 %v3854, %v3852
  %v6647 = vpack.c.b16 %v3855, %v3853
  %v6648 = vpack.c.b16 %v3858, %v3856
  %v6649 = vpack.c.b16 %v3859, %v3857
  %v6650 = vpack.c.b16 %v3862, %v3860
  %v6651 = vpack.c.b16 %v3863, %v3861
  %v6652 = vpack.c.b16 %v3866, %v3864
  %v6653 = vpack.c.b16 %v3867, %v3865
  %v6654 = vpack.c.b16 %v3870, %v3868
  %v6655 = vpack.c.b16 %v3871, %v3869
  %v6656 = vpack.c.b16 %v3874, %v3872
  %v6657 = vpack.c.b16 %v3875, %v3873
  %v6658 = vpack.c.b16 %v3878, %v3876
  %v6659 = vpack.c.b16 %v3879, %v3877
  %v6660 = vpack.c.b16 %v3882, %v3880
  %v6661 = vpack.c.b16 %v3883, %v3881
  %v6662 = vpack.c.b16 %v3886, %v3884
  %v6663 = vpack.c.b16 %v3887, %v3885
  %v6664 = vpack.c.b16 %v3890, %v3888
  %v6665 = vpack.c.b16 %v3891, %v3889
  %v6666 = vpack.c.b16 %v3894, %v3892
  %v6667 = vpack.c.b16 %v3895, %v3893
  %v6668 = vpack.c.b16 %v3898, %v3896
  %v6669 = vpack.c.b16 %v3899, %v3897
  %v6670 = vpack.c.b16 %v3902, %v3900
  %v6671 = vpack.c.b16 %v3903, %v3901
  %v6672 = vpack.c.b16 %v3906, %v3904
  %v6673 = vpack.c.b16 %v3907, %v3905
  %v6674 = vpack.c.b16 %v3910, %v3908
  %v6675 = vpack.c.b16 %v3911, %v3909
  %v6676 = vpack.c.b16 %v3914, %v3912
  %v6677 = vpack.c.b16 %v3915, %v3913
  %v6678 = vpack.c.b16 %v3918, %v3916
  %v6679 = vpack.c.b16 %v3919, %v3917
  %v6680 = vpack.c.b16 %v3922, %v3920
  %v6681 = vpack.c.b16 %v3923, %v3921
  %v6682 = vpack.c.b16 %v3926, %v3924
  %v6683 = vpack.c.b16 %v3927, %v3925
  %v6684 = vpack.c.b16 %v3930, %v3928
  %v6685 = vpack.c.b16 %v3931, %v3929
  %v6686 = vpack.c.b16 %v3934, %v3932
  %v6687 = vpack.c.b16 %v3935, %v3933
  %v6688 = vpack.c.b16 %v3938, %v3936
  %v6689 = vpack.c.b16 %v3939, %v3937
  %v6690 = vpack.c.b16 %v3942, %v3940
  %v6691 = vpack.c.b16 %v3943, %v3941
  %v6692 = vpack.c.b16 %v3946, %v3944
  %v6693 = vpack.c.b16 %v3947, %v3945
  %v6694 = vpack.c.b16 %v3950, %v3948
  %v6695 = vpack.c.b16 %v3951, %v3949
  %v6696 = vpack.c.b16 %v3954, %v3952
  %v6697 = vpack.c.b16 %v3955, %v3953
  %v6698 = vpack.c.b16 %v3958, %v3956
  %v6699 = vpack.c.b16 %v3959, %v3957
  %v6700 = vpack.c.b16 %v3962, %v3960
  %v6701 = vpack.c.b16 %v3963, %v3961
  %v6702 = vpack.c.b16 %v3966, %v3964
  %v6703 = vpack.c.b16 %v3967, %v3965
  %v6704 = vpack.c.b16 %v3970, %v3968
  %v6705 = vpack.c.b16 %v3971, %v3969
  %v6706 = vpack.c.b16 %v3974, %v3972
  %v6707 = vpack.c.b16 %v3975, %v3973
  %v6708 = vpack.c.b16 %v3978, %v3976
  %v6709 = vpack.c.b16 %v3979, %v3977
  %v6710 = vpack.c.b16 %v3982, %v3980
  %v6711 = vpack.c.b16 %v3983, %v3981
  %v6712 = vpack.c.b16 %v3986, %v3984
  %v6713 = vpack.c.b16 %v3987, %v3985
  %v6714 = vpack.c.b16 %v3990, %v3988
  %v6715 = vpack.c.b16 %v3991, %v3989
  %v6716 = vpack.c.b16 %v3994, %v3992
  %v6717 = vpack.c.b16 %v3995, %v3993
  %v6718 = vpack.c.b16 %v3998, %v3996
  %v6719 = vpack.c.b16 %v3999, %v3997
  %v6720 = vpack.c.b16 %v4002, %v4000
  %v6721 = vpack.c.b16 %v4003, %v4001
  %v6722 = vpack.c.b16 %v4006, %v4004
  %v6723 = vpack.c.b16 %v4007, %v4005
  %v6724 = vpack.c.b16 %v4010, %v4008
  %v6725 = vpack.c.b16 %v4011, %v4009
  %v6726 = vpack.c.b16 %v4014, %v4012
  %v6727 = vpack.c.b16 %v4015, %v4013
  %v6728 = vpack.c.b16 %v4018, %v4016
  %v6729 = vpack.c.b16 %v4019, %v4017
  %v6730 = vpack.c.b16 %v4022, %v4020
  %v6731 = vpack.c.b16 %v4023, %v4021
  %v6732 = vpack.c.b16 %v4026, %v4024
  %v6733 = vpack.c.b16 %v4027, %v4025
  %v6734 = vpack.c.b16 %v4030, %v4028
  %v6735 = vpack.c.b16 %v4031, %v4029
  %v6736 = vpack.c.b16 %v4034, %v4032
  %v6737 = vpack.c.b16 %v4035, %v4033
  %v6738 = vpack.c.b16 %v4038, %v4036
  %v6739 = vpack.c.b16 %v4039, %v4037
  %v6740 = vpack.c.b16 %v4042, %v4040
  %v6741 = vpack.c.b16 %v4043, %v4041
  %v6742 = vpack.c.b16 %v4046, %v4044
  %v6743 = vpack.c.b16 %v4047, %v4045
  %v6744 = vpack.c.b16 %v4050, %v4048
  %v6745 = vpack.c.b16 %v4051, %v4049
  %v6746 = vpack.c.b16 %v4054, %v4052
  %v6747 = vpack.c.b16 %v4055, %v4053
  %v6748 = vpack.c.b16 %v4058, %v4056
  %v6749 = vpack.c.b16 %v4059, %v4057
  %v6750 = vpack.c.b16 %v4062, %v4060
  %v6751 = vpack.c.b16 %v4063, %v4061
  %v6752 = vpack.c.b16 %v4066, %v4064
  %v6753 = vpack.c.b16 %v4067, %v4065
  %v6754 = vpack.c.b16 %v4070, %v4068
  %v6755 = vpack.c.b16 %v4071, %v4069
  %v6756 = vpack.c.b16 %v4074, %v4072
  %v6757 = vpack.c.b16 %v4075, %v4073
  %v6758 = vpack.c.b16 %v4078, %v4076
  %v6759 = vpack.c.b16 %v4079, %v4077
  %v6760 = vpack.c.b16 %v4082, %v4080
  %v6761 = vpack.c.b16 %v4083, %v4081
  %v6762 = vpack.c.b16 %v4086, %v4084
  %v6763 = vpack.c.b16 %v4087, %v4085
  %v6764 = vpack.c.b16 %v4090, %v4088
  %v6765 = vpack.c.b16 %v4091, %v4089
  %v6766 = vpack.c.b16 %v4094, %v4092
  %v6767 = vpack.c.b16 %v4095, %v4093
  %v6768 = vpack.c.b16 %v4098, %v4096
  %v6769 = vpack.c.b16 %v4099, %v4097
  %v6770 = vpack.c.b16 %v4102, %v4100
  %v6771 = vpack.c.b16 %v4103, %v4101
  %v6772 = vpack.c.b16 %v4106, %v4104
  %v6773 = vpack.c.b16 %v4107, %v4105
  %v6774 = vpack.c.b16 %v4110, %v4108
  %v6775 = vpack.c.b16 %v4111, %v4109
  %v6776 = vpack.c.b16 %v4114, %v4112
  %v6777 = vpack.c.b16 %v4115, %v4113
  %v6778 = vpack.c.b16 %v4118, %v4116
  %v6779 = vpack.c.b16 %v4119, %v4117
  %v6780 = vpack.c.b16 %v4122, %v4120
  %v6781 = vpack.c.b16 %v4123, %v4121
  %v6782 = vpack.c.b16 %v4126, %v4124
  %v6783 = vpack.c.b16 %v4127, %v4125
  %v6784 = vpack.c.b16 %v4130, %v4128
  %v6785 = vpack.c.b16 %v4131, %v4129
  %v6786 = vpack.c.b16 %v4134, %v4132
  %v6787 = vpack.c.b16 %v4135, %v4133
  %v6788 = vpack.c.b16 %v4138, %v4136
  %v6789 = vpack.c.b16 %v4139, %v4137
  %v6790 = vpack.c.b16 %v4142, %v4140
  %v6791 = vpack.c.b16 %v4143, %v4141
  %v6792 = vpack.c.b16 %v4146, %v4144
  %v6793 = vpack.c.b16 %v4147, %v4145
  %v6794 = vpack.c.b16 %v4150, %v4148
  %v6795 = vpack.c.b16 %v4151, %v4149
  %v6796 = vpack.c.b16 %v4154, %v4152
  %v6797 = vpack.c.b16 %v4155, %v4153
  %v6798 = vpack.c.b16 %v4158, %v4156
  %v6799 = vpack.c.b16 %v4159, %v4157
  %v6800 = vpack.c.b16 %v4162, %v4160
  %v6801 = vpack.c.b16 %v4163, %v4161
  %v6802 = vpack.c.b16 %v4166, %v4164
  %v6803 = vpack.c.b16 %v4167, %v4165
  %v6804 = vpack.c.b16 %v4170, %v4168
  %v6805 = vpack.c.b16 %v4171, %v4169
  %v6806 = vpack.c.b16 %v4174, %v4172
  %v6807 = vpack.c.b16 %v4175, %v4173
  %v6808 = vpack.c.b16 %v4178, %v4176
  %v6809 = vpack.c.b16 %v4179, %v4177
  %v6810 = vpack.c.b16 %v4182, %v4180
  %v6811 = vpack.c.b16 %v4183, %v4181
  %v6812 = vpack.c.b16 %v4186, %v4184
  %v6813 = vpack.c.b16 %v4187, %v4185
  %v6814 = vpack.c.b16 %v4190, %v4188
  %v6815 = vpack.c.b16 %v4191, %v4189
  %v6816 = vpack.c.b16 %v4194, %v4192
  %v6817 = vpack.c.b16 %v4195, %v4193
  %v6818 = vpack.c.b16 %v4198, %v4196
  %v6819 = vpack.c.b16 %v4199, %v4197
  %v6820 = vpack.c.b16 %v4202, %v4200
  %v6821 = vpack.c.b16 %v4203, %v4201
  %v6822 = vpack.c.b16 %v4206, %v4204
  %v6823 = vpack.c.b16 %v4207, %v4205
  %v6824 = vpack.c.b16 %v4210, %v4208
  %v6825 = vpack.c.b16 %v4211, %v4209
  %v6826 = vpack.c.b16 %v4214, %v4212
  %v6827 = vpack.c.b16 %v4215, %v4213
  %v6828 = vpack.c.b16 %v4218, %v4216
  %v6829 = vpack.c.b16 %v4219, %v4217
  %v6830 = vpack.c.b16 %v4222, %v4220
  %v6831 = vpack.c.b16 %v4223, %v4221
  %v6832 = vpack.c.b16 %v4226, %v4224
  %v6833 = vpack.c.b16 %v4227, %v4225
  %v6834 = vpack.c.b16 %v4230, %v4228
  %v6835 = vpack.c.b16 %v4231, %v4229
  %v6836 = vpack.c.b16 %v4234, %v4232
  %v6837 = vpack.c.b16 %v4235, %v4233
  %v6838 = vpack.c.b16 %v4238, %v4236
  %v6839 = vpack.c.b16 %v4239, %v4237
  %v6840 = vpack.c.b16 %v4242, %v4240
  %v6841 = vpack.c.b16 %v4243, %v4241
  %v6842 = vpack.c.b16 %v4246, %v4244
  %v6843 = vpack.c.b16 %v4247, %v4245
  %v6844 = vpack.c.b16 %v4250, %v4248
  %v6845 = vpack.c.b16 %v4251, %v4249
  %v6846 = vpack.c.b16 %v4254, %v4252
  %v6847 = vpack.c.b16 %v4255, %v4253
  %v6848 = vpack.c.b16 %v4258, %v4256
  %v6849 = vpack.c.b16 %v4259, %v4257
  %v6850 = vpack.c.b16 %v4262, %v4260
  %v6851 = vpack.c.b16 %v4263, %v4261
  %v6852 = vpack.c.b16 %v4266, %v4264
  %v6853 = vpack.c.b16 %v4267, %v4265
  %v6854 = vpack.c.b16 %v4270, %v4268
  %v6855 = vpack.c.b16 %v4271, %v4269
  %v6856 = vpack.c.b16 %v4274, %v4272
  %v6857 = vpack.c.b16 %v4275, %v4273
  %v6858 = vpack.c.b16 %v4278, %v4276
  %v6859 = vpack.c.b16 %v4279, %v4277
  %v6860 = vpack.c.b16 %v4282, %v4280
  %v6861 = vpack.c.b16 %v4283, %v4281
  %v6862 = vpack.c.b16 %v4286, %v4284
  %v6863 = vpack.c.b16 %v4287, %v4285
  %v6864 = vpack.c.b16 %v4290, %v4288
  %v6865 = vpack.c.b16 %v4291, %v4289
  %v6866 = vpack.c.b16 %v4294, %v4292
  %v6867 = vpack.c.b16 %v4295, %v4293
  %v6868 = vpack.c.b16 %v4298, %v4296
  %v6869 = vpack.c.b16 %v4299, %v4297
  %v6870 = vpack.c.b16 %v4302, %v4300
  %v6871 = vpack.c.b16 %v4303, %v4301
  %v6872 = vpack.c.b16 %v4306, %v4304
  %v6873 = vpack.c.b16 %v4307, %v4305
  %v6874 = vpack.c.b16 %v4310, %v4308
  %v6875 = vpack.c.b16 %v4311, %v4309
  %v6876 = vpack.c.b16 %v4314, %v4312
  %v6877 = vpack.c.b16 %v4315, %v4313
  %v6878 = vpack.c.b16 %v4318, %v4316
  %v6879 = vpack.c.b16 %v4319, %v4317
  %v6880 = vpack.c.b16 %v4322, %v4320
  %v6881 = vpack.c.b16 %v4323, %v4321
  %v6882 = vpack.c.b16 %v4326, %v4324
  %v6883 = vpack.c.b16 %v4327, %v4325
  %v6884 = vpack.c.b16 %v4330, %v4328
  %v6885 = vpack.c.b16 %v4331, %v4329
  %v6886 = vpack.c.b16 %v4334, %v4332
  %v6887 = vpack.c.b16 %v4335, %v4333
  %v6888 = vpack.c.b16 %v4338, %v4336
  %v6889 = vpack.c.b16 %v4339, %v4337
  %v6890 = vpack.c.b16 %v4342, %v4340
  %v6891 = vpack.c.b16 %v4343, %v4341
  %v6892 = vpack.c.b16 %v4346, %v4344
  %v6893 = vpack.c.b16 %v4347, %v4345
  %v6894 = vpack.c.b16 %v4350, %v4348
  %v6895 = vpack.c.b16 %v4351, %v4349
  %v6896 = vpack.c.b16 %v4354, %v4352
  %v6897 = vpack.c.b16 %v4355, %v4353
  %v6898 = vpack.c.b16 %v4358, %v4356
  %v6899 = vpack.c.b16 %v4359, %v4357
  %v6900 = vpack.c.b16 %v4362, %v4360
  %v6901 = vpack.c.b16 %v4363, %v4361
  %v6902 = vpack.c.b16 %v4366, %v4364
  %v6903 = vpack.c.b16 %v4367, %v4365
  %v6904 = vpack.c.b16 %v4370, %v4368
  %v6905 = vpack.c.b16 %v4371, %v4369
  %v6906 = vpack.c.b16 %v4374, %v4372
  %v6907 = vpack.c.b16 %v4375, %v4373
  %v6908 = vpack.c.b16 %v4378, %v4376
  %v6909 = vpack.c.b16 %v4379, %v4377
  %v6910 = vpack.c.b16 %v4382, %v4380
  %v6911 = vpack.c.b16 %v4383, %v4381
  %v6912 = vpack.c.b16 %v4386, %v4384
  %v6913 = vpack.c.b16 %v4387, %v4385
  %v6914 = vpack.c.b16 %v4390, %v4388
  %v6915 = vpack.c.b16 %v4391, %v4389
  %v6916 = vpack.c.b16 %v4394, %v4392
  %v6917 = vpack.c.b16 %v4395, %v4393
  %v6918 = vpack.c.b16 %v4398, %v4396
  %v6919 = vpack.c.b16 %v4399, %v4397
  %v6920 = vpack.c.b16 %v4402, %v4400
  %v6921 = vpack.c.b16 %v4403, %v4401
  %v6922 = vpack.c.b16 %v4406, %v4404
  %v6923 = vpack.c.b16 %v4407, %v4405
  %v6924 = vpack.c.b16 %v4410, %v4408
  %v6925 = vpack.c.b16 %v4411, %v4409
  %v6926 = vpack.c.b16 %v4414, %v4412
  %v6927 = vpack.c.b16 %v4415, %v4413
  %v6928 = vpack.c.b16 %v4418, %v4416
  %v6929 = vpack.c.b16 %v4419, %v4417
  %v6930 = vpack.c.b16 %v4422, %v4420
  %v6931 = vpack.c.b16 %v4423, %v4421
  %v6932 = vpack.c.b16 %v4426, %v4424
  %v6933 = vpack.c.b16 %v4427, %v4425
  %v6934 = vpack.c.b16 %v4430, %v4428
  %v6935 = vpack.c.b16 %v4431, %v4429
  %v6936 = vpack.c.b16 %v4434, %v4432
  %v6937 = vpack.c.b16 %v4435, %v4433
  %v6938 = vpack.c.b16 %v4438, %v4436
  %v6939 = vpack.c.b16 %v4439, %v4437
  %v6940 = vpack.c.b16 %v4442, %v4440
  %v6941 = vpack.c.b16 %v4443, %v4441
  %v6942 = vpack.c.b16 %v4446, %v4444
  %v6943 = vpack.c.b16 %v4447, %v4445
  %v6944 = vpack.c.b16 %v4450, %v4448
  %v6945 = vpack.c.b16 %v4451, %v4449
  %v6946 = vpack.c.b16 %v4454, %v4452
  %v6947 = vpack.c.b16 %v4455, %v4453
  %v6948 = vpack.c.b16 %v4458, %v4456
  %v6949 = vpack.c.b16 %v4459, %v4457
  %v6950 = vpack.c.b16 %v4462, %v4460
  %v6951 = vpack.c.b16 %v4463, %v4461
  %v6952 = vpack.c.b16 %v4466, %v4464
  %v6953 = vpack.c.b16 %v4467, %v4465
  %v6954 = vpack.c.b16 %v4470, %v4468
  %v6955 = vpack.c.b16 %v4471, %v4469
  %v6956 = vpack.c.b16 %v4474, %v4472
  %v6957 = vpack.c.b16 %v4475, %v4473
  %v6958 = vpack.c.b16 %v4478, %v4476
  %v6959 = vpack.c.b16 %v4479, %v4477
  %v6960 = vpack.c.b16 %v4482, %v4480
  %v6961 = vpack.c.b16 %v4483, %v4481
  %v6962 = vpack.c.b16 %v4486, %v4484
  %v6963 = vpack.c.b16 %v4487, %v4485
  %v6964 = vpack.c.b16 %v4490, %v4488
  %v6965 = vpack.c.b16 %v4491, %v4489
  %v6966 = vpack.c.b16 %v4494, %v4492
  %v6967 = vpack.c.b16 %v4495, %v4493
  %v6968 = vpack.c.b16 %v4498, %v4496
  %v6969 = vpack.c.b16 %v4499, %v4497
  %v6970 = vpack.c.b16 %v4502, %v4500
  %v6971 = vpack.c.b16 %v4503, %v4501
  %v6972 = vpack.c.b16 %v4506, %v4504
  %v6973 = vpack.c.b16 %v4507, %v4505
  %v6974 = vpack.c.b16 %v4510, %v4508
  %v6975 = vpack.c.b16 %v4511, %v4509
  %v6976 = vpack.c.b16 %v4514, %v4512
  %v6977 = vpack.c.b16 %v4515, %v4513
  %v6978 = vpack.c.b16 %v4518, %v4516
  %v6979 = vpack.c.b16 %v4519, %v4517
  %v6980 = vpack.c.b16 %v4522, %v4520
  %v6981 = vpack.c.b16 %v4523, %v4521
  %v6982 = vpack.c.b16 %v4526, %v4524
  %v6983 = vpack.c.b16 %v4527, %v4525
  %v6984 = vpack.c.b16 %v4530, %v4528
  %v6985 = vpack.c.b16 %v4531, %v4529
  %v6986 = vpack.c.b16 %v4534, %v4532
  %v6987 = vpack.c.b16 %v4535, %v4533
  %v6988 = vpack.c.b16 %v4538, %v4536
  %v6989 = vpack.c.b16 %v4539, %v4537
  %v6990 = vpack.c.b16 %v4542, %v4540
  %v6991 = vpack.c.b16 %v4543, %v4541
  %v6992 = vpack.c.b16 %v4546, %v4544
  %v6993 = vpack.c.b16 %v4547, %v4545
  %v6994 = vpack.c.b16 %v4550, %v4548
  %v6995 = vpack.c.b16 %v4551, %v4549
  %v6996 = vpack.c.b16 %v4554, %v4552
  %v6997 = vpack.c.b16 %v4555, %v4553
  %v6998 = vpack.c.b16 %v4558, %v4556
  %v6999 = vpack.c.b16 %v4559, %v4557
  %v7000 = vpack.c.b16 %v4562, %v4560
  %v7001 = vpack.c.b16 %v4563, %v4561
  %v7002 = vpack.c.b16 %v4566, %v4564
  %v7003 = vpack.c.b16 %v4567, %v4565
  %v7004 = vpack.c.b16 %v4570, %v4568
  %v7005 = vpack.c.b16 %v4571, %v4569
  %v7006 = vpack.c.b16 %v4574, %v4572
  %v7007 = vpack.c.b16 %v4575, %v4573
  %v7008 = vpack.c.b16 %v4578, %v4576
  %v7009 = vpack.c.b16 %v4579, %v4577
  %v7010 = vpack.c.b16 %v4582, %v4580
  %v7011 = vpack.c.b16 %v4583, %v4581
  %v7012 = vpack.c.b16 %v4586, %v4584
  %v7013 = vpack.c.b16 %v4587, %v4585
  %v7014 = vpack.c.b16 %v4590, %v4588
  %v7015 = vpack.c.b16 %v4591, %v4589
  %v7016 = vpack.c.b16 %v4594, %v4592
  %v7017 = vpack.c.b16 %v4595, %v4593
  %v7018 = vpack.c.b16 %v4598, %v4596
  %v7019 = vpack.c.b16 %v4599, %v4597
  %v7020 = vpack.c.b16 %v4602, %v4600
  %v7021 = vpack.c.b16 %v4603, %v4601
  %v7022 = vpack.c.b16 %v4606, %v4604
  %v7023 = vpack.c.b16 %v4607, %v4605
  %v7024 = vpack.c.b16 %v4610, %v4608
  %v7025 = vpack.c.b16 %v4611, %v4609
  %v7026 = vpack.c.b16 %v4614, %v4612
  %v7027 = vpack.c.b16 %v4615, %v4613
  %v7028 = vpack.c.b16 %v4618, %v4616
  %v7029 = vpack.c.b16 %v4619, %v4617
  %v7030 = vpack.c.b16 %v4622, %v4620
  %v7031 = vpack.c.b16 %v4623, %v4621
  %v7032 = vpack.c.b16 %v4626, %v4624
  %v7033 = vpack.c.b16 %v4627, %v4625
  %v7034 = vpack.c.b16 %v4630, %v4628
  %v7035 = vpack.c.b16 %v4631, %v4629
  %v7036 = vpack.c.b16 %v4634, %v4632
  %v7037 = vpack.c.b16 %v4635, %v4633
  %v7038 = vpack.c.b16 %v4638, %v4636
  %v7039 = vpack.c.b16 %v4639, %v4637
  %v7040 = vpack.c.b16 %v4642, %v4640
  %v7041 = vpack.c.b16 %v4643, %v4641
  %v7042 = vpack.c.b16 %v4646, %v4644
  %v7043 = vpack.c.b16 %v4647, %v4645
  %v7044 = vpack.c.b16 %v4650, %v4648
  %v7045 = vpack.c.b16 %v4651, %v4649
  %v7046 = vpack.c.b16 %v4654, %v4652
  %v7047 = vpack.c.b16 %v4655, %v4653
  %v7048 = vpack.c.b16 %v4658, %v4656
  %v7049 = vpack.c.b16 %v4659, %v4657
  %v7050 = vpack.c.b16 %v4662, %v4660
  %v7051 = vpack.c.b16 %v4663, %v4661
  %v7052 = vpack.c.b16 %v4666, %v4664
  %v7053 = vpack.c.b16 %v4667, %v4665
  %v7054 = vpack.c.b16 %v4670, %v4668
  %v7055 = vpack.c.b16 %v4671, %v4669
  %v7056 = vpack.c.b16 %v4674, %v4672
  %v7057 = vpack.c.b16 %v4675, %v4673
  %v7058 = vpack.c.b16 %v4678, %v4676
  %v7059 = vpack.c.b16 %v4679, %v4677
  %v7060 = vpack.c.b16 %v4682, %v4680
  %v7061 = vpack.c.b16 %v4683, %v4681
  %v7062 = vpack.c.b16 %v4686, %v4684
  %v7063 = vpack.c.b16 %v4687, %v4685
  %v7064 = vpack.c.b16 %v4690, %v4688
  %v7065 = vpack.c.b16 %v4691, %v4689
  %v7066 = vpack.c.b16 %v4694, %v4692
  %v7067 = vpack.c.b16 %v4695, %v4693
  %v7068 = vpack.c.b16 %v4698, %v4696
  %v7069 = vpack.c.b16 %v4699, %v4697
  %v7070 = vpack.c.b16 %v4702, %v4700
  %v7071 = vpack.c.b16 %v4703, %v4701
  %v7072 = vpack.c.b16 %v4706, %v4704
  %v7073 = vpack.c.b16 %v4707, %v4705
  %v7074 = vpack.c.b16 %v4710, %v4708
  %v7075 = vpack.c.b16 %v4711, %v4709
  %v7076 = vpack.c.b16 %v4714, %v4712
  %v7077 = vpack.c.b16 %v4715, %v4713
  %v7078 = vpack.c.b16 %v4718, %v4716
  %v7079 = vpack.c.b16 %v4719, %v4717
  %v7080 = vpack.c.b16 %v4722, %v4720
  %v7081 = vpack.c.b16 %v4723, %v4721
  %v7082 = vpack.c.b16 %v4726, %v4724
  %v7083 = vpack.c.b16 %v4727, %v4725
  %v7084 = vpack.c.b16 %v4730, %v4728
  %v7085 = vpack.c.b16 %v4731, %v4729
  %v7086 = vpack.c.b16 %v4734, %v4732
  %v7087 = vpack.c.b16 %v4735, %v4733
  %v7088 = vpack.c.b16 %v4738, %v4736
  %v7089 = vpack.c.b16 %v4739, %v4737
  %v7090 = vpack.c.b16 %v4742, %v4740
  %v7091 = vpack.c.b16 %v4743, %v4741
  %v7092 = vpack.c.b16 %v4746, %v4744
  %v7093 = vpack.c.b16 %v4747, %v4745
  %v7094 = vpack.c.b16 %v4750, %v4748
  %v7095 = vpack.c.b16 %v4751, %v4749
  %v7096 = vpack.c.b16 %v4754, %v4752
  %v7097 = vpack.c.b16 %v4755, %v4753
  %v7098 = vpack.c.b16 %v4758, %v4756
  %v7099 = vpack.c.b16 %v4759, %v4757
  %v7100 = vpack.c.b16 %v4762, %v4760
  %v7101 = vpack.c.b16 %v4763, %v4761
  %v7102 = vpack.c.b16 %v4766, %v4764
  %v7103 = vpack.c.b16 %v4767, %v4765
  %v7104 = vpack.c.b16 %v4770, %v4768
  %v7105 = vpack.c.b16 %v4771, %v4769
  %v7106 = vpack.c.b16 %v4774, %v4772
  %v7107 = vpack.c.b16 %v4775, %v4773
  %v7108 = vpack.c.b16 %v4778, %v4776
  %v7109 = vpack.c.b16 %v4779, %v4777
  %v7110 = vpack.c.b16 %v4782, %v4780
  %v7111 = vpack.c.b16 %v4783, %v4781
  %v7112 = vpack.c.b16 %v4786, %v4784
  %v7113 = vpack.c.b16 %v4787, %v4785
  %v7114 = vpack.c.b16 %v4790, %v4788
  %v7115 = vpack.c.b16 %v4791, %v4789
  %v7116 = vpack.c.b16 %v4794, %v4792
  %v7117 = vpack.c.b16 %v4795, %v4793
  %v7118 = vpack.c.b16 %v4798, %v4796
  %v7119 = vpack.c.b16 %v4799, %v4797
  %v7120 = vpack.c.b16 %v4802, %v4800
  %v7121 = vpack.c.b16 %v4803, %v4801
  %v7122 = vpack.c.b16 %v4806, %v4804
  %v7123 = vpack.c.b16 %v4807, %v4805
  %v7124 = vpack.c.b16 %v4810, %v4808
  %v7125 = vpack.c.b16 %v4811, %v4809
  %v7126 = vpack.c.b16 %v4814, %v4812
  %v7127 = vpack.c.b16 %v4815, %v4813
  %v7128 = vpack.c.b16 %v4818, %v4816
  %v7129 = vpack.c.b16 %v4819, %v4817
  %v7130 = vpack.c.b16 %v4822, %v4820
  %v7131 = vpack.c.b16 %v4823, %v4821
  %v7132 = vpack.c.b16 %v4826, %v4824
  %v7133 = vpack.c.b16 %v4827, %v4825
  %v7134 = vpack.c.b16 %v4830, %v4828
  %v7135 = vpack.c.b16 %v4831, %v4829
  %v7136 = vpack.c.b16 %v4834, %v4832
  %v7137 = vpack.c.b16 %v4835, %v4833
  %v7138 = vpack.c.b16 %v4838, %v4836
  %v7139 = vpack.c.b16 %v4839, %v4837
  %v7140 = vpack.c.b16 %v4842, %v4840
  %v7141 = vpack.c.b16 %v4843, %v4841
  %v7142 = vpack.c.b16 %v4846, %v4844
  %v7143 = vpack.c.b16 %v4847, %v4845
  %v7144 = vpack.c.b16 %v4850, %v4848
  %v7145 = vpack.c.b16 %v4851, %v4849
  %v7146 = vpack.c.b16 %v4854, %v4852
  %v7147 = vpack.c.b16 %v4855, %v4853
  %v7148 = vpack.c.b16 %v4858, %v4856
  %v7149 = vpack.c.b16 %v4859, %v4857
  %v7150 = vpack.c.b16 %v4862, %v4860
  %v7151 = vpack.c.b16 %v4863, %v4861
  %v7152 = vpack.c.b16 %v4866, %v4864
  %v7153 = vpack.c.b16 %v4867, %v4865
  %v7154 = vpack.c.b16 %v4870, %v4868
  %v7155 = vpack.c.b16 %v4871, %v4869
  %v7156 = vpack.c.b16 %v4874, %v4872
  %v7157 = vpack.c.b16 %v4875, %v4873
  %v7158 = vpack.c.b16 %v4878, %v4876
  %v7159 = vpack.c.b16 %v4879, %v4877
  %v7160 = vpack.c.b16 %v4882, %v4880
  %v7161 = vpack.c.b16 %v4883, %v4881
  %v7162 = vpack.c.b16 %v4886, %v4884
  %v7163 = vpack.c.b16 %v4887, %v4885
  %v7164 = vpack.c.b16 %v4890, %v4888
  %v7165 = vpack.c.b16 %v4891, %v4889
  %v7166 = vpack.c.b16 %v4894, %v4892
  %v7167 = vpack.c.b16 %v4895, %v4893
  %v7168 = vpack.c.b16 %v4898, %v4896
  %v7169 = vpack.c.b16 %v4899, %v4897
  %v7170 = vpack.c.b16 %v4902, %v4900
  %v7171 = vpack.c.b16 %v4903, %v4901
  %v7172 = vpack.c.b16 %v4906, %v4904
  %v7173 = vpack.c.b16 %v4907, %v4905
  %v7174 = vpack.c.b16 %v4910, %v4908
  %v7175 = vpack.c.b16 %v4911, %v4909
  %v7176 = vpack.c.b16 %v4914, %v4912
  %v7177 = vpack.c.b16 %v4915, %v4913
  %v7178 = vpack.c.b16 %v4918, %v4916
  %v7179 = vpack.c.b16 %v4919, %v4917
  %v7180 = vpack.c.b16 %v4922, %v4920
  %v7181 = vpack.c.b16 %v4923, %v4921
  %v7182 = vpack.c.b16 %v4926, %v4924
  %v7183 = vpack.c.b16 %v4927, %v4925
  %v7184 = vpack.c.b16 %v4930, %v4928
  %v7185 = vpack.c.b16 %v4931, %v4929
  %v7186 = vpack.c.b16 %v4934, %v4932
  %v7187 = vpack.c.b16 %v4935, %v4933
  %v7188 = vpack.c.b16 %v4938, %v4936
  %v7189 = vpack.c.b16 %v4939, %v4937
  %v7190 = vpack.c.b16 %v4942, %v4940
  %v7191 = vpack.c.b16 %v4943, %v4941
  %v7192 = vpack.c.b16 %v4946, %v4944
  %v7193 = vpack.c.b16 %v4947, %v4945
  %v7194 = vpack.c.b16 %v4950, %v4948
  %v7195 = vpack.c.b16 %v4951, %v4949
  %v7196 = vpack.c.b16 %v4954, %v4952
  %v7197 = vpack.c.b16 %v4955, %v4953
  %v7198 = vpack.c.b16 %v4958, %v4956
  %v7199 = vpack.c.b16 %v4959, %v4957
  %v7200 = vpack.c.b16 %v4962, %v4960
  %v7201 = vpack.c.b16 %v4963, %v4961
  %v7202 = vpack.c.b16 %v4966, %v4964
  %v7203 = vpack.c.b16 %v4967, %v4965
  %v7204 = vpack.c.b16 %v4970, %v4968
  %v7205 = vpack.c.b16 %v4971, %v4969
  %v7206 = vpack.c.b16 %v4974, %v4972
  %v7207 = vpack.c.b16 %v4975, %v4973
  %v7208 = vpack.c.b16 %v4978, %v4976
  %v7209 = vpack.c.b16 %v4979, %v4977
  %v7210 = vpack.c.b16 %v4982, %v4980
  %v7211 = vpack.c.b16 %v4983, %v4981
  %v7212 = vpack.c.b16 %v4986, %v4984
  %v7213 = vpack.c.b16 %v4987, %v4985
  %v7214 = vpack.c.b16 %v4990, %v4988
  %v7215 = vpack.c.b16 %v4991, %v4989
  %v7216 = vpack.c.b16 %v4994, %v4992
  %v7217 = vpack.c.b16 %v4995, %v4993
  %v7218 = vpack.c.b16 %v4998, %v4996
  %v7219 = vpack.c.b16 %v4999, %v4997
  %v7220 = vpack.c.b16 %v5002, %v5000
  %v7221 = vpack.c.b16 %v5003, %v5001
  %v7222 = vpack.c.b16 %v5006, %v5004
  %v7223 = vpack.c.b16 %v5007, %v5005
  %v7224 = vpack.c.b16 %v5010, %v5008
  %v7225 = vpack.c.b16 %v5011, %v5009
  %v7226 = vpack.c.b16 %v5014, %v5012
  %v7227 = vpack.c.b16 %v5015, %v5013
  %v7228 = vpack.c.b16 %v5018, %v5016
  %v7229 = vpack.c.b16 %v5019, %v5017
  %v7230 = vpack.c.b16 %v5022, %v5020
  %v7231 = vpack.c.b16 %v5023, %v5021
  %v7232 = vpack.c.b16 %v5026, %v5024
  %v7233 = vpack.c.b16 %v5027, %v5025
  %v7234 = vpack.c.b16 %v5030, %v5028
  %v7235 = vpack.c.b16 %v5031, %v5029
  %v7236 = vpack.c.b16 %v5034, %v5032
  %v7237 = vpack.c.b16 %v5035, %v5033
  %v7238 = vpack.c.b16 %v5038, %v5036
  %v7239 = vpack.c.b16 %v5039, %v5037
  %v7240 = vpack.c.b16 %v5042, %v5040
  %v7241 = vpack.c.b16 %v5043, %v5041
  %v7242 = vpack.c.b16 %v5046, %v5044
  %v7243 = vpack.c.b16 %v5047, %v5045
  %v7244 = vpack.c.b16 %v5050, %v5048
  %v7245 = vpack.c.b16 %v5051, %v5049
  %v7246 = vpack.c.b16 %v5054, %v5052
  %v7247 = vpack.c.b16 %v5055, %v5053
  %v7248 = vpack.c.b16 %v5058, %v5056
  %v7249 = vpack.c.b16 %v5059, %v5057
  %v7250 = vpack.c.b16 %v5062, %v5060
  %v7251 = vpack.c.b16 %v5063, %v5061
  %v7252 = vpack.c.b16 %v5066, %v5064
  %v7253 = vpack.c.b16 %v5067, %v5065
  %v7254 = vpack.c.b16 %v5070, %v5068
  %v7255 = vpack.c.b16 %v5071, %v5069
  %v7256 = vpack.c.b16 %v5074, %v5072
  %v7257 = vpack.c.b16 %v5075, %v5073
  %v7258 = vpack.c.b16 %v5078, %v5076
  %v7259 = vpack.c.b16 %v5079, %v5077
  %v7260 = vpack.c.b16 %v5082, %v5080
  %v7261 = vpack.c.b16 %v5083, %v5081
  %v7262 = vpack.c.b16 %v5086, %v5084
  %v7263 = vpack.c.b16 %v5087, %v5085
  %v7264 = vpack.c.b16 %v5090, %v5088
  %v7265 = vpack.c.b16 %v5091, %v5089
  %v7266 = vpack.c.b16 %v5094, %v5092
  %v7267 = vpack.c.b16 %v5095, %v5093
  %v7268 = vpack.c.b16 %v5098, %v5096
  %v7269 = vpack.c.b16 %v5099, %v5097
  %v7270 = vpack.c.b16 %v5102, %v5100
  %v7271 = vpack.c.b16 %v5103, %v5101
  %v7272 = vpack.c.b16 %v5106, %v5104
  %v7273 = vpack.c.b16 %v5107, %v5105
  %v7274 = vpack.c.b16 %v5110, %v5108
  %v7275 = vpack.c.b16 %v5111, %v5109
  %v7276 = vpack.c.b16 %v5114, %v5112
  %v7277 = vpack.c.b16 %v5115, %v5113
  %v7278 = vpack.c.b16 %v5118, %v5116
  %v7279 = vpack.c.b16 %v5119, %v5117
  %v7280 = vpack.c.b16 %v5122, %v5120
  %v7281 = vpack.c.b16 %v5123, %v5121
  %v7282 = vpack.c.b16 %v5126, %v5124
  %v7283 = vpack.c.b16 %v5127, %v5125
  %v7284 = vpack.c.b16 %v5130, %v5128
  %v7285 = vpack.c.b16 %v5131, %v5129
  %v7286 = vpack.c.b16 %v5134, %v5132
  %v7287 = vpack.c.b16 %v5135, %v5133
  %v7288 = vpack.c.b16 %v5138, %v5136
  %v7289 = vpack.c.b16 %v5139, %v5137
  %v7290 = vpack.c.b16 %v5142, %v5140
  %v7291 = vpack.c.b16 %v5143, %v5141
  %v7292 = vpack.c.b16 %v5146, %v5144
  %v7293 = vpack.c.b16 %v5147, %v5145
  %v7294 = vpack.c.b16 %v5150, %v5148
  %v7295 = vpack.c.b16 %v5151, %v5149
  %v7296 = vpack.c.b16 %v5154, %v5152
  %v7297 = vpack.c.b16 %v5155, %v5153
  %v7298 = vpack.c.b16 %v5158, %v5156
  %v7299 = vpack.c.b16 %v5159, %v5157
  %v7300 = vpack.c.b16 %v5162, %v5160
  %v7301 = vpack.c.b16 %v5163, %v5161
  %v7302 = vpack.c.b16 %v5166, %v5164
  %v7303 = vpack.c.b16 %v5167, %v5165
  %v7304 = vpack.c.b16 %v5170, %v5168
  %v7305 = vpack.c.b16 %v5171, %v5169
  %v7306 = vpack.c.b16 %v5174, %v5172
  %v7307 = vpack.c.b16 %v5175, %v5173
  %v7308 = vpack.c.b16 %v5178, %v5176
  %v7309 = vpack.c.b16 %v5179, %v5177
  %v7310 = vpack.c.b16 %v5182, %v5180
  %v7311 = vpack.c.b16 %v5183, %v5181
  %v7312 = vpack.c.b16 %v5186, %v5184
  %v7313 = vpack.c.b16 %v5187, %v5185
  %v7314 = vpack.c.b16 %v5190, %v5188
  %v7315 = vpack.c.b16 %v5191, %v5189
  %v7316 = vpack.c.b16 %v5194, %v5192
  %v7317 = vpack.c.b16 %v5195, %v5193
  %v7318 = vpack.c.b16 %v5198, %v5196
  %v7319 = vpack.c.b16 %v5199, %v5197
  %v7320 = vpack.c.b16 %v5202, %v5200
  %v7321 = vpack.c.b16 %v5203, %v5201
  %v7322 = vpack.c.b16 %v5206, %v5204
  %v7323 = vpack.c.b16 %v5207, %v5205
  %v7324 = vpack.c.b16 %v5210, %v5208
  %v7325 = vpack.c.b16 %v5211, %v5209
  %v7326 = vpack.c.b16 %v5214, %v5212
  %v7327 = vpack.c.b16 %v5215, %v5213
  %v7328 = vpack.c.b16 %v5218, %v5216
  %v7329 = vpack.c.b16 %v5219, %v5217
  %v7330 = vpack.c.b16 %v5222, %v5220
  %v7331 = vpack.c.b16 %v5223, %v5221
  %v7332 = vpack.c.b16 %v5226, %v5224
  %v7333 = vpack.c.b16 %v5227, %v5225
  %v7334 = vpack.c.b16 %v5230, %v5228
  %v7335 = vpack.c.b16 %v5231, %v5229
  %v7336 = vpack.c.b16 %v5234, %v5232
  %v7337 = vpack.c.b16 %v5235, %v5233
  %v7338 = vpack.c.b16 %v5238, %v5236
  %v7339 = vpack.c.b16 %v5239, %v5237
  %v7340 = vpack.c.b16 %v5242, %v5240
  %v7341 = vpack.c.b16 %v5243, %v5241
  %v7342 = vpack.c.b16 %v5246, %v5244
  %v7343 = vpack.c.b16 %v5247, %v5245
  %v7344 = vpack.c.b16 %v5250, %v5248
  %v7345 = vpack.c.b16 %v5251, %v5249
  %v7346 = vpack.c.b16 %v5254, %v5252
  %v7347 = vpack.c.b16 %v5255, %v5253
  %v7348 = vpack.c.b16 %v5258, %v5256
  %v7349 = vpack.c.b16 %v5259, %v5257
  %v7350 = vpack.c.b16 %v5262, %v5260
  %v7351 = vpack.c.b16 %v5263, %v5261
  %v7352 = vpack.c.b16 %v5266, %v5264
  %v7353 = vpack.c.b16 %v5267, %v5265
  %v7354 = vpack.c.b16 %v5270, %v5268
  %v7355 = vpack.c.b16 %v5271, %v5269
  %v7356 = vpack.c.b16 %v5274, %v5272
  %v7357 = vpack.c.b16 %v5275, %v5273
  %v7358 = vpack.c.b16 %v5278, %v5276
  %v7359 = vpack.c.b16 %v5279, %v5277
  %v7360 = vpack.c.b16 %v5282, %v5280
  %v7361 = vpack.c.b16 %v5283, %v5281
  %v7362 = vpack.c.b16 %v5286, %v5284
  %v7363 = vpack.c.b16 %v5287, %v5285
  %v7364 = vpack.c.b16 %v5290, %v5288
  %v7365 = vpack.c.b16 %v5291, %v5289
  %v7366 = vpack.c.b16 %v5294, %v5292
  %v7367 = vpack.c.b16 %v5295, %v5293
  %v7368 = vpack.c.b16 %v5298, %v5296
  %v7369 = vpack.c.b16 %v5299, %v5297
  %v7370 = vpack.c.b16 %v5302, %v5300
  %v7371 = vpack.c.b16 %v5303, %v5301
  %v7372 = vpack.c.b16 %v5306, %v5304
  %v7373 = vpack.c.b16 %v5307, %v5305
  %v7374 = vpack.c.b16 %v5310, %v5308
  %v7375 = vpack.c.b16 %v5311, %v5309
  %v7376 = vpack.c.b16 %v5314, %v5312
  %v7377 = vpack.c.b16 %v5315, %v5313
  %v7378 = vpack.c.b16 %v5318, %v5316
  %v7379 = vpack.c.b16 %v5319, %v5317
  %v7380 = vpack.c.b16 %v5322, %v5320
  %v7381 = vpack.c.b16 %v5323, %v5321
  %v7382 = vpack.c.b16 %v5326, %v5324
  %v7383 = vpack.c.b16 %v5327, %v5325
  %v7384 = vpack.c.b16 %v5330, %v5328
  %v7385 = vpack.c.b16 %v5331, %v5329
  %v7386 = vpack.c.b16 %v5334, %v5332
  %v7387 = vpack.c.b16 %v5335, %v5333
  %v7388 = vpack.c.b16 %v5338, %v5336
  %v7389 = vpack.c.b16 %v5339, %v5337
  %v7390 = vpack.c.b16 %v5342, %v5340
  %v7391 = vpack.c.b16 %v5343, %v5341
  %v7392 = vpack.c.b16 %v5346, %v5344
  %v7393 = vpack.c.b16 %v5347, %v5345
  %v7394 = vpack.c.b16 %v5350, %v5348
  %v7395 = vpack.c.b16 %v5351, %v5349
  %v7396 = vpack.c.b16 %v5354, %v5352
  %v7397 = vpack.c.b16 %v5355, %v5353
  %v7398 = vpack.c.b16 %v5358, %v5356
  %v7399 = vpack.c.b16 %v5359, %v5357
  %v7400 = vpack.c.b16 %v5362, %v5360
  %v7401 = vpack.c.b16 %v5363, %v5361
  %v7402 = vpack.c.b16 %v5366, %v5364
  %v7403 = vpack.c.b16 %v5367, %v5365
  %v7404 = vpack.c.b16 %v5370, %v5368
  %v7405 = vpack.c.b16 %v5371, %v5369
  %v7406 = vpack.c.b16 %v5374, %v5372
  %v7407 = vpack.c.b16 %v5375, %v5373
  %v7408 = vpack.c.b16 %v5378, %v5376
  %v7409 = vpack.c.b16 %v5379, %v5377
  %v7410 = vpack.c.b16 %v5382, %v5380
  %v7411 = vpack.c.b16 %v5383, %v5381
  %v7412 = vpack.c.b16 %v5386, %v5384
  %v7413 = vpack.c.b16 %v5387, %v5385
  %v7414 = vpack.c.b16 %v5390, %v5388
  %v7415 = vpack.c.b16 %v5391, %v5389
  %v7416 = vpack.c.b16 %v5394, %v5392
  %v7417 = vpack.c.b16 %v5395, %v5393
  %v7418 = vpack.c.b16 %v5398, %v5396
  %v7419 = vpack.c.b16 %v5399, %v5397
  %v7420 = vpack.c.b16 %v5402, %v5400
  %v7421 = vpack.c.b16 %v5403, %v5401
  %v7422 = vpack.c.b16 %v5406, %v5404
  %v7423 = vpack.c.b16 %v5407, %v5405
  %v7424 = vpack.c.b16 %v5410, %v5408
  %v7425 = vpack.c.b16 %v5411, %v5409
  %v7426 = vpack.c.b16 %v5414, %v5412
  %v7427 = vpack.c.b16 %v5415, %v5413
  %v7428 = vpack.c.b16 %v5418, %v5416
  %v7429 = vpack.c.b16 %v5419, %v5417
  %v7430 = vpack.c.b16 %v5422, %v5420
  %v7431 = vpack.c.b16 %v5423, %v5421
  %v7432 = vpack.c.b16 %v5426, %v5424
  %v7433 = vpack.c.b16 %v5427, %v5425
  %v7434 = vpack.c.b16 %v5430, %v5428
  %v7435 = vpack.c.b16 %v5431, %v5429
  %v7436 = vpack.c.b16 %v5434, %v5432
  %v7437 = vpack.c.b16 %v5435, %v5433
  %v7438 = vpack.c.b16 %v5438, %v5436
  %v7439 = vpack.c.b16 %v5439, %v5437
  %v7440 = vpack.c.b16 %v5442, %v5440
  %v7441 = vpack.c.b16 %v5443, %v5441
  %v7442 = vpack.c.b16 %v5446, %v5444
  %v7443 = vpack.c.b16 %v5447, %v5445
  %v7444 = vpack.c.b16 %v5450, %v5448
  %v7445 = vpack.c.b16 %v5451, %v5449
  %v7446 = vpack.c.b16 %v5454, %v5452
  %v7447 = vpack.c.b16 %v5455, %v5453
  %v7448 = vpack.c.b16 %v5458, %v5456
  %v7449 = vpack.c.b16 %v5459, %v5457
  %v7450 = vpack.c.b16 %v5462, %v5460
  %v7451 = vpack.c.b16 %v5463, %v5461
  %v7452 = vpack.c.b16 %v5466, %v5464
  %v7453 = vpack.c.b16 %v5467, %v5465
  %v7454 = vpack.c.b16 %v5470, %v5468
  %v7455 = vpack.c.b16 %v5471, %v5469
  %v7456 = vpack.c.b16 %v5474, %v5472
  %v7457 = vpack.c.b16 %v5475, %v5473
  %v7458 = vpack.c.b16 %v5478, %v5476
  %v7459 = vpack.c.b16 %v5479, %v5477
  %v7460 = vpack.c.b16 %v5482, %v5480
  %v7461 = vpack.c.b16 %v5483, %v5481
  %v7462 = vpack.c.b16 %v5486, %v5484
  %v7463 = vpack.c.b16 %v5487, %v5485
  %v7464 = vpack.c.b16 %v5490, %v5488
  %v7465 = vpack.c.b16 %v5491, %v5489
  %v7466 = vpack.c.b16 %v5494, %v5492
  %v7467 = vpack.c.b16 %v5495, %v5493
  %v7468 = vpack.c.b16 %v5498, %v5496
  %v7469 = vpack.c.b16 %v5499, %v5497
  %v7470 = vpack.c.b16 %v5502, %v5500
  %v7471 = vpack.c.b16 %v5503, %v5501
  %v7472 = vpack.c.b16 %v5506, %v5504
  %v7473 = vpack.c.b16 %v5507, %v5505
  %v7474 = vpack.c.b16 %v5510, %v5508
  %v7475 = vpack.c.b16 %v5511, %v5509
  %v7476 = vpack.c.b16 %v5514, %v5512
  %v7477 = vpack.c.b16 %v5515, %v5513
  %v7478 = vpack.c.b16 %v5518, %v5516
  %v7479 = vpack.c.b16 %v5519, %v5517
  %v7480 = vpack.c.b16 %v5522, %v5520
  %v7481 = vpack.c.b16 %v5523, %v5521
  %v7482 = vpack.c.b16 %v5526, %v5524
  %v7483 = vpack.c.b16 %v5527, %v5525
  %v7484 = vpack.c.b16 %v5530, %v5528
  %v7485 = vpack.c.b16 %v5531, %v5529
  %v7486 = vpack.c.b16 %v5534, %v5532
  %v7487 = vpack.c.b16 %v5535, %v5533
  %v7488 = vpack.c.b16 %v5538, %v5536
  %v7489 = vpack.c.b16 %v5539, %v5537
  %v7490 = vpack.c.b16 %v5542, %v5540
  %v7491 = vpack.c.b16 %v5543, %v5541
  %v7492 = vpack.c.b16 %v5546, %v5544
  %v7493 = vpack.c.b16 %v5547, %v5545
  %v7494 = vpack.c.b16 %v5550, %v5548
  %v7495 = vpack.c.b16 %v5551, %v5549
  %v7496 = vpack.c.b16 %v5554, %v5552
  %v7497 = vpack.c.b16 %v5555, %v5553
  %v7498 = vpack.c.b16 %v5558, %v5556
  %v7499 = vpack.c.b16 %v5559, %v5557
  %v7500 = vpack.c.b16 %v5562, %v5560
  %v7501 = vpack.c.b16 %v5563, %v5561
  %v7502 = vpack.c.b16 %v5566, %v5564
  %v7503 = vpack.c.b16 %v5567, %v5565
  %v7504 = vpack.c.b16 %v5570, %v5568
  %v7505 = vpack.c.b16 %v5571, %v5569
  %v7506 = vpack.c.b16 %v5574, %v5572
  %v7507 = vpack.c.b16 %v5575, %v5573
  %v7508 = vpack.c.b16 %v5578, %v5576
  %v7509 = vpack.c.b16 %v5579, %v5577
  %v7510 = vpack.c.b16 %v5582, %v5580
  %v7511 = vpack.c.b16 %v5583, %v5581
  %v7512 = vpack.c.b16 %v5586, %v5584
  %v7513 = vpack.c.b16 %v5587, %v5585
  %v7514 = vpack.c.b16 %v5590, %v5588
  %v7515 = vpack.c.b16 %v5591, %v5589
  %v7516 = vpack.c.b16 %v5594, %v5592
  %v7517 = vpack.c.b16 %v5595, %v5593
  %v7518 = vpack.c.b16 %v5598, %v5596
  %v7519 = vpack.c.b16 %v5599, %v5597
  %v7520 = vpack.c.b16 %v5602, %v5600
  %v7521 = vpack.c.b16 %v5603, %v5601
  %v7522 = vpack.c.b16 %v5606, %v5604
  %v7523 = vpack.c.b16 %v5607, %v5605
  %v7524 = vpack.c.b16 %v5610, %v5608
  %v7525 = vpack.c.b16 %v5611, %v5609
  %v7526 = vpack.c.b16 %v5614, %v5612
  %v7527 = vpack.c.b16 %v5615, %v5613
  %v7528 = vpack.c.b16 %v5618, %v5616
  %v7529 = vpack.c.b16 %v5619, %v5617
  %v7530 = vpack.c.b16 %v5622, %v5620
  %v7531 = vpack.c.b16 %v5623, %v5621
  %v7532 = vpack.c.b16 %v5626, %v5624
  %v7533 = vpack.c.b16 %v5627, %v5625
  %v7534 = vpack.c.b16 %v5630, %v5628
  %v7535 = vpack.c.b16 %v5631, %v5629
  %v7536 = vpack.c.b16 %v5634, %v5632
  %v7537 = vpack.c.b16 %v5635, %v5633
  %v7538 = vpack.c.b16 %v5638, %v5636
  %v7539 = vpack.c.b16 %v5639, %v5637
  %v7540 = vpack.c.b16 %v5642, %v5640
  %v7541 = vpack.c.b16 %v5643, %v5641
  %v7542 = vpack.c.b16 %v5646, %v5644
  %v7543 = vpack.c.b16 %v5647, %v5645
  %v7544 = vpack.c.b16 %v5650, %v5648
  %v7545 = vpack.c.b16 %v5651, %v5649
  %v7546 = vpack.c.b16 %v5654, %v5652
  %v7547 = vpack.c.b16 %v5655, %v5653
  %v7548 = vpack.c.b16 %v5658, %v5656
  %v7549 = vpack.c.b16 %v5659, %v5657
  %v7550 = vpack.c.b16 %v5662, %v5660
  %v7551 = vpack.c.b16 %v5663, %v5661
  %v7552 = vpack.c.b16 %v5666, %v5664
  %v7553 = vpack.c.b16 %v5667, %v5665
  %v7554 = vpack.c.b16 %v5670, %v5668
  %v7555 = vpack.c.b16 %v5671, %v5669
  %v7556 = vpack.c.b16 %v5674, %v5672
  %v7557 = vpack.c.b16 %v5675, %v5673
  %v7558 = vpack.c.b16 %v5678, %v5676
  %v7559 = vpack.c.b16 %v5679, %v5677
  %v7560 = vpack.c.b16 %v5682, %v5680
  %v7561 = vpack.c.b16 %v5683, %v5681
  %v7562 = vpack.c.b16 %v5686, %v5684
  %v7563 = vpack.c.b16 %v5687, %v5685
  %v7564 = vpack.c.b16 %v5690, %v5688
  %v7565 = vpack.c.b16 %v5691, %v5689
  %v7566 = vpack.c.b16 %v5694, %v5692
  %v7567 = vpack.c.b16 %v5695, %v5693
  %v7568 = vpack.c.b16 %v5698, %v5696
  %v7569 = vpack.c.b16 %v5699, %v5697
  %v7570 = vpack.c.b16 %v5702, %v5700
  %v7571 = vpack.c.b16 %v5703, %v5701
  %v7572 = vpack.c.b16 %v5706, %v5704
  %v7573 = vpack.c.b16 %v5707, %v5705
  %v7574 = vpack.c.b16 %v5710, %v5708
  %v7575 = vpack.c.b16 %v5711, %v5709
  %v7576 = vpack.c.b16 %v5714, %v5712
  %v7577 = vpack.c.b16 %v5715, %v5713
  %v7578 = vpack.c.b16 %v5718, %v5716
  %v7579 = vpack.c.b16 %v5719, %v5717
  %v7580 = vpack.c.b16 %v5722, %v5720
  %v7581 = vpack.c.b16 %v5723, %v5721
  %v7582 = vpack.c.b16 %v5726, %v5724
  %v7583 = vpack.c.b16 %v5727, %v5725
  %v7584 = vpack.c.b16 %v5730, %v5728
  %v7585 = vpack.c.b16 %v5731, %v5729
  %v7586 = vpack.c.b16 %v5734, %v5732
  %v7587 = vpack.c.b16 %v5735, %v5733
  %v7588 = vpack.c.b16 %v5738, %v5736
  %v7589 = vpack.c.b16 %v5739, %v5737
  %v7590 = vpack.c.b16 %v5742, %v5740
  %v7591 = vpack.c.b16 %v5743, %v5741
  %v7592 = vpack.c.b16 %v5746, %v5744
  %v7593 = vpack.c.b16 %v5747, %v5745
  %v7594 = vpack.c.b16 %v5750, %v5748
  %v7595 = vpack.c.b16 %v5751, %v5749
  %v7596 = vpack.c.b16 %v5754, %v5752
  %v7597 = vpack.c.b16 %v5755, %v5753
  %v7598 = vpack.c.b16 %v5758, %v5756
  %v7599 = vpack.c.b16 %v5759, %v5757
  %v7600 = vpack.c.b16 %v5762, %v5760
  %v7601 = vpack.c.b16 %v5763, %v5761
  %v7602 = vpack.c.b16 %v5766, %v5764
  %v7603 = vpack.c.b16 %v5767, %v5765
  %v7604 = vpack.c.b16 %v5770, %v5768
  %v7605 = vpack.c.b16 %v5771, %v5769
  %v7606 = vpack.c.b16 %v5774, %v5772
  %v7607 = vpack.c.b16 %v5775, %v5773
  %v7608 = vpack.c.b16 %v5778, %v5776
  %v7609 = vpack.c.b16 %v5779, %v5777
  %v7610 = vpack.c.b16 %v5782, %v5780
  %v7611 = vpack.c.b16 %v5783, %v5781
  %v7612 = vpack.c.b16 %v5786, %v5784
  %v7613 = vpack.c.b16 %v5787, %v5785
  %v7614 = vpack.c.b16 %v5790, %v5788
  %v7615 = vpack.c.b16 %v5791, %v5789
  %v7616 = vpack.c.b16 %v5794, %v5792
  %v7617 = vpack.c.b16 %v5795, %v5793
  %v7618 = vpack.c.b16 %v5798, %v5796
  %v7619 = vpack.c.b16 %v5799, %v5797
  %v7620 = vpack.c.b16 %v5802, %v5800
  %v7621 = vpack.c.b16 %v5803, %v5801
  %v7622 = vpack.c.b16 %v5806, %v5804
  %v7623 = vpack.c.b16 %v5807, %v5805
  %v7624 = vpack.c.b16 %v5810, %v5808
  %v7625 = vpack.c.b16 %v5811, %v5809
  %v7626 = vpack.c.b16 %v5814, %v5812
  %v7627 = vpack.c.b16 %v5815, %v5813
  %v7628 = vpack.c.b16 %v5818, %v5816
  %v7629 = vpack.c.b16 %v5819, %v5817
  %v7630 = vpack.c.b16 %v5822, %v5820
  %v7631 = vpack.c.b16 %v5823, %v5821
  %v7632 = vpack.c.b16 %v5826, %v5824
  %v7633 = vpack.c.b16 %v5827, %v5825
  %v7634 = vpack.c.b16 %v5830, %v5828
  %v7635 = vpack.c.b16 %v5831, %v5829
  %v7636 = vpack.c.b16 %v5834, %v5832
  %v7637 = vpack.c.b16 %v5835, %v5833
  %v7638 = vpack.c.b16 %v5838, %v5836
  %v7639 = vpack.c.b16 %v5839, %v5837
  %v7640 = vpack.c.b16 %v5842, %v5840
  %v7641 = vpack.c.b16 %v5843, %v5841
  %v7642 = vpack.c.b16 %v5846, %v5844
  %v7643 = vpack.c.b16 %v5847, %v5845
  %v7644 = vpack.c.b16 %v5850, %v5848
  %v7645 = vpack.c.b16 %v5851, %v5849
  %v7646 = vpack.c.b16 %v5854, %v5852
  %v7647 = vpack.c.b16 %v5855, %v5853
  %v7648 = vpack.c.b16 %v5858, %v5856
  %v7649 = vpack.c.b16 %v5859, %v5857
  %v7650 = vpack.c.b16 %v5862, %v5860
  %v7651 = vpack.c.b16 %v5863, %v5861
  %v7652 = vpack.c.b16 %v5866, %v5864
  %v7653 = vpack.c.b16 %v5867, %v5865
  %v7654 = vpack.c.b16 %v5870, %v5868
  %v7655 = vpack.c.b16 %v5871, %v5869
  %v7656 = vpack.c.b16 %v5874, %v5872
  %v7657 = vpack.c.b16 %v5875, %v5873
  %v7658 = vpack.c.b16 %v5878, %v5876
  %v7659 = vpack.c.b16 %v5879, %v5877
  %v7660 = vpack.c.b16 %v5882, %v5880
  %v7661 = vpack.c.b16 %v5883, %v5881
  %v7662 = vpack.c.b16 %v5886, %v5884
  %v7663 = vpack.c.b16 %v5887, %v5885
  %v7664 = vpack.c.b16 %v5890, %v5888
  %v7665 = vpack.c.b16 %v5891, %v5889
  %v7666 = vpack.c.b16 %v5894, %v5892
  %v7667 = vpack.c.b16 %v5895, %v5893
  %v7668 = vpack.c.b16 %v5898, %v5896
  %v7669 = vpack.c.b16 %v5899, %v5897
  %v7670 = vpack.c.b16 %v5902, %v5900
  %v7671 = vpack.c.b16 %v5903, %v5901
  %v7672 = vpack.c.b16 %v5906, %v5904
  %v7673 = vpack.c.b16 %v5907, %v5905
  %v7674 = vpack.c.b16 %v5910, %v5908
  %v7675 = vpack.c.b16 %v5911, %v5909
  %v7676 = vpack.c.b16 %v5914, %v5912
  %v7677 = vpack.c.b16 %v5915, %v5913
  %v7678 = vpack.c.b16 %v5918, %v5916
  %v7679 = vpack.c.b16 %v5919, %v5917
  %v7680 = vpack.c.b16 %v5922, %v5920
  %v7681 = vpack.c.b16 %v5923, %v5921
  %v7682 = vpack.c.b16 %v5926, %v5924
  %v7683 = vpack.c.b16 %v5927, %v5925
  %v7684 = vpack.c.b16 %v5930, %v5928
  %v7685 = vpack.c.b16 %v5931, %v5929
  %v7686 = vpack.c.b16 %v5934, %v5932
  %v7687 = vpack.c.b16 %v5935, %v5933
  %v7688 = vpack.c.b16 %v5938, %v5936
  %v7689 = vpack.c.b16 %v5939, %v5937
  %v7690 = vpack.c.b16 %v5942, %v5940
  %v7691 = vpack.c.b16 %v5943, %v5941
  %v7692 = vpack.c.b16 %v5946, %v5944
  %v7693 = vpack.c.b16 %v5947, %v5945
  %v7694 = vpack.c.b16 %v5950, %v5948
  %v7695 = vpack.c.b16 %v5951, %v5949
  %v7696 = vpack.c.b16 %v5954, %v5952
  %v7697 = vpack.c.b16 %v5955, %v5953
  %v7698 = vpack.c.b16 %v5958, %v5956
  %v7699 = vpack.c.b16 %v5959, %v5957
  %v7700 = vpack.c.b16 %v5962, %v5960
  %v7701 = vpack.c.b16 %v5963, %v5961
  %v7702 = vpack.c.b16 %v5966, %v5964
  %v7703 = vpack.c.b16 %v5967, %v5965
  %v7704 = vpack.c.b16 %v5970, %v5968
  %v7705 = vpack.c.b16 %v5971, %v5969
  %v7706 = vpack.c.b16 %v5974, %v5972
  %v7707 = vpack.c.b16 %v5975, %v5973
  %v7708 = vpack.c.b16 %v5978, %v5976
  %v7709 = vpack.c.b16 %v5979, %v5977
  %v7710 = vpack.c.b16 %v5982, %v5980
  %v7711 = vpack.c.b16 %v5983, %v5981
  %v7712 = vpack.c.b16 %v5986, %v5984
  %v7713 = vpack.c.b16 %v5987, %v5985
  %v7714 = vpack.c.b16 %v5990, %v5988
  %v7715 = vpack.c.b16 %v5991, %v5989
  %v7716 = vpack.c.b16 %v5994, %v5992
  %v7717 = vpack.c.b16 %v5995, %v5993
  %v7718 = vpack.c.b16 %v5998, %v5996
  %v7719 = vpack.c.b16 %v5999, %v5997
  %v7720 = vpack.c.b16 %v6002, %v6000
  %v7721 = vpack.c.b16 %v6003, %v6001
  %v7722 = vpack.c.b16 %v6006, %v6004
  %v7723 = vpack.c.b16 %v6007, %v6005
  %v7724 = vpack.c.b16 %v6010, %v6008
  %v7725 = vpack.c.b16 %v6011, %v6009
  %v7726 = vpack.c.b16 %v6014, %v6012
  %v7727 = vpack.c.b16 %v6015, %v6013
  %v7728 = vpack.c.b16 %v6018, %v6016
  %v7729 = vpack.c.b16 %v6019, %v6017
  %v7730 = vpack.c.b16 %v6022, %v6020
  %v7731 = vpack.c.b16 %v6023, %v6021
  %v7732 = vpack.c.b16 %v6026, %v6024
  %v7733 = vpack.c.b16 %v6027, %v6025
  %v7734 = vpack.c.b16 %v6030, %v6028
  %v7735 = vpack.c.b16 %v6031, %v6029
  %v7736 = vpack.c.b16 %v6034, %v6032
  %v7737 = vpack.c.b16 %v6035, %v6033
  %v7738 = vpack.c.b16 %v6038, %v6036
  %v7739 = vpack.c.b16 %v6039, %v6037
  %v7740 = vpack.c.b16 %v6042, %v6040
  %v7741 = vpack.c.b16 %v6043, %v6041
  %v7742 = vpack.c.b16 %v6046, %v6044
  %v7743 = vpack.c.b16 %v6047, %v6045
  %v7744 = vpack.c.b16 %v6050, %v6048
  %v7745 = vpack.c.b16 %v6051, %v6049
  %v7746 = vpack.c.b16 %v6054, %v6052
  %v7747 = vpack.c.b16 %v6055, %v6053
  %v7748 = vpack.c.b16 %v6058, %v6056
  %v7749 = vpack.c.b16 %v6059, %v6057
  %v7750 = vpack.c.b16 %v6062, %v6060
  %v7751 = vpack.c.b16 %v6063, %v6061
  %v7752 = vpack.c.b16 %v6066, %v6064
  %v7753 = vpack.c.b16 %v6067, %v6065
  %v7754 = vpack.c.b16 %v6070, %v6068
  %v7755 = vpack.c.b16 %v6071, %v6069
  %v7756 = vpack.c.b16 %v6074, %v6072
  %v7757 = vpack.c.b16 %v6075, %v6073
  %v7758 = vpack.c.b16 %v6078, %v6076
  %v7759 = vpack.c.b16 %v6079, %v6077
  %v7760 = vpack.c.b16 %v6082, %v6080
  %v7761 = vpack.c.b16 %v6083, %v6081
  %v7762 = vpack.c.b16 %v6086, %v6084
  %v7763 = vpack.c.b16 %v6087, %v6085
  %v7764 = vpack.c.b16 %v6090, %v6088
  %v7765 = vpack.c.b16 %v6091, %v6089
  %v7766 = vpack.c.b16 %v6094, %v6092
  %v7767 = vpack.c.b16 %v6095, %v6093
  %v7768 = vpack.c.b16 %v6098, %v6096
  %v7769 = vpack.c.b16 %v6099, %v6097
  %v7770 = vpack.c.b16 %v6102, %v6100
  %v7771 = vpack.c.b16 %v6103, %v6101
  %v7772 = vpack.c.b16 %v6106, %v6104
  %v7773 = vpack.c.b16 %v6107, %v6105
  %v7774 = vpack.c.b16 %v6110, %v6108
  %v7775 = vpack.c.b16 %v6111, %v6109
  %v7776 = vpack.c.b16 %v6114, %v6112
  %v7777 = vpack.c.b16 %v6115, %v6113
  %v7778 = vpack.c.b16 %v6118, %v6116
  %v7779 = vpack.c.b16 %v6119, %v6117
  %v7780 = vpack.c.b16 %v6122, %v6120
  %v7781 = vpack.c.b16 %v6123, %v6121
  %v7782 = vpack.c.b16 %v6126, %v6124
  %v7783 = vpack.c.b16 %v6127, %v6125
  %v7784 = vpack.c.b16 %v6130, %v6128
  %v7785 = vpack.c.b16 %v6131, %v6129
  %v7786 = vpack.c.b16 %v6134, %v6132
  %v7787 = vpack.c.b16 %v6135, %v6133
  %v7788 = vpack.c.b16 %v6138, %v6136
  %v7789 = vpack.c.b16 %v6139, %v6137
  %v7790 = vpack.c.b16 %v6142, %v6140
  %v7791 = vpack.c.b16 %v6143, %v6141
  %v7792 = vpack.c.b16 %v6146, %v6144
  %v7793 = vpack.c.b16 %v6147, %v6145
  %v7794 = vpack.c.b16 %v6150, %v6148
  %v7795 = vpack.c.b16 %v6151, %v6149
  %v7796 = vpack.c.b16 %v6154, %v6152
  %v7797 = vpack.c.b16 %v6155, %v6153
  %v7798 = vpack.c.b16 %v6158, %v6156
  %v7799 = vpack.c.b16 %v6159, %v6157
  %v7800 = vpack.c.b16 %v6162, %v6160
  %v7801 = vpack.c.b16 %v6163, %v6161
  %v7802 = vpack.c.b16 %v6166, %v6164
  %v7803 = vpack.c.b16 %v6167, %v6165
  %v7804 = vpack.c.b16 %v6170, %v6168
  %v7805 = vpack.c.b16 %v6171, %v6169
  %v7806 = vpack.c.b16 %v6174, %v6172
  %v7807 = vpack.c.b16 %v6175, %v6173
  %v7808 = vpack.c.b16 %v6178, %v6176
  %v7809 = vpack.c.b16 %v6179, %v6177
  %v7810 = vpack.c.b16 %v6182, %v6180
  %v7811 = vpack.c.b16 %v6183, %v6181
  %v7812 = vpack.c.b16 %v6186, %v6184
  %v7813 = vpack.c.b16 %v6187, %v6185
  %v7814 = vpack.c.b16 %v6190, %v6188
  %v7815 = vpack.c.b16 %v6191, %v6189
  %v7816 = vpack.c.b16 %v6194, %v6192
  %v7817 = vpack.c.b16 %v6195, %v6193
  %v7818 = vpack.c.b16 %v6198, %v6196
  %v7819 = vpack.c.b16 %v6199, %v6197
  %v7820 = vpack.c.b16 %v6202, %v6200
  %v7821 = vpack.c.b16 %v6203, %v6201
  %v7822 = vpack.c.b16 %v6206, %v6204
  %v7823 = vpack.c.b16 %v6207, %v6205
  %v7824 = vpack.c.b16 %v6210, %v6208
  %v7825 = vpack.c.b16 %v6211, %v6209
  %v7826 = vpack.c.b16 %v6214, %v6212
  %v7827 = vpack.c.b16 %v6215, %v6213
  %v7828 = vpack.c.b16 %v6218, %v6216
  %v7829 = vpack.c.b16 %v6219, %v6217
  %v7830 = vpack.c.b16 %v6222, %v6220
  %v7831 = vpack.c.b16 %v6223, %v6221
  %v7832 = vpack.c.b16 %v6226, %v6224
  %v7833 = vpack.c.b16 %v6227, %v6225
  %v7834 = vpack.c.b16 %v6230, %v6228
  %v7835 = vpack.c.b16 %v6231, %v6229
  %v7836 = vpack.c.b16 %v6234, %v6232
  %v7837 = vpack.c.b16 %v6235, %v6233
  %v7838 = vpack.c.b16 %v6238, %v6236
  %v7839 = vpack.c.b16 %v6239, %v6237
  %v7840 = vpack.c.b16 %v6242, %v6240
  %v7841 = vpack.c.b16 %v6243, %v6241
  %v7842 = vpack.c.b16 %v6246, %v6244
  %v7843 = vpack.c.b16 %v6247, %v6245
  %v7844 = vpack.c.b16 %v6250, %v6248
  %v7845 = vpack.c.b16 %v6251, %v6249
  %v7846 = vpack.c.b16 %v6254, %v6252
  %v7847 = vpack.c.b16 %v6255, %v6253
  %v7848 = vpack.c.b16 %v6258, %v6256
  %v7849 = vpack.c.b16 %v6259, %v6257
  %v7850 = vpack.c.b16 %v6262, %v6260
  %v7851 = vpack.c.b16 %v6263, %v6261
  %v7852 = vpack.c.b16 %v6266, %v6264
  %v7853 = vpack.c.b16 %v6267, %v6265
  %v7854 = vpack.c.b16 %v6270, %v6268
  %v7855 = vpack.c.b16 %v6271, %v6269
  %v7856 = vpack.c.b16 %v6274, %v6272
  %v7857 = vpack.c.b16 %v6275, %v6273
  %v7858 = vpack.c.b16 %v6278, %v6276
  %v7859 = vpack.c.b16 %v6279, %v6277
  %v7860 = vpack.c.b16 %v6282, %v6280
  %v7861 = vpack.c.b16 %v6283, %v6281
  %v7862 = vpack.c.b16 %v6286, %v6284
  %v7863 = vpack.c.b16 %v6287, %v6285
  %v7864 = vpack.c.b16 %v6290, %v6288
  %v7865 = vpack.c.b16 %v6291, %v6289
  %v7866 = vpack.c.b16 %v6294, %v6292
  %v7867 = vpack.c.b16 %v6295, %v6293
  %v7868 = vpack.c.b16 %v6298, %v6296
  %v7869 = vpack.c.b16 %v6299, %v6297
  %v7870 = vpack.c.b16 %v6302, %v6300
  %v7871 = vpack.c.b16 %v6303, %v6301
  %v7872 = vpack.c.b16 %v6306, %v6304
  %v7873 = vpack.c.b16 %v6307, %v6305
  %v7874 = vpack.c.b16 %v6310, %v6308
  %v7875 = vpack.c.b16 %v6311, %v6309
  %v7876 = vpack.c.b16 %v6314, %v6312
  %v7877 = vpack.c.b16 %v6315, %v6313
  %v7878 = vpack.c.b16 %v6318, %v6316
  %v7879 = vpack.c.b16 %v6319, %v6317
  %v7880 = vpack.c.b16 %v6322, %v6320
  %v7881 = vpack.c.b16 %v6323, %v6321
  %v7882 = vpack.c.b16 %v6326, %v6324
  %v7883 = vpack.c.b16 %v6327, %v6325
  %v7884 = vpack.c.b16 %v6330, %v6328
  %v7885 = vpack.c.b16 %v6331, %v6329
  %v7886 = vpack.c.b16 %v6334, %v6332
  %v7887 = vpack.c.b16 %v6335, %v6333
  %v7888 = vpack.c.b16 %v6338, %v6336
  %v7889 = vpack.c.b16 %v6339, %v6337
  %v7890 = vpack.c.b16 %v6342, %v6340
  %v7891 = vpack.c.b16 %v6343, %v6341
  %v7892 = vpack.c.b16 %v6346, %v6344
  %v7893 = vpack.c.b16 %v6347, %v6345
  %v7894 = vpack.c.b16 %v6350, %v6348
  %v7895 = vpack.c.b16 %v6351, %v6349
  %v7896 = vpack.c.b16 %v6354, %v6352
  %v7897 = vpack.c.b16 %v6355, %v6353
  %v7898 = vpack.c.b16 %v6358, %v6356
  %v7899 = vpack.c.b16 %v6359, %v6357
  %v7900 = vpack.c.b16 %v6362, %v6360
  %v7901 = vpack.c.b16 %v6363, %v6361
  %v7902 = vpack.c.b16 %v6366, %v6364
  %v7903 = vpack.c.b16 %v6367, %v6365
  %9440 = vmatpush.bf16.msra.mxu0 %v6382
  %9441 = vmatpush.bf16.msra.mxu0 %v6380
  %9442 = vmatpush.bf16.msra.mxu0 %v6378
  %9443 = vmatpush.bf16.msra.mxu0 %v6376
  %9444 = vmatpush.bf16.msra.mxu0 %v6374
  %9445 = vmatpush.bf16.msra.mxu0 %v6372
  %9446 = vmatpush.bf16.msra.mxu0 %v6370
  %9447 = vmatpush.bf16.msra.mxu0 %v6368
  %9448 = vmatmul.bf16.gmra.mxu0 %v122
  %v9449 = vpop.f32.mrf.mxu0
  %v9450 = vadd.f32 %v1756, %v9449
  %v9451 = vpop.f32.mrf.mxu0
  %9452 = vdwg.mxu0
  %9453 = vmatpush.bf16.msra.mxu0 %v6398
  %9454 = vmatpush.bf16.msra.mxu0 %v6396
  %9455 = vmatpush.bf16.msra.mxu0 %v6394
  %9456 = vmatpush.bf16.msra.mxu0 %v6392
  %9457 = vmatpush.bf16.msra.mxu0 %v6390
  %9458 = vmatpush.bf16.msra.mxu0 %v6388
  %9459 = vmatpush.bf16.msra.mxu0 %v6386
  %9460 = vmatpush.bf16.msra.mxu0 %v6384
  %9461 = vmatmul.bf16.gmra.mxu0 %v123
  %v9462 = vpop.f32.mrf.mxu0
  %v9463 = vadd.f32 %v9450, %v9462
  %v9464 = vpop.f32.mrf.mxu0
  %9465 = vdwg.mxu0
  %9466 = vmatpush.bf16.msra.mxu0 %v6414
  %9467 = vmatpush.bf16.msra.mxu0 %v6412
  %9468 = vmatpush.bf16.msra.mxu0 %v6410
  %9469 = vmatpush.bf16.msra.mxu0 %v6408
  %9470 = vmatpush.bf16.msra.mxu0 %v6406
  %9471 = vmatpush.bf16.msra.mxu0 %v6404
  %9472 = vmatpush.bf16.msra.mxu0 %v6402
  %9473 = vmatpush.bf16.msra.mxu0 %v6400
  %9474 = vmatmul.bf16.gmra.mxu0 %v124
  %v9475 = vpop.f32.mrf.mxu0
  %v9476 = vadd.f32 %v9463, %v9475
  %v9477 = vpop.f32.mrf.mxu0
  %9478 = vdwg.mxu0
  %9479 = vmatpush.bf16.msra.mxu0 %v6430
  %9480 = vmatpush.bf16.msra.mxu0 %v6428
  %9481 = vmatpush.bf16.msra.mxu0 %v6426
  %9482 = vmatpush.bf16.msra.mxu0 %v6424
  %9483 = vmatpush.bf16.msra.mxu0 %v6422
  %9484 = vmatpush.bf16.msra.mxu0 %v6420
  %9485 = vmatpush.bf16.msra.mxu0 %v6418
  %9486 = vmatpush.bf16.msra.mxu0 %v6416
  %9487 = vmatmul.bf16.gmra.mxu0 %v125
  %v9488 = vpop.f32.mrf.mxu0
  %v9489 = vadd.f32 %v9476, %v9488
  %v9490 = vpop.f32.mrf.mxu0
  %9491 = vdwg.mxu0
  %9492 = vmatpush.bf16.msra.mxu0 %v6446
  %9493 = vmatpush.bf16.msra.mxu0 %v6444
  %9494 = vmatpush.bf16.msra.mxu0 %v6442
  %9495 = vmatpush.bf16.msra.mxu0 %v6440
  %9496 = vmatpush.bf16.msra.mxu0 %v6438
  %9497 = vmatpush.bf16.msra.mxu0 %v6436
  %9498 = vmatpush.bf16.msra.mxu0 %v6434
  %9499 = vmatpush.bf16.msra.mxu0 %v6432
  %9500 = vmatmul.bf16.gmra.mxu0 %v126
  %v9501 = vpop.f32.mrf.mxu0
  %v9502 = vadd.f32 %v9489, %v9501
  %v9503 = vpop.f32.mrf.mxu0
  %9504 = vdwg.mxu0
  %9505 = vmatpush.bf16.msra.mxu0 %v6462
  %9506 = vmatpush.bf16.msra.mxu0 %v6460
  %9507 = vmatpush.bf16.msra.mxu0 %v6458
  %9508 = vmatpush.bf16.msra.mxu0 %v6456
  %9509 = vmatpush.bf16.msra.mxu0 %v6454
  %9510 = vmatpush.bf16.msra.mxu0 %v6452
  %9511 = vmatpush.bf16.msra.mxu0 %v6450
  %9512 = vmatpush.bf16.msra.mxu0 %v6448
  %9513 = vmatmul.bf16.gmra.mxu0 %v127
  %v9514 = vpop.f32.mrf.mxu0
  %v9515 = vadd.f32 %v9502, %v9514
  %v9516 = vpop.f32.mrf.mxu0
  %9517 = vdwg.mxu0
  %9518 = vmatpush.bf16.msra.mxu0 %v6478
  %9519 = vmatpush.bf16.msra.mxu0 %v6476
  %9520 = vmatpush.bf16.msra.mxu0 %v6474
  %9521 = vmatpush.bf16.msra.mxu0 %v6472
  %9522 = vmatpush.bf16.msra.mxu0 %v6470
  %9523 = vmatpush.bf16.msra.mxu0 %v6468
  %9524 = vmatpush.bf16.msra.mxu0 %v6466
  %9525 = vmatpush.bf16.msra.mxu0 %v6464
  %9526 = vmatmul.bf16.gmra.mxu0 %v128
  %v9527 = vpop.f32.mrf.mxu0
  %v9528 = vadd.f32 %v9515, %v9527
  %v9529 = vpop.f32.mrf.mxu0
  %9530 = vdwg.mxu0
  %9531 = vmatpush.bf16.msra.mxu0 %v6494
  %9532 = vmatpush.bf16.msra.mxu0 %v6492
  %9533 = vmatpush.bf16.msra.mxu0 %v6490
  %9534 = vmatpush.bf16.msra.mxu0 %v6488
  %9535 = vmatpush.bf16.msra.mxu0 %v6486
  %9536 = vmatpush.bf16.msra.mxu0 %v6484
  %9537 = vmatpush.bf16.msra.mxu0 %v6482
  %9538 = vmatpush.bf16.msra.mxu0 %v6480
  %9539 = vmatmul.bf16.gmra.mxu0 %v129
  %v9540 = vpop.f32.mrf.mxu0
  %v9541 = vadd.f32 %v9528, %v9540
  %v9542 = vpop.f32.mrf.mxu0
  %9543 = vdwg.mxu0
  %9544 = vmatpush.bf16.msra.mxu0 %v6510
  %9545 = vmatpush.bf16.msra.mxu0 %v6508
  %9546 = vmatpush.bf16.msra.mxu0 %v6506
  %9547 = vmatpush.bf16.msra.mxu0 %v6504
  %9548 = vmatpush.bf16.msra.mxu0 %v6502
  %9549 = vmatpush.bf16.msra.mxu0 %v6500
  %9550 = vmatpush.bf16.msra.mxu0 %v6498
  %9551 = vmatpush.bf16.msra.mxu0 %v6496
  %9552 = vmatmul.bf16.gmra.mxu0 %v130
  %v9553 = vpop.f32.mrf.mxu0
  %v9554 = vadd.f32 %v9541, %v9553
  %v9555 = vpop.f32.mrf.mxu0
  %9556 = vdwg.mxu0
  %9557 = vmatpush.bf16.msra.mxu0 %v6526
  %9558 = vmatpush.bf16.msra.mxu0 %v6524
  %9559 = vmatpush.bf16.msra.mxu0 %v6522
  %9560 = vmatpush.bf16.msra.mxu0 %v6520
  %9561 = vmatpush.bf16.msra.mxu0 %v6518
  %9562 = vmatpush.bf16.msra.mxu0 %v6516
  %9563 = vmatpush.bf16.msra.mxu0 %v6514
  %9564 = vmatpush.bf16.msra.mxu0 %v6512
  %9565 = vmatmul.bf16.gmra.mxu0 %v131
  %v9566 = vpop.f32.mrf.mxu0
  %v9567 = vadd.f32 %v9554, %v9566
  %v9568 = vpop.f32.mrf.mxu0
  %9569 = vdwg.mxu0
  %9570 = vmatpush.bf16.msra.mxu0 %v6542
  %9571 = vmatpush.bf16.msra.mxu0 %v6540
  %9572 = vmatpush.bf16.msra.mxu0 %v6538
  %9573 = vmatpush.bf16.msra.mxu0 %v6536
  %9574 = vmatpush.bf16.msra.mxu0 %v6534
  %9575 = vmatpush.bf16.msra.mxu0 %v6532
  %9576 = vmatpush.bf16.msra.mxu0 %v6530
  %9577 = vmatpush.bf16.msra.mxu0 %v6528
  %9578 = vmatmul.bf16.gmra.mxu0 %v132
  %v9579 = vpop.f32.mrf.mxu0
  %v9580 = vadd.f32 %v9567, %v9579
  %v9581 = vpop.f32.mrf.mxu0
  %9582 = vdwg.mxu0
  %9583 = vmatpush.bf16.msra.mxu0 %v6558
  %9584 = vmatpush.bf16.msra.mxu0 %v6556
  %9585 = vmatpush.bf16.msra.mxu0 %v6554
  %9586 = vmatpush.bf16.msra.mxu0 %v6552
  %9587 = vmatpush.bf16.msra.mxu0 %v6550
  %9588 = vmatpush.bf16.msra.mxu0 %v6548
  %9589 = vmatpush.bf16.msra.mxu0 %v6546
  %9590 = vmatpush.bf16.msra.mxu0 %v6544
  %9591 = vmatmul.bf16.gmra.mxu0 %v133
  %v9592 = vpop.f32.mrf.mxu0
  %v9593 = vadd.f32 %v9580, %v9592
  %v9594 = vpop.f32.mrf.mxu0
  %9595 = vdwg.mxu0
  %9596 = vmatpush.bf16.msra.mxu0 %v6574
  %9597 = vmatpush.bf16.msra.mxu0 %v6572
  %9598 = vmatpush.bf16.msra.mxu0 %v6570
  %9599 = vmatpush.bf16.msra.mxu0 %v6568
  %9600 = vmatpush.bf16.msra.mxu0 %v6566
  %9601 = vmatpush.bf16.msra.mxu0 %v6564
  %9602 = vmatpush.bf16.msra.mxu0 %v6562
  %9603 = vmatpush.bf16.msra.mxu0 %v6560
  %9604 = vmatmul.bf16.gmra.mxu0 %v134
  %v9605 = vpop.f32.mrf.mxu0
  %v9606 = vadd.f32 %v9593, %v9605
  %v9607 = vpop.f32.mrf.mxu0
  %9608 = vdwg.mxu0
  %9609 = vmatpush.bf16.msra.mxu0 %v6590
  %9610 = vmatpush.bf16.msra.mxu0 %v6588
  %9611 = vmatpush.bf16.msra.mxu0 %v6586
  %9612 = vmatpush.bf16.msra.mxu0 %v6584
  %9613 = vmatpush.bf16.msra.mxu0 %v6582
  %9614 = vmatpush.bf16.msra.mxu0 %v6580
  %9615 = vmatpush.bf16.msra.mxu0 %v6578
  %9616 = vmatpush.bf16.msra.mxu0 %v6576
  %9617 = vmatmul.bf16.gmra.mxu0 %v135
  %v9618 = vpop.f32.mrf.mxu0
  %v9619 = vadd.f32 %v9606, %v9618
  %v9620 = vpop.f32.mrf.mxu0
  %9621 = vdwg.mxu0
  %9622 = vmatpush.bf16.msra.mxu0 %v6606
  %9623 = vmatpush.bf16.msra.mxu0 %v6604
  %9624 = vmatpush.bf16.msra.mxu0 %v6602
  %9625 = vmatpush.bf16.msra.mxu0 %v6600
  %9626 = vmatpush.bf16.msra.mxu0 %v6598
  %9627 = vmatpush.bf16.msra.mxu0 %v6596
  %9628 = vmatpush.bf16.msra.mxu0 %v6594
  %9629 = vmatpush.bf16.msra.mxu0 %v6592
  %9630 = vmatmul.bf16.gmra.mxu0 %v136
  %v9631 = vpop.f32.mrf.mxu0
  %v9632 = vadd.f32 %v9619, %v9631
  %v9633 = vpop.f32.mrf.mxu0
  %9634 = vdwg.mxu0
  %9635 = vmatpush.bf16.msra.mxu0 %v6622
  %9636 = vmatpush.bf16.msra.mxu0 %v6620
  %9637 = vmatpush.bf16.msra.mxu0 %v6618
  %9638 = vmatpush.bf16.msra.mxu0 %v6616
  %9639 = vmatpush.bf16.msra.mxu0 %v6614
  %9640 = vmatpush.bf16.msra.mxu0 %v6612
  %9641 = vmatpush.bf16.msra.mxu0 %v6610
  %9642 = vmatpush.bf16.msra.mxu0 %v6608
  %9643 = vmatmul.bf16.gmra.mxu0 %v137
  %v9644 = vpop.f32.mrf.mxu0
  %v9645 = vadd.f32 %v9632, %v9644
  %v9646 = vpop.f32.mrf.mxu0
  %9647 = vdwg.mxu0
  %9648 = vmatpush.bf16.msra.mxu0 %v6638
  %9649 = vmatpush.bf16.msra.mxu0 %v6636
  %9650 = vmatpush.bf16.msra.mxu0 %v6634
  %9651 = vmatpush.bf16.msra.mxu0 %v6632
  %9652 = vmatpush.bf16.msra.mxu0 %v6630
  %9653 = vmatpush.bf16.msra.mxu0 %v6628
  %9654 = vmatpush.bf16.msra.mxu0 %v6626
  %9655 = vmatpush.bf16.msra.mxu0 %v6624
  %9656 = vmatmul.bf16.gmra.mxu0 %v138
  %v9657 = vpop.f32.mrf.mxu0
  %v9658 = vadd.f32 %v9645, %v9657
  %v9659 = vpop.f32.mrf.mxu0
  %9660 = vdwg.mxu0
  %9661 = vmatpush.bf16.msra.mxu0 %v6654
  %9662 = vmatpush.bf16.msra.mxu0 %v6652
  %9663 = vmatpush.bf16.msra.mxu0 %v6650
  %9664 = vmatpush.bf16.msra.mxu0 %v6648
  %9665 = vmatpush.bf16.msra.mxu0 %v6646
  %9666 = vmatpush.bf16.msra.mxu0 %v6644
  %9667 = vmatpush.bf16.msra.mxu0 %v6642
  %9668 = vmatpush.bf16.msra.mxu0 %v6640
  %9669 = vmatmul.bf16.gmra.mxu0 %v139
  %v9670 = vpop.f32.mrf.mxu0
  %v9671 = vadd.f32 %v9658, %v9670
  %v9672 = vpop.f32.mrf.mxu0
  %9673 = vdwg.mxu0
  %9674 = vmatpush.bf16.msra.mxu0 %v6670
  %9675 = vmatpush.bf16.msra.mxu0 %v6668
  %9676 = vmatpush.bf16.msra.mxu0 %v6666
  %9677 = vmatpush.bf16.msra.mxu0 %v6664
  %9678 = vmatpush.bf16.msra.mxu0 %v6662
  %9679 = vmatpush.bf16.msra.mxu0 %v6660
  %9680 = vmatpush.bf16.msra.mxu0 %v6658
  %9681 = vmatpush.bf16.msra.mxu0 %v6656
  %9682 = vmatmul.bf16.gmra.mxu0 %v140
  %v9683 = vpop.f32.mrf.mxu0
  %v9684 = vadd.f32 %v9671, %v9683
  %v9685 = vpop.f32.mrf.mxu0
  %9686 = vdwg.mxu0
  %9687 = vmatpush.bf16.msra.mxu0 %v6686
  %9688 = vmatpush.bf16.msra.mxu0 %v6684
  %9689 = vmatpush.bf16.msra.mxu0 %v6682
  %9690 = vmatpush.bf16.msra.mxu0 %v6680
  %9691 = vmatpush.bf16.msra.mxu0 %v6678
  %9692 = vmatpush.bf16.msra.mxu0 %v6676
  %9693 = vmatpush.bf16.msra.mxu0 %v6674
  %9694 = vmatpush.bf16.msra.mxu0 %v6672
  %9695 = vmatmul.bf16.gmra.mxu0 %v141
  %v9696 = vpop.f32.mrf.mxu0
  %v9697 = vadd.f32 %v9684, %v9696
  %v9698 = vpop.f32.mrf.mxu0
  %9699 = vdwg.mxu0
  %9700 = vmatpush.bf16.msra.mxu0 %v6702
  %9701 = vmatpush.bf16.msra.mxu0 %v6700
  %9702 = vmatpush.bf16.msra.mxu0 %v6698
  %9703 = vmatpush.bf16.msra.mxu0 %v6696
  %9704 = vmatpush.bf16.msra.mxu0 %v6694
  %9705 = vmatpush.bf16.msra.mxu0 %v6692
  %9706 = vmatpush.bf16.msra.mxu0 %v6690
  %9707 = vmatpush.bf16.msra.mxu0 %v6688
  %9708 = vmatmul.bf16.gmra.mxu0 %v142
  %v9709 = vpop.f32.mrf.mxu0
  %v9710 = vadd.f32 %v9697, %v9709
  %v9711 = vpop.f32.mrf.mxu0
  %9712 = vdwg.mxu0
  %9713 = vmatpush.bf16.msra.mxu0 %v6718
  %9714 = vmatpush.bf16.msra.mxu0 %v6716
  %9715 = vmatpush.bf16.msra.mxu0 %v6714
  %9716 = vmatpush.bf16.msra.mxu0 %v6712
  %9717 = vmatpush.bf16.msra.mxu0 %v6710
  %9718 = vmatpush.bf16.msra.mxu0 %v6708
  %9719 = vmatpush.bf16.msra.mxu0 %v6706
  %9720 = vmatpush.bf16.msra.mxu0 %v6704
  %9721 = vmatmul.bf16.gmra.mxu0 %v143
  %v9722 = vpop.f32.mrf.mxu0
  %v9723 = vadd.f32 %v9710, %v9722
  %v9724 = vpop.f32.mrf.mxu0
  %9725 = vdwg.mxu0
  %9726 = vmatpush.bf16.msra.mxu0 %v6734
  %9727 = vmatpush.bf16.msra.mxu0 %v6732
  %9728 = vmatpush.bf16.msra.mxu0 %v6730
  %9729 = vmatpush.bf16.msra.mxu0 %v6728
  %9730 = vmatpush.bf16.msra.mxu0 %v6726
  %9731 = vmatpush.bf16.msra.mxu0 %v6724
  %9732 = vmatpush.bf16.msra.mxu0 %v6722
  %9733 = vmatpush.bf16.msra.mxu0 %v6720
  %9734 = vmatmul.bf16.gmra.mxu0 %v144
  %v9735 = vpop.f32.mrf.mxu0
  %v9736 = vadd.f32 %v9723, %v9735
  %v9737 = vpop.f32.mrf.mxu0
  %9738 = vdwg.mxu0
  %9739 = vmatpush.bf16.msra.mxu0 %v6750
  %9740 = vmatpush.bf16.msra.mxu0 %v6748
  %9741 = vmatpush.bf16.msra.mxu0 %v6746
  %9742 = vmatpush.bf16.msra.mxu0 %v6744
  %9743 = vmatpush.bf16.msra.mxu0 %v6742
  %9744 = vmatpush.bf16.msra.mxu0 %v6740
  %9745 = vmatpush.bf16.msra.mxu0 %v6738
  %9746 = vmatpush.bf16.msra.mxu0 %v6736
  %9747 = vmatmul.bf16.gmra.mxu0 %v145
  %v9748 = vpop.f32.mrf.mxu0
  %v9749 = vadd.f32 %v9736, %v9748
  %v9750 = vpop.f32.mrf.mxu0
  %9751 = vdwg.mxu0
  %9752 = vmatpush.bf16.msra.mxu0 %v6766
  %9753 = vmatpush.bf16.msra.mxu0 %v6764
  %9754 = vmatpush.bf16.msra.mxu0 %v6762
  %9755 = vmatpush.bf16.msra.mxu0 %v6760
  %9756 = vmatpush.bf16.msra.mxu0 %v6758
  %9757 = vmatpush.bf16.msra.mxu0 %v6756
  %9758 = vmatpush.bf16.msra.mxu0 %v6754
  %9759 = vmatpush.bf16.msra.mxu0 %v6752
  %9760 = vmatmul.bf16.gmra.mxu0 %v146
  %v9761 = vpop.f32.mrf.mxu0
  %v9762 = vadd.f32 %v9749, %v9761
  %v9763 = vpop.f32.mrf.mxu0
  %9764 = vdwg.mxu0
  %9765 = vmatpush.bf16.msra.mxu0 %v6782
  %9766 = vmatpush.bf16.msra.mxu0 %v6780
  %9767 = vmatpush.bf16.msra.mxu0 %v6778
  %9768 = vmatpush.bf16.msra.mxu0 %v6776
  %9769 = vmatpush.bf16.msra.mxu0 %v6774
  %9770 = vmatpush.bf16.msra.mxu0 %v6772
  %9771 = vmatpush.bf16.msra.mxu0 %v6770
  %9772 = vmatpush.bf16.msra.mxu0 %v6768
  %9773 = vmatmul.bf16.gmra.mxu0 %v147
  %v9774 = vpop.f32.mrf.mxu0
  %v9775 = vadd.f32 %v9762, %v9774
  %v9776 = vpop.f32.mrf.mxu0
  %9777 = vdwg.mxu0
  %9778 = vmatpush.bf16.msra.mxu0 %v6798
  %9779 = vmatpush.bf16.msra.mxu0 %v6796
  %9780 = vmatpush.bf16.msra.mxu0 %v6794
  %9781 = vmatpush.bf16.msra.mxu0 %v6792
  %9782 = vmatpush.bf16.msra.mxu0 %v6790
  %9783 = vmatpush.bf16.msra.mxu0 %v6788
  %9784 = vmatpush.bf16.msra.mxu0 %v6786
  %9785 = vmatpush.bf16.msra.mxu0 %v6784
  %9786 = vmatmul.bf16.gmra.mxu0 %v148
  %v9787 = vpop.f32.mrf.mxu0
  %v9788 = vadd.f32 %v9775, %v9787
  %v9789 = vpop.f32.mrf.mxu0
  %9790 = vdwg.mxu0
  %9791 = vmatpush.bf16.msra.mxu0 %v6814
  %9792 = vmatpush.bf16.msra.mxu0 %v6812
  %9793 = vmatpush.bf16.msra.mxu0 %v6810
  %9794 = vmatpush.bf16.msra.mxu0 %v6808
  %9795 = vmatpush.bf16.msra.mxu0 %v6806
  %9796 = vmatpush.bf16.msra.mxu0 %v6804
  %9797 = vmatpush.bf16.msra.mxu0 %v6802
  %9798 = vmatpush.bf16.msra.mxu0 %v6800
  %9799 = vmatmul.bf16.gmra.mxu0 %v149
  %v9800 = vpop.f32.mrf.mxu0
  %v9801 = vadd.f32 %v9788, %v9800
  %v9802 = vpop.f32.mrf.mxu0
  %9803 = vdwg.mxu0
  %9804 = vmatpush.bf16.msra.mxu0 %v6830
  %9805 = vmatpush.bf16.msra.mxu0 %v6828
  %9806 = vmatpush.bf16.msra.mxu0 %v6826
  %9807 = vmatpush.bf16.msra.mxu0 %v6824
  %9808 = vmatpush.bf16.msra.mxu0 %v6822
  %9809 = vmatpush.bf16.msra.mxu0 %v6820
  %9810 = vmatpush.bf16.msra.mxu0 %v6818
  %9811 = vmatpush.bf16.msra.mxu0 %v6816
  %9812 = vmatmul.bf16.gmra.mxu0 %v150
  %v9813 = vpop.f32.mrf.mxu0
  %v9814 = vadd.f32 %v9801, %v9813
  %v9815 = vpop.f32.mrf.mxu0
  %9816 = vdwg.mxu0
  %9817 = vmatpush.bf16.msra.mxu0 %v6846
  %9818 = vmatpush.bf16.msra.mxu0 %v6844
  %9819 = vmatpush.bf16.msra.mxu0 %v6842
  %9820 = vmatpush.bf16.msra.mxu0 %v6840
  %9821 = vmatpush.bf16.msra.mxu0 %v6838
  %9822 = vmatpush.bf16.msra.mxu0 %v6836
  %9823 = vmatpush.bf16.msra.mxu0 %v6834
  %9824 = vmatpush.bf16.msra.mxu0 %v6832
  %9825 = vmatmul.bf16.gmra.mxu0 %v151
  %v9826 = vpop.f32.mrf.mxu0
  %v9827 = vadd.f32 %v9814, %v9826
  %v9828 = vpop.f32.mrf.mxu0
  %9829 = vdwg.mxu0
  %9830 = vmatpush.bf16.msra.mxu0 %v6862
  %9831 = vmatpush.bf16.msra.mxu0 %v6860
  %9832 = vmatpush.bf16.msra.mxu0 %v6858
  %9833 = vmatpush.bf16.msra.mxu0 %v6856
  %9834 = vmatpush.bf16.msra.mxu0 %v6854
  %9835 = vmatpush.bf16.msra.mxu0 %v6852
  %9836 = vmatpush.bf16.msra.mxu0 %v6850
  %9837 = vmatpush.bf16.msra.mxu0 %v6848
  %9838 = vmatmul.bf16.gmra.mxu0 %v152
  %v9839 = vpop.f32.mrf.mxu0
  %v9840 = vadd.f32 %v9827, %v9839
  %v9841 = vpop.f32.mrf.mxu0
  %9842 = vdwg.mxu0
  %9843 = vmatpush.bf16.msra.mxu0 %v6878
  %9844 = vmatpush.bf16.msra.mxu0 %v6876
  %9845 = vmatpush.bf16.msra.mxu0 %v6874
  %9846 = vmatpush.bf16.msra.mxu0 %v6872
  %9847 = vmatpush.bf16.msra.mxu0 %v6870
  %9848 = vmatpush.bf16.msra.mxu0 %v6868
  %9849 = vmatpush.bf16.msra.mxu0 %v6866
  %9850 = vmatpush.bf16.msra.mxu0 %v6864
  %9851 = vmatmul.bf16.gmra.mxu0 %v153
  %v9852 = vpop.f32.mrf.mxu0
  %v9853 = vadd.f32 %v9840, %v9852
  %v9854 = vpop.f32.mrf.mxu0
  %9855 = vdwg.mxu0
  %9856 = vmatpush.bf16.msra.mxu0 %v6894
  %9857 = vmatpush.bf16.msra.mxu0 %v6892
  %9858 = vmatpush.bf16.msra.mxu0 %v6890
  %9859 = vmatpush.bf16.msra.mxu0 %v6888
  %9860 = vmatpush.bf16.msra.mxu0 %v6886
  %9861 = vmatpush.bf16.msra.mxu0 %v6884
  %9862 = vmatpush.bf16.msra.mxu0 %v6882
  %9863 = vmatpush.bf16.msra.mxu0 %v6880
  %9864 = vmatmul.bf16.gmra.mxu0 %v154
  %v9865 = vpop.f32.mrf.mxu0
  %v9866 = vadd.f32 %v9853, %v9865
  %v9867 = vpop.f32.mrf.mxu0
  %9868 = vdwg.mxu0
  %9869 = vmatpush.bf16.msra.mxu0 %v6910
  %9870 = vmatpush.bf16.msra.mxu0 %v6908
  %9871 = vmatpush.bf16.msra.mxu0 %v6906
  %9872 = vmatpush.bf16.msra.mxu0 %v6904
  %9873 = vmatpush.bf16.msra.mxu0 %v6902
  %9874 = vmatpush.bf16.msra.mxu0 %v6900
  %9875 = vmatpush.bf16.msra.mxu0 %v6898
  %9876 = vmatpush.bf16.msra.mxu0 %v6896
  %9877 = vmatmul.bf16.gmra.mxu0 %v155
  %v9878 = vpop.f32.mrf.mxu0
  %v9879 = vadd.f32 %v9866, %v9878
  %v9880 = vpop.f32.mrf.mxu0
  %9881 = vdwg.mxu0
  %9882 = vmatpush.bf16.msra.mxu0 %v6926
  %9883 = vmatpush.bf16.msra.mxu0 %v6924
  %9884 = vmatpush.bf16.msra.mxu0 %v6922
  %9885 = vmatpush.bf16.msra.mxu0 %v6920
  %9886 = vmatpush.bf16.msra.mxu0 %v6918
  %9887 = vmatpush.bf16.msra.mxu0 %v6916
  %9888 = vmatpush.bf16.msra.mxu0 %v6914
  %9889 = vmatpush.bf16.msra.mxu0 %v6912
  %9890 = vmatmul.bf16.gmra.mxu0 %v156
  %v9891 = vpop.f32.mrf.mxu0
  %v9892 = vadd.f32 %v9879, %v9891
  %v9893 = vpop.f32.mrf.mxu0
  %9894 = vdwg.mxu0
  %9895 = vmatpush.bf16.msra.mxu0 %v6942
  %9896 = vmatpush.bf16.msra.mxu0 %v6940
  %9897 = vmatpush.bf16.msra.mxu0 %v6938
  %9898 = vmatpush.bf16.msra.mxu0 %v6936
  %9899 = vmatpush.bf16.msra.mxu0 %v6934
  %9900 = vmatpush.bf16.msra.mxu0 %v6932
  %9901 = vmatpush.bf16.msra.mxu0 %v6930
  %9902 = vmatpush.bf16.msra.mxu0 %v6928
  %9903 = vmatmul.bf16.gmra.mxu0 %v157
  %v9904 = vpop.f32.mrf.mxu0
  %v9905 = vadd.f32 %v9892, %v9904
  %v9906 = vpop.f32.mrf.mxu0
  %9907 = vdwg.mxu0
  %9908 = vmatpush.bf16.msra.mxu0 %v6958
  %9909 = vmatpush.bf16.msra.mxu0 %v6956
  %9910 = vmatpush.bf16.msra.mxu0 %v6954
  %9911 = vmatpush.bf16.msra.mxu0 %v6952
  %9912 = vmatpush.bf16.msra.mxu0 %v6950
  %9913 = vmatpush.bf16.msra.mxu0 %v6948
  %9914 = vmatpush.bf16.msra.mxu0 %v6946
  %9915 = vmatpush.bf16.msra.mxu0 %v6944
  %9916 = vmatmul.bf16.gmra.mxu0 %v158
  %v9917 = vpop.f32.mrf.mxu0
  %v9918 = vadd.f32 %v9905, %v9917
  %v9919 = vpop.f32.mrf.mxu0
  %9920 = vdwg.mxu0
  %9921 = vmatpush.bf16.msra.mxu0 %v6974
  %9922 = vmatpush.bf16.msra.mxu0 %v6972
  %9923 = vmatpush.bf16.msra.mxu0 %v6970
  %9924 = vmatpush.bf16.msra.mxu0 %v6968
  %9925 = vmatpush.bf16.msra.mxu0 %v6966
  %9926 = vmatpush.bf16.msra.mxu0 %v6964
  %9927 = vmatpush.bf16.msra.mxu0 %v6962
  %9928 = vmatpush.bf16.msra.mxu0 %v6960
  %9929 = vmatmul.bf16.gmra.mxu0 %v159
  %v9930 = vpop.f32.mrf.mxu0
  %v9931 = vadd.f32 %v9918, %v9930
  %v9932 = vpop.f32.mrf.mxu0
  %9933 = vdwg.mxu0
  %9934 = vmatpush.bf16.msra.mxu0 %v6990
  %9935 = vmatpush.bf16.msra.mxu0 %v6988
  %9936 = vmatpush.bf16.msra.mxu0 %v6986
  %9937 = vmatpush.bf16.msra.mxu0 %v6984
  %9938 = vmatpush.bf16.msra.mxu0 %v6982
  %9939 = vmatpush.bf16.msra.mxu0 %v6980
  %9940 = vmatpush.bf16.msra.mxu0 %v6978
  %9941 = vmatpush.bf16.msra.mxu0 %v6976
  %9942 = vmatmul.bf16.gmra.mxu0 %v160
  %v9943 = vpop.f32.mrf.mxu0
  %v9944 = vadd.f32 %v9931, %v9943
  %v9945 = vpop.f32.mrf.mxu0
  %9946 = vdwg.mxu0
  %9947 = vmatpush.bf16.msra.mxu0 %v7006
  %9948 = vmatpush.bf16.msra.mxu0 %v7004
  %9949 = vmatpush.bf16.msra.mxu0 %v7002
  %9950 = vmatpush.bf16.msra.mxu0 %v7000
  %9951 = vmatpush.bf16.msra.mxu0 %v6998
  %9952 = vmatpush.bf16.msra.mxu0 %v6996
  %9953 = vmatpush.bf16.msra.mxu0 %v6994
  %9954 = vmatpush.bf16.msra.mxu0 %v6992
  %9955 = vmatmul.bf16.gmra.mxu0 %v161
  %v9956 = vpop.f32.mrf.mxu0
  %v9957 = vadd.f32 %v9944, %v9956
  %v9958 = vpop.f32.mrf.mxu0
  %9959 = vdwg.mxu0
  %9960 = vmatpush.bf16.msra.mxu0 %v7022
  %9961 = vmatpush.bf16.msra.mxu0 %v7020
  %9962 = vmatpush.bf16.msra.mxu0 %v7018
  %9963 = vmatpush.bf16.msra.mxu0 %v7016
  %9964 = vmatpush.bf16.msra.mxu0 %v7014
  %9965 = vmatpush.bf16.msra.mxu0 %v7012
  %9966 = vmatpush.bf16.msra.mxu0 %v7010
  %9967 = vmatpush.bf16.msra.mxu0 %v7008
  %9968 = vmatmul.bf16.gmra.mxu0 %v162
  %v9969 = vpop.f32.mrf.mxu0
  %v9970 = vadd.f32 %v9957, %v9969
  %v9971 = vpop.f32.mrf.mxu0
  %9972 = vdwg.mxu0
  %9973 = vmatpush.bf16.msra.mxu0 %v7038
  %9974 = vmatpush.bf16.msra.mxu0 %v7036
  %9975 = vmatpush.bf16.msra.mxu0 %v7034
  %9976 = vmatpush.bf16.msra.mxu0 %v7032
  %9977 = vmatpush.bf16.msra.mxu0 %v7030
  %9978 = vmatpush.bf16.msra.mxu0 %v7028
  %9979 = vmatpush.bf16.msra.mxu0 %v7026
  %9980 = vmatpush.bf16.msra.mxu0 %v7024
  %9981 = vmatmul.bf16.gmra.mxu0 %v163
  %v9982 = vpop.f32.mrf.mxu0
  %v9983 = vadd.f32 %v9970, %v9982
  %v9984 = vpop.f32.mrf.mxu0
  %9985 = vdwg.mxu0
  %9986 = vmatpush.bf16.msra.mxu0 %v7054
  %9987 = vmatpush.bf16.msra.mxu0 %v7052
  %9988 = vmatpush.bf16.msra.mxu0 %v7050
  %9989 = vmatpush.bf16.msra.mxu0 %v7048
  %9990 = vmatpush.bf16.msra.mxu0 %v7046
  %9991 = vmatpush.bf16.msra.mxu0 %v7044
  %9992 = vmatpush.bf16.msra.mxu0 %v7042
  %9993 = vmatpush.bf16.msra.mxu0 %v7040
  %9994 = vmatmul.bf16.gmra.mxu0 %v164
  %v9995 = vpop.f32.mrf.mxu0
  %v9996 = vadd.f32 %v9983, %v9995
  %v9997 = vpop.f32.mrf.mxu0
  %9998 = vdwg.mxu0
  %9999 = vmatpush.bf16.msra.mxu0 %v7070
  %10000 = vmatpush.bf16.msra.mxu0 %v7068
  %10001 = vmatpush.bf16.msra.mxu0 %v7066
  %10002 = vmatpush.bf16.msra.mxu0 %v7064
  %10003 = vmatpush.bf16.msra.mxu0 %v7062
  %10004 = vmatpush.bf16.msra.mxu0 %v7060
  %10005 = vmatpush.bf16.msra.mxu0 %v7058
  %10006 = vmatpush.bf16.msra.mxu0 %v7056
  %10007 = vmatmul.bf16.gmra.mxu0 %v165
  %v10008 = vpop.f32.mrf.mxu0
  %v10009 = vadd.f32 %v9996, %v10008
  %v10010 = vpop.f32.mrf.mxu0
  %10011 = vdwg.mxu0
  %10012 = vmatpush.bf16.msra.mxu0 %v7086
  %10013 = vmatpush.bf16.msra.mxu0 %v7084
  %10014 = vmatpush.bf16.msra.mxu0 %v7082
  %10015 = vmatpush.bf16.msra.mxu0 %v7080
  %10016 = vmatpush.bf16.msra.mxu0 %v7078
  %10017 = vmatpush.bf16.msra.mxu0 %v7076
  %10018 = vmatpush.bf16.msra.mxu0 %v7074
  %10019 = vmatpush.bf16.msra.mxu0 %v7072
  %10020 = vmatmul.bf16.gmra.mxu0 %v166
  %v10021 = vpop.f32.mrf.mxu0
  %v10022 = vadd.f32 %v10009, %v10021
  %v10023 = vpop.f32.mrf.mxu0
  %10024 = vdwg.mxu0
  %10025 = vmatpush.bf16.msra.mxu0 %v7102
  %10026 = vmatpush.bf16.msra.mxu0 %v7100
  %10027 = vmatpush.bf16.msra.mxu0 %v7098
  %10028 = vmatpush.bf16.msra.mxu0 %v7096
  %10029 = vmatpush.bf16.msra.mxu0 %v7094
  %10030 = vmatpush.bf16.msra.mxu0 %v7092
  %10031 = vmatpush.bf16.msra.mxu0 %v7090
  %10032 = vmatpush.bf16.msra.mxu0 %v7088
  %10033 = vmatmul.bf16.gmra.mxu0 %v167
  %v10034 = vpop.f32.mrf.mxu0
  %v10035 = vadd.f32 %v10022, %v10034
  %v10036 = vpop.f32.mrf.mxu0
  %10037 = vdwg.mxu0
  %10038 = vmatpush.bf16.msra.mxu0 %v7118
  %10039 = vmatpush.bf16.msra.mxu0 %v7116
  %10040 = vmatpush.bf16.msra.mxu0 %v7114
  %10041 = vmatpush.bf16.msra.mxu0 %v7112
  %10042 = vmatpush.bf16.msra.mxu0 %v7110
  %10043 = vmatpush.bf16.msra.mxu0 %v7108
  %10044 = vmatpush.bf16.msra.mxu0 %v7106
  %10045 = vmatpush.bf16.msra.mxu0 %v7104
  %10046 = vmatmul.bf16.gmra.mxu0 %v168
  %v10047 = vpop.f32.mrf.mxu0
  %v10048 = vadd.f32 %v10035, %v10047
  %v10049 = vpop.f32.mrf.mxu0
  %10050 = vdwg.mxu0
  %10051 = vmatpush.bf16.msra.mxu0 %v7134
  %10052 = vmatpush.bf16.msra.mxu0 %v7132
  %10053 = vmatpush.bf16.msra.mxu0 %v7130
  %10054 = vmatpush.bf16.msra.mxu0 %v7128
  %10055 = vmatpush.bf16.msra.mxu0 %v7126
  %10056 = vmatpush.bf16.msra.mxu0 %v7124
  %10057 = vmatpush.bf16.msra.mxu0 %v7122
  %10058 = vmatpush.bf16.msra.mxu0 %v7120
  %10059 = vmatmul.bf16.gmra.mxu0 %v169
  %v10060 = vpop.f32.mrf.mxu0
  %v10061 = vadd.f32 %v10048, %v10060
  %v10062 = vpop.f32.mrf.mxu0
  %10063 = vdwg.mxu0
  %10064 = vmatpush.bf16.msra.mxu0 %v7150
  %10065 = vmatpush.bf16.msra.mxu0 %v7148
  %10066 = vmatpush.bf16.msra.mxu0 %v7146
  %10067 = vmatpush.bf16.msra.mxu0 %v7144
  %10068 = vmatpush.bf16.msra.mxu0 %v7142
  %10069 = vmatpush.bf16.msra.mxu0 %v7140
  %10070 = vmatpush.bf16.msra.mxu0 %v7138
  %10071 = vmatpush.bf16.msra.mxu0 %v7136
  %10072 = vmatmul.bf16.gmra.mxu0 %v170
  %v10073 = vpop.f32.mrf.mxu0
  %v10074 = vadd.f32 %v10061, %v10073
  %v10075 = vpop.f32.mrf.mxu0
  %10076 = vdwg.mxu0
  %10077 = vmatpush.bf16.msra.mxu0 %v7166
  %10078 = vmatpush.bf16.msra.mxu0 %v7164
  %10079 = vmatpush.bf16.msra.mxu0 %v7162
  %10080 = vmatpush.bf16.msra.mxu0 %v7160
  %10081 = vmatpush.bf16.msra.mxu0 %v7158
  %10082 = vmatpush.bf16.msra.mxu0 %v7156
  %10083 = vmatpush.bf16.msra.mxu0 %v7154
  %10084 = vmatpush.bf16.msra.mxu0 %v7152
  %10085 = vmatmul.bf16.gmra.mxu0 %v171
  %v10086 = vpop.f32.mrf.mxu0
  %v10087 = vadd.f32 %v10074, %v10086
  %v10088 = vpop.f32.mrf.mxu0
  %10089 = vdwg.mxu0
  %10090 = vmatpush.bf16.msra.mxu0 %v7182
  %10091 = vmatpush.bf16.msra.mxu0 %v7180
  %10092 = vmatpush.bf16.msra.mxu0 %v7178
  %10093 = vmatpush.bf16.msra.mxu0 %v7176
  %10094 = vmatpush.bf16.msra.mxu0 %v7174
  %10095 = vmatpush.bf16.msra.mxu0 %v7172
  %10096 = vmatpush.bf16.msra.mxu0 %v7170
  %10097 = vmatpush.bf16.msra.mxu0 %v7168
  %10098 = vmatmul.bf16.gmra.mxu0 %v172
  %v10099 = vpop.f32.mrf.mxu0
  %v10100 = vadd.f32 %v10087, %v10099
  %v10101 = vpop.f32.mrf.mxu0
  %10102 = vdwg.mxu0
  %10103 = vmatpush.bf16.msra.mxu0 %v7198
  %10104 = vmatpush.bf16.msra.mxu0 %v7196
  %10105 = vmatpush.bf16.msra.mxu0 %v7194
  %10106 = vmatpush.bf16.msra.mxu0 %v7192
  %10107 = vmatpush.bf16.msra.mxu0 %v7190
  %10108 = vmatpush.bf16.msra.mxu0 %v7188
  %10109 = vmatpush.bf16.msra.mxu0 %v7186
  %10110 = vmatpush.bf16.msra.mxu0 %v7184
  %10111 = vmatmul.bf16.gmra.mxu0 %v173
  %v10112 = vpop.f32.mrf.mxu0
  %v10113 = vadd.f32 %v10100, %v10112
  %v10114 = vpop.f32.mrf.mxu0
  %10115 = vdwg.mxu0
  %10116 = vmatpush.bf16.msra.mxu0 %v7214
  %10117 = vmatpush.bf16.msra.mxu0 %v7212
  %10118 = vmatpush.bf16.msra.mxu0 %v7210
  %10119 = vmatpush.bf16.msra.mxu0 %v7208
  %10120 = vmatpush.bf16.msra.mxu0 %v7206
  %10121 = vmatpush.bf16.msra.mxu0 %v7204
  %10122 = vmatpush.bf16.msra.mxu0 %v7202
  %10123 = vmatpush.bf16.msra.mxu0 %v7200
  %10124 = vmatmul.bf16.gmra.mxu0 %v174
  %v10125 = vpop.f32.mrf.mxu0
  %v10126 = vadd.f32 %v10113, %v10125
  %v10127 = vpop.f32.mrf.mxu0
  %10128 = vdwg.mxu0
  %10129 = vmatpush.bf16.msra.mxu0 %v7230
  %10130 = vmatpush.bf16.msra.mxu0 %v7228
  %10131 = vmatpush.bf16.msra.mxu0 %v7226
  %10132 = vmatpush.bf16.msra.mxu0 %v7224
  %10133 = vmatpush.bf16.msra.mxu0 %v7222
  %10134 = vmatpush.bf16.msra.mxu0 %v7220
  %10135 = vmatpush.bf16.msra.mxu0 %v7218
  %10136 = vmatpush.bf16.msra.mxu0 %v7216
  %10137 = vmatmul.bf16.gmra.mxu0 %v175
  %v10138 = vpop.f32.mrf.mxu0
  %v10139 = vadd.f32 %v10126, %v10138
  %v10140 = vpop.f32.mrf.mxu0
  %10141 = vdwg.mxu0
  %10142 = vmatpush.bf16.msra.mxu0 %v7246
  %10143 = vmatpush.bf16.msra.mxu0 %v7244
  %10144 = vmatpush.bf16.msra.mxu0 %v7242
  %10145 = vmatpush.bf16.msra.mxu0 %v7240
  %10146 = vmatpush.bf16.msra.mxu0 %v7238
  %10147 = vmatpush.bf16.msra.mxu0 %v7236
  %10148 = vmatpush.bf16.msra.mxu0 %v7234
  %10149 = vmatpush.bf16.msra.mxu0 %v7232
  %10150 = vmatmul.bf16.gmra.mxu0 %v176
  %v10151 = vpop.f32.mrf.mxu0
  %v10152 = vadd.f32 %v10139, %v10151
  %v10153 = vpop.f32.mrf.mxu0
  %10154 = vdwg.mxu0
  %10155 = vmatpush.bf16.msra.mxu0 %v7262
  %10156 = vmatpush.bf16.msra.mxu0 %v7260
  %10157 = vmatpush.bf16.msra.mxu0 %v7258
  %10158 = vmatpush.bf16.msra.mxu0 %v7256
  %10159 = vmatpush.bf16.msra.mxu0 %v7254
  %10160 = vmatpush.bf16.msra.mxu0 %v7252
  %10161 = vmatpush.bf16.msra.mxu0 %v7250
  %10162 = vmatpush.bf16.msra.mxu0 %v7248
  %10163 = vmatmul.bf16.gmra.mxu0 %v177
  %v10164 = vpop.f32.mrf.mxu0
  %v10165 = vadd.f32 %v10152, %v10164
  %v10166 = vpop.f32.mrf.mxu0
  %10167 = vdwg.mxu0
  %10168 = vmatpush.bf16.msra.mxu0 %v7278
  %10169 = vmatpush.bf16.msra.mxu0 %v7276
  %10170 = vmatpush.bf16.msra.mxu0 %v7274
  %10171 = vmatpush.bf16.msra.mxu0 %v7272
  %10172 = vmatpush.bf16.msra.mxu0 %v7270
  %10173 = vmatpush.bf16.msra.mxu0 %v7268
  %10174 = vmatpush.bf16.msra.mxu0 %v7266
  %10175 = vmatpush.bf16.msra.mxu0 %v7264
  %10176 = vmatmul.bf16.gmra.mxu0 %v178
  %v10177 = vpop.f32.mrf.mxu0
  %v10178 = vadd.f32 %v10165, %v10177
  %v10179 = vpop.f32.mrf.mxu0
  %10180 = vdwg.mxu0
  %10181 = vmatpush.bf16.msra.mxu0 %v7294
  %10182 = vmatpush.bf16.msra.mxu0 %v7292
  %10183 = vmatpush.bf16.msra.mxu0 %v7290
  %10184 = vmatpush.bf16.msra.mxu0 %v7288
  %10185 = vmatpush.bf16.msra.mxu0 %v7286
  %10186 = vmatpush.bf16.msra.mxu0 %v7284
  %10187 = vmatpush.bf16.msra.mxu0 %v7282
  %10188 = vmatpush.bf16.msra.mxu0 %v7280
  %10189 = vmatmul.bf16.gmra.mxu0 %v179
  %v10190 = vpop.f32.mrf.mxu0
  %v10191 = vadd.f32 %v10178, %v10190
  %v10192 = vpop.f32.mrf.mxu0
  %10193 = vdwg.mxu0
  %10194 = vmatpush.bf16.msra.mxu0 %v7310
  %10195 = vmatpush.bf16.msra.mxu0 %v7308
  %10196 = vmatpush.bf16.msra.mxu0 %v7306
  %10197 = vmatpush.bf16.msra.mxu0 %v7304
  %10198 = vmatpush.bf16.msra.mxu0 %v7302
  %10199 = vmatpush.bf16.msra.mxu0 %v7300
  %10200 = vmatpush.bf16.msra.mxu0 %v7298
  %10201 = vmatpush.bf16.msra.mxu0 %v7296
  %10202 = vmatmul.bf16.gmra.mxu0 %v180
  %v10203 = vpop.f32.mrf.mxu0
  %v10204 = vadd.f32 %v10191, %v10203
  %v10205 = vpop.f32.mrf.mxu0
  %10206 = vdwg.mxu0
  %10207 = vmatpush.bf16.msra.mxu0 %v7326
  %10208 = vmatpush.bf16.msra.mxu0 %v7324
  %10209 = vmatpush.bf16.msra.mxu0 %v7322
  %10210 = vmatpush.bf16.msra.mxu0 %v7320
  %10211 = vmatpush.bf16.msra.mxu0 %v7318
  %10212 = vmatpush.bf16.msra.mxu0 %v7316
  %10213 = vmatpush.bf16.msra.mxu0 %v7314
  %10214 = vmatpush.bf16.msra.mxu0 %v7312
  %10215 = vmatmul.bf16.gmra.mxu0 %v181
  %v10216 = vpop.f32.mrf.mxu0
  %v10217 = vadd.f32 %v10204, %v10216
  %v10218 = vpop.f32.mrf.mxu0
  %10219 = vdwg.mxu0
  %10220 = vmatpush.bf16.msra.mxu0 %v7342
  %10221 = vmatpush.bf16.msra.mxu0 %v7340
  %10222 = vmatpush.bf16.msra.mxu0 %v7338
  %10223 = vmatpush.bf16.msra.mxu0 %v7336
  %10224 = vmatpush.bf16.msra.mxu0 %v7334
  %10225 = vmatpush.bf16.msra.mxu0 %v7332
  %10226 = vmatpush.bf16.msra.mxu0 %v7330
  %10227 = vmatpush.bf16.msra.mxu0 %v7328
  %10228 = vmatmul.bf16.gmra.mxu0 %v182
  %v10229 = vpop.f32.mrf.mxu0
  %v10230 = vadd.f32 %v10217, %v10229
  %v10231 = vpop.f32.mrf.mxu0
  %10232 = vdwg.mxu0
  %10233 = vmatpush.bf16.msra.mxu0 %v7358
  %10234 = vmatpush.bf16.msra.mxu0 %v7356
  %10235 = vmatpush.bf16.msra.mxu0 %v7354
  %10236 = vmatpush.bf16.msra.mxu0 %v7352
  %10237 = vmatpush.bf16.msra.mxu0 %v7350
  %10238 = vmatpush.bf16.msra.mxu0 %v7348
  %10239 = vmatpush.bf16.msra.mxu0 %v7346
  %10240 = vmatpush.bf16.msra.mxu0 %v7344
  %10241 = vmatmul.bf16.gmra.mxu0 %v183
  %v10242 = vpop.f32.mrf.mxu0
  %v10243 = vadd.f32 %v10230, %v10242
  %v10244 = vpop.f32.mrf.mxu0
  %10245 = vdwg.mxu0
  %10246 = vmatpush.bf16.msra.mxu0 %v7374
  %10247 = vmatpush.bf16.msra.mxu0 %v7372
  %10248 = vmatpush.bf16.msra.mxu0 %v7370
  %10249 = vmatpush.bf16.msra.mxu0 %v7368
  %10250 = vmatpush.bf16.msra.mxu0 %v7366
  %10251 = vmatpush.bf16.msra.mxu0 %v7364
  %10252 = vmatpush.bf16.msra.mxu0 %v7362
  %10253 = vmatpush.bf16.msra.mxu0 %v7360
  %10254 = vmatmul.bf16.gmra.mxu0 %v184
  %v10255 = vpop.f32.mrf.mxu0
  %v10256 = vadd.f32 %v10243, %v10255
  %v10257 = vpop.f32.mrf.mxu0
  %10258 = vdwg.mxu0
  %10259 = vmatpush.bf16.msra.mxu0 %v7390
  %10260 = vmatpush.bf16.msra.mxu0 %v7388
  %10261 = vmatpush.bf16.msra.mxu0 %v7386
  %10262 = vmatpush.bf16.msra.mxu0 %v7384
  %10263 = vmatpush.bf16.msra.mxu0 %v7382
  %10264 = vmatpush.bf16.msra.mxu0 %v7380
  %10265 = vmatpush.bf16.msra.mxu0 %v7378
  %10266 = vmatpush.bf16.msra.mxu0 %v7376
  %10267 = vmatmul.bf16.gmra.mxu0 %v185
  %v10268 = vpop.f32.mrf.mxu0
  %v10269 = vadd.f32 %v10256, %v10268
  %v10270 = vpop.f32.mrf.mxu0
  %10271 = vdwg.mxu0
  %10272 = vmatpush.bf16.msra.mxu0 %v7406
  %10273 = vmatpush.bf16.msra.mxu0 %v7404
  %10274 = vmatpush.bf16.msra.mxu0 %v7402
  %10275 = vmatpush.bf16.msra.mxu0 %v7400
  %10276 = vmatpush.bf16.msra.mxu0 %v7398
  %10277 = vmatpush.bf16.msra.mxu0 %v7396
  %10278 = vmatpush.bf16.msra.mxu0 %v7394
  %10279 = vmatpush.bf16.msra.mxu0 %v7392
  %10280 = vmatmul.bf16.gmra.mxu0 %v186
  %v10281 = vpop.f32.mrf.mxu0
  %v10282 = vadd.f32 %v10269, %v10281
  %v10283 = vpop.f32.mrf.mxu0
  %10284 = vdwg.mxu0
  %10285 = vmatpush.bf16.msra.mxu0 %v7422
  %10286 = vmatpush.bf16.msra.mxu0 %v7420
  %10287 = vmatpush.bf16.msra.mxu0 %v7418
  %10288 = vmatpush.bf16.msra.mxu0 %v7416
  %10289 = vmatpush.bf16.msra.mxu0 %v7414
  %10290 = vmatpush.bf16.msra.mxu0 %v7412
  %10291 = vmatpush.bf16.msra.mxu0 %v7410
  %10292 = vmatpush.bf16.msra.mxu0 %v7408
  %10293 = vmatmul.bf16.gmra.mxu0 %v187
  %v10294 = vpop.f32.mrf.mxu0
  %v10295 = vadd.f32 %v10282, %v10294
  %v10296 = vpop.f32.mrf.mxu0
  %10297 = vdwg.mxu0
  %10298 = vmatpush.bf16.msra.mxu0 %v7438
  %10299 = vmatpush.bf16.msra.mxu0 %v7436
  %10300 = vmatpush.bf16.msra.mxu0 %v7434
  %10301 = vmatpush.bf16.msra.mxu0 %v7432
  %10302 = vmatpush.bf16.msra.mxu0 %v7430
  %10303 = vmatpush.bf16.msra.mxu0 %v7428
  %10304 = vmatpush.bf16.msra.mxu0 %v7426
  %10305 = vmatpush.bf16.msra.mxu0 %v7424
  %10306 = vmatmul.bf16.gmra.mxu0 %v188
  %v10307 = vpop.f32.mrf.mxu0
  %v10308 = vadd.f32 %v10295, %v10307
  %v10309 = vpop.f32.mrf.mxu0
  %10310 = vdwg.mxu0
  %10311 = vmatpush.bf16.msra.mxu0 %v7454
  %10312 = vmatpush.bf16.msra.mxu0 %v7452
  %10313 = vmatpush.bf16.msra.mxu0 %v7450
  %10314 = vmatpush.bf16.msra.mxu0 %v7448
  %10315 = vmatpush.bf16.msra.mxu0 %v7446
  %10316 = vmatpush.bf16.msra.mxu0 %v7444
  %10317 = vmatpush.bf16.msra.mxu0 %v7442
  %10318 = vmatpush.bf16.msra.mxu0 %v7440
  %10319 = vmatmul.bf16.gmra.mxu0 %v189
  %v10320 = vpop.f32.mrf.mxu0
  %v10321 = vadd.f32 %v10308, %v10320
  %v10322 = vpop.f32.mrf.mxu0
  %10323 = vdwg.mxu0
  %10324 = vmatpush.bf16.msra.mxu0 %v7470
  %10325 = vmatpush.bf16.msra.mxu0 %v7468
  %10326 = vmatpush.bf16.msra.mxu0 %v7466
  %10327 = vmatpush.bf16.msra.mxu0 %v7464
  %10328 = vmatpush.bf16.msra.mxu0 %v7462
  %10329 = vmatpush.bf16.msra.mxu0 %v7460
  %10330 = vmatpush.bf16.msra.mxu0 %v7458
  %10331 = vmatpush.bf16.msra.mxu0 %v7456
  %10332 = vmatmul.bf16.gmra.mxu0 %v190
  %v10333 = vpop.f32.mrf.mxu0
  %v10334 = vadd.f32 %v10321, %v10333
  %v10335 = vpop.f32.mrf.mxu0
  %10336 = vdwg.mxu0
  %10337 = vmatpush.bf16.msra.mxu0 %v7486
  %10338 = vmatpush.bf16.msra.mxu0 %v7484
  %10339 = vmatpush.bf16.msra.mxu0 %v7482
  %10340 = vmatpush.bf16.msra.mxu0 %v7480
  %10341 = vmatpush.bf16.msra.mxu0 %v7478
  %10342 = vmatpush.bf16.msra.mxu0 %v7476
  %10343 = vmatpush.bf16.msra.mxu0 %v7474
  %10344 = vmatpush.bf16.msra.mxu0 %v7472
  %10345 = vmatmul.bf16.gmra.mxu0 %v191
  %v10346 = vpop.f32.mrf.mxu0
  %v10347 = vadd.f32 %v10334, %v10346
  %v10348 = vpop.f32.mrf.mxu0
  %10349 = vdwg.mxu0
  %10350 = vmatpush.bf16.msra.mxu0 %v7502
  %10351 = vmatpush.bf16.msra.mxu0 %v7500
  %10352 = vmatpush.bf16.msra.mxu0 %v7498
  %10353 = vmatpush.bf16.msra.mxu0 %v7496
  %10354 = vmatpush.bf16.msra.mxu0 %v7494
  %10355 = vmatpush.bf16.msra.mxu0 %v7492
  %10356 = vmatpush.bf16.msra.mxu0 %v7490
  %10357 = vmatpush.bf16.msra.mxu0 %v7488
  %10358 = vmatmul.bf16.gmra.mxu0 %v192
  %v10359 = vpop.f32.mrf.mxu0
  %v10360 = vadd.f32 %v10347, %v10359
  %v10361 = vpop.f32.mrf.mxu0
  %10362 = vdwg.mxu0
  %10363 = vmatpush.bf16.msra.mxu0 %v7518
  %10364 = vmatpush.bf16.msra.mxu0 %v7516
  %10365 = vmatpush.bf16.msra.mxu0 %v7514
  %10366 = vmatpush.bf16.msra.mxu0 %v7512
  %10367 = vmatpush.bf16.msra.mxu0 %v7510
  %10368 = vmatpush.bf16.msra.mxu0 %v7508
  %10369 = vmatpush.bf16.msra.mxu0 %v7506
  %10370 = vmatpush.bf16.msra.mxu0 %v7504
  %10371 = vmatmul.bf16.gmra.mxu0 %v193
  %v10372 = vpop.f32.mrf.mxu0
  %v10373 = vadd.f32 %v10360, %v10372
  %v10374 = vpop.f32.mrf.mxu0
  %10375 = vdwg.mxu0
  %10376 = vmatpush.bf16.msra.mxu0 %v7534
  %10377 = vmatpush.bf16.msra.mxu0 %v7532
  %10378 = vmatpush.bf16.msra.mxu0 %v7530
  %10379 = vmatpush.bf16.msra.mxu0 %v7528
  %10380 = vmatpush.bf16.msra.mxu0 %v7526
  %10381 = vmatpush.bf16.msra.mxu0 %v7524
  %10382 = vmatpush.bf16.msra.mxu0 %v7522
  %10383 = vmatpush.bf16.msra.mxu0 %v7520
  %10384 = vmatmul.bf16.gmra.mxu0 %v194
  %v10385 = vpop.f32.mrf.mxu0
  %v10386 = vadd.f32 %v10373, %v10385
  %v10387 = vpop.f32.mrf.mxu0
  %10388 = vdwg.mxu0
  %10389 = vmatpush.bf16.msra.mxu0 %v7550
  %10390 = vmatpush.bf16.msra.mxu0 %v7548
  %10391 = vmatpush.bf16.msra.mxu0 %v7546
  %10392 = vmatpush.bf16.msra.mxu0 %v7544
  %10393 = vmatpush.bf16.msra.mxu0 %v7542
  %10394 = vmatpush.bf16.msra.mxu0 %v7540
  %10395 = vmatpush.bf16.msra.mxu0 %v7538
  %10396 = vmatpush.bf16.msra.mxu0 %v7536
  %10397 = vmatmul.bf16.gmra.mxu0 %v195
  %v10398 = vpop.f32.mrf.mxu0
  %v10399 = vadd.f32 %v10386, %v10398
  %v10400 = vpop.f32.mrf.mxu0
  %10401 = vdwg.mxu0
  %10402 = vmatpush.bf16.msra.mxu0 %v7566
  %10403 = vmatpush.bf16.msra.mxu0 %v7564
  %10404 = vmatpush.bf16.msra.mxu0 %v7562
  %10405 = vmatpush.bf16.msra.mxu0 %v7560
  %10406 = vmatpush.bf16.msra.mxu0 %v7558
  %10407 = vmatpush.bf16.msra.mxu0 %v7556
  %10408 = vmatpush.bf16.msra.mxu0 %v7554
  %10409 = vmatpush.bf16.msra.mxu0 %v7552
  %10410 = vmatmul.bf16.gmra.mxu0 %v196
  %v10411 = vpop.f32.mrf.mxu0
  %v10412 = vadd.f32 %v10399, %v10411
  %v10413 = vpop.f32.mrf.mxu0
  %10414 = vdwg.mxu0
  %10415 = vmatpush.bf16.msra.mxu0 %v7582
  %10416 = vmatpush.bf16.msra.mxu0 %v7580
  %10417 = vmatpush.bf16.msra.mxu0 %v7578
  %10418 = vmatpush.bf16.msra.mxu0 %v7576
  %10419 = vmatpush.bf16.msra.mxu0 %v7574
  %10420 = vmatpush.bf16.msra.mxu0 %v7572
  %10421 = vmatpush.bf16.msra.mxu0 %v7570
  %10422 = vmatpush.bf16.msra.mxu0 %v7568
  %10423 = vmatmul.bf16.gmra.mxu0 %v197
  %v10424 = vpop.f32.mrf.mxu0
  %v10425 = vadd.f32 %v10412, %v10424
  %v10426 = vpop.f32.mrf.mxu0
  %10427 = vdwg.mxu0
  %10428 = vmatpush.bf16.msra.mxu0 %v7598
  %10429 = vmatpush.bf16.msra.mxu0 %v7596
  %10430 = vmatpush.bf16.msra.mxu0 %v7594
  %10431 = vmatpush.bf16.msra.mxu0 %v7592
  %10432 = vmatpush.bf16.msra.mxu0 %v7590
  %10433 = vmatpush.bf16.msra.mxu0 %v7588
  %10434 = vmatpush.bf16.msra.mxu0 %v7586
  %10435 = vmatpush.bf16.msra.mxu0 %v7584
  %10436 = vmatmul.bf16.gmra.mxu0 %v198
  %v10437 = vpop.f32.mrf.mxu0
  %v10438 = vadd.f32 %v10425, %v10437
  %v10439 = vpop.f32.mrf.mxu0
  %10440 = vdwg.mxu0
  %10441 = vmatpush.bf16.msra.mxu0 %v7614
  %10442 = vmatpush.bf16.msra.mxu0 %v7612
  %10443 = vmatpush.bf16.msra.mxu0 %v7610
  %10444 = vmatpush.bf16.msra.mxu0 %v7608
  %10445 = vmatpush.bf16.msra.mxu0 %v7606
  %10446 = vmatpush.bf16.msra.mxu0 %v7604
  %10447 = vmatpush.bf16.msra.mxu0 %v7602
  %10448 = vmatpush.bf16.msra.mxu0 %v7600
  %10449 = vmatmul.bf16.gmra.mxu0 %v199
  %v10450 = vpop.f32.mrf.mxu0
  %v10451 = vadd.f32 %v10438, %v10450
  %v10452 = vpop.f32.mrf.mxu0
  %10453 = vdwg.mxu0
  %10454 = vmatpush.bf16.msra.mxu0 %v7630
  %10455 = vmatpush.bf16.msra.mxu0 %v7628
  %10456 = vmatpush.bf16.msra.mxu0 %v7626
  %10457 = vmatpush.bf16.msra.mxu0 %v7624
  %10458 = vmatpush.bf16.msra.mxu0 %v7622
  %10459 = vmatpush.bf16.msra.mxu0 %v7620
  %10460 = vmatpush.bf16.msra.mxu0 %v7618
  %10461 = vmatpush.bf16.msra.mxu0 %v7616
  %10462 = vmatmul.bf16.gmra.mxu0 %v200
  %v10463 = vpop.f32.mrf.mxu0
  %v10464 = vadd.f32 %v10451, %v10463
  %v10465 = vpop.f32.mrf.mxu0
  %10466 = vdwg.mxu0
  %10467 = vmatpush.bf16.msra.mxu0 %v7646
  %10468 = vmatpush.bf16.msra.mxu0 %v7644
  %10469 = vmatpush.bf16.msra.mxu0 %v7642
  %10470 = vmatpush.bf16.msra.mxu0 %v7640
  %10471 = vmatpush.bf16.msra.mxu0 %v7638
  %10472 = vmatpush.bf16.msra.mxu0 %v7636
  %10473 = vmatpush.bf16.msra.mxu0 %v7634
  %10474 = vmatpush.bf16.msra.mxu0 %v7632
  %10475 = vmatmul.bf16.gmra.mxu0 %v201
  %v10476 = vpop.f32.mrf.mxu0
  %v10477 = vadd.f32 %v10464, %v10476
  %v10478 = vpop.f32.mrf.mxu0
  %10479 = vdwg.mxu0
  %10480 = vmatpush.bf16.msra.mxu0 %v7662
  %10481 = vmatpush.bf16.msra.mxu0 %v7660
  %10482 = vmatpush.bf16.msra.mxu0 %v7658
  %10483 = vmatpush.bf16.msra.mxu0 %v7656
  %10484 = vmatpush.bf16.msra.mxu0 %v7654
  %10485 = vmatpush.bf16.msra.mxu0 %v7652
  %10486 = vmatpush.bf16.msra.mxu0 %v7650
  %10487 = vmatpush.bf16.msra.mxu0 %v7648
  %10488 = vmatmul.bf16.gmra.mxu0 %v202
  %v10489 = vpop.f32.mrf.mxu0
  %v10490 = vadd.f32 %v10477, %v10489
  %v10491 = vpop.f32.mrf.mxu0
  %10492 = vdwg.mxu0
  %10493 = vmatpush.bf16.msra.mxu0 %v7678
  %10494 = vmatpush.bf16.msra.mxu0 %v7676
  %10495 = vmatpush.bf16.msra.mxu0 %v7674
  %10496 = vmatpush.bf16.msra.mxu0 %v7672
  %10497 = vmatpush.bf16.msra.mxu0 %v7670
  %10498 = vmatpush.bf16.msra.mxu0 %v7668
  %10499 = vmatpush.bf16.msra.mxu0 %v7666
  %10500 = vmatpush.bf16.msra.mxu0 %v7664
  %10501 = vmatmul.bf16.gmra.mxu0 %v203
  %v10502 = vpop.f32.mrf.mxu0
  %v10503 = vadd.f32 %v10490, %v10502
  %v10504 = vpop.f32.mrf.mxu0
  %10505 = vdwg.mxu0
  %10506 = vmatpush.bf16.msra.mxu0 %v7694
  %10507 = vmatpush.bf16.msra.mxu0 %v7692
  %10508 = vmatpush.bf16.msra.mxu0 %v7690
  %10509 = vmatpush.bf16.msra.mxu0 %v7688
  %10510 = vmatpush.bf16.msra.mxu0 %v7686
  %10511 = vmatpush.bf16.msra.mxu0 %v7684
  %10512 = vmatpush.bf16.msra.mxu0 %v7682
  %10513 = vmatpush.bf16.msra.mxu0 %v7680
  %10514 = vmatmul.bf16.gmra.mxu0 %v204
  %v10515 = vpop.f32.mrf.mxu0
  %v10516 = vadd.f32 %v10503, %v10515
  %v10517 = vpop.f32.mrf.mxu0
  %10518 = vdwg.mxu0
  %10519 = vmatpush.bf16.msra.mxu0 %v7710
  %10520 = vmatpush.bf16.msra.mxu0 %v7708
  %10521 = vmatpush.bf16.msra.mxu0 %v7706
  %10522 = vmatpush.bf16.msra.mxu0 %v7704
  %10523 = vmatpush.bf16.msra.mxu0 %v7702
  %10524 = vmatpush.bf16.msra.mxu0 %v7700
  %10525 = vmatpush.bf16.msra.mxu0 %v7698
  %10526 = vmatpush.bf16.msra.mxu0 %v7696
  %10527 = vmatmul.bf16.gmra.mxu0 %v205
  %v10528 = vpop.f32.mrf.mxu0
  %v10529 = vadd.f32 %v10516, %v10528
  %v10530 = vpop.f32.mrf.mxu0
  %10531 = vdwg.mxu0
  %10532 = vmatpush.bf16.msra.mxu0 %v7726
  %10533 = vmatpush.bf16.msra.mxu0 %v7724
  %10534 = vmatpush.bf16.msra.mxu0 %v7722
  %10535 = vmatpush.bf16.msra.mxu0 %v7720
  %10536 = vmatpush.bf16.msra.mxu0 %v7718
  %10537 = vmatpush.bf16.msra.mxu0 %v7716
  %10538 = vmatpush.bf16.msra.mxu0 %v7714
  %10539 = vmatpush.bf16.msra.mxu0 %v7712
  %10540 = vmatmul.bf16.gmra.mxu0 %v206
  %v10541 = vpop.f32.mrf.mxu0
  %v10542 = vadd.f32 %v10529, %v10541
  %v10543 = vpop.f32.mrf.mxu0
  %10544 = vdwg.mxu0
  %10545 = vmatpush.bf16.msra.mxu0 %v7742
  %10546 = vmatpush.bf16.msra.mxu0 %v7740
  %10547 = vmatpush.bf16.msra.mxu0 %v7738
  %10548 = vmatpush.bf16.msra.mxu0 %v7736
  %10549 = vmatpush.bf16.msra.mxu0 %v7734
  %10550 = vmatpush.bf16.msra.mxu0 %v7732
  %10551 = vmatpush.bf16.msra.mxu0 %v7730
  %10552 = vmatpush.bf16.msra.mxu0 %v7728
  %10553 = vmatmul.bf16.gmra.mxu0 %v207
  %v10554 = vpop.f32.mrf.mxu0
  %v10555 = vadd.f32 %v10542, %v10554
  %v10556 = vpop.f32.mrf.mxu0
  %10557 = vdwg.mxu0
  %10558 = vmatpush.bf16.msra.mxu0 %v7758
  %10559 = vmatpush.bf16.msra.mxu0 %v7756
  %10560 = vmatpush.bf16.msra.mxu0 %v7754
  %10561 = vmatpush.bf16.msra.mxu0 %v7752
  %10562 = vmatpush.bf16.msra.mxu0 %v7750
  %10563 = vmatpush.bf16.msra.mxu0 %v7748
  %10564 = vmatpush.bf16.msra.mxu0 %v7746
  %10565 = vmatpush.bf16.msra.mxu0 %v7744
  %10566 = vmatmul.bf16.gmra.mxu0 %v208
  %v10567 = vpop.f32.mrf.mxu0
  %v10568 = vadd.f32 %v10555, %v10567
  %v10569 = vpop.f32.mrf.mxu0
  %10570 = vdwg.mxu0
  %10571 = vmatpush.bf16.msra.mxu0 %v7774
  %10572 = vmatpush.bf16.msra.mxu0 %v7772
  %10573 = vmatpush.bf16.msra.mxu0 %v7770
  %10574 = vmatpush.bf16.msra.mxu0 %v7768
  %10575 = vmatpush.bf16.msra.mxu0 %v7766
  %10576 = vmatpush.bf16.msra.mxu0 %v7764
  %10577 = vmatpush.bf16.msra.mxu0 %v7762
  %10578 = vmatpush.bf16.msra.mxu0 %v7760
  %10579 = vmatmul.bf16.gmra.mxu0 %v209
  %v10580 = vpop.f32.mrf.mxu0
  %v10581 = vadd.f32 %v10568, %v10580
  %v10582 = vpop.f32.mrf.mxu0
  %10583 = vdwg.mxu0
  %10584 = vmatpush.bf16.msra.mxu0 %v7790
  %10585 = vmatpush.bf16.msra.mxu0 %v7788
  %10586 = vmatpush.bf16.msra.mxu0 %v7786
  %10587 = vmatpush.bf16.msra.mxu0 %v7784
  %10588 = vmatpush.bf16.msra.mxu0 %v7782
  %10589 = vmatpush.bf16.msra.mxu0 %v7780
  %10590 = vmatpush.bf16.msra.mxu0 %v7778
  %10591 = vmatpush.bf16.msra.mxu0 %v7776
  %10592 = vmatmul.bf16.gmra.mxu0 %v210
  %v10593 = vpop.f32.mrf.mxu0
  %v10594 = vadd.f32 %v10581, %v10593
  %v10595 = vpop.f32.mrf.mxu0
  %10596 = vdwg.mxu0
  %10597 = vmatpush.bf16.msra.mxu0 %v7806
  %10598 = vmatpush.bf16.msra.mxu0 %v7804
  %10599 = vmatpush.bf16.msra.mxu0 %v7802
  %10600 = vmatpush.bf16.msra.mxu0 %v7800
  %10601 = vmatpush.bf16.msra.mxu0 %v7798
  %10602 = vmatpush.bf16.msra.mxu0 %v7796
  %10603 = vmatpush.bf16.msra.mxu0 %v7794
  %10604 = vmatpush.bf16.msra.mxu0 %v7792
  %10605 = vmatmul.bf16.gmra.mxu0 %v211
  %v10606 = vpop.f32.mrf.mxu0
  %v10607 = vadd.f32 %v10594, %v10606
  %v10608 = vpop.f32.mrf.mxu0
  %10609 = vdwg.mxu0
  %10610 = vmatpush.bf16.msra.mxu0 %v7822
  %10611 = vmatpush.bf16.msra.mxu0 %v7820
  %10612 = vmatpush.bf16.msra.mxu0 %v7818
  %10613 = vmatpush.bf16.msra.mxu0 %v7816
  %10614 = vmatpush.bf16.msra.mxu0 %v7814
  %10615 = vmatpush.bf16.msra.mxu0 %v7812
  %10616 = vmatpush.bf16.msra.mxu0 %v7810
  %10617 = vmatpush.bf16.msra.mxu0 %v7808
  %10618 = vmatmul.bf16.gmra.mxu0 %v212
  %v10619 = vpop.f32.mrf.mxu0
  %v10620 = vadd.f32 %v10607, %v10619
  %v10621 = vpop.f32.mrf.mxu0
  %10622 = vdwg.mxu0
  %10623 = vmatpush.bf16.msra.mxu0 %v7838
  %10624 = vmatpush.bf16.msra.mxu0 %v7836
  %10625 = vmatpush.bf16.msra.mxu0 %v7834
  %10626 = vmatpush.bf16.msra.mxu0 %v7832
  %10627 = vmatpush.bf16.msra.mxu0 %v7830
  %10628 = vmatpush.bf16.msra.mxu0 %v7828
  %10629 = vmatpush.bf16.msra.mxu0 %v7826
  %10630 = vmatpush.bf16.msra.mxu0 %v7824
  %10631 = vmatmul.bf16.gmra.mxu0 %v213
  %v10632 = vpop.f32.mrf.mxu0
  %v10633 = vadd.f32 %v10620, %v10632
  %v10634 = vpop.f32.mrf.mxu0
  %10635 = vdwg.mxu0
  %10636 = vmatpush.bf16.msra.mxu0 %v7854
  %10637 = vmatpush.bf16.msra.mxu0 %v7852
  %10638 = vmatpush.bf16.msra.mxu0 %v7850
  %10639 = vmatpush.bf16.msra.mxu0 %v7848
  %10640 = vmatpush.bf16.msra.mxu0 %v7846
  %10641 = vmatpush.bf16.msra.mxu0 %v7844
  %10642 = vmatpush.bf16.msra.mxu0 %v7842
  %10643 = vmatpush.bf16.msra.mxu0 %v7840
  %10644 = vmatmul.bf16.gmra.mxu0 %v214
  %v10645 = vpop.f32.mrf.mxu0
  %v10646 = vadd.f32 %v10633, %v10645
  %v10647 = vpop.f32.mrf.mxu0
  %10648 = vdwg.mxu0
  %10649 = vmatpush.bf16.msra.mxu0 %v7870
  %10650 = vmatpush.bf16.msra.mxu0 %v7868
  %10651 = vmatpush.bf16.msra.mxu0 %v7866
  %10652 = vmatpush.bf16.msra.mxu0 %v7864
  %10653 = vmatpush.bf16.msra.mxu0 %v7862
  %10654 = vmatpush.bf16.msra.mxu0 %v7860
  %10655 = vmatpush.bf16.msra.mxu0 %v7858
  %10656 = vmatpush.bf16.msra.mxu0 %v7856
  %10657 = vmatmul.bf16.gmra.mxu0 %v215
  %v10658 = vpop.f32.mrf.mxu0
  %v10659 = vadd.f32 %v10646, %v10658
  %v10660 = vpop.f32.mrf.mxu0
  %10661 = vdwg.mxu0
  %10662 = vmatpush.bf16.msra.mxu0 %v7886
  %10663 = vmatpush.bf16.msra.mxu0 %v7884
  %10664 = vmatpush.bf16.msra.mxu0 %v7882
  %10665 = vmatpush.bf16.msra.mxu0 %v7880
  %10666 = vmatpush.bf16.msra.mxu0 %v7878
  %10667 = vmatpush.bf16.msra.mxu0 %v7876
  %10668 = vmatpush.bf16.msra.mxu0 %v7874
  %10669 = vmatpush.bf16.msra.mxu0 %v7872
  %10670 = vmatmul.bf16.gmra.mxu0 %v216
  %v10671 = vpop.f32.mrf.mxu0
  %v10672 = vadd.f32 %v10659, %v10671
  %v10673 = vpop.f32.mrf.mxu0
  %10674 = vdwg.mxu0
  %10675 = vmatpush.bf16.msra.mxu0 %v7902
  %10676 = vmatpush.bf16.msra.mxu0 %v7900
  %10677 = vmatpush.bf16.msra.mxu0 %v7898
  %10678 = vmatpush.bf16.msra.mxu0 %v7896
  %10679 = vmatpush.bf16.msra.mxu0 %v7894
  %10680 = vmatpush.bf16.msra.mxu0 %v7892
  %10681 = vmatpush.bf16.msra.mxu0 %v7890
  %10682 = vmatpush.bf16.msra.mxu0 %v7888
  %10683 = vmatmul.bf16.gmra.mxu0 %v217
  %v10684 = vpop.f32.mrf.mxu0
  %v10685 = vadd.f32 %v10672, %v10684
  %v10686 = vpop.f32.mrf.mxu0
  %10687 = vdwg.mxu0
  %10688 = vmatpush.bf16.msra.mxu0 %v6383
  %10689 = vmatpush.bf16.msra.mxu0 %v6381
  %10690 = vmatpush.bf16.msra.mxu0 %v6379
  %10691 = vmatpush.bf16.msra.mxu0 %v6377
  %10692 = vmatpush.bf16.msra.mxu0 %v6375
  %10693 = vmatpush.bf16.msra.mxu0 %v6373
  %10694 = vmatpush.bf16.msra.mxu0 %v6371
  %10695 = vmatpush.bf16.msra.mxu0 %v6369
  %10696 = vmatmul.bf16.gmra.mxu0 %v122
  %v10697 = vpop.f32.mrf.mxu0
  %v10698 = vadd.f32 %v1757, %v10697
  %v10699 = vpop.f32.mrf.mxu0
  %10700 = vdwg.mxu0
  %10701 = vmatpush.bf16.msra.mxu0 %v6399
  %10702 = vmatpush.bf16.msra.mxu0 %v6397
  %10703 = vmatpush.bf16.msra.mxu0 %v6395
  %10704 = vmatpush.bf16.msra.mxu0 %v6393
  %10705 = vmatpush.bf16.msra.mxu0 %v6391
  %10706 = vmatpush.bf16.msra.mxu0 %v6389
  %10707 = vmatpush.bf16.msra.mxu0 %v6387
  %10708 = vmatpush.bf16.msra.mxu0 %v6385
  %10709 = vmatmul.bf16.gmra.mxu0 %v123
  %v10710 = vpop.f32.mrf.mxu0
  %v10711 = vadd.f32 %v10698, %v10710
  %v10712 = vpop.f32.mrf.mxu0
  %10713 = vdwg.mxu0
  %10714 = vmatpush.bf16.msra.mxu0 %v6415
  %10715 = vmatpush.bf16.msra.mxu0 %v6413
  %10716 = vmatpush.bf16.msra.mxu0 %v6411
  %10717 = vmatpush.bf16.msra.mxu0 %v6409
  %10718 = vmatpush.bf16.msra.mxu0 %v6407
  %10719 = vmatpush.bf16.msra.mxu0 %v6405
  %10720 = vmatpush.bf16.msra.mxu0 %v6403
  %10721 = vmatpush.bf16.msra.mxu0 %v6401
  %10722 = vmatmul.bf16.gmra.mxu0 %v124
  %v10723 = vpop.f32.mrf.mxu0
  %v10724 = vadd.f32 %v10711, %v10723
  %v10725 = vpop.f32.mrf.mxu0
  %10726 = vdwg.mxu0
  %10727 = vmatpush.bf16.msra.mxu0 %v6431
  %10728 = vmatpush.bf16.msra.mxu0 %v6429
  %10729 = vmatpush.bf16.msra.mxu0 %v6427
  %10730 = vmatpush.bf16.msra.mxu0 %v6425
  %10731 = vmatpush.bf16.msra.mxu0 %v6423
  %10732 = vmatpush.bf16.msra.mxu0 %v6421
  %10733 = vmatpush.bf16.msra.mxu0 %v6419
  %10734 = vmatpush.bf16.msra.mxu0 %v6417
  %10735 = vmatmul.bf16.gmra.mxu0 %v125
  %v10736 = vpop.f32.mrf.mxu0
  %v10737 = vadd.f32 %v10724, %v10736
  %v10738 = vpop.f32.mrf.mxu0
  %10739 = vdwg.mxu0
  %10740 = vmatpush.bf16.msra.mxu0 %v6447
  %10741 = vmatpush.bf16.msra.mxu0 %v6445
  %10742 = vmatpush.bf16.msra.mxu0 %v6443
  %10743 = vmatpush.bf16.msra.mxu0 %v6441
  %10744 = vmatpush.bf16.msra.mxu0 %v6439
  %10745 = vmatpush.bf16.msra.mxu0 %v6437
  %10746 = vmatpush.bf16.msra.mxu0 %v6435
  %10747 = vmatpush.bf16.msra.mxu0 %v6433
  %10748 = vmatmul.bf16.gmra.mxu0 %v126
  %v10749 = vpop.f32.mrf.mxu0
  %v10750 = vadd.f32 %v10737, %v10749
  %v10751 = vpop.f32.mrf.mxu0
  %10752 = vdwg.mxu0
  %10753 = vmatpush.bf16.msra.mxu0 %v6463
  %10754 = vmatpush.bf16.msra.mxu0 %v6461
  %10755 = vmatpush.bf16.msra.mxu0 %v6459
  %10756 = vmatpush.bf16.msra.mxu0 %v6457
  %10757 = vmatpush.bf16.msra.mxu0 %v6455
  %10758 = vmatpush.bf16.msra.mxu0 %v6453
  %10759 = vmatpush.bf16.msra.mxu0 %v6451
  %10760 = vmatpush.bf16.msra.mxu0 %v6449
  %10761 = vmatmul.bf16.gmra.mxu0 %v127
  %v10762 = vpop.f32.mrf.mxu0
  %v10763 = vadd.f32 %v10750, %v10762
  %v10764 = vpop.f32.mrf.mxu0
  %10765 = vdwg.mxu0
  %10766 = vmatpush.bf16.msra.mxu0 %v6479
  %10767 = vmatpush.bf16.msra.mxu0 %v6477
  %10768 = vmatpush.bf16.msra.mxu0 %v6475
  %10769 = vmatpush.bf16.msra.mxu0 %v6473
  %10770 = vmatpush.bf16.msra.mxu0 %v6471
  %10771 = vmatpush.bf16.msra.mxu0 %v6469
  %10772 = vmatpush.bf16.msra.mxu0 %v6467
  %10773 = vmatpush.bf16.msra.mxu0 %v6465
  %10774 = vmatmul.bf16.gmra.mxu0 %v128
  %v10775 = vpop.f32.mrf.mxu0
  %v10776 = vadd.f32 %v10763, %v10775
  %v10777 = vpop.f32.mrf.mxu0
  %10778 = vdwg.mxu0
  %10779 = vmatpush.bf16.msra.mxu0 %v6495
  %10780 = vmatpush.bf16.msra.mxu0 %v6493
  %10781 = vmatpush.bf16.msra.mxu0 %v6491
  %10782 = vmatpush.bf16.msra.mxu0 %v6489
  %10783 = vmatpush.bf16.msra.mxu0 %v6487
  %10784 = vmatpush.bf16.msra.mxu0 %v6485
  %10785 = vmatpush.bf16.msra.mxu0 %v6483
  %10786 = vmatpush.bf16.msra.mxu0 %v6481
  %10787 = vmatmul.bf16.gmra.mxu0 %v129
  %v10788 = vpop.f32.mrf.mxu0
  %v10789 = vadd.f32 %v10776, %v10788
  %v10790 = vpop.f32.mrf.mxu0
  %10791 = vdwg.mxu0
  %10792 = vmatpush.bf16.msra.mxu0 %v6511
  %10793 = vmatpush.bf16.msra.mxu0 %v6509
  %10794 = vmatpush.bf16.msra.mxu0 %v6507
  %10795 = vmatpush.bf16.msra.mxu0 %v6505
  %10796 = vmatpush.bf16.msra.mxu0 %v6503
  %10797 = vmatpush.bf16.msra.mxu0 %v6501
  %10798 = vmatpush.bf16.msra.mxu0 %v6499
  %10799 = vmatpush.bf16.msra.mxu0 %v6497
  %10800 = vmatmul.bf16.gmra.mxu0 %v130
  %v10801 = vpop.f32.mrf.mxu0
  %v10802 = vadd.f32 %v10789, %v10801
  %v10803 = vpop.f32.mrf.mxu0
  %10804 = vdwg.mxu0
  %10805 = vmatpush.bf16.msra.mxu0 %v6527
  %10806 = vmatpush.bf16.msra.mxu0 %v6525
  %10807 = vmatpush.bf16.msra.mxu0 %v6523
  %10808 = vmatpush.bf16.msra.mxu0 %v6521
  %10809 = vmatpush.bf16.msra.mxu0 %v6519
  %10810 = vmatpush.bf16.msra.mxu0 %v6517
  %10811 = vmatpush.bf16.msra.mxu0 %v6515
  %10812 = vmatpush.bf16.msra.mxu0 %v6513
  %10813 = vmatmul.bf16.gmra.mxu0 %v131
  %v10814 = vpop.f32.mrf.mxu0
  %v10815 = vadd.f32 %v10802, %v10814
  %v10816 = vpop.f32.mrf.mxu0
  %10817 = vdwg.mxu0
  %10818 = vmatpush.bf16.msra.mxu0 %v6543
  %10819 = vmatpush.bf16.msra.mxu0 %v6541
  %10820 = vmatpush.bf16.msra.mxu0 %v6539
  %10821 = vmatpush.bf16.msra.mxu0 %v6537
  %10822 = vmatpush.bf16.msra.mxu0 %v6535
  %10823 = vmatpush.bf16.msra.mxu0 %v6533
  %10824 = vmatpush.bf16.msra.mxu0 %v6531
  %10825 = vmatpush.bf16.msra.mxu0 %v6529
  %10826 = vmatmul.bf16.gmra.mxu0 %v132
  %v10827 = vpop.f32.mrf.mxu0
  %v10828 = vadd.f32 %v10815, %v10827
  %v10829 = vpop.f32.mrf.mxu0
  %10830 = vdwg.mxu0
  %10831 = vmatpush.bf16.msra.mxu0 %v6559
  %10832 = vmatpush.bf16.msra.mxu0 %v6557
  %10833 = vmatpush.bf16.msra.mxu0 %v6555
  %10834 = vmatpush.bf16.msra.mxu0 %v6553
  %10835 = vmatpush.bf16.msra.mxu0 %v6551
  %10836 = vmatpush.bf16.msra.mxu0 %v6549
  %10837 = vmatpush.bf16.msra.mxu0 %v6547
  %10838 = vmatpush.bf16.msra.mxu0 %v6545
  %10839 = vmatmul.bf16.gmra.mxu0 %v133
  %v10840 = vpop.f32.mrf.mxu0
  %v10841 = vadd.f32 %v10828, %v10840
  %v10842 = vpop.f32.mrf.mxu0
  %10843 = vdwg.mxu0
  %10844 = vmatpush.bf16.msra.mxu0 %v6575
  %10845 = vmatpush.bf16.msra.mxu0 %v6573
  %10846 = vmatpush.bf16.msra.mxu0 %v6571
  %10847 = vmatpush.bf16.msra.mxu0 %v6569
  %10848 = vmatpush.bf16.msra.mxu0 %v6567
  %10849 = vmatpush.bf16.msra.mxu0 %v6565
  %10850 = vmatpush.bf16.msra.mxu0 %v6563
  %10851 = vmatpush.bf16.msra.mxu0 %v6561
  %10852 = vmatmul.bf16.gmra.mxu0 %v134
  %v10853 = vpop.f32.mrf.mxu0
  %v10854 = vadd.f32 %v10841, %v10853
  %v10855 = vpop.f32.mrf.mxu0
  %10856 = vdwg.mxu0
  %10857 = vmatpush.bf16.msra.mxu0 %v6591
  %10858 = vmatpush.bf16.msra.mxu0 %v6589
  %10859 = vmatpush.bf16.msra.mxu0 %v6587
  %10860 = vmatpush.bf16.msra.mxu0 %v6585
  %10861 = vmatpush.bf16.msra.mxu0 %v6583
  %10862 = vmatpush.bf16.msra.mxu0 %v6581
  %10863 = vmatpush.bf16.msra.mxu0 %v6579
  %10864 = vmatpush.bf16.msra.mxu0 %v6577
  %10865 = vmatmul.bf16.gmra.mxu0 %v135
  %v10866 = vpop.f32.mrf.mxu0
  %v10867 = vadd.f32 %v10854, %v10866
  %v10868 = vpop.f32.mrf.mxu0
  %10869 = vdwg.mxu0
  %10870 = vmatpush.bf16.msra.mxu0 %v6607
  %10871 = vmatpush.bf16.msra.mxu0 %v6605
  %10872 = vmatpush.bf16.msra.mxu0 %v6603
  %10873 = vmatpush.bf16.msra.mxu0 %v6601
  %10874 = vmatpush.bf16.msra.mxu0 %v6599
  %10875 = vmatpush.bf16.msra.mxu0 %v6597
  %10876 = vmatpush.bf16.msra.mxu0 %v6595
  %10877 = vmatpush.bf16.msra.mxu0 %v6593
  %10878 = vmatmul.bf16.gmra.mxu0 %v136
  %v10879 = vpop.f32.mrf.mxu0
  %v10880 = vadd.f32 %v10867, %v10879
  %v10881 = vpop.f32.mrf.mxu0
  %10882 = vdwg.mxu0
  %10883 = vmatpush.bf16.msra.mxu0 %v6623
  %10884 = vmatpush.bf16.msra.mxu0 %v6621
  %10885 = vmatpush.bf16.msra.mxu0 %v6619
  %10886 = vmatpush.bf16.msra.mxu0 %v6617
  %10887 = vmatpush.bf16.msra.mxu0 %v6615
  %10888 = vmatpush.bf16.msra.mxu0 %v6613
  %10889 = vmatpush.bf16.msra.mxu0 %v6611
  %10890 = vmatpush.bf16.msra.mxu0 %v6609
  %10891 = vmatmul.bf16.gmra.mxu0 %v137
  %v10892 = vpop.f32.mrf.mxu0
  %v10893 = vadd.f32 %v10880, %v10892
  %v10894 = vpop.f32.mrf.mxu0
  %10895 = vdwg.mxu0
  %10896 = vmatpush.bf16.msra.mxu0 %v6639
  %10897 = vmatpush.bf16.msra.mxu0 %v6637
  %10898 = vmatpush.bf16.msra.mxu0 %v6635
  %10899 = vmatpush.bf16.msra.mxu0 %v6633
  %10900 = vmatpush.bf16.msra.mxu0 %v6631
  %10901 = vmatpush.bf16.msra.mxu0 %v6629
  %10902 = vmatpush.bf16.msra.mxu0 %v6627
  %10903 = vmatpush.bf16.msra.mxu0 %v6625
  %10904 = vmatmul.bf16.gmra.mxu0 %v138
  %v10905 = vpop.f32.mrf.mxu0
  %v10906 = vadd.f32 %v10893, %v10905
  %v10907 = vpop.f32.mrf.mxu0
  %10908 = vdwg.mxu0
  %10909 = vmatpush.bf16.msra.mxu0 %v6655
  %10910 = vmatpush.bf16.msra.mxu0 %v6653
  %10911 = vmatpush.bf16.msra.mxu0 %v6651
  %10912 = vmatpush.bf16.msra.mxu0 %v6649
  %10913 = vmatpush.bf16.msra.mxu0 %v6647
  %10914 = vmatpush.bf16.msra.mxu0 %v6645
  %10915 = vmatpush.bf16.msra.mxu0 %v6643
  %10916 = vmatpush.bf16.msra.mxu0 %v6641
  %10917 = vmatmul.bf16.gmra.mxu0 %v139
  %v10918 = vpop.f32.mrf.mxu0
  %v10919 = vadd.f32 %v10906, %v10918
  %v10920 = vpop.f32.mrf.mxu0
  %10921 = vdwg.mxu0
  %10922 = vmatpush.bf16.msra.mxu0 %v6671
  %10923 = vmatpush.bf16.msra.mxu0 %v6669
  %10924 = vmatpush.bf16.msra.mxu0 %v6667
  %10925 = vmatpush.bf16.msra.mxu0 %v6665
  %10926 = vmatpush.bf16.msra.mxu0 %v6663
  %10927 = vmatpush.bf16.msra.mxu0 %v6661
  %10928 = vmatpush.bf16.msra.mxu0 %v6659
  %10929 = vmatpush.bf16.msra.mxu0 %v6657
  %10930 = vmatmul.bf16.gmra.mxu0 %v140
  %v10931 = vpop.f32.mrf.mxu0
  %v10932 = vadd.f32 %v10919, %v10931
  %v10933 = vpop.f32.mrf.mxu0
  %10934 = vdwg.mxu0
  %10935 = vmatpush.bf16.msra.mxu0 %v6687
  %10936 = vmatpush.bf16.msra.mxu0 %v6685
  %10937 = vmatpush.bf16.msra.mxu0 %v6683
  %10938 = vmatpush.bf16.msra.mxu0 %v6681
  %10939 = vmatpush.bf16.msra.mxu0 %v6679
  %10940 = vmatpush.bf16.msra.mxu0 %v6677
  %10941 = vmatpush.bf16.msra.mxu0 %v6675
  %10942 = vmatpush.bf16.msra.mxu0 %v6673
  %10943 = vmatmul.bf16.gmra.mxu0 %v141
  %v10944 = vpop.f32.mrf.mxu0
  %v10945 = vadd.f32 %v10932, %v10944
  %v10946 = vpop.f32.mrf.mxu0
  %10947 = vdwg.mxu0
  %10948 = vmatpush.bf16.msra.mxu0 %v6703
  %10949 = vmatpush.bf16.msra.mxu0 %v6701
  %10950 = vmatpush.bf16.msra.mxu0 %v6699
  %10951 = vmatpush.bf16.msra.mxu0 %v6697
  %10952 = vmatpush.bf16.msra.mxu0 %v6695
  %10953 = vmatpush.bf16.msra.mxu0 %v6693
  %10954 = vmatpush.bf16.msra.mxu0 %v6691
  %10955 = vmatpush.bf16.msra.mxu0 %v6689
  %10956 = vmatmul.bf16.gmra.mxu0 %v142
  %v10957 = vpop.f32.mrf.mxu0
  %v10958 = vadd.f32 %v10945, %v10957
  %v10959 = vpop.f32.mrf.mxu0
  %10960 = vdwg.mxu0
  %10961 = vmatpush.bf16.msra.mxu0 %v6719
  %10962 = vmatpush.bf16.msra.mxu0 %v6717
  %10963 = vmatpush.bf16.msra.mxu0 %v6715
  %10964 = vmatpush.bf16.msra.mxu0 %v6713
  %10965 = vmatpush.bf16.msra.mxu0 %v6711
  %10966 = vmatpush.bf16.msra.mxu0 %v6709
  %10967 = vmatpush.bf16.msra.mxu0 %v6707
  %10968 = vmatpush.bf16.msra.mxu0 %v6705
  %10969 = vmatmul.bf16.gmra.mxu0 %v143
  %v10970 = vpop.f32.mrf.mxu0
  %v10971 = vadd.f32 %v10958, %v10970
  %v10972 = vpop.f32.mrf.mxu0
  %10973 = vdwg.mxu0
  %10974 = vmatpush.bf16.msra.mxu0 %v6735
  %10975 = vmatpush.bf16.msra.mxu0 %v6733
  %10976 = vmatpush.bf16.msra.mxu0 %v6731
  %10977 = vmatpush.bf16.msra.mxu0 %v6729
  %10978 = vmatpush.bf16.msra.mxu0 %v6727
  %10979 = vmatpush.bf16.msra.mxu0 %v6725
  %10980 = vmatpush.bf16.msra.mxu0 %v6723
  %10981 = vmatpush.bf16.msra.mxu0 %v6721
  %10982 = vmatmul.bf16.gmra.mxu0 %v144
  %v10983 = vpop.f32.mrf.mxu0
  %v10984 = vadd.f32 %v10971, %v10983
  %v10985 = vpop.f32.mrf.mxu0
  %10986 = vdwg.mxu0
  %10987 = vmatpush.bf16.msra.mxu0 %v6751
  %10988 = vmatpush.bf16.msra.mxu0 %v6749
  %10989 = vmatpush.bf16.msra.mxu0 %v6747
  %10990 = vmatpush.bf16.msra.mxu0 %v6745
  %10991 = vmatpush.bf16.msra.mxu0 %v6743
  %10992 = vmatpush.bf16.msra.mxu0 %v6741
  %10993 = vmatpush.bf16.msra.mxu0 %v6739
  %10994 = vmatpush.bf16.msra.mxu0 %v6737
  %10995 = vmatmul.bf16.gmra.mxu0 %v145
  %v10996 = vpop.f32.mrf.mxu0
  %v10997 = vadd.f32 %v10984, %v10996
  %v10998 = vpop.f32.mrf.mxu0
  %10999 = vdwg.mxu0
  %11000 = vmatpush.bf16.msra.mxu0 %v6767
  %11001 = vmatpush.bf16.msra.mxu0 %v6765
  %11002 = vmatpush.bf16.msra.mxu0 %v6763
  %11003 = vmatpush.bf16.msra.mxu0 %v6761
  %11004 = vmatpush.bf16.msra.mxu0 %v6759
  %11005 = vmatpush.bf16.msra.mxu0 %v6757
  %11006 = vmatpush.bf16.msra.mxu0 %v6755
  %11007 = vmatpush.bf16.msra.mxu0 %v6753
  %11008 = vmatmul.bf16.gmra.mxu0 %v146
  %v11009 = vpop.f32.mrf.mxu0
  %v11010 = vadd.f32 %v10997, %v11009
  %v11011 = vpop.f32.mrf.mxu0
  %11012 = vdwg.mxu0
  %11013 = vmatpush.bf16.msra.mxu0 %v6783
  %11014 = vmatpush.bf16.msra.mxu0 %v6781
  %11015 = vmatpush.bf16.msra.mxu0 %v6779
  %11016 = vmatpush.bf16.msra.mxu0 %v6777
  %11017 = vmatpush.bf16.msra.mxu0 %v6775
  %11018 = vmatpush.bf16.msra.mxu0 %v6773
  %11019 = vmatpush.bf16.msra.mxu0 %v6771
  %11020 = vmatpush.bf16.msra.mxu0 %v6769
  %11021 = vmatmul.bf16.gmra.mxu0 %v147
  %v11022 = vpop.f32.mrf.mxu0
  %v11023 = vadd.f32 %v11010, %v11022
  %v11024 = vpop.f32.mrf.mxu0
  %11025 = vdwg.mxu0
  %11026 = vmatpush.bf16.msra.mxu0 %v6799
  %11027 = vmatpush.bf16.msra.mxu0 %v6797
  %11028 = vmatpush.bf16.msra.mxu0 %v6795
  %11029 = vmatpush.bf16.msra.mxu0 %v6793
  %11030 = vmatpush.bf16.msra.mxu0 %v6791
  %11031 = vmatpush.bf16.msra.mxu0 %v6789
  %11032 = vmatpush.bf16.msra.mxu0 %v6787
  %11033 = vmatpush.bf16.msra.mxu0 %v6785
  %11034 = vmatmul.bf16.gmra.mxu0 %v148
  %v11035 = vpop.f32.mrf.mxu0
  %v11036 = vadd.f32 %v11023, %v11035
  %v11037 = vpop.f32.mrf.mxu0
  %11038 = vdwg.mxu0
  %11039 = vmatpush.bf16.msra.mxu0 %v6815
  %11040 = vmatpush.bf16.msra.mxu0 %v6813
  %11041 = vmatpush.bf16.msra.mxu0 %v6811
  %11042 = vmatpush.bf16.msra.mxu0 %v6809
  %11043 = vmatpush.bf16.msra.mxu0 %v6807
  %11044 = vmatpush.bf16.msra.mxu0 %v6805
  %11045 = vmatpush.bf16.msra.mxu0 %v6803
  %11046 = vmatpush.bf16.msra.mxu0 %v6801
  %11047 = vmatmul.bf16.gmra.mxu0 %v149
  %v11048 = vpop.f32.mrf.mxu0
  %v11049 = vadd.f32 %v11036, %v11048
  %v11050 = vpop.f32.mrf.mxu0
  %11051 = vdwg.mxu0
  %11052 = vmatpush.bf16.msra.mxu0 %v6831
  %11053 = vmatpush.bf16.msra.mxu0 %v6829
  %11054 = vmatpush.bf16.msra.mxu0 %v6827
  %11055 = vmatpush.bf16.msra.mxu0 %v6825
  %11056 = vmatpush.bf16.msra.mxu0 %v6823
  %11057 = vmatpush.bf16.msra.mxu0 %v6821
  %11058 = vmatpush.bf16.msra.mxu0 %v6819
  %11059 = vmatpush.bf16.msra.mxu0 %v6817
  %11060 = vmatmul.bf16.gmra.mxu0 %v150
  %v11061 = vpop.f32.mrf.mxu0
  %v11062 = vadd.f32 %v11049, %v11061
  %v11063 = vpop.f32.mrf.mxu0
  %11064 = vdwg.mxu0
  %11065 = vmatpush.bf16.msra.mxu0 %v6847
  %11066 = vmatpush.bf16.msra.mxu0 %v6845
  %11067 = vmatpush.bf16.msra.mxu0 %v6843
  %11068 = vmatpush.bf16.msra.mxu0 %v6841
  %11069 = vmatpush.bf16.msra.mxu0 %v6839
  %11070 = vmatpush.bf16.msra.mxu0 %v6837
  %11071 = vmatpush.bf16.msra.mxu0 %v6835
  %11072 = vmatpush.bf16.msra.mxu0 %v6833
  %11073 = vmatmul.bf16.gmra.mxu0 %v151
  %v11074 = vpop.f32.mrf.mxu0
  %v11075 = vadd.f32 %v11062, %v11074
  %v11076 = vpop.f32.mrf.mxu0
  %11077 = vdwg.mxu0
  %11078 = vmatpush.bf16.msra.mxu0 %v6863
  %11079 = vmatpush.bf16.msra.mxu0 %v6861
  %11080 = vmatpush.bf16.msra.mxu0 %v6859
  %11081 = vmatpush.bf16.msra.mxu0 %v6857
  %11082 = vmatpush.bf16.msra.mxu0 %v6855
  %11083 = vmatpush.bf16.msra.mxu0 %v6853
  %11084 = vmatpush.bf16.msra.mxu0 %v6851
  %11085 = vmatpush.bf16.msra.mxu0 %v6849
  %11086 = vmatmul.bf16.gmra.mxu0 %v152
  %v11087 = vpop.f32.mrf.mxu0
  %v11088 = vadd.f32 %v11075, %v11087
  %v11089 = vpop.f32.mrf.mxu0
  %11090 = vdwg.mxu0
  %11091 = vmatpush.bf16.msra.mxu0 %v6879
  %11092 = vmatpush.bf16.msra.mxu0 %v6877
  %11093 = vmatpush.bf16.msra.mxu0 %v6875
  %11094 = vmatpush.bf16.msra.mxu0 %v6873
  %11095 = vmatpush.bf16.msra.mxu0 %v6871
  %11096 = vmatpush.bf16.msra.mxu0 %v6869
  %11097 = vmatpush.bf16.msra.mxu0 %v6867
  %11098 = vmatpush.bf16.msra.mxu0 %v6865
  %11099 = vmatmul.bf16.gmra.mxu0 %v153
  %v11100 = vpop.f32.mrf.mxu0
  %v11101 = vadd.f32 %v11088, %v11100
  %v11102 = vpop.f32.mrf.mxu0
  %11103 = vdwg.mxu0
  %11104 = vmatpush.bf16.msra.mxu0 %v6895
  %11105 = vmatpush.bf16.msra.mxu0 %v6893
  %11106 = vmatpush.bf16.msra.mxu0 %v6891
  %11107 = vmatpush.bf16.msra.mxu0 %v6889
  %11108 = vmatpush.bf16.msra.mxu0 %v6887
  %11109 = vmatpush.bf16.msra.mxu0 %v6885
  %11110 = vmatpush.bf16.msra.mxu0 %v6883
  %11111 = vmatpush.bf16.msra.mxu0 %v6881
  %11112 = vmatmul.bf16.gmra.mxu0 %v154
  %v11113 = vpop.f32.mrf.mxu0
  %v11114 = vadd.f32 %v11101, %v11113
  %v11115 = vpop.f32.mrf.mxu0
  %11116 = vdwg.mxu0
  %11117 = vmatpush.bf16.msra.mxu0 %v6911
  %11118 = vmatpush.bf16.msra.mxu0 %v6909
  %11119 = vmatpush.bf16.msra.mxu0 %v6907
  %11120 = vmatpush.bf16.msra.mxu0 %v6905
  %11121 = vmatpush.bf16.msra.mxu0 %v6903
  %11122 = vmatpush.bf16.msra.mxu0 %v6901
  %11123 = vmatpush.bf16.msra.mxu0 %v6899
  %11124 = vmatpush.bf16.msra.mxu0 %v6897
  %11125 = vmatmul.bf16.gmra.mxu0 %v155
  %v11126 = vpop.f32.mrf.mxu0
  %v11127 = vadd.f32 %v11114, %v11126
  %v11128 = vpop.f32.mrf.mxu0
  %11129 = vdwg.mxu0
  %11130 = vmatpush.bf16.msra.mxu0 %v6927
  %11131 = vmatpush.bf16.msra.mxu0 %v6925
  %11132 = vmatpush.bf16.msra.mxu0 %v6923
  %11133 = vmatpush.bf16.msra.mxu0 %v6921
  %11134 = vmatpush.bf16.msra.mxu0 %v6919
  %11135 = vmatpush.bf16.msra.mxu0 %v6917
  %11136 = vmatpush.bf16.msra.mxu0 %v6915
  %11137 = vmatpush.bf16.msra.mxu0 %v6913
  %11138 = vmatmul.bf16.gmra.mxu0 %v156
  %v11139 = vpop.f32.mrf.mxu0
  %v11140 = vadd.f32 %v11127, %v11139
  %v11141 = vpop.f32.mrf.mxu0
  %11142 = vdwg.mxu0
  %11143 = vmatpush.bf16.msra.mxu0 %v6943
  %11144 = vmatpush.bf16.msra.mxu0 %v6941
  %11145 = vmatpush.bf16.msra.mxu0 %v6939
  %11146 = vmatpush.bf16.msra.mxu0 %v6937
  %11147 = vmatpush.bf16.msra.mxu0 %v6935
  %11148 = vmatpush.bf16.msra.mxu0 %v6933
  %11149 = vmatpush.bf16.msra.mxu0 %v6931
  %11150 = vmatpush.bf16.msra.mxu0 %v6929
  %11151 = vmatmul.bf16.gmra.mxu0 %v157
  %v11152 = vpop.f32.mrf.mxu0
  %v11153 = vadd.f32 %v11140, %v11152
  %v11154 = vpop.f32.mrf.mxu0
  %11155 = vdwg.mxu0
  %11156 = vmatpush.bf16.msra.mxu0 %v6959
  %11157 = vmatpush.bf16.msra.mxu0 %v6957
  %11158 = vmatpush.bf16.msra.mxu0 %v6955
  %11159 = vmatpush.bf16.msra.mxu0 %v6953
  %11160 = vmatpush.bf16.msra.mxu0 %v6951
  %11161 = vmatpush.bf16.msra.mxu0 %v6949
  %11162 = vmatpush.bf16.msra.mxu0 %v6947
  %11163 = vmatpush.bf16.msra.mxu0 %v6945
  %11164 = vmatmul.bf16.gmra.mxu0 %v158
  %v11165 = vpop.f32.mrf.mxu0
  %v11166 = vadd.f32 %v11153, %v11165
  %v11167 = vpop.f32.mrf.mxu0
  %11168 = vdwg.mxu0
  %11169 = vmatpush.bf16.msra.mxu0 %v6975
  %11170 = vmatpush.bf16.msra.mxu0 %v6973
  %11171 = vmatpush.bf16.msra.mxu0 %v6971
  %11172 = vmatpush.bf16.msra.mxu0 %v6969
  %11173 = vmatpush.bf16.msra.mxu0 %v6967
  %11174 = vmatpush.bf16.msra.mxu0 %v6965
  %11175 = vmatpush.bf16.msra.mxu0 %v6963
  %11176 = vmatpush.bf16.msra.mxu0 %v6961
  %11177 = vmatmul.bf16.gmra.mxu0 %v159
  %v11178 = vpop.f32.mrf.mxu0
  %v11179 = vadd.f32 %v11166, %v11178
  %v11180 = vpop.f32.mrf.mxu0
  %11181 = vdwg.mxu0
  %11182 = vmatpush.bf16.msra.mxu0 %v6991
  %11183 = vmatpush.bf16.msra.mxu0 %v6989
  %11184 = vmatpush.bf16.msra.mxu0 %v6987
  %11185 = vmatpush.bf16.msra.mxu0 %v6985
  %11186 = vmatpush.bf16.msra.mxu0 %v6983
  %11187 = vmatpush.bf16.msra.mxu0 %v6981
  %11188 = vmatpush.bf16.msra.mxu0 %v6979
  %11189 = vmatpush.bf16.msra.mxu0 %v6977
  %11190 = vmatmul.bf16.gmra.mxu0 %v160
  %v11191 = vpop.f32.mrf.mxu0
  %v11192 = vadd.f32 %v11179, %v11191
  %v11193 = vpop.f32.mrf.mxu0
  %11194 = vdwg.mxu0
  %11195 = vmatpush.bf16.msra.mxu0 %v7007
  %11196 = vmatpush.bf16.msra.mxu0 %v7005
  %11197 = vmatpush.bf16.msra.mxu0 %v7003
  %11198 = vmatpush.bf16.msra.mxu0 %v7001
  %11199 = vmatpush.bf16.msra.mxu0 %v6999
  %11200 = vmatpush.bf16.msra.mxu0 %v6997
  %11201 = vmatpush.bf16.msra.mxu0 %v6995
  %11202 = vmatpush.bf16.msra.mxu0 %v6993
  %11203 = vmatmul.bf16.gmra.mxu0 %v161
  %v11204 = vpop.f32.mrf.mxu0
  %v11205 = vadd.f32 %v11192, %v11204
  %v11206 = vpop.f32.mrf.mxu0
  %11207 = vdwg.mxu0
  %11208 = vmatpush.bf16.msra.mxu0 %v7023
  %11209 = vmatpush.bf16.msra.mxu0 %v7021
  %11210 = vmatpush.bf16.msra.mxu0 %v7019
  %11211 = vmatpush.bf16.msra.mxu0 %v7017
  %11212 = vmatpush.bf16.msra.mxu0 %v7015
  %11213 = vmatpush.bf16.msra.mxu0 %v7013
  %11214 = vmatpush.bf16.msra.mxu0 %v7011
  %11215 = vmatpush.bf16.msra.mxu0 %v7009
  %11216 = vmatmul.bf16.gmra.mxu0 %v162
  %v11217 = vpop.f32.mrf.mxu0
  %v11218 = vadd.f32 %v11205, %v11217
  %v11219 = vpop.f32.mrf.mxu0
  %11220 = vdwg.mxu0
  %11221 = vmatpush.bf16.msra.mxu0 %v7039
  %11222 = vmatpush.bf16.msra.mxu0 %v7037
  %11223 = vmatpush.bf16.msra.mxu0 %v7035
  %11224 = vmatpush.bf16.msra.mxu0 %v7033
  %11225 = vmatpush.bf16.msra.mxu0 %v7031
  %11226 = vmatpush.bf16.msra.mxu0 %v7029
  %11227 = vmatpush.bf16.msra.mxu0 %v7027
  %11228 = vmatpush.bf16.msra.mxu0 %v7025
  %11229 = vmatmul.bf16.gmra.mxu0 %v163
  %v11230 = vpop.f32.mrf.mxu0
  %v11231 = vadd.f32 %v11218, %v11230
  %v11232 = vpop.f32.mrf.mxu0
  %11233 = vdwg.mxu0
  %11234 = vmatpush.bf16.msra.mxu0 %v7055
  %11235 = vmatpush.bf16.msra.mxu0 %v7053
  %11236 = vmatpush.bf16.msra.mxu0 %v7051
  %11237 = vmatpush.bf16.msra.mxu0 %v7049
  %11238 = vmatpush.bf16.msra.mxu0 %v7047
  %11239 = vmatpush.bf16.msra.mxu0 %v7045
  %11240 = vmatpush.bf16.msra.mxu0 %v7043
  %11241 = vmatpush.bf16.msra.mxu0 %v7041
  %11242 = vmatmul.bf16.gmra.mxu0 %v164
  %v11243 = vpop.f32.mrf.mxu0
  %v11244 = vadd.f32 %v11231, %v11243
  %v11245 = vpop.f32.mrf.mxu0
  %11246 = vdwg.mxu0
  %11247 = vmatpush.bf16.msra.mxu0 %v7071
  %11248 = vmatpush.bf16.msra.mxu0 %v7069
  %11249 = vmatpush.bf16.msra.mxu0 %v7067
  %11250 = vmatpush.bf16.msra.mxu0 %v7065
  %11251 = vmatpush.bf16.msra.mxu0 %v7063
  %11252 = vmatpush.bf16.msra.mxu0 %v7061
  %11253 = vmatpush.bf16.msra.mxu0 %v7059
  %11254 = vmatpush.bf16.msra.mxu0 %v7057
  %11255 = vmatmul.bf16.gmra.mxu0 %v165
  %v11256 = vpop.f32.mrf.mxu0
  %v11257 = vadd.f32 %v11244, %v11256
  %v11258 = vpop.f32.mrf.mxu0
  %11259 = vdwg.mxu0
  %11260 = vmatpush.bf16.msra.mxu0 %v7087
  %11261 = vmatpush.bf16.msra.mxu0 %v7085
  %11262 = vmatpush.bf16.msra.mxu0 %v7083
  %11263 = vmatpush.bf16.msra.mxu0 %v7081
  %11264 = vmatpush.bf16.msra.mxu0 %v7079
  %11265 = vmatpush.bf16.msra.mxu0 %v7077
  %11266 = vmatpush.bf16.msra.mxu0 %v7075
  %11267 = vmatpush.bf16.msra.mxu0 %v7073
  %11268 = vmatmul.bf16.gmra.mxu0 %v166
  %v11269 = vpop.f32.mrf.mxu0
  %v11270 = vadd.f32 %v11257, %v11269
  %v11271 = vpop.f32.mrf.mxu0
  %11272 = vdwg.mxu0
  %11273 = vmatpush.bf16.msra.mxu0 %v7103
  %11274 = vmatpush.bf16.msra.mxu0 %v7101
  %11275 = vmatpush.bf16.msra.mxu0 %v7099
  %11276 = vmatpush.bf16.msra.mxu0 %v7097
  %11277 = vmatpush.bf16.msra.mxu0 %v7095
  %11278 = vmatpush.bf16.msra.mxu0 %v7093
  %11279 = vmatpush.bf16.msra.mxu0 %v7091
  %11280 = vmatpush.bf16.msra.mxu0 %v7089
  %11281 = vmatmul.bf16.gmra.mxu0 %v167
  %v11282 = vpop.f32.mrf.mxu0
  %v11283 = vadd.f32 %v11270, %v11282
  %v11284 = vpop.f32.mrf.mxu0
  %11285 = vdwg.mxu0
  %11286 = vmatpush.bf16.msra.mxu0 %v7119
  %11287 = vmatpush.bf16.msra.mxu0 %v7117
  %11288 = vmatpush.bf16.msra.mxu0 %v7115
  %11289 = vmatpush.bf16.msra.mxu0 %v7113
  %11290 = vmatpush.bf16.msra.mxu0 %v7111
  %11291 = vmatpush.bf16.msra.mxu0 %v7109
  %11292 = vmatpush.bf16.msra.mxu0 %v7107
  %11293 = vmatpush.bf16.msra.mxu0 %v7105
  %11294 = vmatmul.bf16.gmra.mxu0 %v168
  %v11295 = vpop.f32.mrf.mxu0
  %v11296 = vadd.f32 %v11283, %v11295
  %v11297 = vpop.f32.mrf.mxu0
  %11298 = vdwg.mxu0
  %11299 = vmatpush.bf16.msra.mxu0 %v7135
  %11300 = vmatpush.bf16.msra.mxu0 %v7133
  %11301 = vmatpush.bf16.msra.mxu0 %v7131
  %11302 = vmatpush.bf16.msra.mxu0 %v7129
  %11303 = vmatpush.bf16.msra.mxu0 %v7127
  %11304 = vmatpush.bf16.msra.mxu0 %v7125
  %11305 = vmatpush.bf16.msra.mxu0 %v7123
  %11306 = vmatpush.bf16.msra.mxu0 %v7121
  %11307 = vmatmul.bf16.gmra.mxu0 %v169
  %v11308 = vpop.f32.mrf.mxu0
  %v11309 = vadd.f32 %v11296, %v11308
  %v11310 = vpop.f32.mrf.mxu0
  %11311 = vdwg.mxu0
  %11312 = vmatpush.bf16.msra.mxu0 %v7151
  %11313 = vmatpush.bf16.msra.mxu0 %v7149
  %11314 = vmatpush.bf16.msra.mxu0 %v7147
  %11315 = vmatpush.bf16.msra.mxu0 %v7145
  %11316 = vmatpush.bf16.msra.mxu0 %v7143
  %11317 = vmatpush.bf16.msra.mxu0 %v7141
  %11318 = vmatpush.bf16.msra.mxu0 %v7139
  %11319 = vmatpush.bf16.msra.mxu0 %v7137
  %11320 = vmatmul.bf16.gmra.mxu0 %v170
  %v11321 = vpop.f32.mrf.mxu0
  %v11322 = vadd.f32 %v11309, %v11321
  %v11323 = vpop.f32.mrf.mxu0
  %11324 = vdwg.mxu0
  %11325 = vmatpush.bf16.msra.mxu0 %v7167
  %11326 = vmatpush.bf16.msra.mxu0 %v7165
  %11327 = vmatpush.bf16.msra.mxu0 %v7163
  %11328 = vmatpush.bf16.msra.mxu0 %v7161
  %11329 = vmatpush.bf16.msra.mxu0 %v7159
  %11330 = vmatpush.bf16.msra.mxu0 %v7157
  %11331 = vmatpush.bf16.msra.mxu0 %v7155
  %11332 = vmatpush.bf16.msra.mxu0 %v7153
  %11333 = vmatmul.bf16.gmra.mxu0 %v171
  %v11334 = vpop.f32.mrf.mxu0
  %v11335 = vadd.f32 %v11322, %v11334
  %v11336 = vpop.f32.mrf.mxu0
  %11337 = vdwg.mxu0
  %11338 = vmatpush.bf16.msra.mxu0 %v7183
  %11339 = vmatpush.bf16.msra.mxu0 %v7181
  %11340 = vmatpush.bf16.msra.mxu0 %v7179
  %11341 = vmatpush.bf16.msra.mxu0 %v7177
  %11342 = vmatpush.bf16.msra.mxu0 %v7175
  %11343 = vmatpush.bf16.msra.mxu0 %v7173
  %11344 = vmatpush.bf16.msra.mxu0 %v7171
  %11345 = vmatpush.bf16.msra.mxu0 %v7169
  %11346 = vmatmul.bf16.gmra.mxu0 %v172
  %v11347 = vpop.f32.mrf.mxu0
  %v11348 = vadd.f32 %v11335, %v11347
  %v11349 = vpop.f32.mrf.mxu0
  %11350 = vdwg.mxu0
  %11351 = vmatpush.bf16.msra.mxu0 %v7199
  %11352 = vmatpush.bf16.msra.mxu0 %v7197
  %11353 = vmatpush.bf16.msra.mxu0 %v7195
  %11354 = vmatpush.bf16.msra.mxu0 %v7193
  %11355 = vmatpush.bf16.msra.mxu0 %v7191
  %11356 = vmatpush.bf16.msra.mxu0 %v7189
  %11357 = vmatpush.bf16.msra.mxu0 %v7187
  %11358 = vmatpush.bf16.msra.mxu0 %v7185
  %11359 = vmatmul.bf16.gmra.mxu0 %v173
  %v11360 = vpop.f32.mrf.mxu0
  %v11361 = vadd.f32 %v11348, %v11360
  %v11362 = vpop.f32.mrf.mxu0
  %11363 = vdwg.mxu0
  %11364 = vmatpush.bf16.msra.mxu0 %v7215
  %11365 = vmatpush.bf16.msra.mxu0 %v7213
  %11366 = vmatpush.bf16.msra.mxu0 %v7211
  %11367 = vmatpush.bf16.msra.mxu0 %v7209
  %11368 = vmatpush.bf16.msra.mxu0 %v7207
  %11369 = vmatpush.bf16.msra.mxu0 %v7205
  %11370 = vmatpush.bf16.msra.mxu0 %v7203
  %11371 = vmatpush.bf16.msra.mxu0 %v7201
  %11372 = vmatmul.bf16.gmra.mxu0 %v174
  %v11373 = vpop.f32.mrf.mxu0
  %v11374 = vadd.f32 %v11361, %v11373
  %v11375 = vpop.f32.mrf.mxu0
  %11376 = vdwg.mxu0
  %11377 = vmatpush.bf16.msra.mxu0 %v7231
  %11378 = vmatpush.bf16.msra.mxu0 %v7229
  %11379 = vmatpush.bf16.msra.mxu0 %v7227
  %11380 = vmatpush.bf16.msra.mxu0 %v7225
  %11381 = vmatpush.bf16.msra.mxu0 %v7223
  %11382 = vmatpush.bf16.msra.mxu0 %v7221
  %11383 = vmatpush.bf16.msra.mxu0 %v7219
  %11384 = vmatpush.bf16.msra.mxu0 %v7217
  %11385 = vmatmul.bf16.gmra.mxu0 %v175
  %v11386 = vpop.f32.mrf.mxu0
  %v11387 = vadd.f32 %v11374, %v11386
  %v11388 = vpop.f32.mrf.mxu0
  %11389 = vdwg.mxu0
  %11390 = vmatpush.bf16.msra.mxu0 %v7247
  %11391 = vmatpush.bf16.msra.mxu0 %v7245
  %11392 = vmatpush.bf16.msra.mxu0 %v7243
  %11393 = vmatpush.bf16.msra.mxu0 %v7241
  %11394 = vmatpush.bf16.msra.mxu0 %v7239
  %11395 = vmatpush.bf16.msra.mxu0 %v7237
  %11396 = vmatpush.bf16.msra.mxu0 %v7235
  %11397 = vmatpush.bf16.msra.mxu0 %v7233
  %11398 = vmatmul.bf16.gmra.mxu0 %v176
  %v11399 = vpop.f32.mrf.mxu0
  %v11400 = vadd.f32 %v11387, %v11399
  %v11401 = vpop.f32.mrf.mxu0
  %11402 = vdwg.mxu0
  %11403 = vmatpush.bf16.msra.mxu0 %v7263
  %11404 = vmatpush.bf16.msra.mxu0 %v7261
  %11405 = vmatpush.bf16.msra.mxu0 %v7259
  %11406 = vmatpush.bf16.msra.mxu0 %v7257
  %11407 = vmatpush.bf16.msra.mxu0 %v7255
  %11408 = vmatpush.bf16.msra.mxu0 %v7253
  %11409 = vmatpush.bf16.msra.mxu0 %v7251
  %11410 = vmatpush.bf16.msra.mxu0 %v7249
  %11411 = vmatmul.bf16.gmra.mxu0 %v177
  %v11412 = vpop.f32.mrf.mxu0
  %v11413 = vadd.f32 %v11400, %v11412
  %v11414 = vpop.f32.mrf.mxu0
  %11415 = vdwg.mxu0
  %11416 = vmatpush.bf16.msra.mxu0 %v7279
  %11417 = vmatpush.bf16.msra.mxu0 %v7277
  %11418 = vmatpush.bf16.msra.mxu0 %v7275
  %11419 = vmatpush.bf16.msra.mxu0 %v7273
  %11420 = vmatpush.bf16.msra.mxu0 %v7271
  %11421 = vmatpush.bf16.msra.mxu0 %v7269
  %11422 = vmatpush.bf16.msra.mxu0 %v7267
  %11423 = vmatpush.bf16.msra.mxu0 %v7265
  %11424 = vmatmul.bf16.gmra.mxu0 %v178
  %v11425 = vpop.f32.mrf.mxu0
  %v11426 = vadd.f32 %v11413, %v11425
  %v11427 = vpop.f32.mrf.mxu0
  %11428 = vdwg.mxu0
  %11429 = vmatpush.bf16.msra.mxu0 %v7295
  %11430 = vmatpush.bf16.msra.mxu0 %v7293
  %11431 = vmatpush.bf16.msra.mxu0 %v7291
  %11432 = vmatpush.bf16.msra.mxu0 %v7289
  %11433 = vmatpush.bf16.msra.mxu0 %v7287
  %11434 = vmatpush.bf16.msra.mxu0 %v7285
  %11435 = vmatpush.bf16.msra.mxu0 %v7283
  %11436 = vmatpush.bf16.msra.mxu0 %v7281
  %11437 = vmatmul.bf16.gmra.mxu0 %v179
  %v11438 = vpop.f32.mrf.mxu0
  %v11439 = vadd.f32 %v11426, %v11438
  %v11440 = vpop.f32.mrf.mxu0
  %11441 = vdwg.mxu0
  %11442 = vmatpush.bf16.msra.mxu0 %v7311
  %11443 = vmatpush.bf16.msra.mxu0 %v7309
  %11444 = vmatpush.bf16.msra.mxu0 %v7307
  %11445 = vmatpush.bf16.msra.mxu0 %v7305
  %11446 = vmatpush.bf16.msra.mxu0 %v7303
  %11447 = vmatpush.bf16.msra.mxu0 %v7301
  %11448 = vmatpush.bf16.msra.mxu0 %v7299
  %11449 = vmatpush.bf16.msra.mxu0 %v7297
  %11450 = vmatmul.bf16.gmra.mxu0 %v180
  %v11451 = vpop.f32.mrf.mxu0
  %v11452 = vadd.f32 %v11439, %v11451
  %v11453 = vpop.f32.mrf.mxu0
  %11454 = vdwg.mxu0
  %11455 = vmatpush.bf16.msra.mxu0 %v7327
  %11456 = vmatpush.bf16.msra.mxu0 %v7325
  %11457 = vmatpush.bf16.msra.mxu0 %v7323
  %11458 = vmatpush.bf16.msra.mxu0 %v7321
  %11459 = vmatpush.bf16.msra.mxu0 %v7319
  %11460 = vmatpush.bf16.msra.mxu0 %v7317
  %11461 = vmatpush.bf16.msra.mxu0 %v7315
  %11462 = vmatpush.bf16.msra.mxu0 %v7313
  %11463 = vmatmul.bf16.gmra.mxu0 %v181
  %v11464 = vpop.f32.mrf.mxu0
  %v11465 = vadd.f32 %v11452, %v11464
  %v11466 = vpop.f32.mrf.mxu0
  %11467 = vdwg.mxu0
  %11468 = vmatpush.bf16.msra.mxu0 %v7343
  %11469 = vmatpush.bf16.msra.mxu0 %v7341
  %11470 = vmatpush.bf16.msra.mxu0 %v7339
  %11471 = vmatpush.bf16.msra.mxu0 %v7337
  %11472 = vmatpush.bf16.msra.mxu0 %v7335
  %11473 = vmatpush.bf16.msra.mxu0 %v7333
  %11474 = vmatpush.bf16.msra.mxu0 %v7331
  %11475 = vmatpush.bf16.msra.mxu0 %v7329
  %11476 = vmatmul.bf16.gmra.mxu0 %v182
  %v11477 = vpop.f32.mrf.mxu0
  %v11478 = vadd.f32 %v11465, %v11477
  %v11479 = vpop.f32.mrf.mxu0
  %11480 = vdwg.mxu0
  %11481 = vmatpush.bf16.msra.mxu0 %v7359
  %11482 = vmatpush.bf16.msra.mxu0 %v7357
  %11483 = vmatpush.bf16.msra.mxu0 %v7355
  %11484 = vmatpush.bf16.msra.mxu0 %v7353
  %11485 = vmatpush.bf16.msra.mxu0 %v7351
  %11486 = vmatpush.bf16.msra.mxu0 %v7349
  %11487 = vmatpush.bf16.msra.mxu0 %v7347
  %11488 = vmatpush.bf16.msra.mxu0 %v7345
  %11489 = vmatmul.bf16.gmra.mxu0 %v183
  %v11490 = vpop.f32.mrf.mxu0
  %v11491 = vadd.f32 %v11478, %v11490
  %v11492 = vpop.f32.mrf.mxu0
  %11493 = vdwg.mxu0
  %11494 = vmatpush.bf16.msra.mxu0 %v7375
  %11495 = vmatpush.bf16.msra.mxu0 %v7373
  %11496 = vmatpush.bf16.msra.mxu0 %v7371
  %11497 = vmatpush.bf16.msra.mxu0 %v7369
  %11498 = vmatpush.bf16.msra.mxu0 %v7367
  %11499 = vmatpush.bf16.msra.mxu0 %v7365
  %11500 = vmatpush.bf16.msra.mxu0 %v7363
  %11501 = vmatpush.bf16.msra.mxu0 %v7361
  %11502 = vmatmul.bf16.gmra.mxu0 %v184
  %v11503 = vpop.f32.mrf.mxu0
  %v11504 = vadd.f32 %v11491, %v11503
  %v11505 = vpop.f32.mrf.mxu0
  %11506 = vdwg.mxu0
  %11507 = vmatpush.bf16.msra.mxu0 %v7391
  %11508 = vmatpush.bf16.msra.mxu0 %v7389
  %11509 = vmatpush.bf16.msra.mxu0 %v7387
  %11510 = vmatpush.bf16.msra.mxu0 %v7385
  %11511 = vmatpush.bf16.msra.mxu0 %v7383
  %11512 = vmatpush.bf16.msra.mxu0 %v7381
  %11513 = vmatpush.bf16.msra.mxu0 %v7379
  %11514 = vmatpush.bf16.msra.mxu0 %v7377
  %11515 = vmatmul.bf16.gmra.mxu0 %v185
  %v11516 = vpop.f32.mrf.mxu0
  %v11517 = vadd.f32 %v11504, %v11516
  %v11518 = vpop.f32.mrf.mxu0
  %11519 = vdwg.mxu0
  %11520 = vmatpush.bf16.msra.mxu0 %v7407
  %11521 = vmatpush.bf16.msra.mxu0 %v7405
  %11522 = vmatpush.bf16.msra.mxu0 %v7403
  %11523 = vmatpush.bf16.msra.mxu0 %v7401
  %11524 = vmatpush.bf16.msra.mxu0 %v7399
  %11525 = vmatpush.bf16.msra.mxu0 %v7397
  %11526 = vmatpush.bf16.msra.mxu0 %v7395
  %11527 = vmatpush.bf16.msra.mxu0 %v7393
  %11528 = vmatmul.bf16.gmra.mxu0 %v186
  %v11529 = vpop.f32.mrf.mxu0
  %v11530 = vadd.f32 %v11517, %v11529
  %v11531 = vpop.f32.mrf.mxu0
  %11532 = vdwg.mxu0
  %11533 = vmatpush.bf16.msra.mxu0 %v7423
  %11534 = vmatpush.bf16.msra.mxu0 %v7421
  %11535 = vmatpush.bf16.msra.mxu0 %v7419
  %11536 = vmatpush.bf16.msra.mxu0 %v7417
  %11537 = vmatpush.bf16.msra.mxu0 %v7415
  %11538 = vmatpush.bf16.msra.mxu0 %v7413
  %11539 = vmatpush.bf16.msra.mxu0 %v7411
  %11540 = vmatpush.bf16.msra.mxu0 %v7409
  %11541 = vmatmul.bf16.gmra.mxu0 %v187
  %v11542 = vpop.f32.mrf.mxu0
  %v11543 = vadd.f32 %v11530, %v11542
  %v11544 = vpop.f32.mrf.mxu0
  %11545 = vdwg.mxu0
  %11546 = vmatpush.bf16.msra.mxu0 %v7439
  %11547 = vmatpush.bf16.msra.mxu0 %v7437
  %11548 = vmatpush.bf16.msra.mxu0 %v7435
  %11549 = vmatpush.bf16.msra.mxu0 %v7433
  %11550 = vmatpush.bf16.msra.mxu0 %v7431
  %11551 = vmatpush.bf16.msra.mxu0 %v7429
  %11552 = vmatpush.bf16.msra.mxu0 %v7427
  %11553 = vmatpush.bf16.msra.mxu0 %v7425
  %11554 = vmatmul.bf16.gmra.mxu0 %v188
  %v11555 = vpop.f32.mrf.mxu0
  %v11556 = vadd.f32 %v11543, %v11555
  %v11557 = vpop.f32.mrf.mxu0
  %11558 = vdwg.mxu0
  %11559 = vmatpush.bf16.msra.mxu0 %v7455
  %11560 = vmatpush.bf16.msra.mxu0 %v7453
  %11561 = vmatpush.bf16.msra.mxu0 %v7451
  %11562 = vmatpush.bf16.msra.mxu0 %v7449
  %11563 = vmatpush.bf16.msra.mxu0 %v7447
  %11564 = vmatpush.bf16.msra.mxu0 %v7445
  %11565 = vmatpush.bf16.msra.mxu0 %v7443
  %11566 = vmatpush.bf16.msra.mxu0 %v7441
  %11567 = vmatmul.bf16.gmra.mxu0 %v189
  %v11568 = vpop.f32.mrf.mxu0
  %v11569 = vadd.f32 %v11556, %v11568
  %v11570 = vpop.f32.mrf.mxu0
  %11571 = vdwg.mxu0
  %11572 = vmatpush.bf16.msra.mxu0 %v7471
  %11573 = vmatpush.bf16.msra.mxu0 %v7469
  %11574 = vmatpush.bf16.msra.mxu0 %v7467
  %11575 = vmatpush.bf16.msra.mxu0 %v7465
  %11576 = vmatpush.bf16.msra.mxu0 %v7463
  %11577 = vmatpush.bf16.msra.mxu0 %v7461
  %11578 = vmatpush.bf16.msra.mxu0 %v7459
  %11579 = vmatpush.bf16.msra.mxu0 %v7457
  %11580 = vmatmul.bf16.gmra.mxu0 %v190
  %v11581 = vpop.f32.mrf.mxu0
  %v11582 = vadd.f32 %v11569, %v11581
  %v11583 = vpop.f32.mrf.mxu0
  %11584 = vdwg.mxu0
  %11585 = vmatpush.bf16.msra.mxu0 %v7487
  %11586 = vmatpush.bf16.msra.mxu0 %v7485
  %11587 = vmatpush.bf16.msra.mxu0 %v7483
  %11588 = vmatpush.bf16.msra.mxu0 %v7481
  %11589 = vmatpush.bf16.msra.mxu0 %v7479
  %11590 = vmatpush.bf16.msra.mxu0 %v7477
  %11591 = vmatpush.bf16.msra.mxu0 %v7475
  %11592 = vmatpush.bf16.msra.mxu0 %v7473
  %11593 = vmatmul.bf16.gmra.mxu0 %v191
  %v11594 = vpop.f32.mrf.mxu0
  %v11595 = vadd.f32 %v11582, %v11594
  %v11596 = vpop.f32.mrf.mxu0
  %11597 = vdwg.mxu0
  %11598 = vmatpush.bf16.msra.mxu0 %v7503
  %11599 = vmatpush.bf16.msra.mxu0 %v7501
  %11600 = vmatpush.bf16.msra.mxu0 %v7499
  %11601 = vmatpush.bf16.msra.mxu0 %v7497
  %11602 = vmatpush.bf16.msra.mxu0 %v7495
  %11603 = vmatpush.bf16.msra.mxu0 %v7493
  %11604 = vmatpush.bf16.msra.mxu0 %v7491
  %11605 = vmatpush.bf16.msra.mxu0 %v7489
  %11606 = vmatmul.bf16.gmra.mxu0 %v192
  %v11607 = vpop.f32.mrf.mxu0
  %v11608 = vadd.f32 %v11595, %v11607
  %v11609 = vpop.f32.mrf.mxu0
  %11610 = vdwg.mxu0
  %11611 = vmatpush.bf16.msra.mxu0 %v7519
  %11612 = vmatpush.bf16.msra.mxu0 %v7517
  %11613 = vmatpush.bf16.msra.mxu0 %v7515
  %11614 = vmatpush.bf16.msra.mxu0 %v7513
  %11615 = vmatpush.bf16.msra.mxu0 %v7511
  %11616 = vmatpush.bf16.msra.mxu0 %v7509
  %11617 = vmatpush.bf16.msra.mxu0 %v7507
  %11618 = vmatpush.bf16.msra.mxu0 %v7505
  %11619 = vmatmul.bf16.gmra.mxu0 %v193
  %v11620 = vpop.f32.mrf.mxu0
  %v11621 = vadd.f32 %v11608, %v11620
  %v11622 = vpop.f32.mrf.mxu0
  %11623 = vdwg.mxu0
  %11624 = vmatpush.bf16.msra.mxu0 %v7535
  %11625 = vmatpush.bf16.msra.mxu0 %v7533
  %11626 = vmatpush.bf16.msra.mxu0 %v7531
  %11627 = vmatpush.bf16.msra.mxu0 %v7529
  %11628 = vmatpush.bf16.msra.mxu0 %v7527
  %11629 = vmatpush.bf16.msra.mxu0 %v7525
  %11630 = vmatpush.bf16.msra.mxu0 %v7523
  %11631 = vmatpush.bf16.msra.mxu0 %v7521
  %11632 = vmatmul.bf16.gmra.mxu0 %v194
  %v11633 = vpop.f32.mrf.mxu0
  %v11634 = vadd.f32 %v11621, %v11633
  %v11635 = vpop.f32.mrf.mxu0
  %11636 = vdwg.mxu0
  %11637 = vmatpush.bf16.msra.mxu0 %v7551
  %11638 = vmatpush.bf16.msra.mxu0 %v7549
  %11639 = vmatpush.bf16.msra.mxu0 %v7547
  %11640 = vmatpush.bf16.msra.mxu0 %v7545
  %11641 = vmatpush.bf16.msra.mxu0 %v7543
  %11642 = vmatpush.bf16.msra.mxu0 %v7541
  %11643 = vmatpush.bf16.msra.mxu0 %v7539
  %11644 = vmatpush.bf16.msra.mxu0 %v7537
  %11645 = vmatmul.bf16.gmra.mxu0 %v195
  %v11646 = vpop.f32.mrf.mxu0
  %v11647 = vadd.f32 %v11634, %v11646
  %v11648 = vpop.f32.mrf.mxu0
  %11649 = vdwg.mxu0
  %11650 = vmatpush.bf16.msra.mxu0 %v7567
  %11651 = vmatpush.bf16.msra.mxu0 %v7565
  %11652 = vmatpush.bf16.msra.mxu0 %v7563
  %11653 = vmatpush.bf16.msra.mxu0 %v7561
  %11654 = vmatpush.bf16.msra.mxu0 %v7559
  %11655 = vmatpush.bf16.msra.mxu0 %v7557
  %11656 = vmatpush.bf16.msra.mxu0 %v7555
  %11657 = vmatpush.bf16.msra.mxu0 %v7553
  %11658 = vmatmul.bf16.gmra.mxu0 %v196
  %v11659 = vpop.f32.mrf.mxu0
  %v11660 = vadd.f32 %v11647, %v11659
  %v11661 = vpop.f32.mrf.mxu0
  %11662 = vdwg.mxu0
  %11663 = vmatpush.bf16.msra.mxu0 %v7583
  %11664 = vmatpush.bf16.msra.mxu0 %v7581
  %11665 = vmatpush.bf16.msra.mxu0 %v7579
  %11666 = vmatpush.bf16.msra.mxu0 %v7577
  %11667 = vmatpush.bf16.msra.mxu0 %v7575
  %11668 = vmatpush.bf16.msra.mxu0 %v7573
  %11669 = vmatpush.bf16.msra.mxu0 %v7571
  %11670 = vmatpush.bf16.msra.mxu0 %v7569
  %11671 = vmatmul.bf16.gmra.mxu0 %v197
  %v11672 = vpop.f32.mrf.mxu0
  %v11673 = vadd.f32 %v11660, %v11672
  %v11674 = vpop.f32.mrf.mxu0
  %11675 = vdwg.mxu0
  %11676 = vmatpush.bf16.msra.mxu0 %v7599
  %11677 = vmatpush.bf16.msra.mxu0 %v7597
  %11678 = vmatpush.bf16.msra.mxu0 %v7595
  %11679 = vmatpush.bf16.msra.mxu0 %v7593
  %11680 = vmatpush.bf16.msra.mxu0 %v7591
  %11681 = vmatpush.bf16.msra.mxu0 %v7589
  %11682 = vmatpush.bf16.msra.mxu0 %v7587
  %11683 = vmatpush.bf16.msra.mxu0 %v7585
  %11684 = vmatmul.bf16.gmra.mxu0 %v198
  %v11685 = vpop.f32.mrf.mxu0
  %v11686 = vadd.f32 %v11673, %v11685
  %v11687 = vpop.f32.mrf.mxu0
  %11688 = vdwg.mxu0
  %11689 = vmatpush.bf16.msra.mxu0 %v7615
  %11690 = vmatpush.bf16.msra.mxu0 %v7613
  %11691 = vmatpush.bf16.msra.mxu0 %v7611
  %11692 = vmatpush.bf16.msra.mxu0 %v7609
  %11693 = vmatpush.bf16.msra.mxu0 %v7607
  %11694 = vmatpush.bf16.msra.mxu0 %v7605
  %11695 = vmatpush.bf16.msra.mxu0 %v7603
  %11696 = vmatpush.bf16.msra.mxu0 %v7601
  %11697 = vmatmul.bf16.gmra.mxu0 %v199
  %v11698 = vpop.f32.mrf.mxu0
  %v11699 = vadd.f32 %v11686, %v11698
  %v11700 = vpop.f32.mrf.mxu0
  %11701 = vdwg.mxu0
  %11702 = vmatpush.bf16.msra.mxu0 %v7631
  %11703 = vmatpush.bf16.msra.mxu0 %v7629
  %11704 = vmatpush.bf16.msra.mxu0 %v7627
  %11705 = vmatpush.bf16.msra.mxu0 %v7625
  %11706 = vmatpush.bf16.msra.mxu0 %v7623
  %11707 = vmatpush.bf16.msra.mxu0 %v7621
  %11708 = vmatpush.bf16.msra.mxu0 %v7619
  %11709 = vmatpush.bf16.msra.mxu0 %v7617
  %11710 = vmatmul.bf16.gmra.mxu0 %v200
  %v11711 = vpop.f32.mrf.mxu0
  %v11712 = vadd.f32 %v11699, %v11711
  %v11713 = vpop.f32.mrf.mxu0
  %11714 = vdwg.mxu0
  %11715 = vmatpush.bf16.msra.mxu0 %v7647
  %11716 = vmatpush.bf16.msra.mxu0 %v7645
  %11717 = vmatpush.bf16.msra.mxu0 %v7643
  %11718 = vmatpush.bf16.msra.mxu0 %v7641
  %11719 = vmatpush.bf16.msra.mxu0 %v7639
  %11720 = vmatpush.bf16.msra.mxu0 %v7637
  %11721 = vmatpush.bf16.msra.mxu0 %v7635
  %11722 = vmatpush.bf16.msra.mxu0 %v7633
  %11723 = vmatmul.bf16.gmra.mxu0 %v201
  %v11724 = vpop.f32.mrf.mxu0
  %v11725 = vadd.f32 %v11712, %v11724
  %v11726 = vpop.f32.mrf.mxu0
  %11727 = vdwg.mxu0
  %11728 = vmatpush.bf16.msra.mxu0 %v7663
  %11729 = vmatpush.bf16.msra.mxu0 %v7661
  %11730 = vmatpush.bf16.msra.mxu0 %v7659
  %11731 = vmatpush.bf16.msra.mxu0 %v7657
  %11732 = vmatpush.bf16.msra.mxu0 %v7655
  %11733 = vmatpush.bf16.msra.mxu0 %v7653
  %11734 = vmatpush.bf16.msra.mxu0 %v7651
  %11735 = vmatpush.bf16.msra.mxu0 %v7649
  %11736 = vmatmul.bf16.gmra.mxu0 %v202
  %v11737 = vpop.f32.mrf.mxu0
  %v11738 = vadd.f32 %v11725, %v11737
  %v11739 = vpop.f32.mrf.mxu0
  %11740 = vdwg.mxu0
  %11741 = vmatpush.bf16.msra.mxu0 %v7679
  %11742 = vmatpush.bf16.msra.mxu0 %v7677
  %11743 = vmatpush.bf16.msra.mxu0 %v7675
  %11744 = vmatpush.bf16.msra.mxu0 %v7673
  %11745 = vmatpush.bf16.msra.mxu0 %v7671
  %11746 = vmatpush.bf16.msra.mxu0 %v7669
  %11747 = vmatpush.bf16.msra.mxu0 %v7667
  %11748 = vmatpush.bf16.msra.mxu0 %v7665
  %11749 = vmatmul.bf16.gmra.mxu0 %v203
  %v11750 = vpop.f32.mrf.mxu0
  %v11751 = vadd.f32 %v11738, %v11750
  %v11752 = vpop.f32.mrf.mxu0
  %11753 = vdwg.mxu0
  %11754 = vmatpush.bf16.msra.mxu0 %v7695
  %11755 = vmatpush.bf16.msra.mxu0 %v7693
  %11756 = vmatpush.bf16.msra.mxu0 %v7691
  %11757 = vmatpush.bf16.msra.mxu0 %v7689
  %11758 = vmatpush.bf16.msra.mxu0 %v7687
  %11759 = vmatpush.bf16.msra.mxu0 %v7685
  %11760 = vmatpush.bf16.msra.mxu0 %v7683
  %11761 = vmatpush.bf16.msra.mxu0 %v7681
  %11762 = vmatmul.bf16.gmra.mxu0 %v204
  %v11763 = vpop.f32.mrf.mxu0
  %v11764 = vadd.f32 %v11751, %v11763
  %v11765 = vpop.f32.mrf.mxu0
  %11766 = vdwg.mxu0
  %11767 = vmatpush.bf16.msra.mxu0 %v7711
  %11768 = vmatpush.bf16.msra.mxu0 %v7709
  %11769 = vmatpush.bf16.msra.mxu0 %v7707
  %11770 = vmatpush.bf16.msra.mxu0 %v7705
  %11771 = vmatpush.bf16.msra.mxu0 %v7703
  %11772 = vmatpush.bf16.msra.mxu0 %v7701
  %11773 = vmatpush.bf16.msra.mxu0 %v7699
  %11774 = vmatpush.bf16.msra.mxu0 %v7697
  %11775 = vmatmul.bf16.gmra.mxu0 %v205
  %v11776 = vpop.f32.mrf.mxu0
  %v11777 = vadd.f32 %v11764, %v11776
  %v11778 = vpop.f32.mrf.mxu0
  %11779 = vdwg.mxu0
  %11780 = vmatpush.bf16.msra.mxu0 %v7727
  %11781 = vmatpush.bf16.msra.mxu0 %v7725
  %11782 = vmatpush.bf16.msra.mxu0 %v7723
  %11783 = vmatpush.bf16.msra.mxu0 %v7721
  %11784 = vmatpush.bf16.msra.mxu0 %v7719
  %11785 = vmatpush.bf16.msra.mxu0 %v7717
  %11786 = vmatpush.bf16.msra.mxu0 %v7715
  %11787 = vmatpush.bf16.msra.mxu0 %v7713
  %11788 = vmatmul.bf16.gmra.mxu0 %v206
  %v11789 = vpop.f32.mrf.mxu0
  %v11790 = vadd.f32 %v11777, %v11789
  %v11791 = vpop.f32.mrf.mxu0
  %11792 = vdwg.mxu0
  %11793 = vmatpush.bf16.msra.mxu0 %v7743
  %11794 = vmatpush.bf16.msra.mxu0 %v7741
  %11795 = vmatpush.bf16.msra.mxu0 %v7739
  %11796 = vmatpush.bf16.msra.mxu0 %v7737
  %11797 = vmatpush.bf16.msra.mxu0 %v7735
  %11798 = vmatpush.bf16.msra.mxu0 %v7733
  %11799 = vmatpush.bf16.msra.mxu0 %v7731
  %11800 = vmatpush.bf16.msra.mxu0 %v7729
  %11801 = vmatmul.bf16.gmra.mxu0 %v207
  %v11802 = vpop.f32.mrf.mxu0
  %v11803 = vadd.f32 %v11790, %v11802
  %v11804 = vpop.f32.mrf.mxu0
  %11805 = vdwg.mxu0
  %11806 = vmatpush.bf16.msra.mxu0 %v7759
  %11807 = vmatpush.bf16.msra.mxu0 %v7757
  %11808 = vmatpush.bf16.msra.mxu0 %v7755
  %11809 = vmatpush.bf16.msra.mxu0 %v7753
  %11810 = vmatpush.bf16.msra.mxu0 %v7751
  %11811 = vmatpush.bf16.msra.mxu0 %v7749
  %11812 = vmatpush.bf16.msra.mxu0 %v7747
  %11813 = vmatpush.bf16.msra.mxu0 %v7745
  %11814 = vmatmul.bf16.gmra.mxu0 %v208
  %v11815 = vpop.f32.mrf.mxu0
  %v11816 = vadd.f32 %v11803, %v11815
  %v11817 = vpop.f32.mrf.mxu0
  %11818 = vdwg.mxu0
  %11819 = vmatpush.bf16.msra.mxu0 %v7775
  %11820 = vmatpush.bf16.msra.mxu0 %v7773
  %11821 = vmatpush.bf16.msra.mxu0 %v7771
  %11822 = vmatpush.bf16.msra.mxu0 %v7769
  %11823 = vmatpush.bf16.msra.mxu0 %v7767
  %11824 = vmatpush.bf16.msra.mxu0 %v7765
  %11825 = vmatpush.bf16.msra.mxu0 %v7763
  %11826 = vmatpush.bf16.msra.mxu0 %v7761
  %11827 = vmatmul.bf16.gmra.mxu0 %v209
  %v11828 = vpop.f32.mrf.mxu0
  %v11829 = vadd.f32 %v11816, %v11828
  %v11830 = vpop.f32.mrf.mxu0
  %11831 = vdwg.mxu0
  %11832 = vmatpush.bf16.msra.mxu0 %v7791
  %11833 = vmatpush.bf16.msra.mxu0 %v7789
  %11834 = vmatpush.bf16.msra.mxu0 %v7787
  %11835 = vmatpush.bf16.msra.mxu0 %v7785
  %11836 = vmatpush.bf16.msra.mxu0 %v7783
  %11837 = vmatpush.bf16.msra.mxu0 %v7781
  %11838 = vmatpush.bf16.msra.mxu0 %v7779
  %11839 = vmatpush.bf16.msra.mxu0 %v7777
  %11840 = vmatmul.bf16.gmra.mxu0 %v210
  %v11841 = vpop.f32.mrf.mxu0
  %v11842 = vadd.f32 %v11829, %v11841
  %v11843 = vpop.f32.mrf.mxu0
  %11844 = vdwg.mxu0
  %11845 = vmatpush.bf16.msra.mxu0 %v7807
  %11846 = vmatpush.bf16.msra.mxu0 %v7805
  %11847 = vmatpush.bf16.msra.mxu0 %v7803
  %11848 = vmatpush.bf16.msra.mxu0 %v7801
  %11849 = vmatpush.bf16.msra.mxu0 %v7799
  %11850 = vmatpush.bf16.msra.mxu0 %v7797
  %11851 = vmatpush.bf16.msra.mxu0 %v7795
  %11852 = vmatpush.bf16.msra.mxu0 %v7793
  %11853 = vmatmul.bf16.gmra.mxu0 %v211
  %v11854 = vpop.f32.mrf.mxu0
  %v11855 = vadd.f32 %v11842, %v11854
  %v11856 = vpop.f32.mrf.mxu0
  %11857 = vdwg.mxu0
  %11858 = vmatpush.bf16.msra.mxu0 %v7823
  %11859 = vmatpush.bf16.msra.mxu0 %v7821
  %11860 = vmatpush.bf16.msra.mxu0 %v7819
  %11861 = vmatpush.bf16.msra.mxu0 %v7817
  %11862 = vmatpush.bf16.msra.mxu0 %v7815
  %11863 = vmatpush.bf16.msra.mxu0 %v7813
  %11864 = vmatpush.bf16.msra.mxu0 %v7811
  %11865 = vmatpush.bf16.msra.mxu0 %v7809
  %11866 = vmatmul.bf16.gmra.mxu0 %v212
  %v11867 = vpop.f32.mrf.mxu0
  %v11868 = vadd.f32 %v11855, %v11867
  %v11869 = vpop.f32.mrf.mxu0
  %11870 = vdwg.mxu0
  %11871 = vmatpush.bf16.msra.mxu0 %v7839
  %11872 = vmatpush.bf16.msra.mxu0 %v7837
  %11873 = vmatpush.bf16.msra.mxu0 %v7835
  %11874 = vmatpush.bf16.msra.mxu0 %v7833
  %11875 = vmatpush.bf16.msra.mxu0 %v7831
  %11876 = vmatpush.bf16.msra.mxu0 %v7829
  %11877 = vmatpush.bf16.msra.mxu0 %v7827
  %11878 = vmatpush.bf16.msra.mxu0 %v7825
  %11879 = vmatmul.bf16.gmra.mxu0 %v213
  %v11880 = vpop.f32.mrf.mxu0
  %v11881 = vadd.f32 %v11868, %v11880
  %v11882 = vpop.f32.mrf.mxu0
  %11883 = vdwg.mxu0
  %11884 = vmatpush.bf16.msra.mxu0 %v7855
  %11885 = vmatpush.bf16.msra.mxu0 %v7853
  %11886 = vmatpush.bf16.msra.mxu0 %v7851
  %11887 = vmatpush.bf16.msra.mxu0 %v7849
  %11888 = vmatpush.bf16.msra.mxu0 %v7847
  %11889 = vmatpush.bf16.msra.mxu0 %v7845
  %11890 = vmatpush.bf16.msra.mxu0 %v7843
  %11891 = vmatpush.bf16.msra.mxu0 %v7841
  %11892 = vmatmul.bf16.gmra.mxu0 %v214
  %v11893 = vpop.f32.mrf.mxu0
  %v11894 = vadd.f32 %v11881, %v11893
  %v11895 = vpop.f32.mrf.mxu0
  %11896 = vdwg.mxu0
  %11897 = vmatpush.bf16.msra.mxu0 %v7871
  %11898 = vmatpush.bf16.msra.mxu0 %v7869
  %11899 = vmatpush.bf16.msra.mxu0 %v7867
  %11900 = vmatpush.bf16.msra.mxu0 %v7865
  %11901 = vmatpush.bf16.msra.mxu0 %v7863
  %11902 = vmatpush.bf16.msra.mxu0 %v7861
  %11903 = vmatpush.bf16.msra.mxu0 %v7859
  %11904 = vmatpush.bf16.msra.mxu0 %v7857
  %11905 = vmatmul.bf16.gmra.mxu0 %v215
  %v11906 = vpop.f32.mrf.mxu0
  %v11907 = vadd.f32 %v11894, %v11906
  %v11908 = vpop.f32.mrf.mxu0
  %11909 = vdwg.mxu0
  %11910 = vmatpush.bf16.msra.mxu0 %v7887
  %11911 = vmatpush.bf16.msra.mxu0 %v7885
  %11912 = vmatpush.bf16.msra.mxu0 %v7883
  %11913 = vmatpush.bf16.msra.mxu0 %v7881
  %11914 = vmatpush.bf16.msra.mxu0 %v7879
  %11915 = vmatpush.bf16.msra.mxu0 %v7877
  %11916 = vmatpush.bf16.msra.mxu0 %v7875
  %11917 = vmatpush.bf16.msra.mxu0 %v7873
  %11918 = vmatmul.bf16.gmra.mxu0 %v216
  %v11919 = vpop.f32.mrf.mxu0
  %v11920 = vadd.f32 %v11907, %v11919
  %v11921 = vpop.f32.mrf.mxu0
  %11922 = vdwg.mxu0
  %11923 = vmatpush.bf16.msra.mxu0 %v7903
  %11924 = vmatpush.bf16.msra.mxu0 %v7901
  %11925 = vmatpush.bf16.msra.mxu0 %v7899
  %11926 = vmatpush.bf16.msra.mxu0 %v7897
  %11927 = vmatpush.bf16.msra.mxu0 %v7895
  %11928 = vmatpush.bf16.msra.mxu0 %v7893
  %11929 = vmatpush.bf16.msra.mxu0 %v7891
  %11930 = vmatpush.bf16.msra.mxu0 %v7889
  %11931 = vmatmul.bf16.gmra.mxu0 %v217
  %v11932 = vpop.f32.mrf.mxu0
  %v11933 = vadd.f32 %v11920, %v11932
  %v11934 = vpop.f32.mrf.mxu0
  %11935 = vdwg.mxu0
  %v11936 = vmax.f32 %v10685, 0.0
  %v11937 = vmax.f32 %v11933, 0.0
  %v11938 = vld [vmem:[%s3] sm:$0xff]
  %v11939 = vld [vmem:[%s3 + $0x8] sm:$0xff]
  %v11940 = vld [vmem:[%s3 + $0x10] sm:$0xff]
  %v11941 = vld [vmem:[%s3 + $0x18] sm:$0xff]
  %v11942 = vld [vmem:[%s3 + $0x20] sm:$0xff]
  %v11943 = vld [vmem:[%s3 + $0x28] sm:$0xff]
  %v11944 = vld [vmem:[%s3 + $0x30] sm:$0xff]
  %v11945 = vld [vmem:[%s3 + $0x38] sm:$0xff]
  %v11946 = vld [vmem:[%s3 + $0x40] sm:$0xff]
  %v11947 = vld [vmem:[%s3 + $0x48] sm:$0xff]
  %v11948 = vld [vmem:[%s3 + $0x50] sm:$0xff]
  %v11949 = vld [vmem:[%s3 + $0x58] sm:$0xff]
  %v11950 = vld [vmem:[%s3 + $0x60] sm:$0xff]
  %v11951 = vld [vmem:[%s3 + $0x68] sm:$0xff]
  %v11952 = vld [vmem:[%s3 + $0x70] sm:$0xff]
  %v11953 = vld [vmem:[%s3 + $0x78] sm:$0xff]
  %v11954 = vld [vmem:[%s3 + $0x80] sm:$0xff]
  %v11955 = vld [vmem:[%s3 + $0x88] sm:$0xff]
  %v11956 = vld [vmem:[%s3 + $0x90] sm:$0xff]
  %v11957 = vld [vmem:[%s3 + $0x98] sm:$0xff]
  %v11958 = vld [vmem:[%s3 + $0xa0] sm:$0xff]
  %v11959 = vld [vmem:[%s3 + $0xa8] sm:$0xff]
  %v11960 = vld [vmem:[%s3 + $0xb0] sm:$0xff]
  %v11961 = vld [vmem:[%s3 + $0xb8] sm:$0xff]
  %v11962 = vld [vmem:[%s4] sm:$0x1]
  %v11964 = vperm.slane %v11962, 0
  %vm11966 = vcmask 523264
  %v11968 = vsel %vm11966, %v11937, 0
  %11970 = vmatpush.msra.mxu0 %v11953
  %11971 = vmatpush.msra.mxu0 %v11952
  %11972 = vmatpush.msra.mxu0 %v11951
  %11973 = vmatpush.msra.mxu0 %v11950
  %11974 = vmatpush.msra.mxu0 %v11949
  %11975 = vmatpush.msra.mxu0 %v11948
  %11976 = vmatpush.msra.mxu0 %v11947
  %11977 = vmatpush.msra.mxu0 %v11946
  %11978 = vmatpush.msra.mxu0 %v11945
  %11979 = vmatpush.msra.mxu0 %v11944
  %11980 = vmatpush.msra.mxu0 %v11943
  %11981 = vmatpush.msra.mxu0 %v11942
  %11982 = vmatpush.msra.mxu0 %v11941
  %11983 = vmatpush.msra.mxu0 %v11940
  %11984 = vmatpush.msra.mxu0 %v11939
  %11985 = vmatpush.msra.mxu0 %v11938
  %11986 = vmatmul.f32.gmra.mxu0 %v11936
  %v11987 = vpop.f32.mrf.mxu0
  %v11988 = vadd.f32 %v11964, %v11987
  %11989 = vdwg.mxu0
  %11990 = vmatpush.msra.mxu0 0.0
  %11991 = vmatpush.msra.mxu0 0.0
  %11992 = vmatpush.msra.mxu0 0.0
  %11993 = vmatpush.msra.mxu0 0.0
  %11994 = vmatpush.msra.mxu0 0.0
  %11995 = vmatpush.msra.mxu0 0.0
  %11996 = vmatpush.msra.mxu0 0.0
  %11997 = vmatpush.msra.mxu0 0.0
  %11998 = vmatpush.msra.mxu0 %v11961
  %11999 = vmatpush.msra.mxu0 %v11960
  %12000 = vmatpush.msra.mxu0 %v11959
  %12001 = vmatpush.msra.mxu0 %v11958
  %12002 = vmatpush.msra.mxu0 %v11957
  %12003 = vmatpush.msra.mxu0 %v11956
  %12004 = vmatpush.msra.mxu0 %v11955
  %12005 = vmatpush.msra.mxu0 %v11954
  %12006 = vmatmul.f32.gmra.mxu0 %v11968
  %v12007 = vpop.f32.mrf.mxu0
  %v12008 = vadd.f32 %v11988, %v12007
  %12009 = vdwg.mxu0
  %v12010 = vmax.f32 %v12008, 0.0
  %v12011 = vld [vmem:[%s5] sm:$0xff]
  %v12012 = vld [vmem:[%s5 + $0x8] sm:$0xff]
  %v12013 = vld [vmem:[%s5 + $0x10] sm:$0xff]
  %v12014 = vld [vmem:[%s5 + $0x18] sm:$0xff]
  %v12015 = vld [vmem:[%s5 + $0x20] sm:$0xff]
  %v12016 = vld [vmem:[%s5 + $0x28] sm:$0xff]
  %v12017 = vld [vmem:[%s5 + $0x30] sm:$0xff]
  %v12018 = vld [vmem:[%s5 + $0x38] sm:$0xff]
  %v12019 = vld [vmem:[%s5 + $0x40] sm:$0xff]
  %v12020 = vld [vmem:[%s5 + $0x48] sm:$0xff]
  %v12021 = vld [vmem:[%s5 + $0x50] sm:$0xff]
  %v12022 = vld [vmem:[%s5 + $0x58] sm:$0xff]
  %v12023 = vld [vmem:[%s5 + $0x60] sm:$0xff]
  %v12024 = vld [vmem:[%s5 + $0x68] sm:$0xff]
  %v12025 = vld [vmem:[%s5 + $0x70] sm:$0xff]
  %v12026 = vld [vmem:[%s5 + $0x78] sm:$0xff]
  %v12027 = vld [vmem:[%s6] sm:$0x1]
  %v12029 = vperm.slane %v12027, 0
  %12031 = vmatpush.msra.mxu0 %v12026
  %12032 = vmatpush.msra.mxu0 %v12025
  %12033 = vmatpush.msra.mxu0 %v12024
  %12034 = vmatpush.msra.mxu0 %v12023
  %12035 = vmatpush.msra.mxu0 %v12022
  %12036 = vmatpush.msra.mxu0 %v12021
  %12037 = vmatpush.msra.mxu0 %v12020
  %12038 = vmatpush.msra.mxu0 %v12019
  %12039 = vmatpush.msra.mxu0 %v12018
  %12040 = vmatpush.msra.mxu0 %v12017
  %12041 = vmatpush.msra.mxu0 %v12016
  %12042 = vmatpush.msra.mxu0 %v12015
  %12043 = vmatpush.msra.mxu0 %v12014
  %12044 = vmatpush.msra.mxu0 %v12013
  %12045 = vmatpush.msra.mxu0 %v12012
  %12046 = vmatpush.msra.mxu0 %v12011
  %12047 = vmatmul.f32.gmra.mxu0 %v12010
  %v12048 = vpop.f32.mrf.mxu0
  %v12049 = vadd.f32 %v12029, %v12048
  %12050 = vdwg.mxu0
  %12051 = vst [vmem:[%s7] sm:$0xff] %v12049
  // Predicated region
  $region30: #{mlp_classifier_forward.1} parent=0 // pred_check
    _
  $region31: #{mlp_classifier_forward.1} parent=0 // pred_check_branch
    %12053 = sbr.rel (0) target = $region33
  $region32: #{mlp_classifier_forward.1} parent=0 // pred_region
    _
  $region33: #{mlp_classifier_forward.1} parent=0 // pred_fallthru
    _
  // Predicated region
  $region34: #{mlp_classifier_forward.1} parent=0 // pred_check
    _
  $region35: #{mlp_classifier_forward.1} parent=0 // pred_check_branch
    %12055 = sbr.rel (0) target = $region37
  $region36: #{mlp_classifier_forward.1} parent=0 // pred_region
    _
  $region37: #{mlp_classifier_forward.1} parent=0 // pred_fallthru
    _

</llo_original>
